<compile_context>
chip_gen: v7x
topology: tpu7x:2x2x1
jax: 0.10.0
libtpu: 0.0.40
codegen_flags: <defaults>
</compile_context>

<pallas_src>
import functools

import numpy as np
import jax
import jax.numpy as jnp
from jax.experimental import pallas as pl
from jax.experimental.pallas import tpu as pltpu

C1 = 0.01 ** 2
C2 = 0.03 ** 2


def _gaussian_taps(window_size: int, sigma: float = 1.5):
    """1-D Gaussian taps as Python floats (baked into the kernel as constants)."""
    coords = np.arange(window_size, dtype=np.float32) - np.float32(window_size // 2)
    g = np.exp(-(coords ** 2) / np.float32(2.0 * sigma * sigma)).astype(np.float32)
    g = (g / g.sum()).astype(np.float32)
    return tuple(float(v) for v in g)


def _taps_symmetric(taps):
    ws = len(taps)
    return (ws % 2 == 1) and all(
        abs(taps[k] - taps[ws - 1 - k]) < 1e-12 for k in range(ws))


def _gauss_blur_3d(x, taps, p, symmetric):
    """Separable zero-padded Gaussian cross-correlation over the last two axes.

    x: (N, H, W) f32 value (N independent planes).  Implemented as shifted
    multiply-adds (VPU only).  When the taps are symmetric, tap pairs share a
    multiply.
    """
    N, H, W = x.shape
    ws = len(taps)

    # Row (H / sublane) pass.
    zr = jnp.zeros((N, p, W), jnp.float32)
    xp = jnp.concatenate([zr, x, zr], axis=1)          # (N, H+2p, W)

    def row(k):
        return xp[:, k:k + H, :]

    if symmetric:
        acc = taps[p] * row(p)
        for k in range(p):
            acc = acc + taps[k] * (row(k) + row(ws - 1 - k))
    else:
        acc = taps[0] * row(0)
        for k in range(1, ws):
            acc = acc + taps[k] * row(k)

    # Column (W / lane) pass.
    zc = jnp.zeros((N, H, p), jnp.float32)
    xq = jnp.concatenate([zc, acc, zc], axis=2)        # (N, H, W+2p)

    def col(k):
        return xq[:, :, k:k + W]

    if symmetric:
        out = taps[p] * col(p)
        for k in range(p):
            out = out + taps[k] * (col(k) + col(ws - 1 - k))
    else:
        out = taps[0] * col(0)
        for k in range(1, ws):
            out = out + taps[k] * col(k)
    return out


def _ssim_map_from_blocks(x1, x2, taps, p, symmetric):
    """SSIM map for a (P, H, W) block of plane pairs (all f32)."""
    P = x1.shape[0]
    # Fuse the five Gaussian convs into a single separable pass.
    stacked = jnp.concatenate([x1, x2, x1 * x1, x2 * x2, x1 * x2], axis=0)  # (5P,H,W)
    conv = _gauss_blur_3d(stacked, taps, p, symmetric)
    mu1 = conv[0 * P:1 * P]
    mu2 = conv[1 * P:2 * P]
    e11 = conv[2 * P:3 * P]
    e22 = conv[3 * P:4 * P]
    e12 = conv[4 * P:5 * P]

    mu1_sq = mu1 * mu1
    mu2_sq = mu2 * mu2
    mu1_mu2 = mu1 * mu2
    sigma1_sq = e11 - mu1_sq
    sigma2_sq = e22 - mu2_sq
    sigma12 = e12 - mu1_mu2

    num = (2.0 * mu1_mu2 + C1) * (2.0 * sigma12 + C2)
    den = (mu1_sq + mu2_sq + C1) * (sigma1_sq + sigma2_sq + C2)
    return num / den


def _ssim_mean_kernel(x1_ref, x2_ref, psum_ref, *, taps, pad, symmetric,
                      n_valid, planes_per_block):
    """Mean-mode kernel: emits one f32 partial sum per grid step (no map writeback)."""
    x1 = x1_ref[...].astype(jnp.float32)
    x2 = x2_ref[...].astype(jnp.float32)
    smap = _ssim_map_from_blocks(x1, x2, taps, pad, symmetric)   # (P, H, W)

    # Mask out zero-padded planes (their SSIM is exactly 1 and must not count).
    base = pl.program_id(0) * planes_per_block
    plane_idx = base + jax.lax.broadcasted_iota(
        jnp.int32, (planes_per_block, 1, 1), 0)
    valid = plane_idx < n_valid
    psum_ref[0, 0] = jnp.sum(jnp.where(valid, smap, 0.0))


def _ssim_map_kernel(x1_ref, x2_ref, map_ref, *, taps, pad, symmetric):
    """'none'-mode kernel: writes the SSIM map block."""
    x1 = x1_ref[...].astype(jnp.float32)
    x2 = x2_ref[...].astype(jnp.float32)
    map_ref[...] = _ssim_map_from_blocks(
        x1, x2, taps, pad, symmetric).astype(map_ref.dtype)


def _pick_planes_per_block(n, plane_bytes, budget_bytes=512 * 1024):
    """Planes per grid step.

    Keep the (P,H,W) input block <= ~512 KiB so double-buffered inputs plus
    the ~5x fused-conv temporaries stay well inside a 32 MiB scoped-VMEM
    budget on v5e/v6e/v7x.  Prefer a divisor of n so no plane padding (and no
    extra HBM copy of the inputs) is needed.
    """
    cap = max(1, min(n, budget_bytes // max(1, plane_bytes)))
    for cand in range(cap, 0, -1):
        if n % cand == 0:
            if cand >= max(1, cap // 2):
                return cand
            break
    return cap


def ssim(img1, img2, window_size: int = 11, reduction: str = 'mean'):
    if img1.shape != img2.shape:
        raise ValueError('Input images must have the same dimensions')
    if reduction not in ('mean', 'none'):
        raise ValueError(f'Invalid reduction mode: {reduction}')

    B, C, H, W = img1.shape
    p = window_size // 2
    taps = _gaussian_taps(window_size)
    symmetric = _taps_symmetric(taps)

    n = B * C
    x1 = img1.reshape(n, H, W)
    x2 = img2.reshape(n, H, W)

    plane_bytes = H * W * 4
    P = _pick_planes_per_block(n, plane_bytes)
    num_steps = -(-n // P)
    n_pad = num_steps * P
    if n_pad != n:
        padz = jnp.zeros((n_pad - n, H, W), x1.dtype)
        x1 = jnp.concatenate([x1, padz], axis=0)
        x2 = jnp.concatenate([x2, padz], axis=0)

    cparams = pltpu.CompilerParams(
        dimension_semantics=("parallel",),          # plane blocks are independent
        vmem_limit_bytes=32 * 1024 * 1024,
    )
    in_specs = [
        pl.BlockSpec((P, H, W), lambda i: (i, 0, 0)),
        pl.BlockSpec((P, H, W), lambda i: (i, 0, 0)),
    ]

    if reduction == 'mean':
        kernel = functools.partial(
            _ssim_mean_kernel, taps=taps, pad=p, symmetric=symmetric,
            n_valid=n, planes_per_block=P)
        psums = pl.pallas_call(
            kernel,
            out_shape=jax.ShapeDtypeStruct((num_steps, 1), jnp.float32),
            grid=(num_steps,),
            in_specs=in_specs,
            out_specs=pl.BlockSpec((1, 1), lambda i: (i, 0),
                                   memory_space=pltpu.MemorySpace.SMEM),
            compiler_params=cparams,
        )(x1, x2)
        mean = jnp.sum(psums) / jnp.float32(n * H * W)
        return mean.astype(img1.dtype)

    # reduction == 'none'
    kernel = functools.partial(_ssim_map_kernel, taps=taps, pad=p,
                               symmetric=symmetric)
    smap = pl.pallas_call(
        kernel,
        out_shape=jax.ShapeDtypeStruct((n_pad, H, W), img1.dtype),
        grid=(num_steps,),
        in_specs=in_specs,
        out_specs=pl.BlockSpec((P, H, W), lambda i: (i, 0, 0)),
        compiler_params=cparams,
    )(x1, x2)
    return smap[:n].reshape(B, C, H, W)


def _ssim_reference(img1, img2, window_size: int = 11):
    """Pure-JAX reference mirroring the PyTorch _ssim, for a sanity check."""
    B, C, H, W = img1.shape
    g = jnp.asarray(_gaussian_taps(window_size), dtype=jnp.float32)
    w2 = jnp.outer(g, g)
    window = jnp.tile(w2[None, None], (C, 1, 1, 1))
    p = window_size // 2

    def conv(x):
        return jax.lax.conv_general_dilated(
            x, window, window_strides=(1, 1), padding=[(p, p), (p, p)],
            feature_group_count=C,
            dimension_numbers=('NCHW', 'OIHW', 'NCHW'),
            precision=jax.lax.Precision.HIGHEST)

    mu1 = conv(img1)
    mu2 = conv(img2)
    mu1_sq = mu1 ** 2
    mu2_sq = mu2 ** 2
    mu1_mu2 = mu1 * mu2
    sigma1_sq = conv(img1 * img1) - mu1_sq
    sigma2_sq = conv(img2 * img2) - mu2_sq
    sigma12 = conv(img1 * img2) - mu1_mu2
    ssim_map = (2 * mu1_mu2 + C1) * (2 * sigma12 + C2) / (
        (mu1_sq + mu2_sq + C1) * (sigma1_sq + sigma2_sq + C2))
    return ssim_map.mean(), ssim_map


if __name__ == "__main__":
    key = jax.random.PRNGKey(0)
    k1, k2 = jax.random.split(key)
    img1 = jax.random.uniform(k1, (2, 4, 16, 16), dtype=jnp.float32)
    img2 = jax.random.uniform(k2, (2, 4, 16, 16), dtype=jnp.float32)

    out_mean = ssim(img1, img2, window_size=11, reduction='mean')
    out_map = ssim(img1, img2, window_size=11, reduction='none')
    jax.block_until_ready((out_mean, out_map))

    ref_mean, ref_map = _ssim_reference(img1, img2, window_size=11)
    assert jnp.allclose(out_map, ref_map, atol=1e-3, rtol=1e-3), "ssim map mismatch"
    assert jnp.allclose(out_mean, ref_mean, atol=1e-3, rtol=1e-3), "ssim mean mismatch"

    print("KERNEL_OK")
</pallas_src>

<mosaic_0001>
module attributes {stable_mosaic.version = 11 : i64} {
  func.func @_ssim_mean_kernel(%arg0: i32, %arg1: memref<8x16x16xf32, #tpu.memory_space<vmem>>, %arg2: memref<8x16x16xf32, #tpu.memory_space<vmem>>, %arg3: memref<1x1xf32, #tpu.memory_space<smem>>) attributes {dimension_semantics = [#tpu.dimension_semantics<parallel>], iteration_bounds = array<i64: 1>, scalar_prefetch = 0 : i64, scratch_operands = 0 : i64, tpu.core_type = #tpu.core_type<tc>, window_params = [{transform_indices = @transform_0, window_bounds = array<i64: 8, 16, 16>}, {transform_indices = @transform_1, window_bounds = array<i64: 8, 16, 16>}, {transform_indices = @transform_2, window_bounds = array<i64: 1, 1>}]} {
    %c0 = arith.constant 0 : index
    %c0_0 = arith.constant 0 : index
    %c0_1 = arith.constant 0 : index
    %0 = vector.load %arg1[%c0, %c0_0, %c0_1] : memref<8x16x16xf32, #tpu.memory_space<vmem>>, vector<8x16x16xf32>
    %c0_2 = arith.constant 0 : index
    %c0_3 = arith.constant 0 : index
    %c0_4 = arith.constant 0 : index
    %1 = vector.load %arg2[%c0_2, %c0_3, %c0_4] : memref<8x16x16xf32, #tpu.memory_space<vmem>>, vector<8x16x16xf32>
    %2 = arith.mulf %0, %0 : vector<8x16x16xf32>
    %3 = arith.mulf %1, %1 : vector<8x16x16xf32>
    %4 = arith.mulf %0, %1 : vector<8x16x16xf32>
    %5 = tpu.concatenate %0, %1, %2, %3, %4 in 0 : vector<8x16x16xf32>, vector<8x16x16xf32>, vector<8x16x16xf32>, vector<8x16x16xf32>, vector<8x16x16xf32> -> vector<40x16x16xf32>
    %cst = arith.constant 0.000000e+00 : f32
    %6 = vector.broadcast %cst : f32 to vector<40x5x16xf32>
    %7 = tpu.concatenate %6, %5, %6 in 1 : vector<40x5x16xf32>, vector<40x16x16xf32>, vector<40x5x16xf32> -> vector<40x26x16xf32>
    %8 = vector.extract_strided_slice %7 {offsets = [0, 5, 0], sizes = [40, 16, 16], strides = [1, 1, 1]} : vector<40x26x16xf32> to vector<40x16x16xf32>
    %cst_5 = arith.constant 0.266011745 : f32
    %9 = vector.broadcast %cst_5 : f32 to vector<40x16x16xf32>
    %10 = arith.mulf %9, %8 : vector<40x16x16xf32>
    %11 = vector.extract_strided_slice %7 {offsets = [0, 0, 0], sizes = [40, 16, 16], strides = [1, 1, 1]} : vector<40x26x16xf32> to vector<40x16x16xf32>
    %12 = vector.extract_strided_slice %7 {offsets = [0, 10, 0], sizes = [40, 16, 16], strides = [1, 1, 1]} : vector<40x26x16xf32> to vector<40x16x16xf32>
    %13 = arith.addf %11, %12 : vector<40x16x16xf32>
    %cst_6 = arith.constant 0.00102838036 : f32
    %14 = vector.broadcast %cst_6 : f32 to vector<40x16x16xf32>
    %15 = arith.mulf %14, %13 : vector<40x16x16xf32>
    %16 = arith.addf %10, %15 : vector<40x16x16xf32>
    %17 = vector.extract_strided_slice %7 {offsets = [0, 1, 0], sizes = [40, 16, 16], strides = [1, 1, 1]} : vector<40x26x16xf32> to vector<40x16x16xf32>
    %18 = vector.extract_strided_slice %7 {offsets = [0, 9, 0], sizes = [40, 16, 16], strides = [1, 1, 1]} : vector<40x26x16xf32> to vector<40x16x16xf32>
    %19 = arith.addf %17, %18 : vector<40x16x16xf32>
    %cst_7 = arith.constant 0.00759875868 : f32
    %20 = vector.broadcast %cst_7 : f32 to vector<40x16x16xf32>
    %21 = arith.mulf %20, %19 : vector<40x16x16xf32>
    %22 = arith.addf %16, %21 : vector<40x16x16xf32>
    %23 = vector.extract_strided_slice %7 {offsets = [0, 2, 0], sizes = [40, 16, 16], strides = [1, 1, 1]} : vector<40x26x16xf32> to vector<40x16x16xf32>
    %24 = vector.extract_strided_slice %7 {offsets = [0, 8, 0], sizes = [40, 16, 16], strides = [1, 1, 1]} : vector<40x26x16xf32> to vector<40x16x16xf32>
    %25 = arith.addf %23, %24 : vector<40x16x16xf32>
    %cst_8 = arith.constant 0.0360007733 : f32
    %26 = vector.broadcast %cst_8 : f32 to vector<40x16x16xf32>
    %27 = arith.mulf %26, %25 : vector<40x16x16xf32>
    %28 = arith.addf %22, %27 : vector<40x16x16xf32>
    %29 = vector.extract_strided_slice %7 {offsets = [0, 3, 0], sizes = [40, 16, 16], strides = [1, 1, 1]} : vector<40x26x16xf32> to vector<40x16x16xf32>
    %30 = vector.extract_strided_slice %7 {offsets = [0, 7, 0], sizes = [40, 16, 16], strides = [1, 1, 1]} : vector<40x26x16xf32> to vector<40x16x16xf32>
    %31 = arith.addf %29, %30 : vector<40x16x16xf32>
    %cst_9 = arith.constant 0.109360702 : f32
    %32 = vector.broadcast %cst_9 : f32 to vector<40x16x16xf32>
    %33 = arith.mulf %32, %31 : vector<40x16x16xf32>
    %34 = arith.addf %28, %33 : vector<40x16x16xf32>
    %35 = vector.extract_strided_slice %7 {offsets = [0, 4, 0], sizes = [40, 16, 16], strides = [1, 1, 1]} : vector<40x26x16xf32> to vector<40x16x16xf32>
    %36 = vector.extract_strided_slice %7 {offsets = [0, 6, 0], sizes = [40, 16, 16], strides = [1, 1, 1]} : vector<40x26x16xf32> to vector<40x16x16xf32>
    %37 = arith.addf %35, %36 : vector<40x16x16xf32>
    %cst_10 = arith.constant 0.213005543 : f32
    %38 = vector.broadcast %cst_10 : f32 to vector<40x16x16xf32>
    %39 = arith.mulf %38, %37 : vector<40x16x16xf32>
    %40 = arith.addf %34, %39 : vector<40x16x16xf32>
    %cst_11 = arith.constant 0.000000e+00 : f32
    %41 = vector.broadcast %cst_11 : f32 to vector<40x16x5xf32>
    %42 = tpu.concatenate %41, %40, %41 in 2 : vector<40x16x5xf32>, vector<40x16x16xf32>, vector<40x16x5xf32> -> vector<40x16x26xf32>
    %43 = vector.extract_strided_slice %42 {offsets = [0, 0, 5], sizes = [40, 16, 16], strides = [1, 1, 1]} : vector<40x16x26xf32> to vector<40x16x16xf32>
    %cst_12 = arith.constant 0.266011745 : f32
    %44 = vector.broadcast %cst_12 : f32 to vector<40x16x16xf32>
    %45 = arith.mulf %44, %43 : vector<40x16x16xf32>
    %46 = vector.extract_strided_slice %42 {offsets = [0, 0, 0], sizes = [40, 16, 16], strides = [1, 1, 1]} : vector<40x16x26xf32> to vector<40x16x16xf32>
    %47 = vector.extract_strided_slice %42 {offsets = [0, 0, 10], sizes = [40, 16, 16], strides = [1, 1, 1]} : vector<40x16x26xf32> to vector<40x16x16xf32>
    %48 = arith.addf %46, %47 : vector<40x16x16xf32>
    %cst_13 = arith.constant 0.00102838036 : f32
    %49 = vector.broadcast %cst_13 : f32 to vector<40x16x16xf32>
    %50 = arith.mulf %49, %48 : vector<40x16x16xf32>
    %51 = arith.addf %45, %50 : vector<40x16x16xf32>
    %52 = vector.extract_strided_slice %42 {offsets = [0, 0, 1], sizes = [40, 16, 16], strides = [1, 1, 1]} : vector<40x16x26xf32> to vector<40x16x16xf32>
    %53 = vector.extract_strided_slice %42 {offsets = [0, 0, 9], sizes = [40, 16, 16], strides = [1, 1, 1]} : vector<40x16x26xf32> to vector<40x16x16xf32>
    %54 = arith.addf %52, %53 : vector<40x16x16xf32>
    %cst_14 = arith.constant 0.00759875868 : f32
    %55 = vector.broadcast %cst_14 : f32 to vector<40x16x16xf32>
    %56 = arith.mulf %55, %54 : vector<40x16x16xf32>
    %57 = arith.addf %51, %56 : vector<40x16x16xf32>
    %58 = vector.extract_strided_slice %42 {offsets = [0, 0, 2], sizes = [40, 16, 16], strides = [1, 1, 1]} : vector<40x16x26xf32> to vector<40x16x16xf32>
    %59 = vector.extract_strided_slice %42 {offsets = [0, 0, 8], sizes = [40, 16, 16], strides = [1, 1, 1]} : vector<40x16x26xf32> to vector<40x16x16xf32>
    %60 = arith.addf %58, %59 : vector<40x16x16xf32>
    %cst_15 = arith.constant 0.0360007733 : f32
    %61 = vector.broadcast %cst_15 : f32 to vector<40x16x16xf32>
    %62 = arith.mulf %61, %60 : vector<40x16x16xf32>
    %63 = arith.addf %57, %62 : vector<40x16x16xf32>
    %64 = vector.extract_strided_slice %42 {offsets = [0, 0, 3], sizes = [40, 16, 16], strides = [1, 1, 1]} : vector<40x16x26xf32> to vector<40x16x16xf32>
    %65 = vector.extract_strided_slice %42 {offsets = [0, 0, 7], sizes = [40, 16, 16], strides = [1, 1, 1]} : vector<40x16x26xf32> to vector<40x16x16xf32>
    %66 = arith.addf %64, %65 : vector<40x16x16xf32>
    %cst_16 = arith.constant 0.109360702 : f32
    %67 = vector.broadcast %cst_16 : f32 to vector<40x16x16xf32>
    %68 = arith.mulf %67, %66 : vector<40x16x16xf32>
    %69 = arith.addf %63, %68 : vector<40x16x16xf32>
    %70 = vector.extract_strided_slice %42 {offsets = [0, 0, 4], sizes = [40, 16, 16], strides = [1, 1, 1]} : vector<40x16x26xf32> to vector<40x16x16xf32>
    %71 = vector.extract_strided_slice %42 {offsets = [0, 0, 6], sizes = [40, 16, 16], strides = [1, 1, 1]} : vector<40x16x26xf32> to vector<40x16x16xf32>
    %72 = arith.addf %70, %71 : vector<40x16x16xf32>
    %cst_17 = arith.constant 0.213005543 : f32
    %73 = vector.broadcast %cst_17 : f32 to vector<40x16x16xf32>
    %74 = arith.mulf %73, %72 : vector<40x16x16xf32>
    %75 = arith.addf %69, %74 : vector<40x16x16xf32>
    %76 = vector.extract_strided_slice %75 {offsets = [0, 0, 0], sizes = [8, 16, 16], strides = [1, 1, 1]} : vector<40x16x16xf32> to vector<8x16x16xf32>
    %77 = vector.extract_strided_slice %75 {offsets = [8, 0, 0], sizes = [8, 16, 16], strides = [1, 1, 1]} : vector<40x16x16xf32> to vector<8x16x16xf32>
    %78 = vector.extract_strided_slice %75 {offsets = [16, 0, 0], sizes = [8, 16, 16], strides = [1, 1, 1]} : vector<40x16x16xf32> to vector<8x16x16xf32>
    %79 = vector.extract_strided_slice %75 {offsets = [24, 0, 0], sizes = [8, 16, 16], strides = [1, 1, 1]} : vector<40x16x16xf32> to vector<8x16x16xf32>
    %80 = vector.extract_strided_slice %75 {offsets = [32, 0, 0], sizes = [8, 16, 16], strides = [1, 1, 1]} : vector<40x16x16xf32> to vector<8x16x16xf32>
    %81 = arith.mulf %76, %76 : vector<8x16x16xf32>
    %82 = arith.mulf %77, %77 : vector<8x16x16xf32>
    %83 = arith.mulf %76, %77 : vector<8x16x16xf32>
    %84 = arith.subf %78, %81 : vector<8x16x16xf32>
    %85 = arith.subf %79, %82 : vector<8x16x16xf32>
    %86 = arith.subf %80, %83 : vector<8x16x16xf32>
    %cst_18 = arith.constant 2.000000e+00 : f32
    %87 = vector.broadcast %cst_18 : f32 to vector<8x16x16xf32>
    %88 = arith.mulf %87, %83 : vector<8x16x16xf32>
    %cst_19 = arith.constant 9.99999974E-5 : f32
    %89 = vector.broadcast %cst_19 : f32 to vector<8x16x16xf32>
    %90 = arith.addf %88, %89 : vector<8x16x16xf32>
    %cst_20 = arith.constant 2.000000e+00 : f32
    %91 = vector.broadcast %cst_20 : f32 to vector<8x16x16xf32>
    %92 = arith.mulf %91, %86 : vector<8x16x16xf32>
    %cst_21 = arith.constant 8.99999984E-4 : f32
    %93 = vector.broadcast %cst_21 : f32 to vector<8x16x16xf32>
    %94 = arith.addf %92, %93 : vector<8x16x16xf32>
    %95 = arith.mulf %90, %94 : vector<8x16x16xf32>
    %96 = arith.addf %81, %82 : vector<8x16x16xf32>
    %cst_22 = arith.constant 9.99999974E-5 : f32
    %97 = vector.broadcast %cst_22 : f32 to vector<8x16x16xf32>
    %98 = arith.addf %96, %97 : vector<8x16x16xf32>
    %99 = arith.addf %84, %85 : vector<8x16x16xf32>
    %cst_23 = arith.constant 8.99999984E-4 : f32
    %100 = vector.broadcast %cst_23 : f32 to vector<8x16x16xf32>
    %101 = arith.addf %99, %100 : vector<8x16x16xf32>
    %102 = arith.mulf %98, %101 : vector<8x16x16xf32>
    %103 = arith.divf %95, %102 : vector<8x16x16xf32>
    %c8_i32 = arith.constant 8 : i32
    %104 = arith.muli %arg0, %c8_i32 : i32
    %105 = tpu.iota {dimensions = array<i32: 0>} : vector<8x1x1xi32>
    %106 = vector.broadcast %104 : i32 to vector<8x1x1xi32>
    %107 = arith.addi %106, %105 : vector<8x1x1xi32>
    %c8_i32_24 = arith.constant 8 : i32
    %108 = vector.broadcast %c8_i32_24 : i32 to vector<8x1x1xi32>
    %109 = arith.cmpi slt, %107, %108 : vector<8x1x1xi32>
    %cst_25 = arith.constant 0.000000e+00 : f32
    %110 = vector.shape_cast %109 : vector<8x1x1xi1> to vector<8x1x1xi1>
    %111 = vector.broadcast %110 : vector<8x1x1xi1> to vector<8x16x16xi1>
    %112 = vector.broadcast %cst_25 : f32 to vector<8x16x16xf32>
    %113 = arith.select %111, %103, %112 : vector<8x16x16xi1>, vector<8x16x16xf32>
    %114 = vector.shape_cast %113 : vector<8x16x16xf32> to vector<1x8x16x16xf32>
    %cst_26 = arith.constant dense<0.000000e+00> : vector<1xf32>
    %115 = vector.multi_reduction <add>, %114, %cst_26 [1, 2, 3] : vector<1x8x16x16xf32> to vector<1xf32>
    %116 = vector.shape_cast %115 : vector<1xf32> to vector<1x1x1x1xf32>
    %117 = vector.extract %116[0, 0, 0, 0] : f32 from vector<1x1x1x1xf32>
    %c0_27 = arith.constant 0 : index
    %c0_28 = arith.constant 0 : index
    %118 = memref.load %arg3[%c0_27, %c0_28] : memref<1x1xf32, #tpu.memory_space<smem>>
    memref.store %117, %arg3[%c0_27, %c0_28] : memref<1x1xf32, #tpu.memory_space<smem>>
    return
  }
  func.func @transform_0(%arg0: i32) -> (i32, i32, i32) {
    %c0_i32 = arith.constant 0 : i32
    %c0_i32_0 = arith.constant 0 : i32
    %c0_i32_1 = arith.constant 0 : i32
    return %arg0, %c0_i32, %c0_i32_0 : i32, i32, i32
  }
  func.func @transform_1(%arg0: i32) -> (i32, i32, i32) {
    %c0_i32 = arith.constant 0 : i32
    %c0_i32_0 = arith.constant 0 : i32
    %c0_i32_1 = arith.constant 0 : i32
    return %arg0, %c0_i32, %c0_i32_0 : i32, i32, i32
  }
  func.func @transform_2(%arg0: i32) -> (i32, i32) {
    %c0_i32 = arith.constant 0 : i32
    %c0_i32_0 = arith.constant 0 : i32
    return %arg0, %c0_i32 : i32, i32
  }
}

</mosaic_0001>

<llo_original>
// kernel: tpu_custom_call.1
$region0: #{tpu_custom_call.1}
  #allocation0 [shape = 'u32[]', space=smem, size = 0x4, offset = 0x4, fixed_abs, tag = 'smem constant byte address 0x4 - core index']
  #allocation1 [shape = 'u32[144,128]{1,0:T(1,128)}', space=vmem, size = 0x12000, scoped, tag = 'internal scratch']
  %s0 = inlined_call_operand.hbm [shape: f32[8,16,16], index: 0, kind: input, shape index: {}]
  %s1 = inlined_call_operand.hbm [shape: f32[8,16,16], index: 1, kind: input, shape index: {}]
  %s2 = inlined_call_operand.hbm [shape: f32[1,1], index: 2, kind: output, shape index: {}]
  %s3 = sld [smem:[#allocation0]]
  $region26: #{tpu_custom_call.1} parent=0
    _
  %s5 = ssub.s32 1, %s3
  %s6 = scalar_select 0, %s5, %s3
  $region1: #{tpu_custom_call.1} parent=0
    #allocation2 [shape = 'u8[65536]{0}', space=vmem, size = 0x10000, scoped, tag = 'input window, operand 0, single buffered']
    #allocation3 [shape = 's32[1]{0}', space=sflag, size = 0x4, scoped, tag = 'scoped memory for tpu_custom_call.1']
    #allocation4 [shape = 's32[1]{0}', space=sflag, size = 0x4, scoped, tag = 'scoped memory for tpu_custom_call.1']
    #allocation5 [shape = 'u8[65536]{0}', space=vmem, size = 0x10000, scoped, tag = 'input window, operand 1, single buffered']
    #allocation6 [shape = 's32[1]{0}', space=sflag, size = 0x4, scoped, tag = 'scoped memory for tpu_custom_call.1']
    #allocation7 [shape = 'u8[512]{0}', space=smem, size = 0x200, scoped, tag = 'output window, operand 0, single buffered']
    %7 = vsyncpa [#allocation3], 0
    %8 = vsyncpa [#allocation6], 0
    %9 = vsyncpa [#allocation4], 0
    // Predicated region
    $region2: #{tpu_custom_call.1} parent=1 // pred_check
      _
    $region3: #{tpu_custom_call.1} parent=1 // pred_check_branch
      %11 = sbr.rel (0) target = $region5
    $region4: #{tpu_custom_call.1} parent=1 // pred_region
      %s13 = ssub.s32 2048, 2048
      %14 = vsyncadd [#allocation3], %s13
      %s15 = sshll.u32 [#allocation2], 4
      %s16 = int_to_ptr.vmem [resolvable:$true] %s15
      %21 = dma.hbm_to_vmem [thread:$0]  %s0, 2048, %s16, [#allocation3], 128, 128, 8
    $region5: #{tpu_custom_call.1} parent=1 // pred_fallthru
      _
    // Predicated region
    $region6: #{tpu_custom_call.1} parent=1 // pred_check
      _
    $region7: #{tpu_custom_call.1} parent=1 // pred_check_branch
      %23 = sbr.rel (0) target = $region9
    $region8: #{tpu_custom_call.1} parent=1 // pred_region
      %s25 = ssub.s32 2048, 2048
      %26 = vsyncadd [#allocation6], %s25
      %s27 = sshll.u32 [#allocation5], 4
      %s28 = int_to_ptr.vmem [resolvable:$true] %s27
      %33 = dma.hbm_to_vmem [thread:$0]  %s1, 2048, %s28, [#allocation6], 128, 128, 8
    $region9: #{tpu_custom_call.1} parent=1 // pred_fallthru
      _
    // Predicated region
    $region10: #{tpu_custom_call.1} parent=1 // pred_check
      _
    $region11: #{tpu_custom_call.1} parent=1 // pred_check_branch
      %35 = sbr.rel (0) target = $region13
    $region12: #{tpu_custom_call.1} parent=1 // pred_region
      %36 = dma.done [#allocation3], 2048
    $region13: #{tpu_custom_call.1} parent=1 // pred_fallthru
      _
    // Predicated region
    $region14: #{tpu_custom_call.1} parent=1 // pred_check
      _
    $region15: #{tpu_custom_call.1} parent=1 // pred_check_branch
      %38 = sbr.rel (0) target = $region17
    $region16: #{tpu_custom_call.1} parent=1 // pred_region
      %39 = dma.done [#allocation6], 2048
    $region17: #{tpu_custom_call.1} parent=1 // pred_fallthru
      _
    %v40 = vld [vmem:[#allocation2] sm:$0xff]
    %v41 = vld [vmem:[#allocation2 + $0x8] sm:$0xff]
    %v42 = vld [vmem:[#allocation2 + $0x10] sm:$0xff]
    %v43 = vld [vmem:[#allocation2 + $0x18] sm:$0xff]
    %v44 = vld [vmem:[#allocation2 + $0x20] sm:$0xff]
    %v45 = vld [vmem:[#allocation2 + $0x28] sm:$0xff]
    %v46 = vld [vmem:[#allocation2 + $0x30] sm:$0xff]
    %v47 = vld [vmem:[#allocation2 + $0x38] sm:$0xff]
    %v48 = vld [vmem:[#allocation2 + $0x40] sm:$0xff]
    %v49 = vld [vmem:[#allocation2 + $0x48] sm:$0xff]
    %v50 = vld [vmem:[#allocation2 + $0x50] sm:$0xff]
    %v51 = vld [vmem:[#allocation2 + $0x58] sm:$0xff]
    %v52 = vld [vmem:[#allocation2 + $0x60] sm:$0xff]
    %v53 = vld [vmem:[#allocation2 + $0x68] sm:$0xff]
    %v54 = vld [vmem:[#allocation2 + $0x70] sm:$0xff]
    %v55 = vld [vmem:[#allocation2 + $0x78] sm:$0xff]
    %v56 = vld [vmem:[#allocation5] sm:$0xff]
    %v57 = vld [vmem:[#allocation5 + $0x8] sm:$0xff]
    %v58 = vld [vmem:[#allocation5 + $0x10] sm:$0xff]
    %v59 = vld [vmem:[#allocation5 + $0x18] sm:$0xff]
    %v60 = vld [vmem:[#allocation5 + $0x20] sm:$0xff]
    %v61 = vld [vmem:[#allocation5 + $0x28] sm:$0xff]
    %v62 = vld [vmem:[#allocation5 + $0x30] sm:$0xff]
    %v63 = vld [vmem:[#allocation5 + $0x38] sm:$0xff]
    %v64 = vld [vmem:[#allocation5 + $0x40] sm:$0xff]
    %v65 = vld [vmem:[#allocation5 + $0x48] sm:$0xff]
    %v66 = vld [vmem:[#allocation5 + $0x50] sm:$0xff]
    %v67 = vld [vmem:[#allocation5 + $0x58] sm:$0xff]
    %v68 = vld [vmem:[#allocation5 + $0x60] sm:$0xff]
    %v69 = vld [vmem:[#allocation5 + $0x68] sm:$0xff]
    %v70 = vld [vmem:[#allocation5 + $0x70] sm:$0xff]
    %v71 = vld [vmem:[#allocation5 + $0x78] sm:$0xff]
    %v72 = vmul.f32 %v40, %v40
    %v73 = vmul.f32 %v41, %v41
    %v74 = vmul.f32 %v42, %v42
    %v75 = vmul.f32 %v43, %v43
    %v76 = vmul.f32 %v44, %v44
    %v77 = vmul.f32 %v45, %v45
    %v78 = vmul.f32 %v46, %v46
    %v79 = vmul.f32 %v47, %v47
    %v80 = vmul.f32 %v48, %v48
    %v81 = vmul.f32 %v49, %v49
    %v82 = vmul.f32 %v50, %v50
    %v83 = vmul.f32 %v51, %v51
    %v84 = vmul.f32 %v52, %v52
    %v85 = vmul.f32 %v53, %v53
    %v86 = vmul.f32 %v54, %v54
    %v87 = vmul.f32 %v55, %v55
    %v88 = vmul.f32 %v56, %v56
    %v89 = vmul.f32 %v57, %v57
    %v90 = vmul.f32 %v58, %v58
    %v91 = vmul.f32 %v59, %v59
    %v92 = vmul.f32 %v60, %v60
    %v93 = vmul.f32 %v61, %v61
    %v94 = vmul.f32 %v62, %v62
    %v95 = vmul.f32 %v63, %v63
    %v96 = vmul.f32 %v64, %v64
    %v97 = vmul.f32 %v65, %v65
    %v98 = vmul.f32 %v66, %v66
    %v99 = vmul.f32 %v67, %v67
    %v100 = vmul.f32 %v68, %v68
    %v101 = vmul.f32 %v69, %v69
    %v102 = vmul.f32 %v70, %v70
    %v103 = vmul.f32 %v71, %v71
    %v104 = vmul.f32 %v40, %v56
    %v105 = vmul.f32 %v41, %v57
    %v106 = vmul.f32 %v42, %v58
    %v107 = vmul.f32 %v43, %v59
    %v108 = vmul.f32 %v44, %v60
    %v109 = vmul.f32 %v45, %v61
    %v110 = vmul.f32 %v46, %v62
    %v111 = vmul.f32 %v47, %v63
    %v112 = vmul.f32 %v48, %v64
    %v113 = vmul.f32 %v49, %v65
    %v114 = vmul.f32 %v50, %v66
    %v115 = vmul.f32 %v51, %v67
    %v116 = vmul.f32 %v52, %v68
    %v117 = vmul.f32 %v53, %v69
    %v118 = vmul.f32 %v54, %v70
    %v119 = vmul.f32 %v55, %v71
    %vm200 = vcmask 1044480
    %v201 = vrot.slane %v40, 3
    %v202 = vrot.slane %v41, 3
    %v203 = vsel %vm200, %v201, %v202
    %v204 = vrot.slane %v42, 3
    %v205 = vrot.slane %v43, 3
    %v206 = vsel %vm200, %v204, %v205
    %v207 = vrot.slane %v44, 3
    %v208 = vrot.slane %v45, 3
    %v209 = vsel %vm200, %v207, %v208
    %v210 = vrot.slane %v46, 3
    %v211 = vrot.slane %v47, 3
    %v212 = vsel %vm200, %v210, %v211
    %v213 = vrot.slane %v48, 3
    %v214 = vrot.slane %v49, 3
    %v215 = vsel %vm200, %v213, %v214
    %v216 = vrot.slane %v50, 3
    %v217 = vrot.slane %v51, 3
    %v218 = vsel %vm200, %v216, %v217
    %v219 = vrot.slane %v52, 3
    %v220 = vrot.slane %v53, 3
    %v221 = vsel %vm200, %v219, %v220
    %v222 = vrot.slane %v54, 3
    %v223 = vrot.slane %v55, 3
    %v224 = vsel %vm200, %v222, %v223
    %v225 = vrot.slane %v56, 3
    %v226 = vrot.slane %v57, 3
    %v227 = vsel %vm200, %v225, %v226
    %v228 = vrot.slane %v58, 3
    %v229 = vrot.slane %v59, 3
    %v230 = vsel %vm200, %v228, %v229
    %v231 = vrot.slane %v60, 3
    %v232 = vrot.slane %v61, 3
    %v233 = vsel %vm200, %v231, %v232
    %v234 = vrot.slane %v62, 3
    %v235 = vrot.slane %v63, 3
    %v236 = vsel %vm200, %v234, %v235
    %v237 = vrot.slane %v64, 3
    %v238 = vrot.slane %v65, 3
    %v239 = vsel %vm200, %v237, %v238
    %v240 = vrot.slane %v66, 3
    %v241 = vrot.slane %v67, 3
    %v242 = vsel %vm200, %v240, %v241
    %v243 = vrot.slane %v68, 3
    %v244 = vrot.slane %v69, 3
    %v245 = vsel %vm200, %v243, %v244
    %v246 = vrot.slane %v70, 3
    %v247 = vrot.slane %v71, 3
    %v248 = vsel %vm200, %v246, %v247
    %v249 = vrot.slane %v72, 3
    %v250 = vrot.slane %v73, 3
    %v251 = vsel %vm200, %v249, %v250
    %v252 = vrot.slane %v74, 3
    %v253 = vrot.slane %v75, 3
    %v254 = vsel %vm200, %v252, %v253
    %v255 = vrot.slane %v76, 3
    %v256 = vrot.slane %v77, 3
    %v257 = vsel %vm200, %v255, %v256
    %v258 = vrot.slane %v78, 3
    %v259 = vrot.slane %v79, 3
    %v260 = vsel %vm200, %v258, %v259
    %v261 = vrot.slane %v80, 3
    %v262 = vrot.slane %v81, 3
    %v263 = vsel %vm200, %v261, %v262
    %v264 = vrot.slane %v82, 3
    %v265 = vrot.slane %v83, 3
    %v266 = vsel %vm200, %v264, %v265
    %v267 = vrot.slane %v84, 3
    %v268 = vrot.slane %v85, 3
    %v269 = vsel %vm200, %v267, %v268
    %v270 = vrot.slane %v86, 3
    %v271 = vrot.slane %v87, 3
    %v272 = vsel %vm200, %v270, %v271
    %v273 = vrot.slane %v88, 3
    %v274 = vrot.slane %v89, 3
    %v275 = vsel %vm200, %v273, %v274
    %v276 = vrot.slane %v90, 3
    %v277 = vrot.slane %v91, 3
    %v278 = vsel %vm200, %v276, %v277
    %v279 = vrot.slane %v92, 3
    %v280 = vrot.slane %v93, 3
    %v281 = vsel %vm200, %v279, %v280
    %v282 = vrot.slane %v94, 3
    %v283 = vrot.slane %v95, 3
    %v284 = vsel %vm200, %v282, %v283
    %v285 = vrot.slane %v96, 3
    %v286 = vrot.slane %v97, 3
    %v287 = vsel %vm200, %v285, %v286
    %v288 = vrot.slane %v98, 3
    %v289 = vrot.slane %v99, 3
    %v290 = vsel %vm200, %v288, %v289
    %v291 = vrot.slane %v100, 3
    %v292 = vrot.slane %v101, 3
    %v293 = vsel %vm200, %v291, %v292
    %v294 = vrot.slane %v102, 3
    %v295 = vrot.slane %v103, 3
    %v296 = vsel %vm200, %v294, %v295
    %v297 = vrot.slane %v104, 3
    %v298 = vrot.slane %v105, 3
    %v299 = vsel %vm200, %v297, %v298
    %v300 = vrot.slane %v106, 3
    %v301 = vrot.slane %v107, 3
    %v302 = vsel %vm200, %v300, %v301
    %v303 = vrot.slane %v108, 3
    %v304 = vrot.slane %v109, 3
    %v305 = vsel %vm200, %v303, %v304
    %v306 = vrot.slane %v110, 3
    %v307 = vrot.slane %v111, 3
    %v308 = vsel %vm200, %v306, %v307
    %v309 = vrot.slane %v112, 3
    %v310 = vrot.slane %v113, 3
    %v311 = vsel %vm200, %v309, %v310
    %v312 = vrot.slane %v114, 3
    %v313 = vrot.slane %v115, 3
    %v314 = vsel %vm200, %v312, %v313
    %v315 = vrot.slane %v116, 3
    %v316 = vrot.slane %v117, 3
    %v317 = vsel %vm200, %v315, %v316
    %v318 = vrot.slane %v118, 3
    %v319 = vrot.slane %v119, 3
    %v320 = vsel %vm200, %v318, %v319
    %v441 = vsel %vm200, 0.0, %v201
    %v442 = vsel %vm200, 0.0, %v204
    %v443 = vsel %vm200, 0.0, %v207
    %v444 = vsel %vm200, 0.0, %v210
    %v445 = vsel %vm200, 0.0, %v213
    %v446 = vsel %vm200, 0.0, %v216
    %v447 = vsel %vm200, 0.0, %v219
    %v448 = vsel %vm200, 0.0, %v222
    %v449 = vsel %vm200, 0.0, %v225
    %v450 = vsel %vm200, 0.0, %v228
    %v451 = vsel %vm200, 0.0, %v231
    %v452 = vsel %vm200, 0.0, %v234
    %v453 = vsel %vm200, 0.0, %v237
    %v454 = vsel %vm200, 0.0, %v240
    %v455 = vsel %vm200, 0.0, %v243
    %v456 = vsel %vm200, 0.0, %v246
    %v457 = vsel %vm200, 0.0, %v249
    %v458 = vsel %vm200, 0.0, %v252
    %v459 = vsel %vm200, 0.0, %v255
    %v460 = vsel %vm200, 0.0, %v258
    %v461 = vsel %vm200, 0.0, %v261
    %v462 = vsel %vm200, 0.0, %v264
    %v463 = vsel %vm200, 0.0, %v267
    %v464 = vsel %vm200, 0.0, %v270
    %v465 = vsel %vm200, 0.0, %v273
    %v466 = vsel %vm200, 0.0, %v276
    %v467 = vsel %vm200, 0.0, %v279
    %v468 = vsel %vm200, 0.0, %v282
    %v469 = vsel %vm200, 0.0, %v285
    %v470 = vsel %vm200, 0.0, %v288
    %v471 = vsel %vm200, 0.0, %v291
    %v472 = vsel %vm200, 0.0, %v294
    %v473 = vsel %vm200, 0.0, %v297
    %v474 = vsel %vm200, 0.0, %v300
    %v475 = vsel %vm200, 0.0, %v303
    %v476 = vsel %vm200, 0.0, %v306
    %v477 = vsel %vm200, 0.0, %v309
    %v478 = vsel %vm200, 0.0, %v312
    %v479 = vsel %vm200, 0.0, %v315
    %v480 = vsel %vm200, 0.0, %v318
    %v481 = vsel %vm200, %v202, 0.0
    %v482 = vsel %vm200, %v205, 0.0
    %v483 = vsel %vm200, %v208, 0.0
    %v484 = vsel %vm200, %v211, 0.0
    %v485 = vsel %vm200, %v214, 0.0
    %v486 = vsel %vm200, %v217, 0.0
    %v487 = vsel %vm200, %v220, 0.0
    %v488 = vsel %vm200, %v223, 0.0
    %v489 = vsel %vm200, %v226, 0.0
    %v490 = vsel %vm200, %v229, 0.0
    %v491 = vsel %vm200, %v232, 0.0
    %v492 = vsel %vm200, %v235, 0.0
    %v493 = vsel %vm200, %v238, 0.0
    %v494 = vsel %vm200, %v241, 0.0
    %v495 = vsel %vm200, %v244, 0.0
    %v496 = vsel %vm200, %v247, 0.0
    %v497 = vsel %vm200, %v250, 0.0
    %v498 = vsel %vm200, %v253, 0.0
    %v499 = vsel %vm200, %v256, 0.0
    %v500 = vsel %vm200, %v259, 0.0
    %v501 = vsel %vm200, %v262, 0.0
    %v502 = vsel %vm200, %v265, 0.0
    %v503 = vsel %vm200, %v268, 0.0
    %v504 = vsel %vm200, %v271, 0.0
    %v505 = vsel %vm200, %v274, 0.0
    %v506 = vsel %vm200, %v277, 0.0
    %v507 = vsel %vm200, %v280, 0.0
    %v508 = vsel %vm200, %v283, 0.0
    %v509 = vsel %vm200, %v286, 0.0
    %v510 = vsel %vm200, %v289, 0.0
    %v511 = vsel %vm200, %v292, 0.0
    %v512 = vsel %vm200, %v295, 0.0
    %v513 = vsel %vm200, %v298, 0.0
    %v514 = vsel %vm200, %v301, 0.0
    %v515 = vsel %vm200, %v304, 0.0
    %v516 = vsel %vm200, %v307, 0.0
    %v517 = vsel %vm200, %v310, 0.0
    %v518 = vsel %vm200, %v313, 0.0
    %v519 = vsel %vm200, %v316, 0.0
    %v520 = vsel %vm200, %v319, 0.0
    %v521 = vmul.f32 %v441, 0.26601174
    %v522 = vmul.f32 %v203, 0.26601174
    %v523 = vmul.f32 %v481, 0.26601174
    %v524 = vmul.f32 %v442, 0.26601174
    %v525 = vmul.f32 %v206, 0.26601174
    %v526 = vmul.f32 %v482, 0.26601174
    %v527 = vmul.f32 %v443, 0.26601174
    %v528 = vmul.f32 %v209, 0.26601174
    %v529 = vmul.f32 %v483, 0.26601174
    %v530 = vmul.f32 %v444, 0.26601174
    %v531 = vmul.f32 %v212, 0.26601174
    %v532 = vmul.f32 %v484, 0.26601174
    %v533 = vmul.f32 %v445, 0.26601174
    %v534 = vmul.f32 %v215, 0.26601174
    %v535 = vmul.f32 %v485, 0.26601174
    %v536 = vmul.f32 %v446, 0.26601174
    %v537 = vmul.f32 %v218, 0.26601174
    %v538 = vmul.f32 %v486, 0.26601174
    %v539 = vmul.f32 %v447, 0.26601174
    %v540 = vmul.f32 %v221, 0.26601174
    %v541 = vmul.f32 %v487, 0.26601174
    %v542 = vmul.f32 %v448, 0.26601174
    %v543 = vmul.f32 %v224, 0.26601174
    %v544 = vmul.f32 %v488, 0.26601174
    %v545 = vmul.f32 %v449, 0.26601174
    %v546 = vmul.f32 %v227, 0.26601174
    %v547 = vmul.f32 %v489, 0.26601174
    %v548 = vmul.f32 %v450, 0.26601174
    %v549 = vmul.f32 %v230, 0.26601174
    %v550 = vmul.f32 %v490, 0.26601174
    %v551 = vmul.f32 %v451, 0.26601174
    %v552 = vmul.f32 %v233, 0.26601174
    %v553 = vmul.f32 %v491, 0.26601174
    %v554 = vmul.f32 %v452, 0.26601174
    %v555 = vmul.f32 %v236, 0.26601174
    %v556 = vmul.f32 %v492, 0.26601174
    %v557 = vmul.f32 %v453, 0.26601174
    %v558 = vmul.f32 %v239, 0.26601174
    %v559 = vmul.f32 %v493, 0.26601174
    %v560 = vmul.f32 %v454, 0.26601174
    %v561 = vmul.f32 %v242, 0.26601174
    %v562 = vmul.f32 %v494, 0.26601174
    %v563 = vmul.f32 %v455, 0.26601174
    %v564 = vmul.f32 %v245, 0.26601174
    %v565 = vmul.f32 %v495, 0.26601174
    %v566 = vmul.f32 %v456, 0.26601174
    %v567 = vmul.f32 %v248, 0.26601174
    %v568 = vmul.f32 %v496, 0.26601174
    %v569 = vmul.f32 %v457, 0.26601174
    %v570 = vmul.f32 %v251, 0.26601174
    %v571 = vmul.f32 %v497, 0.26601174
    %v572 = vmul.f32 %v458, 0.26601174
    %v573 = vmul.f32 %v254, 0.26601174
    %v574 = vmul.f32 %v498, 0.26601174
    %v575 = vmul.f32 %v459, 0.26601174
    %v576 = vmul.f32 %v257, 0.26601174
    %v577 = vmul.f32 %v499, 0.26601174
    %v578 = vmul.f32 %v460, 0.26601174
    %v579 = vmul.f32 %v260, 0.26601174
    %v580 = vmul.f32 %v500, 0.26601174
    %v581 = vmul.f32 %v461, 0.26601174
    %v582 = vmul.f32 %v263, 0.26601174
    %v583 = vmul.f32 %v501, 0.26601174
    %v584 = vmul.f32 %v462, 0.26601174
    %v585 = vmul.f32 %v266, 0.26601174
    %v586 = vmul.f32 %v502, 0.26601174
    %v587 = vmul.f32 %v463, 0.26601174
    %v588 = vmul.f32 %v269, 0.26601174
    %v589 = vmul.f32 %v503, 0.26601174
    %v590 = vmul.f32 %v464, 0.26601174
    %v591 = vmul.f32 %v272, 0.26601174
    %v592 = vmul.f32 %v504, 0.26601174
    %v593 = vmul.f32 %v465, 0.26601174
    %v594 = vmul.f32 %v275, 0.26601174
    %v595 = vmul.f32 %v505, 0.26601174
    %v596 = vmul.f32 %v466, 0.26601174
    %v597 = vmul.f32 %v278, 0.26601174
    %v598 = vmul.f32 %v506, 0.26601174
    %v599 = vmul.f32 %v467, 0.26601174
    %v600 = vmul.f32 %v281, 0.26601174
    %v601 = vmul.f32 %v507, 0.26601174
    %v602 = vmul.f32 %v468, 0.26601174
    %v603 = vmul.f32 %v284, 0.26601174
    %v604 = vmul.f32 %v508, 0.26601174
    %v605 = vmul.f32 %v469, 0.26601174
    %v606 = vmul.f32 %v287, 0.26601174
    %v607 = vmul.f32 %v509, 0.26601174
    %v608 = vmul.f32 %v470, 0.26601174
    %v609 = vmul.f32 %v290, 0.26601174
    %v610 = vmul.f32 %v510, 0.26601174
    %v611 = vmul.f32 %v471, 0.26601174
    %v612 = vmul.f32 %v293, 0.26601174
    %v613 = vmul.f32 %v511, 0.26601174
    %v614 = vmul.f32 %v472, 0.26601174
    %v615 = vmul.f32 %v296, 0.26601174
    %v616 = vmul.f32 %v512, 0.26601174
    %v617 = vmul.f32 %v473, 0.26601174
    %v618 = vmul.f32 %v299, 0.26601174
    %v619 = vmul.f32 %v513, 0.26601174
    %v620 = vmul.f32 %v474, 0.26601174
    %v621 = vmul.f32 %v302, 0.26601174
    %v622 = vmul.f32 %v514, 0.26601174
    %v623 = vmul.f32 %v475, 0.26601174
    %v624 = vmul.f32 %v305, 0.26601174
    %v625 = vmul.f32 %v515, 0.26601174
    %v626 = vmul.f32 %v476, 0.26601174
    %v627 = vmul.f32 %v308, 0.26601174
    %v628 = vmul.f32 %v516, 0.26601174
    %v629 = vmul.f32 %v477, 0.26601174
    %v630 = vmul.f32 %v311, 0.26601174
    %v631 = vmul.f32 %v517, 0.26601174
    %v632 = vmul.f32 %v478, 0.26601174
    %v633 = vmul.f32 %v314, 0.26601174
    %v634 = vmul.f32 %v518, 0.26601174
    %v635 = vmul.f32 %v479, 0.26601174
    %v636 = vmul.f32 %v317, 0.26601174
    %v637 = vmul.f32 %v519, 0.26601174
    %v638 = vmul.f32 %v480, 0.26601174
    %v639 = vmul.f32 %v320, 0.26601174
    %v640 = vmul.f32 %v520, 0.26601174
    %vm682 = vcmask 1045504
    %v683 = vrot.slane %v203, 2
    %v684 = vrot.slane %v481, 2
    %v685 = vsel %vm682, %v683, %v684
    %v686 = vrot.slane 0.0, 2
    %v687 = vsel %vm682, %v684, %v686
    %v688 = vrot.slane %v206, 2
    %v689 = vrot.slane %v482, 2
    %v690 = vsel %vm682, %v688, %v689
    %v691 = vsel %vm682, %v689, %v686
    %v692 = vrot.slane %v209, 2
    %v693 = vrot.slane %v483, 2
    %v694 = vsel %vm682, %v692, %v693
    %v695 = vsel %vm682, %v693, %v686
    %v696 = vrot.slane %v212, 2
    %v697 = vrot.slane %v484, 2
    %v698 = vsel %vm682, %v696, %v697
    %v699 = vsel %vm682, %v697, %v686
    %v700 = vrot.slane %v215, 2
    %v701 = vrot.slane %v485, 2
    %v702 = vsel %vm682, %v700, %v701
    %v703 = vsel %vm682, %v701, %v686
    %v704 = vrot.slane %v218, 2
    %v705 = vrot.slane %v486, 2
    %v706 = vsel %vm682, %v704, %v705
    %v707 = vsel %vm682, %v705, %v686
    %v708 = vrot.slane %v221, 2
    %v709 = vrot.slane %v487, 2
    %v710 = vsel %vm682, %v708, %v709
    %v711 = vsel %vm682, %v709, %v686
    %v712 = vrot.slane %v224, 2
    %v713 = vrot.slane %v488, 2
    %v714 = vsel %vm682, %v712, %v713
    %v715 = vsel %vm682, %v713, %v686
    %v716 = vrot.slane %v227, 2
    %v717 = vrot.slane %v489, 2
    %v718 = vsel %vm682, %v716, %v717
    %v719 = vsel %vm682, %v717, %v686
    %v720 = vrot.slane %v230, 2
    %v721 = vrot.slane %v490, 2
    %v722 = vsel %vm682, %v720, %v721
    %v723 = vsel %vm682, %v721, %v686
    %v724 = vrot.slane %v233, 2
    %v725 = vrot.slane %v491, 2
    %v726 = vsel %vm682, %v724, %v725
    %v727 = vsel %vm682, %v725, %v686
    %v728 = vrot.slane %v236, 2
    %v729 = vrot.slane %v492, 2
    %v730 = vsel %vm682, %v728, %v729
    %v731 = vsel %vm682, %v729, %v686
    %v732 = vrot.slane %v239, 2
    %v733 = vrot.slane %v493, 2
    %v734 = vsel %vm682, %v732, %v733
    %v735 = vsel %vm682, %v733, %v686
    %v736 = vrot.slane %v242, 2
    %v737 = vrot.slane %v494, 2
    %v738 = vsel %vm682, %v736, %v737
    %v739 = vsel %vm682, %v737, %v686
    %v740 = vrot.slane %v245, 2
    %v741 = vrot.slane %v495, 2
    %v742 = vsel %vm682, %v740, %v741
    %v743 = vsel %vm682, %v741, %v686
    %v744 = vrot.slane %v248, 2
    %v745 = vrot.slane %v496, 2
    %v746 = vsel %vm682, %v744, %v745
    %v747 = vsel %vm682, %v745, %v686
    %v748 = vrot.slane %v251, 2
    %v749 = vrot.slane %v497, 2
    %v750 = vsel %vm682, %v748, %v749
    %v751 = vsel %vm682, %v749, %v686
    %v752 = vrot.slane %v254, 2
    %v753 = vrot.slane %v498, 2
    %v754 = vsel %vm682, %v752, %v753
    %v755 = vsel %vm682, %v753, %v686
    %v756 = vrot.slane %v257, 2
    %v757 = vrot.slane %v499, 2
    %v758 = vsel %vm682, %v756, %v757
    %v759 = vsel %vm682, %v757, %v686
    %v760 = vrot.slane %v260, 2
    %v761 = vrot.slane %v500, 2
    %v762 = vsel %vm682, %v760, %v761
    %v763 = vsel %vm682, %v761, %v686
    %v764 = vrot.slane %v263, 2
    %v765 = vrot.slane %v501, 2
    %v766 = vsel %vm682, %v764, %v765
    %v767 = vsel %vm682, %v765, %v686
    %v768 = vrot.slane %v266, 2
    %v769 = vrot.slane %v502, 2
    %v770 = vsel %vm682, %v768, %v769
    %v771 = vsel %vm682, %v769, %v686
    %v772 = vrot.slane %v269, 2
    %v773 = vrot.slane %v503, 2
    %v774 = vsel %vm682, %v772, %v773
    %v775 = vsel %vm682, %v773, %v686
    %v776 = vrot.slane %v272, 2
    %v777 = vrot.slane %v504, 2
    %v778 = vsel %vm682, %v776, %v777
    %v779 = vsel %vm682, %v777, %v686
    %v780 = vrot.slane %v275, 2
    %v781 = vrot.slane %v505, 2
    %v782 = vsel %vm682, %v780, %v781
    %v783 = vsel %vm682, %v781, %v686
    %v784 = vrot.slane %v278, 2
    %v785 = vrot.slane %v506, 2
    %v786 = vsel %vm682, %v784, %v785
    %v787 = vsel %vm682, %v785, %v686
    %v788 = vrot.slane %v281, 2
    %v789 = vrot.slane %v507, 2
    %v790 = vsel %vm682, %v788, %v789
    %v791 = vsel %vm682, %v789, %v686
    %v792 = vrot.slane %v284, 2
    %v793 = vrot.slane %v508, 2
    %v794 = vsel %vm682, %v792, %v793
    %v795 = vsel %vm682, %v793, %v686
    %v796 = vrot.slane %v287, 2
    %v797 = vrot.slane %v509, 2
    %v798 = vsel %vm682, %v796, %v797
    %v799 = vsel %vm682, %v797, %v686
    %v800 = vrot.slane %v290, 2
    %v801 = vrot.slane %v510, 2
    %v802 = vsel %vm682, %v800, %v801
    %v803 = vsel %vm682, %v801, %v686
    %v804 = vrot.slane %v293, 2
    %v805 = vrot.slane %v511, 2
    %v806 = vsel %vm682, %v804, %v805
    %v807 = vsel %vm682, %v805, %v686
    %v808 = vrot.slane %v296, 2
    %v809 = vrot.slane %v512, 2
    %v810 = vsel %vm682, %v808, %v809
    %v811 = vsel %vm682, %v809, %v686
    %v812 = vrot.slane %v299, 2
    %v813 = vrot.slane %v513, 2
    %v814 = vsel %vm682, %v812, %v813
    %v815 = vsel %vm682, %v813, %v686
    %v816 = vrot.slane %v302, 2
    %v817 = vrot.slane %v514, 2
    %v818 = vsel %vm682, %v816, %v817
    %v819 = vsel %vm682, %v817, %v686
    %v820 = vrot.slane %v305, 2
    %v821 = vrot.slane %v515, 2
    %v822 = vsel %vm682, %v820, %v821
    %v823 = vsel %vm682, %v821, %v686
    %v824 = vrot.slane %v308, 2
    %v825 = vrot.slane %v516, 2
    %v826 = vsel %vm682, %v824, %v825
    %v827 = vsel %vm682, %v825, %v686
    %v828 = vrot.slane %v311, 2
    %v829 = vrot.slane %v517, 2
    %v830 = vsel %vm682, %v828, %v829
    %v831 = vsel %vm682, %v829, %v686
    %v832 = vrot.slane %v314, 2
    %v833 = vrot.slane %v518, 2
    %v834 = vsel %vm682, %v832, %v833
    %v835 = vsel %vm682, %v833, %v686
    %v836 = vrot.slane %v317, 2
    %v837 = vrot.slane %v519, 2
    %v838 = vsel %vm682, %v836, %v837
    %v839 = vsel %vm682, %v837, %v686
    %v840 = vrot.slane %v320, 2
    %v841 = vrot.slane %v520, 2
    %v842 = vsel %vm682, %v840, %v841
    %v843 = vsel %vm682, %v841, %v686
    %v924 = vadd.f32 %v441, %v685
    %v925 = vadd.f32 %v203, %v687
    %v926 = vadd.f32 %v442, %v690
    %v927 = vadd.f32 %v206, %v691
    %v928 = vadd.f32 %v443, %v694
    %v929 = vadd.f32 %v209, %v695
    %v930 = vadd.f32 %v444, %v698
    %v931 = vadd.f32 %v212, %v699
    %v932 = vadd.f32 %v445, %v702
    %v933 = vadd.f32 %v215, %v703
    %v934 = vadd.f32 %v446, %v706
    %v935 = vadd.f32 %v218, %v707
    %v936 = vadd.f32 %v447, %v710
    %v937 = vadd.f32 %v221, %v711
    %v938 = vadd.f32 %v448, %v714
    %v939 = vadd.f32 %v224, %v715
    %v940 = vadd.f32 %v449, %v718
    %v941 = vadd.f32 %v227, %v719
    %v942 = vadd.f32 %v450, %v722
    %v943 = vadd.f32 %v230, %v723
    %v944 = vadd.f32 %v451, %v726
    %v945 = vadd.f32 %v233, %v727
    %v946 = vadd.f32 %v452, %v730
    %v947 = vadd.f32 %v236, %v731
    %v948 = vadd.f32 %v453, %v734
    %v949 = vadd.f32 %v239, %v735
    %v950 = vadd.f32 %v454, %v738
    %v951 = vadd.f32 %v242, %v739
    %v952 = vadd.f32 %v455, %v742
    %v953 = vadd.f32 %v245, %v743
    %v954 = vadd.f32 %v456, %v746
    %v955 = vadd.f32 %v248, %v747
    %v956 = vadd.f32 %v457, %v750
    %v957 = vadd.f32 %v251, %v751
    %v958 = vadd.f32 %v458, %v754
    %v959 = vadd.f32 %v254, %v755
    %v960 = vadd.f32 %v459, %v758
    %v961 = vadd.f32 %v257, %v759
    %v962 = vadd.f32 %v460, %v762
    %v963 = vadd.f32 %v260, %v763
    %v964 = vadd.f32 %v461, %v766
    %v965 = vadd.f32 %v263, %v767
    %v966 = vadd.f32 %v462, %v770
    %v967 = vadd.f32 %v266, %v771
    %v968 = vadd.f32 %v463, %v774
    %v969 = vadd.f32 %v269, %v775
    %v970 = vadd.f32 %v464, %v778
    %v971 = vadd.f32 %v272, %v779
    %v972 = vadd.f32 %v465, %v782
    %v973 = vadd.f32 %v275, %v783
    %v974 = vadd.f32 %v466, %v786
    %v975 = vadd.f32 %v278, %v787
    %v976 = vadd.f32 %v467, %v790
    %v977 = vadd.f32 %v281, %v791
    %v978 = vadd.f32 %v468, %v794
    %v979 = vadd.f32 %v284, %v795
    %v980 = vadd.f32 %v469, %v798
    %v981 = vadd.f32 %v287, %v799
    %v982 = vadd.f32 %v470, %v802
    %v983 = vadd.f32 %v290, %v803
    %v984 = vadd.f32 %v471, %v806
    %v985 = vadd.f32 %v293, %v807
    %v986 = vadd.f32 %v472, %v810
    %v987 = vadd.f32 %v296, %v811
    %v988 = vadd.f32 %v473, %v814
    %v989 = vadd.f32 %v299, %v815
    %v990 = vadd.f32 %v474, %v818
    %v991 = vadd.f32 %v302, %v819
    %v992 = vadd.f32 %v475, %v822
    %v993 = vadd.f32 %v305, %v823
    %v994 = vadd.f32 %v476, %v826
    %v995 = vadd.f32 %v308, %v827
    %v996 = vadd.f32 %v477, %v830
    %v997 = vadd.f32 %v311, %v831
    %v998 = vadd.f32 %v478, %v834
    %v999 = vadd.f32 %v314, %v835
    %v1000 = vadd.f32 %v479, %v838
    %v1001 = vadd.f32 %v317, %v839
    %v1002 = vadd.f32 %v480, %v842
    %v1003 = vadd.f32 %v320, %v843
    %v1004 = vmul.f32 %v924, 0.0010283804
    %v1005 = vmul.f32 %v925, 0.0010283804
    %v1006 = vmul.f32 %v926, 0.0010283804
    %v1007 = vmul.f32 %v927, 0.0010283804
    %v1008 = vmul.f32 %v928, 0.0010283804
    %v1009 = vmul.f32 %v929, 0.0010283804
    %v1010 = vmul.f32 %v930, 0.0010283804
    %v1011 = vmul.f32 %v931, 0.0010283804
    %v1012 = vmul.f32 %v932, 0.0010283804
    %v1013 = vmul.f32 %v933, 0.0010283804
    %v1014 = vmul.f32 %v934, 0.0010283804
    %v1015 = vmul.f32 %v935, 0.0010283804
    %v1016 = vmul.f32 %v936, 0.0010283804
    %v1017 = vmul.f32 %v937, 0.0010283804
    %v1018 = vmul.f32 %v938, 0.0010283804
    %v1019 = vmul.f32 %v939, 0.0010283804
    %v1020 = vmul.f32 %v940, 0.0010283804
    %v1021 = vmul.f32 %v941, 0.0010283804
    %v1022 = vmul.f32 %v942, 0.0010283804
    %v1023 = vmul.f32 %v943, 0.0010283804
    %v1024 = vmul.f32 %v944, 0.0010283804
    %v1025 = vmul.f32 %v945, 0.0010283804
    %v1026 = vmul.f32 %v946, 0.0010283804
    %v1027 = vmul.f32 %v947, 0.0010283804
    %v1028 = vmul.f32 %v948, 0.0010283804
    %v1029 = vmul.f32 %v949, 0.0010283804
    %v1030 = vmul.f32 %v950, 0.0010283804
    %v1031 = vmul.f32 %v951, 0.0010283804
    %v1032 = vmul.f32 %v952, 0.0010283804
    %v1033 = vmul.f32 %v953, 0.0010283804
    %v1034 = vmul.f32 %v954, 0.0010283804
    %v1035 = vmul.f32 %v955, 0.0010283804
    %v1036 = vmul.f32 %v956, 0.0010283804
    %v1037 = vmul.f32 %v957, 0.0010283804
    %v1038 = vmul.f32 %v958, 0.0010283804
    %v1039 = vmul.f32 %v959, 0.0010283804
    %v1040 = vmul.f32 %v960, 0.0010283804
    %v1041 = vmul.f32 %v961, 0.0010283804
    %v1042 = vmul.f32 %v962, 0.0010283804
    %v1043 = vmul.f32 %v963, 0.0010283804
    %v1044 = vmul.f32 %v964, 0.0010283804
    %v1045 = vmul.f32 %v965, 0.0010283804
    %v1046 = vmul.f32 %v966, 0.0010283804
    %v1047 = vmul.f32 %v967, 0.0010283804
    %v1048 = vmul.f32 %v968, 0.0010283804
    %v1049 = vmul.f32 %v969, 0.0010283804
    %v1050 = vmul.f32 %v970, 0.0010283804
    %v1051 = vmul.f32 %v971, 0.0010283804
    %v1052 = vmul.f32 %v972, 0.0010283804
    %v1053 = vmul.f32 %v973, 0.0010283804
    %v1054 = vmul.f32 %v974, 0.0010283804
    %v1055 = vmul.f32 %v975, 0.0010283804
    %v1056 = vmul.f32 %v976, 0.0010283804
    %v1057 = vmul.f32 %v977, 0.0010283804
    %v1058 = vmul.f32 %v978, 0.0010283804
    %v1059 = vmul.f32 %v979, 0.0010283804
    %v1060 = vmul.f32 %v980, 0.0010283804
    %v1061 = vmul.f32 %v981, 0.0010283804
    %v1062 = vmul.f32 %v982, 0.0010283804
    %v1063 = vmul.f32 %v983, 0.0010283804
    %v1064 = vmul.f32 %v984, 0.0010283804
    %v1065 = vmul.f32 %v985, 0.0010283804
    %v1066 = vmul.f32 %v986, 0.0010283804
    %v1067 = vmul.f32 %v987, 0.0010283804
    %v1068 = vmul.f32 %v988, 0.0010283804
    %v1069 = vmul.f32 %v989, 0.0010283804
    %v1070 = vmul.f32 %v990, 0.0010283804
    %v1071 = vmul.f32 %v991, 0.0010283804
    %v1072 = vmul.f32 %v992, 0.0010283804
    %v1073 = vmul.f32 %v993, 0.0010283804
    %v1074 = vmul.f32 %v994, 0.0010283804
    %v1075 = vmul.f32 %v995, 0.0010283804
    %v1076 = vmul.f32 %v996, 0.0010283804
    %v1077 = vmul.f32 %v997, 0.0010283804
    %v1078 = vmul.f32 %v998, 0.0010283804
    %v1079 = vmul.f32 %v999, 0.0010283804
    %v1080 = vmul.f32 %v1000, 0.0010283804
    %v1081 = vmul.f32 %v1001, 0.0010283804
    %v1082 = vmul.f32 %v1002, 0.0010283804
    %v1083 = vmul.f32 %v1003, 0.0010283804
    %v1164 = vrot.slane %v1004, 3
    %v1165 = vrot.slane %v1005, 3
    %v1166 = vsel %vm200, %v1164, %v1165
    %v1167 = vrot.slane %v1006, 3
    %v1168 = vrot.slane %v1007, 3
    %v1169 = vsel %vm200, %v1167, %v1168
    %v1170 = vrot.slane %v1008, 3
    %v1171 = vrot.slane %v1009, 3
    %v1172 = vsel %vm200, %v1170, %v1171
    %v1173 = vrot.slane %v1010, 3
    %v1174 = vrot.slane %v1011, 3
    %v1175 = vsel %vm200, %v1173, %v1174
    %v1176 = vrot.slane %v1012, 3
    %v1177 = vrot.slane %v1013, 3
    %v1178 = vsel %vm200, %v1176, %v1177
    %v1179 = vrot.slane %v1014, 3
    %v1180 = vrot.slane %v1015, 3
    %v1181 = vsel %vm200, %v1179, %v1180
    %v1182 = vrot.slane %v1016, 3
    %v1183 = vrot.slane %v1017, 3
    %v1184 = vsel %vm200, %v1182, %v1183
    %v1185 = vrot.slane %v1018, 3
    %v1186 = vrot.slane %v1019, 3
    %v1187 = vsel %vm200, %v1185, %v1186
    %v1188 = vrot.slane %v1020, 3
    %v1189 = vrot.slane %v1021, 3
    %v1190 = vsel %vm200, %v1188, %v1189
    %v1191 = vrot.slane %v1022, 3
    %v1192 = vrot.slane %v1023, 3
    %v1193 = vsel %vm200, %v1191, %v1192
    %v1194 = vrot.slane %v1024, 3
    %v1195 = vrot.slane %v1025, 3
    %v1196 = vsel %vm200, %v1194, %v1195
    %v1197 = vrot.slane %v1026, 3
    %v1198 = vrot.slane %v1027, 3
    %v1199 = vsel %vm200, %v1197, %v1198
    %v1200 = vrot.slane %v1028, 3
    %v1201 = vrot.slane %v1029, 3
    %v1202 = vsel %vm200, %v1200, %v1201
    %v1203 = vrot.slane %v1030, 3
    %v1204 = vrot.slane %v1031, 3
    %v1205 = vsel %vm200, %v1203, %v1204
    %v1206 = vrot.slane %v1032, 3
    %v1207 = vrot.slane %v1033, 3
    %v1208 = vsel %vm200, %v1206, %v1207
    %v1209 = vrot.slane %v1034, 3
    %v1210 = vrot.slane %v1035, 3
    %v1211 = vsel %vm200, %v1209, %v1210
    %v1212 = vrot.slane %v1036, 3
    %v1213 = vrot.slane %v1037, 3
    %v1214 = vsel %vm200, %v1212, %v1213
    %v1215 = vrot.slane %v1038, 3
    %v1216 = vrot.slane %v1039, 3
    %v1217 = vsel %vm200, %v1215, %v1216
    %v1218 = vrot.slane %v1040, 3
    %v1219 = vrot.slane %v1041, 3
    %v1220 = vsel %vm200, %v1218, %v1219
    %v1221 = vrot.slane %v1042, 3
    %v1222 = vrot.slane %v1043, 3
    %v1223 = vsel %vm200, %v1221, %v1222
    %v1224 = vrot.slane %v1044, 3
    %v1225 = vrot.slane %v1045, 3
    %v1226 = vsel %vm200, %v1224, %v1225
    %v1227 = vrot.slane %v1046, 3
    %v1228 = vrot.slane %v1047, 3
    %v1229 = vsel %vm200, %v1227, %v1228
    %v1230 = vrot.slane %v1048, 3
    %v1231 = vrot.slane %v1049, 3
    %v1232 = vsel %vm200, %v1230, %v1231
    %v1233 = vrot.slane %v1050, 3
    %v1234 = vrot.slane %v1051, 3
    %v1235 = vsel %vm200, %v1233, %v1234
    %v1236 = vrot.slane %v1052, 3
    %v1237 = vrot.slane %v1053, 3
    %v1238 = vsel %vm200, %v1236, %v1237
    %v1239 = vrot.slane %v1054, 3
    %v1240 = vrot.slane %v1055, 3
    %v1241 = vsel %vm200, %v1239, %v1240
    %v1242 = vrot.slane %v1056, 3
    %v1243 = vrot.slane %v1057, 3
    %v1244 = vsel %vm200, %v1242, %v1243
    %v1245 = vrot.slane %v1058, 3
    %v1246 = vrot.slane %v1059, 3
    %v1247 = vsel %vm200, %v1245, %v1246
    %v1248 = vrot.slane %v1060, 3
    %v1249 = vrot.slane %v1061, 3
    %v1250 = vsel %vm200, %v1248, %v1249
    %v1251 = vrot.slane %v1062, 3
    %v1252 = vrot.slane %v1063, 3
    %v1253 = vsel %vm200, %v1251, %v1252
    %v1254 = vrot.slane %v1064, 3
    %v1255 = vrot.slane %v1065, 3
    %v1256 = vsel %vm200, %v1254, %v1255
    %v1257 = vrot.slane %v1066, 3
    %v1258 = vrot.slane %v1067, 3
    %v1259 = vsel %vm200, %v1257, %v1258
    %v1260 = vrot.slane %v1068, 3
    %v1261 = vrot.slane %v1069, 3
    %v1262 = vsel %vm200, %v1260, %v1261
    %v1263 = vrot.slane %v1070, 3
    %v1264 = vrot.slane %v1071, 3
    %v1265 = vsel %vm200, %v1263, %v1264
    %v1266 = vrot.slane %v1072, 3
    %v1267 = vrot.slane %v1073, 3
    %v1268 = vsel %vm200, %v1266, %v1267
    %v1269 = vrot.slane %v1074, 3
    %v1270 = vrot.slane %v1075, 3
    %v1271 = vsel %vm200, %v1269, %v1270
    %v1272 = vrot.slane %v1076, 3
    %v1273 = vrot.slane %v1077, 3
    %v1274 = vsel %vm200, %v1272, %v1273
    %v1275 = vrot.slane %v1078, 3
    %v1276 = vrot.slane %v1079, 3
    %v1277 = vsel %vm200, %v1275, %v1276
    %v1278 = vrot.slane %v1080, 3
    %v1279 = vrot.slane %v1081, 3
    %v1280 = vsel %vm200, %v1278, %v1279
    %v1281 = vrot.slane %v1082, 3
    %v1282 = vrot.slane %v1083, 3
    %v1283 = vsel %vm200, %v1281, %v1282
    %v1404 = vadd.f32 %v521, %v1164
    %v1405 = vadd.f32 %v522, %v1166
    %v1406 = vadd.f32 %v523, %v1165
    %v1407 = vadd.f32 %v524, %v1167
    %v1408 = vadd.f32 %v525, %v1169
    %v1409 = vadd.f32 %v526, %v1168
    %v1410 = vadd.f32 %v527, %v1170
    %v1411 = vadd.f32 %v528, %v1172
    %v1412 = vadd.f32 %v529, %v1171
    %v1413 = vadd.f32 %v530, %v1173
    %v1414 = vadd.f32 %v531, %v1175
    %v1415 = vadd.f32 %v532, %v1174
    %v1416 = vadd.f32 %v533, %v1176
    %v1417 = vadd.f32 %v534, %v1178
    %v1418 = vadd.f32 %v535, %v1177
    %v1419 = vadd.f32 %v536, %v1179
    %v1420 = vadd.f32 %v537, %v1181
    %v1421 = vadd.f32 %v538, %v1180
    %v1422 = vadd.f32 %v539, %v1182
    %v1423 = vadd.f32 %v540, %v1184
    %v1424 = vadd.f32 %v541, %v1183
    %v1425 = vadd.f32 %v542, %v1185
    %v1426 = vadd.f32 %v543, %v1187
    %v1427 = vadd.f32 %v544, %v1186
    %v1428 = vadd.f32 %v545, %v1188
    %v1429 = vadd.f32 %v546, %v1190
    %v1430 = vadd.f32 %v547, %v1189
    %v1431 = vadd.f32 %v548, %v1191
    %v1432 = vadd.f32 %v549, %v1193
    %v1433 = vadd.f32 %v550, %v1192
    %v1434 = vadd.f32 %v551, %v1194
    %v1435 = vadd.f32 %v552, %v1196
    %v1436 = vadd.f32 %v553, %v1195
    %v1437 = vadd.f32 %v554, %v1197
    %v1438 = vadd.f32 %v555, %v1199
    %v1439 = vadd.f32 %v556, %v1198
    %v1440 = vadd.f32 %v557, %v1200
    %v1441 = vadd.f32 %v558, %v1202
    %v1442 = vadd.f32 %v559, %v1201
    %v1443 = vadd.f32 %v560, %v1203
    %v1444 = vadd.f32 %v561, %v1205
    %v1445 = vadd.f32 %v562, %v1204
    %v1446 = vadd.f32 %v563, %v1206
    %v1447 = vadd.f32 %v564, %v1208
    %v1448 = vadd.f32 %v565, %v1207
    %v1449 = vadd.f32 %v566, %v1209
    %v1450 = vadd.f32 %v567, %v1211
    %v1451 = vadd.f32 %v568, %v1210
    %v1452 = vadd.f32 %v569, %v1212
    %v1453 = vadd.f32 %v570, %v1214
    %v1454 = vadd.f32 %v571, %v1213
    %v1455 = vadd.f32 %v572, %v1215
    %v1456 = vadd.f32 %v573, %v1217
    %v1457 = vadd.f32 %v574, %v1216
    %v1458 = vadd.f32 %v575, %v1218
    %v1459 = vadd.f32 %v576, %v1220
    %v1460 = vadd.f32 %v577, %v1219
    %v1461 = vadd.f32 %v578, %v1221
    %v1462 = vadd.f32 %v579, %v1223
    %v1463 = vadd.f32 %v580, %v1222
    %v1464 = vadd.f32 %v581, %v1224
    %v1465 = vadd.f32 %v582, %v1226
    %v1466 = vadd.f32 %v583, %v1225
    %v1467 = vadd.f32 %v584, %v1227
    %v1468 = vadd.f32 %v585, %v1229
    %v1469 = vadd.f32 %v586, %v1228
    %v1470 = vadd.f32 %v587, %v1230
    %v1471 = vadd.f32 %v588, %v1232
    %v1472 = vadd.f32 %v589, %v1231
    %v1473 = vadd.f32 %v590, %v1233
    %v1474 = vadd.f32 %v591, %v1235
    %v1475 = vadd.f32 %v592, %v1234
    %v1476 = vadd.f32 %v593, %v1236
    %v1477 = vadd.f32 %v594, %v1238
    %v1478 = vadd.f32 %v595, %v1237
    %v1479 = vadd.f32 %v596, %v1239
    %v1480 = vadd.f32 %v597, %v1241
    %v1481 = vadd.f32 %v598, %v1240
    %v1482 = vadd.f32 %v599, %v1242
    %v1483 = vadd.f32 %v600, %v1244
    %v1484 = vadd.f32 %v601, %v1243
    %v1485 = vadd.f32 %v602, %v1245
    %v1486 = vadd.f32 %v603, %v1247
    %v1487 = vadd.f32 %v604, %v1246
    %v1488 = vadd.f32 %v605, %v1248
    %v1489 = vadd.f32 %v606, %v1250
    %v1490 = vadd.f32 %v607, %v1249
    %v1491 = vadd.f32 %v608, %v1251
    %v1492 = vadd.f32 %v609, %v1253
    %v1493 = vadd.f32 %v610, %v1252
    %v1494 = vadd.f32 %v611, %v1254
    %v1495 = vadd.f32 %v612, %v1256
    %v1496 = vadd.f32 %v613, %v1255
    %v1497 = vadd.f32 %v614, %v1257
    %v1498 = vadd.f32 %v615, %v1259
    %v1499 = vadd.f32 %v616, %v1258
    %v1500 = vadd.f32 %v617, %v1260
    %v1501 = vadd.f32 %v618, %v1262
    %v1502 = vadd.f32 %v619, %v1261
    %v1503 = vadd.f32 %v620, %v1263
    %v1504 = vadd.f32 %v621, %v1265
    %v1505 = vadd.f32 %v622, %v1264
    %v1506 = vadd.f32 %v623, %v1266
    %v1507 = vadd.f32 %v624, %v1268
    %v1508 = vadd.f32 %v625, %v1267
    %v1509 = vadd.f32 %v626, %v1269
    %v1510 = vadd.f32 %v627, %v1271
    %v1511 = vadd.f32 %v628, %v1270
    %v1512 = vadd.f32 %v629, %v1272
    %v1513 = vadd.f32 %v630, %v1274
    %v1514 = vadd.f32 %v631, %v1273
    %v1515 = vadd.f32 %v632, %v1275
    %v1516 = vadd.f32 %v633, %v1277
    %v1517 = vadd.f32 %v634, %v1276
    %v1518 = vadd.f32 %v635, %v1278
    %v1519 = vadd.f32 %v636, %v1280
    %v1520 = vadd.f32 %v637, %v1279
    %v1521 = vadd.f32 %v638, %v1281
    %v1522 = vadd.f32 %v639, %v1283
    %v1523 = vadd.f32 %v640, %v1282
    %v1524 = vadd.f32 %v441, %v203
    %v1525 = vadd.f32 %v203, %v481
    %v1526 = vadd.f32 %v481, 0.0
    %v1527 = vadd.f32 %v442, %v206
    %v1528 = vadd.f32 %v206, %v482
    %v1529 = vadd.f32 %v482, 0.0
    %v1530 = vadd.f32 %v443, %v209
    %v1531 = vadd.f32 %v209, %v483
    %v1532 = vadd.f32 %v483, 0.0
    %v1533 = vadd.f32 %v444, %v212
    %v1534 = vadd.f32 %v212, %v484
    %v1535 = vadd.f32 %v484, 0.0
    %v1536 = vadd.f32 %v445, %v215
    %v1537 = vadd.f32 %v215, %v485
    %v1538 = vadd.f32 %v485, 0.0
    %v1539 = vadd.f32 %v446, %v218
    %v1540 = vadd.f32 %v218, %v486
    %v1541 = vadd.f32 %v486, 0.0
    %v1542 = vadd.f32 %v447, %v221
    %v1543 = vadd.f32 %v221, %v487
    %v1544 = vadd.f32 %v487, 0.0
    %v1545 = vadd.f32 %v448, %v224
    %v1546 = vadd.f32 %v224, %v488
    %v1547 = vadd.f32 %v488, 0.0
    %v1548 = vadd.f32 %v449, %v227
    %v1549 = vadd.f32 %v227, %v489
    %v1550 = vadd.f32 %v489, 0.0
    %v1551 = vadd.f32 %v450, %v230
    %v1552 = vadd.f32 %v230, %v490
    %v1553 = vadd.f32 %v490, 0.0
    %v1554 = vadd.f32 %v451, %v233
    %v1555 = vadd.f32 %v233, %v491
    %v1556 = vadd.f32 %v491, 0.0
    %v1557 = vadd.f32 %v452, %v236
    %v1558 = vadd.f32 %v236, %v492
    %v1559 = vadd.f32 %v492, 0.0
    %v1560 = vadd.f32 %v453, %v239
    %v1561 = vadd.f32 %v239, %v493
    %v1562 = vadd.f32 %v493, 0.0
    %v1563 = vadd.f32 %v454, %v242
    %v1564 = vadd.f32 %v242, %v494
    %v1565 = vadd.f32 %v494, 0.0
    %v1566 = vadd.f32 %v455, %v245
    %v1567 = vadd.f32 %v245, %v495
    %v1568 = vadd.f32 %v495, 0.0
    %v1569 = vadd.f32 %v456, %v248
    %v1570 = vadd.f32 %v248, %v496
    %v1571 = vadd.f32 %v496, 0.0
    %v1572 = vadd.f32 %v457, %v251
    %v1573 = vadd.f32 %v251, %v497
    %v1574 = vadd.f32 %v497, 0.0
    %v1575 = vadd.f32 %v458, %v254
    %v1576 = vadd.f32 %v254, %v498
    %v1577 = vadd.f32 %v498, 0.0
    %v1578 = vadd.f32 %v459, %v257
    %v1579 = vadd.f32 %v257, %v499
    %v1580 = vadd.f32 %v499, 0.0
    %v1581 = vadd.f32 %v460, %v260
    %v1582 = vadd.f32 %v260, %v500
    %v1583 = vadd.f32 %v500, 0.0
    %v1584 = vadd.f32 %v461, %v263
    %v1585 = vadd.f32 %v263, %v501
    %v1586 = vadd.f32 %v501, 0.0
    %v1587 = vadd.f32 %v462, %v266
    %v1588 = vadd.f32 %v266, %v502
    %v1589 = vadd.f32 %v502, 0.0
    %v1590 = vadd.f32 %v463, %v269
    %v1591 = vadd.f32 %v269, %v503
    %v1592 = vadd.f32 %v503, 0.0
    %v1593 = vadd.f32 %v464, %v272
    %v1594 = vadd.f32 %v272, %v504
    %v1595 = vadd.f32 %v504, 0.0
    %v1596 = vadd.f32 %v465, %v275
    %v1597 = vadd.f32 %v275, %v505
    %v1598 = vadd.f32 %v505, 0.0
    %v1599 = vadd.f32 %v466, %v278
    %v1600 = vadd.f32 %v278, %v506
    %v1601 = vadd.f32 %v506, 0.0
    %v1602 = vadd.f32 %v467, %v281
    %v1603 = vadd.f32 %v281, %v507
    %v1604 = vadd.f32 %v507, 0.0
    %v1605 = vadd.f32 %v468, %v284
    %v1606 = vadd.f32 %v284, %v508
    %v1607 = vadd.f32 %v508, 0.0
    %v1608 = vadd.f32 %v469, %v287
    %v1609 = vadd.f32 %v287, %v509
    %v1610 = vadd.f32 %v509, 0.0
    %v1611 = vadd.f32 %v470, %v290
    %v1612 = vadd.f32 %v290, %v510
    %v1613 = vadd.f32 %v510, 0.0
    %v1614 = vadd.f32 %v471, %v293
    %v1615 = vadd.f32 %v293, %v511
    %v1616 = vadd.f32 %v511, 0.0
    %v1617 = vadd.f32 %v472, %v296
    %v1618 = vadd.f32 %v296, %v512
    %v1619 = vadd.f32 %v512, 0.0
    %v1620 = vadd.f32 %v473, %v299
    %v1621 = vadd.f32 %v299, %v513
    %v1622 = vadd.f32 %v513, 0.0
    %v1623 = vadd.f32 %v474, %v302
    %v1624 = vadd.f32 %v302, %v514
    %v1625 = vadd.f32 %v514, 0.0
    %v1626 = vadd.f32 %v475, %v305
    %v1627 = vadd.f32 %v305, %v515
    %v1628 = vadd.f32 %v515, 0.0
    %v1629 = vadd.f32 %v476, %v308
    %v1630 = vadd.f32 %v308, %v516
    %v1631 = vadd.f32 %v516, 0.0
    %v1632 = vadd.f32 %v477, %v311
    %v1633 = vadd.f32 %v311, %v517
    %v1634 = vadd.f32 %v517, 0.0
    %v1635 = vadd.f32 %v478, %v314
    %v1636 = vadd.f32 %v314, %v518
    %v1637 = vadd.f32 %v518, 0.0
    %v1638 = vadd.f32 %v479, %v317
    %v1639 = vadd.f32 %v317, %v519
    %v1640 = vadd.f32 %v519, 0.0
    %v1641 = vadd.f32 %v480, %v320
    %v1642 = vadd.f32 %v320, %v520
    %v1643 = vadd.f32 %v520, 0.0
    %v1644 = vmul.f32 %v1524, 0.0075987587
    %v1645 = vmul.f32 %v1525, 0.0075987587
    %v1646 = vmul.f32 %v1526, 0.0075987587
    %v1647 = vmul.f32 %v1527, 0.0075987587
    %v1648 = vmul.f32 %v1528, 0.0075987587
    %v1649 = vmul.f32 %v1529, 0.0075987587
    %v1650 = vmul.f32 %v1530, 0.0075987587
    %v1651 = vmul.f32 %v1531, 0.0075987587
    %v1652 = vmul.f32 %v1532, 0.0075987587
    %v1653 = vmul.f32 %v1533, 0.0075987587
    %v1654 = vmul.f32 %v1534, 0.0075987587
    %v1655 = vmul.f32 %v1535, 0.0075987587
    %v1656 = vmul.f32 %v1536, 0.0075987587
    %v1657 = vmul.f32 %v1537, 0.0075987587
    %v1658 = vmul.f32 %v1538, 0.0075987587
    %v1659 = vmul.f32 %v1539, 0.0075987587
    %v1660 = vmul.f32 %v1540, 0.0075987587
    %v1661 = vmul.f32 %v1541, 0.0075987587
    %v1662 = vmul.f32 %v1542, 0.0075987587
    %v1663 = vmul.f32 %v1543, 0.0075987587
    %v1664 = vmul.f32 %v1544, 0.0075987587
    %v1665 = vmul.f32 %v1545, 0.0075987587
    %v1666 = vmul.f32 %v1546, 0.0075987587
    %v1667 = vmul.f32 %v1547, 0.0075987587
    %v1668 = vmul.f32 %v1548, 0.0075987587
    %v1669 = vmul.f32 %v1549, 0.0075987587
    %v1670 = vmul.f32 %v1550, 0.0075987587
    %v1671 = vmul.f32 %v1551, 0.0075987587
    %v1672 = vmul.f32 %v1552, 0.0075987587
    %v1673 = vmul.f32 %v1553, 0.0075987587
    %v1674 = vmul.f32 %v1554, 0.0075987587
    %v1675 = vmul.f32 %v1555, 0.0075987587
    %v1676 = vmul.f32 %v1556, 0.0075987587
    %v1677 = vmul.f32 %v1557, 0.0075987587
    %v1678 = vmul.f32 %v1558, 0.0075987587
    %v1679 = vmul.f32 %v1559, 0.0075987587
    %v1680 = vmul.f32 %v1560, 0.0075987587
    %v1681 = vmul.f32 %v1561, 0.0075987587
    %v1682 = vmul.f32 %v1562, 0.0075987587
    %v1683 = vmul.f32 %v1563, 0.0075987587
    %v1684 = vmul.f32 %v1564, 0.0075987587
    %v1685 = vmul.f32 %v1565, 0.0075987587
    %v1686 = vmul.f32 %v1566, 0.0075987587
    %v1687 = vmul.f32 %v1567, 0.0075987587
    %v1688 = vmul.f32 %v1568, 0.0075987587
    %v1689 = vmul.f32 %v1569, 0.0075987587
    %v1690 = vmul.f32 %v1570, 0.0075987587
    %v1691 = vmul.f32 %v1571, 0.0075987587
    %v1692 = vmul.f32 %v1572, 0.0075987587
    %v1693 = vmul.f32 %v1573, 0.0075987587
    %v1694 = vmul.f32 %v1574, 0.0075987587
    %v1695 = vmul.f32 %v1575, 0.0075987587
    %v1696 = vmul.f32 %v1576, 0.0075987587
    %v1697 = vmul.f32 %v1577, 0.0075987587
    %v1698 = vmul.f32 %v1578, 0.0075987587
    %v1699 = vmul.f32 %v1579, 0.0075987587
    %v1700 = vmul.f32 %v1580, 0.0075987587
    %v1701 = vmul.f32 %v1581, 0.0075987587
    %v1702 = vmul.f32 %v1582, 0.0075987587
    %v1703 = vmul.f32 %v1583, 0.0075987587
    %v1704 = vmul.f32 %v1584, 0.0075987587
    %v1705 = vmul.f32 %v1585, 0.0075987587
    %v1706 = vmul.f32 %v1586, 0.0075987587
    %v1707 = vmul.f32 %v1587, 0.0075987587
    %v1708 = vmul.f32 %v1588, 0.0075987587
    %v1709 = vmul.f32 %v1589, 0.0075987587
    %v1710 = vmul.f32 %v1590, 0.0075987587
    %v1711 = vmul.f32 %v1591, 0.0075987587
    %v1712 = vmul.f32 %v1592, 0.0075987587
    %v1713 = vmul.f32 %v1593, 0.0075987587
    %v1714 = vmul.f32 %v1594, 0.0075987587
    %v1715 = vmul.f32 %v1595, 0.0075987587
    %v1716 = vmul.f32 %v1596, 0.0075987587
    %v1717 = vmul.f32 %v1597, 0.0075987587
    %v1718 = vmul.f32 %v1598, 0.0075987587
    %v1719 = vmul.f32 %v1599, 0.0075987587
    %v1720 = vmul.f32 %v1600, 0.0075987587
    %v1721 = vmul.f32 %v1601, 0.0075987587
    %v1722 = vmul.f32 %v1602, 0.0075987587
    %v1723 = vmul.f32 %v1603, 0.0075987587
    %v1724 = vmul.f32 %v1604, 0.0075987587
    %v1725 = vmul.f32 %v1605, 0.0075987587
    %v1726 = vmul.f32 %v1606, 0.0075987587
    %v1727 = vmul.f32 %v1607, 0.0075987587
    %v1728 = vmul.f32 %v1608, 0.0075987587
    %v1729 = vmul.f32 %v1609, 0.0075987587
    %v1730 = vmul.f32 %v1610, 0.0075987587
    %v1731 = vmul.f32 %v1611, 0.0075987587
    %v1732 = vmul.f32 %v1612, 0.0075987587
    %v1733 = vmul.f32 %v1613, 0.0075987587
    %v1734 = vmul.f32 %v1614, 0.0075987587
    %v1735 = vmul.f32 %v1615, 0.0075987587
    %v1736 = vmul.f32 %v1616, 0.0075987587
    %v1737 = vmul.f32 %v1617, 0.0075987587
    %v1738 = vmul.f32 %v1618, 0.0075987587
    %v1739 = vmul.f32 %v1619, 0.0075987587
    %v1740 = vmul.f32 %v1620, 0.0075987587
    %v1741 = vmul.f32 %v1621, 0.0075987587
    %v1742 = vmul.f32 %v1622, 0.0075987587
    %v1743 = vmul.f32 %v1623, 0.0075987587
    %v1744 = vmul.f32 %v1624, 0.0075987587
    %v1745 = vmul.f32 %v1625, 0.0075987587
    %v1746 = vmul.f32 %v1626, 0.0075987587
    %v1747 = vmul.f32 %v1627, 0.0075987587
    %v1748 = vmul.f32 %v1628, 0.0075987587
    %v1749 = vmul.f32 %v1629, 0.0075987587
    %v1750 = vmul.f32 %v1630, 0.0075987587
    %v1751 = vmul.f32 %v1631, 0.0075987587
    %v1752 = vmul.f32 %v1632, 0.0075987587
    %v1753 = vmul.f32 %v1633, 0.0075987587
    %v1754 = vmul.f32 %v1634, 0.0075987587
    %v1755 = vmul.f32 %v1635, 0.0075987587
    %v1756 = vmul.f32 %v1636, 0.0075987587
    %v1757 = vmul.f32 %v1637, 0.0075987587
    %v1758 = vmul.f32 %v1638, 0.0075987587
    %v1759 = vmul.f32 %v1639, 0.0075987587
    %v1760 = vmul.f32 %v1640, 0.0075987587
    %v1761 = vmul.f32 %v1641, 0.0075987587
    %v1762 = vmul.f32 %v1642, 0.0075987587
    %v1763 = vmul.f32 %v1643, 0.0075987587
    %vm1884 = vcmask 1043456
    %v1885 = vrot.slane %v1644, 4
    %v1886 = vrot.slane %v1645, 4
    %v1887 = vsel %vm1884, %v1885, %v1886
    %v1888 = vrot.slane %v1646, 4
    %v1889 = vsel %vm1884, %v1886, %v1888
    %v1890 = vrot.slane %v1647, 4
    %v1891 = vrot.slane %v1648, 4
    %v1892 = vsel %vm1884, %v1890, %v1891
    %v1893 = vrot.slane %v1649, 4
    %v1894 = vsel %vm1884, %v1891, %v1893
    %v1895 = vrot.slane %v1650, 4
    %v1896 = vrot.slane %v1651, 4
    %v1897 = vsel %vm1884, %v1895, %v1896
    %v1898 = vrot.slane %v1652, 4
    %v1899 = vsel %vm1884, %v1896, %v1898
    %v1900 = vrot.slane %v1653, 4
    %v1901 = vrot.slane %v1654, 4
    %v1902 = vsel %vm1884, %v1900, %v1901
    %v1903 = vrot.slane %v1655, 4
    %v1904 = vsel %vm1884, %v1901, %v1903
    %v1905 = vrot.slane %v1656, 4
    %v1906 = vrot.slane %v1657, 4
    %v1907 = vsel %vm1884, %v1905, %v1906
    %v1908 = vrot.slane %v1658, 4
    %v1909 = vsel %vm1884, %v1906, %v1908
    %v1910 = vrot.slane %v1659, 4
    %v1911 = vrot.slane %v1660, 4
    %v1912 = vsel %vm1884, %v1910, %v1911
    %v1913 = vrot.slane %v1661, 4
    %v1914 = vsel %vm1884, %v1911, %v1913
    %v1915 = vrot.slane %v1662, 4
    %v1916 = vrot.slane %v1663, 4
    %v1917 = vsel %vm1884, %v1915, %v1916
    %v1918 = vrot.slane %v1664, 4
    %v1919 = vsel %vm1884, %v1916, %v1918
    %v1920 = vrot.slane %v1665, 4
    %v1921 = vrot.slane %v1666, 4
    %v1922 = vsel %vm1884, %v1920, %v1921
    %v1923 = vrot.slane %v1667, 4
    %v1924 = vsel %vm1884, %v1921, %v1923
    %v1925 = vrot.slane %v1668, 4
    %v1926 = vrot.slane %v1669, 4
    %v1927 = vsel %vm1884, %v1925, %v1926
    %v1928 = vrot.slane %v1670, 4
    %v1929 = vsel %vm1884, %v1926, %v1928
    %v1930 = vrot.slane %v1671, 4
    %v1931 = vrot.slane %v1672, 4
    %v1932 = vsel %vm1884, %v1930, %v1931
    %v1933 = vrot.slane %v1673, 4
    %v1934 = vsel %vm1884, %v1931, %v1933
    %v1935 = vrot.slane %v1674, 4
    %v1936 = vrot.slane %v1675, 4
    %v1937 = vsel %vm1884, %v1935, %v1936
    %v1938 = vrot.slane %v1676, 4
    %v1939 = vsel %vm1884, %v1936, %v1938
    %v1940 = vrot.slane %v1677, 4
    %v1941 = vrot.slane %v1678, 4
    %v1942 = vsel %vm1884, %v1940, %v1941
    %v1943 = vrot.slane %v1679, 4
    %v1944 = vsel %vm1884, %v1941, %v1943
    %v1945 = vrot.slane %v1680, 4
    %v1946 = vrot.slane %v1681, 4
    %v1947 = vsel %vm1884, %v1945, %v1946
    %v1948 = vrot.slane %v1682, 4
    %v1949 = vsel %vm1884, %v1946, %v1948
    %v1950 = vrot.slane %v1683, 4
    %v1951 = vrot.slane %v1684, 4
    %v1952 = vsel %vm1884, %v1950, %v1951
    %v1953 = vrot.slane %v1685, 4
    %v1954 = vsel %vm1884, %v1951, %v1953
    %v1955 = vrot.slane %v1686, 4
    %v1956 = vrot.slane %v1687, 4
    %v1957 = vsel %vm1884, %v1955, %v1956
    %v1958 = vrot.slane %v1688, 4
    %v1959 = vsel %vm1884, %v1956, %v1958
    %v1960 = vrot.slane %v1689, 4
    %v1961 = vrot.slane %v1690, 4
    %v1962 = vsel %vm1884, %v1960, %v1961
    %v1963 = vrot.slane %v1691, 4
    %v1964 = vsel %vm1884, %v1961, %v1963
    %v1965 = vrot.slane %v1692, 4
    %v1966 = vrot.slane %v1693, 4
    %v1967 = vsel %vm1884, %v1965, %v1966
    %v1968 = vrot.slane %v1694, 4
    %v1969 = vsel %vm1884, %v1966, %v1968
    %v1970 = vrot.slane %v1695, 4
    %v1971 = vrot.slane %v1696, 4
    %v1972 = vsel %vm1884, %v1970, %v1971
    %v1973 = vrot.slane %v1697, 4
    %v1974 = vsel %vm1884, %v1971, %v1973
    %v1975 = vrot.slane %v1698, 4
    %v1976 = vrot.slane %v1699, 4
    %v1977 = vsel %vm1884, %v1975, %v1976
    %v1978 = vrot.slane %v1700, 4
    %v1979 = vsel %vm1884, %v1976, %v1978
    %v1980 = vrot.slane %v1701, 4
    %v1981 = vrot.slane %v1702, 4
    %v1982 = vsel %vm1884, %v1980, %v1981
    %v1983 = vrot.slane %v1703, 4
    %v1984 = vsel %vm1884, %v1981, %v1983
    %v1985 = vrot.slane %v1704, 4
    %v1986 = vrot.slane %v1705, 4
    %v1987 = vsel %vm1884, %v1985, %v1986
    %v1988 = vrot.slane %v1706, 4
    %v1989 = vsel %vm1884, %v1986, %v1988
    %v1990 = vrot.slane %v1707, 4
    %v1991 = vrot.slane %v1708, 4
    %v1992 = vsel %vm1884, %v1990, %v1991
    %v1993 = vrot.slane %v1709, 4
    %v1994 = vsel %vm1884, %v1991, %v1993
    %v1995 = vrot.slane %v1710, 4
    %v1996 = vrot.slane %v1711, 4
    %v1997 = vsel %vm1884, %v1995, %v1996
    %v1998 = vrot.slane %v1712, 4
    %v1999 = vsel %vm1884, %v1996, %v1998
    %v2000 = vrot.slane %v1713, 4
    %v2001 = vrot.slane %v1714, 4
    %v2002 = vsel %vm1884, %v2000, %v2001
    %v2003 = vrot.slane %v1715, 4
    %v2004 = vsel %vm1884, %v2001, %v2003
    %v2005 = vrot.slane %v1716, 4
    %v2006 = vrot.slane %v1717, 4
    %v2007 = vsel %vm1884, %v2005, %v2006
    %v2008 = vrot.slane %v1718, 4
    %v2009 = vsel %vm1884, %v2006, %v2008
    %v2010 = vrot.slane %v1719, 4
    %v2011 = vrot.slane %v1720, 4
    %v2012 = vsel %vm1884, %v2010, %v2011
    %v2013 = vrot.slane %v1721, 4
    %v2014 = vsel %vm1884, %v2011, %v2013
    %v2015 = vrot.slane %v1722, 4
    %v2016 = vrot.slane %v1723, 4
    %v2017 = vsel %vm1884, %v2015, %v2016
    %v2018 = vrot.slane %v1724, 4
    %v2019 = vsel %vm1884, %v2016, %v2018
    %v2020 = vrot.slane %v1725, 4
    %v2021 = vrot.slane %v1726, 4
    %v2022 = vsel %vm1884, %v2020, %v2021
    %v2023 = vrot.slane %v1727, 4
    %v2024 = vsel %vm1884, %v2021, %v2023
    %v2025 = vrot.slane %v1728, 4
    %v2026 = vrot.slane %v1729, 4
    %v2027 = vsel %vm1884, %v2025, %v2026
    %v2028 = vrot.slane %v1730, 4
    %v2029 = vsel %vm1884, %v2026, %v2028
    %v2030 = vrot.slane %v1731, 4
    %v2031 = vrot.slane %v1732, 4
    %v2032 = vsel %vm1884, %v2030, %v2031
    %v2033 = vrot.slane %v1733, 4
    %v2034 = vsel %vm1884, %v2031, %v2033
    %v2035 = vrot.slane %v1734, 4
    %v2036 = vrot.slane %v1735, 4
    %v2037 = vsel %vm1884, %v2035, %v2036
    %v2038 = vrot.slane %v1736, 4
    %v2039 = vsel %vm1884, %v2036, %v2038
    %v2040 = vrot.slane %v1737, 4
    %v2041 = vrot.slane %v1738, 4
    %v2042 = vsel %vm1884, %v2040, %v2041
    %v2043 = vrot.slane %v1739, 4
    %v2044 = vsel %vm1884, %v2041, %v2043
    %v2045 = vrot.slane %v1740, 4
    %v2046 = vrot.slane %v1741, 4
    %v2047 = vsel %vm1884, %v2045, %v2046
    %v2048 = vrot.slane %v1742, 4
    %v2049 = vsel %vm1884, %v2046, %v2048
    %v2050 = vrot.slane %v1743, 4
    %v2051 = vrot.slane %v1744, 4
    %v2052 = vsel %vm1884, %v2050, %v2051
    %v2053 = vrot.slane %v1745, 4
    %v2054 = vsel %vm1884, %v2051, %v2053
    %v2055 = vrot.slane %v1746, 4
    %v2056 = vrot.slane %v1747, 4
    %v2057 = vsel %vm1884, %v2055, %v2056
    %v2058 = vrot.slane %v1748, 4
    %v2059 = vsel %vm1884, %v2056, %v2058
    %v2060 = vrot.slane %v1749, 4
    %v2061 = vrot.slane %v1750, 4
    %v2062 = vsel %vm1884, %v2060, %v2061
    %v2063 = vrot.slane %v1751, 4
    %v2064 = vsel %vm1884, %v2061, %v2063
    %v2065 = vrot.slane %v1752, 4
    %v2066 = vrot.slane %v1753, 4
    %v2067 = vsel %vm1884, %v2065, %v2066
    %v2068 = vrot.slane %v1754, 4
    %v2069 = vsel %vm1884, %v2066, %v2068
    %v2070 = vrot.slane %v1755, 4
    %v2071 = vrot.slane %v1756, 4
    %v2072 = vsel %vm1884, %v2070, %v2071
    %v2073 = vrot.slane %v1757, 4
    %v2074 = vsel %vm1884, %v2071, %v2073
    %v2075 = vrot.slane %v1758, 4
    %v2076 = vrot.slane %v1759, 4
    %v2077 = vsel %vm1884, %v2075, %v2076
    %v2078 = vrot.slane %v1760, 4
    %v2079 = vsel %vm1884, %v2076, %v2078
    %v2080 = vrot.slane %v1761, 4
    %v2081 = vrot.slane %v1762, 4
    %v2082 = vsel %vm1884, %v2080, %v2081
    %v2083 = vrot.slane %v1763, 4
    %v2084 = vsel %vm1884, %v2081, %v2083
    %v2205 = vadd.f32 %v1404, %v1885
    %v2206 = vadd.f32 %v1405, %v1887
    %v2207 = vadd.f32 %v1406, %v1889
    %v2208 = vadd.f32 %v1407, %v1890
    %v2209 = vadd.f32 %v1408, %v1892
    %v2210 = vadd.f32 %v1409, %v1894
    %v2211 = vadd.f32 %v1410, %v1895
    %v2212 = vadd.f32 %v1411, %v1897
    %v2213 = vadd.f32 %v1412, %v1899
    %v2214 = vadd.f32 %v1413, %v1900
    %v2215 = vadd.f32 %v1414, %v1902
    %v2216 = vadd.f32 %v1415, %v1904
    %v2217 = vadd.f32 %v1416, %v1905
    %v2218 = vadd.f32 %v1417, %v1907
    %v2219 = vadd.f32 %v1418, %v1909
    %v2220 = vadd.f32 %v1419, %v1910
    %v2221 = vadd.f32 %v1420, %v1912
    %v2222 = vadd.f32 %v1421, %v1914
    %v2223 = vadd.f32 %v1422, %v1915
    %v2224 = vadd.f32 %v1423, %v1917
    %v2225 = vadd.f32 %v1424, %v1919
    %v2226 = vadd.f32 %v1425, %v1920
    %v2227 = vadd.f32 %v1426, %v1922
    %v2228 = vadd.f32 %v1427, %v1924
    %v2229 = vadd.f32 %v1428, %v1925
    %v2230 = vadd.f32 %v1429, %v1927
    %v2231 = vadd.f32 %v1430, %v1929
    %v2232 = vadd.f32 %v1431, %v1930
    %v2233 = vadd.f32 %v1432, %v1932
    %v2234 = vadd.f32 %v1433, %v1934
    %v2235 = vadd.f32 %v1434, %v1935
    %v2236 = vadd.f32 %v1435, %v1937
    %v2237 = vadd.f32 %v1436, %v1939
    %v2238 = vadd.f32 %v1437, %v1940
    %v2239 = vadd.f32 %v1438, %v1942
    %v2240 = vadd.f32 %v1439, %v1944
    %v2241 = vadd.f32 %v1440, %v1945
    %v2242 = vadd.f32 %v1441, %v1947
    %v2243 = vadd.f32 %v1442, %v1949
    %v2244 = vadd.f32 %v1443, %v1950
    %v2245 = vadd.f32 %v1444, %v1952
    %v2246 = vadd.f32 %v1445, %v1954
    %v2247 = vadd.f32 %v1446, %v1955
    %v2248 = vadd.f32 %v1447, %v1957
    %v2249 = vadd.f32 %v1448, %v1959
    %v2250 = vadd.f32 %v1449, %v1960
    %v2251 = vadd.f32 %v1450, %v1962
    %v2252 = vadd.f32 %v1451, %v1964
    %v2253 = vadd.f32 %v1452, %v1965
    %v2254 = vadd.f32 %v1453, %v1967
    %v2255 = vadd.f32 %v1454, %v1969
    %v2256 = vadd.f32 %v1455, %v1970
    %v2257 = vadd.f32 %v1456, %v1972
    %v2258 = vadd.f32 %v1457, %v1974
    %v2259 = vadd.f32 %v1458, %v1975
    %v2260 = vadd.f32 %v1459, %v1977
    %v2261 = vadd.f32 %v1460, %v1979
    %v2262 = vadd.f32 %v1461, %v1980
    %v2263 = vadd.f32 %v1462, %v1982
    %v2264 = vadd.f32 %v1463, %v1984
    %v2265 = vadd.f32 %v1464, %v1985
    %v2266 = vadd.f32 %v1465, %v1987
    %v2267 = vadd.f32 %v1466, %v1989
    %v2268 = vadd.f32 %v1467, %v1990
    %v2269 = vadd.f32 %v1468, %v1992
    %v2270 = vadd.f32 %v1469, %v1994
    %v2271 = vadd.f32 %v1470, %v1995
    %v2272 = vadd.f32 %v1471, %v1997
    %v2273 = vadd.f32 %v1472, %v1999
    %v2274 = vadd.f32 %v1473, %v2000
    %v2275 = vadd.f32 %v1474, %v2002
    %v2276 = vadd.f32 %v1475, %v2004
    %v2277 = vadd.f32 %v1476, %v2005
    %v2278 = vadd.f32 %v1477, %v2007
    %v2279 = vadd.f32 %v1478, %v2009
    %v2280 = vadd.f32 %v1479, %v2010
    %v2281 = vadd.f32 %v1480, %v2012
    %v2282 = vadd.f32 %v1481, %v2014
    %v2283 = vadd.f32 %v1482, %v2015
    %v2284 = vadd.f32 %v1483, %v2017
    %v2285 = vadd.f32 %v1484, %v2019
    %v2286 = vadd.f32 %v1485, %v2020
    %v2287 = vadd.f32 %v1486, %v2022
    %v2288 = vadd.f32 %v1487, %v2024
    %v2289 = vadd.f32 %v1488, %v2025
    %v2290 = vadd.f32 %v1489, %v2027
    %v2291 = vadd.f32 %v1490, %v2029
    %v2292 = vadd.f32 %v1491, %v2030
    %v2293 = vadd.f32 %v1492, %v2032
    %v2294 = vadd.f32 %v1493, %v2034
    %v2295 = vadd.f32 %v1494, %v2035
    %v2296 = vadd.f32 %v1495, %v2037
    %v2297 = vadd.f32 %v1496, %v2039
    %v2298 = vadd.f32 %v1497, %v2040
    %v2299 = vadd.f32 %v1498, %v2042
    %v2300 = vadd.f32 %v1499, %v2044
    %v2301 = vadd.f32 %v1500, %v2045
    %v2302 = vadd.f32 %v1501, %v2047
    %v2303 = vadd.f32 %v1502, %v2049
    %v2304 = vadd.f32 %v1503, %v2050
    %v2305 = vadd.f32 %v1504, %v2052
    %v2306 = vadd.f32 %v1505, %v2054
    %v2307 = vadd.f32 %v1506, %v2055
    %v2308 = vadd.f32 %v1507, %v2057
    %v2309 = vadd.f32 %v1508, %v2059
    %v2310 = vadd.f32 %v1509, %v2060
    %v2311 = vadd.f32 %v1510, %v2062
    %v2312 = vadd.f32 %v1511, %v2064
    %v2313 = vadd.f32 %v1512, %v2065
    %v2314 = vadd.f32 %v1513, %v2067
    %v2315 = vadd.f32 %v1514, %v2069
    %v2316 = vadd.f32 %v1515, %v2070
    %v2317 = vadd.f32 %v1516, %v2072
    %v2318 = vadd.f32 %v1517, %v2074
    %v2319 = vadd.f32 %v1518, %v2075
    %v2320 = vadd.f32 %v1519, %v2077
    %v2321 = vadd.f32 %v1520, %v2079
    %v2322 = vadd.f32 %v1521, %v2080
    %v2323 = vadd.f32 %v1522, %v2082
    %v2324 = vadd.f32 %v1523, %v2084
    %vm2325 = vcmask 1041408
    %v2326 = vrot.slane %v203, 6
    %v2327 = vrot.slane %v481, 6
    %v2328 = vsel %vm2325, %v2326, %v2327
    %v2329 = vrot.slane %v206, 6
    %v2330 = vrot.slane %v482, 6
    %v2331 = vsel %vm2325, %v2329, %v2330
    %v2332 = vrot.slane %v209, 6
    %v2333 = vrot.slane %v483, 6
    %v2334 = vsel %vm2325, %v2332, %v2333
    %v2335 = vrot.slane %v212, 6
    %v2336 = vrot.slane %v484, 6
    %v2337 = vsel %vm2325, %v2335, %v2336
    %v2338 = vrot.slane %v215, 6
    %v2339 = vrot.slane %v485, 6
    %v2340 = vsel %vm2325, %v2338, %v2339
    %v2341 = vrot.slane %v218, 6
    %v2342 = vrot.slane %v486, 6
    %v2343 = vsel %vm2325, %v2341, %v2342
    %v2344 = vrot.slane %v221, 6
    %v2345 = vrot.slane %v487, 6
    %v2346 = vsel %vm2325, %v2344, %v2345
    %v2347 = vrot.slane %v224, 6
    %v2348 = vrot.slane %v488, 6
    %v2349 = vsel %vm2325, %v2347, %v2348
    %v2350 = vrot.slane %v227, 6
    %v2351 = vrot.slane %v489, 6
    %v2352 = vsel %vm2325, %v2350, %v2351
    %v2353 = vrot.slane %v230, 6
    %v2354 = vrot.slane %v490, 6
    %v2355 = vsel %vm2325, %v2353, %v2354
    %v2356 = vrot.slane %v233, 6
    %v2357 = vrot.slane %v491, 6
    %v2358 = vsel %vm2325, %v2356, %v2357
    %v2359 = vrot.slane %v236, 6
    %v2360 = vrot.slane %v492, 6
    %v2361 = vsel %vm2325, %v2359, %v2360
    %v2362 = vrot.slane %v239, 6
    %v2363 = vrot.slane %v493, 6
    %v2364 = vsel %vm2325, %v2362, %v2363
    %v2365 = vrot.slane %v242, 6
    %v2366 = vrot.slane %v494, 6
    %v2367 = vsel %vm2325, %v2365, %v2366
    %v2368 = vrot.slane %v245, 6
    %v2369 = vrot.slane %v495, 6
    %v2370 = vsel %vm2325, %v2368, %v2369
    %v2371 = vrot.slane %v248, 6
    %v2372 = vrot.slane %v496, 6
    %v2373 = vsel %vm2325, %v2371, %v2372
    %v2374 = vrot.slane %v251, 6
    %v2375 = vrot.slane %v497, 6
    %v2376 = vsel %vm2325, %v2374, %v2375
    %v2377 = vrot.slane %v254, 6
    %v2378 = vrot.slane %v498, 6
    %v2379 = vsel %vm2325, %v2377, %v2378
    %v2380 = vrot.slane %v257, 6
    %v2381 = vrot.slane %v499, 6
    %v2382 = vsel %vm2325, %v2380, %v2381
    %v2383 = vrot.slane %v260, 6
    %v2384 = vrot.slane %v500, 6
    %v2385 = vsel %vm2325, %v2383, %v2384
    %v2386 = vrot.slane %v263, 6
    %v2387 = vrot.slane %v501, 6
    %v2388 = vsel %vm2325, %v2386, %v2387
    %v2389 = vrot.slane %v266, 6
    %v2390 = vrot.slane %v502, 6
    %v2391 = vsel %vm2325, %v2389, %v2390
    %v2392 = vrot.slane %v269, 6
    %v2393 = vrot.slane %v503, 6
    %v2394 = vsel %vm2325, %v2392, %v2393
    %v2395 = vrot.slane %v272, 6
    %v2396 = vrot.slane %v504, 6
    %v2397 = vsel %vm2325, %v2395, %v2396
    %v2398 = vrot.slane %v275, 6
    %v2399 = vrot.slane %v505, 6
    %v2400 = vsel %vm2325, %v2398, %v2399
    %v2401 = vrot.slane %v278, 6
    %v2402 = vrot.slane %v506, 6
    %v2403 = vsel %vm2325, %v2401, %v2402
    %v2404 = vrot.slane %v281, 6
    %v2405 = vrot.slane %v507, 6
    %v2406 = vsel %vm2325, %v2404, %v2405
    %v2407 = vrot.slane %v284, 6
    %v2408 = vrot.slane %v508, 6
    %v2409 = vsel %vm2325, %v2407, %v2408
    %v2410 = vrot.slane %v287, 6
    %v2411 = vrot.slane %v509, 6
    %v2412 = vsel %vm2325, %v2410, %v2411
    %v2413 = vrot.slane %v290, 6
    %v2414 = vrot.slane %v510, 6
    %v2415 = vsel %vm2325, %v2413, %v2414
    %v2416 = vrot.slane %v293, 6
    %v2417 = vrot.slane %v511, 6
    %v2418 = vsel %vm2325, %v2416, %v2417
    %v2419 = vrot.slane %v296, 6
    %v2420 = vrot.slane %v512, 6
    %v2421 = vsel %vm2325, %v2419, %v2420
    %v2422 = vrot.slane %v299, 6
    %v2423 = vrot.slane %v513, 6
    %v2424 = vsel %vm2325, %v2422, %v2423
    %v2425 = vrot.slane %v302, 6
    %v2426 = vrot.slane %v514, 6
    %v2427 = vsel %vm2325, %v2425, %v2426
    %v2428 = vrot.slane %v305, 6
    %v2429 = vrot.slane %v515, 6
    %v2430 = vsel %vm2325, %v2428, %v2429
    %v2431 = vrot.slane %v308, 6
    %v2432 = vrot.slane %v516, 6
    %v2433 = vsel %vm2325, %v2431, %v2432
    %v2434 = vrot.slane %v311, 6
    %v2435 = vrot.slane %v517, 6
    %v2436 = vsel %vm2325, %v2434, %v2435
    %v2437 = vrot.slane %v314, 6
    %v2438 = vrot.slane %v518, 6
    %v2439 = vsel %vm2325, %v2437, %v2438
    %v2440 = vrot.slane %v317, 6
    %v2441 = vrot.slane %v519, 6
    %v2442 = vsel %vm2325, %v2440, %v2441
    %v2443 = vrot.slane %v320, 6
    %v2444 = vrot.slane %v520, 6
    %v2445 = vsel %vm2325, %v2443, %v2444
    %v2566 = vadd.f32 %v441, %v2326
    %v2567 = vadd.f32 %v203, %v2328
    %v2568 = vadd.f32 %v481, %v2327
    %v2569 = vadd.f32 %v442, %v2329
    %v2570 = vadd.f32 %v206, %v2331
    %v2571 = vadd.f32 %v482, %v2330
    %v2572 = vadd.f32 %v443, %v2332
    %v2573 = vadd.f32 %v209, %v2334
    %v2574 = vadd.f32 %v483, %v2333
    %v2575 = vadd.f32 %v444, %v2335
    %v2576 = vadd.f32 %v212, %v2337
    %v2577 = vadd.f32 %v484, %v2336
    %v2578 = vadd.f32 %v445, %v2338
    %v2579 = vadd.f32 %v215, %v2340
    %v2580 = vadd.f32 %v485, %v2339
    %v2581 = vadd.f32 %v446, %v2341
    %v2582 = vadd.f32 %v218, %v2343
    %v2583 = vadd.f32 %v486, %v2342
    %v2584 = vadd.f32 %v447, %v2344
    %v2585 = vadd.f32 %v221, %v2346
    %v2586 = vadd.f32 %v487, %v2345
    %v2587 = vadd.f32 %v448, %v2347
    %v2588 = vadd.f32 %v224, %v2349
    %v2589 = vadd.f32 %v488, %v2348
    %v2590 = vadd.f32 %v449, %v2350
    %v2591 = vadd.f32 %v227, %v2352
    %v2592 = vadd.f32 %v489, %v2351
    %v2593 = vadd.f32 %v450, %v2353
    %v2594 = vadd.f32 %v230, %v2355
    %v2595 = vadd.f32 %v490, %v2354
    %v2596 = vadd.f32 %v451, %v2356
    %v2597 = vadd.f32 %v233, %v2358
    %v2598 = vadd.f32 %v491, %v2357
    %v2599 = vadd.f32 %v452, %v2359
    %v2600 = vadd.f32 %v236, %v2361
    %v2601 = vadd.f32 %v492, %v2360
    %v2602 = vadd.f32 %v453, %v2362
    %v2603 = vadd.f32 %v239, %v2364
    %v2604 = vadd.f32 %v493, %v2363
    %v2605 = vadd.f32 %v454, %v2365
    %v2606 = vadd.f32 %v242, %v2367
    %v2607 = vadd.f32 %v494, %v2366
    %v2608 = vadd.f32 %v455, %v2368
    %v2609 = vadd.f32 %v245, %v2370
    %v2610 = vadd.f32 %v495, %v2369
    %v2611 = vadd.f32 %v456, %v2371
    %v2612 = vadd.f32 %v248, %v2373
    %v2613 = vadd.f32 %v496, %v2372
    %v2614 = vadd.f32 %v457, %v2374
    %v2615 = vadd.f32 %v251, %v2376
    %v2616 = vadd.f32 %v497, %v2375
    %v2617 = vadd.f32 %v458, %v2377
    %v2618 = vadd.f32 %v254, %v2379
    %v2619 = vadd.f32 %v498, %v2378
    %v2620 = vadd.f32 %v459, %v2380
    %v2621 = vadd.f32 %v257, %v2382
    %v2622 = vadd.f32 %v499, %v2381
    %v2623 = vadd.f32 %v460, %v2383
    %v2624 = vadd.f32 %v260, %v2385
    %v2625 = vadd.f32 %v500, %v2384
    %v2626 = vadd.f32 %v461, %v2386
    %v2627 = vadd.f32 %v263, %v2388
    %v2628 = vadd.f32 %v501, %v2387
    %v2629 = vadd.f32 %v462, %v2389
    %v2630 = vadd.f32 %v266, %v2391
    %v2631 = vadd.f32 %v502, %v2390
    %v2632 = vadd.f32 %v463, %v2392
    %v2633 = vadd.f32 %v269, %v2394
    %v2634 = vadd.f32 %v503, %v2393
    %v2635 = vadd.f32 %v464, %v2395
    %v2636 = vadd.f32 %v272, %v2397
    %v2637 = vadd.f32 %v504, %v2396
    %v2638 = vadd.f32 %v465, %v2398
    %v2639 = vadd.f32 %v275, %v2400
    %v2640 = vadd.f32 %v505, %v2399
    %v2641 = vadd.f32 %v466, %v2401
    %v2642 = vadd.f32 %v278, %v2403
    %v2643 = vadd.f32 %v506, %v2402
    %v2644 = vadd.f32 %v467, %v2404
    %v2645 = vadd.f32 %v281, %v2406
    %v2646 = vadd.f32 %v507, %v2405
    %v2647 = vadd.f32 %v468, %v2407
    %v2648 = vadd.f32 %v284, %v2409
    %v2649 = vadd.f32 %v508, %v2408
    %v2650 = vadd.f32 %v469, %v2410
    %v2651 = vadd.f32 %v287, %v2412
    %v2652 = vadd.f32 %v509, %v2411
    %v2653 = vadd.f32 %v470, %v2413
    %v2654 = vadd.f32 %v290, %v2415
    %v2655 = vadd.f32 %v510, %v2414
    %v2656 = vadd.f32 %v471, %v2416
    %v2657 = vadd.f32 %v293, %v2418
    %v2658 = vadd.f32 %v511, %v2417
    %v2659 = vadd.f32 %v472, %v2419
    %v2660 = vadd.f32 %v296, %v2421
    %v2661 = vadd.f32 %v512, %v2420
    %v2662 = vadd.f32 %v473, %v2422
    %v2663 = vadd.f32 %v299, %v2424
    %v2664 = vadd.f32 %v513, %v2423
    %v2665 = vadd.f32 %v474, %v2425
    %v2666 = vadd.f32 %v302, %v2427
    %v2667 = vadd.f32 %v514, %v2426
    %v2668 = vadd.f32 %v475, %v2428
    %v2669 = vadd.f32 %v305, %v2430
    %v2670 = vadd.f32 %v515, %v2429
    %v2671 = vadd.f32 %v476, %v2431
    %v2672 = vadd.f32 %v308, %v2433
    %v2673 = vadd.f32 %v516, %v2432
    %v2674 = vadd.f32 %v477, %v2434
    %v2675 = vadd.f32 %v311, %v2436
    %v2676 = vadd.f32 %v517, %v2435
    %v2677 = vadd.f32 %v478, %v2437
    %v2678 = vadd.f32 %v314, %v2439
    %v2679 = vadd.f32 %v518, %v2438
    %v2680 = vadd.f32 %v479, %v2440
    %v2681 = vadd.f32 %v317, %v2442
    %v2682 = vadd.f32 %v519, %v2441
    %v2683 = vadd.f32 %v480, %v2443
    %v2684 = vadd.f32 %v320, %v2445
    %v2685 = vadd.f32 %v520, %v2444
    %v2686 = vmul.f32 %v2566, 0.036000773
    %v2687 = vmul.f32 %v2567, 0.036000773
    %v2688 = vmul.f32 %v2568, 0.036000773
    %v2689 = vmul.f32 %v2569, 0.036000773
    %v2690 = vmul.f32 %v2570, 0.036000773
    %v2691 = vmul.f32 %v2571, 0.036000773
    %v2692 = vmul.f32 %v2572, 0.036000773
    %v2693 = vmul.f32 %v2573, 0.036000773
    %v2694 = vmul.f32 %v2574, 0.036000773
    %v2695 = vmul.f32 %v2575, 0.036000773
    %v2696 = vmul.f32 %v2576, 0.036000773
    %v2697 = vmul.f32 %v2577, 0.036000773
    %v2698 = vmul.f32 %v2578, 0.036000773
    %v2699 = vmul.f32 %v2579, 0.036000773
    %v2700 = vmul.f32 %v2580, 0.036000773
    %v2701 = vmul.f32 %v2581, 0.036000773
    %v2702 = vmul.f32 %v2582, 0.036000773
    %v2703 = vmul.f32 %v2583, 0.036000773
    %v2704 = vmul.f32 %v2584, 0.036000773
    %v2705 = vmul.f32 %v2585, 0.036000773
    %v2706 = vmul.f32 %v2586, 0.036000773
    %v2707 = vmul.f32 %v2587, 0.036000773
    %v2708 = vmul.f32 %v2588, 0.036000773
    %v2709 = vmul.f32 %v2589, 0.036000773
    %v2710 = vmul.f32 %v2590, 0.036000773
    %v2711 = vmul.f32 %v2591, 0.036000773
    %v2712 = vmul.f32 %v2592, 0.036000773
    %v2713 = vmul.f32 %v2593, 0.036000773
    %v2714 = vmul.f32 %v2594, 0.036000773
    %v2715 = vmul.f32 %v2595, 0.036000773
    %v2716 = vmul.f32 %v2596, 0.036000773
    %v2717 = vmul.f32 %v2597, 0.036000773
    %v2718 = vmul.f32 %v2598, 0.036000773
    %v2719 = vmul.f32 %v2599, 0.036000773
    %v2720 = vmul.f32 %v2600, 0.036000773
    %v2721 = vmul.f32 %v2601, 0.036000773
    %v2722 = vmul.f32 %v2602, 0.036000773
    %v2723 = vmul.f32 %v2603, 0.036000773
    %v2724 = vmul.f32 %v2604, 0.036000773
    %v2725 = vmul.f32 %v2605, 0.036000773
    %v2726 = vmul.f32 %v2606, 0.036000773
    %v2727 = vmul.f32 %v2607, 0.036000773
    %v2728 = vmul.f32 %v2608, 0.036000773
    %v2729 = vmul.f32 %v2609, 0.036000773
    %v2730 = vmul.f32 %v2610, 0.036000773
    %v2731 = vmul.f32 %v2611, 0.036000773
    %v2732 = vmul.f32 %v2612, 0.036000773
    %v2733 = vmul.f32 %v2613, 0.036000773
    %v2734 = vmul.f32 %v2614, 0.036000773
    %v2735 = vmul.f32 %v2615, 0.036000773
    %v2736 = vmul.f32 %v2616, 0.036000773
    %v2737 = vmul.f32 %v2617, 0.036000773
    %v2738 = vmul.f32 %v2618, 0.036000773
    %v2739 = vmul.f32 %v2619, 0.036000773
    %v2740 = vmul.f32 %v2620, 0.036000773
    %v2741 = vmul.f32 %v2621, 0.036000773
    %v2742 = vmul.f32 %v2622, 0.036000773
    %v2743 = vmul.f32 %v2623, 0.036000773
    %v2744 = vmul.f32 %v2624, 0.036000773
    %v2745 = vmul.f32 %v2625, 0.036000773
    %v2746 = vmul.f32 %v2626, 0.036000773
    %v2747 = vmul.f32 %v2627, 0.036000773
    %v2748 = vmul.f32 %v2628, 0.036000773
    %v2749 = vmul.f32 %v2629, 0.036000773
    %v2750 = vmul.f32 %v2630, 0.036000773
    %v2751 = vmul.f32 %v2631, 0.036000773
    %v2752 = vmul.f32 %v2632, 0.036000773
    %v2753 = vmul.f32 %v2633, 0.036000773
    %v2754 = vmul.f32 %v2634, 0.036000773
    %v2755 = vmul.f32 %v2635, 0.036000773
    %v2756 = vmul.f32 %v2636, 0.036000773
    %v2757 = vmul.f32 %v2637, 0.036000773
    %v2758 = vmul.f32 %v2638, 0.036000773
    %v2759 = vmul.f32 %v2639, 0.036000773
    %v2760 = vmul.f32 %v2640, 0.036000773
    %v2761 = vmul.f32 %v2641, 0.036000773
    %v2762 = vmul.f32 %v2642, 0.036000773
    %v2763 = vmul.f32 %v2643, 0.036000773
    %v2764 = vmul.f32 %v2644, 0.036000773
    %v2765 = vmul.f32 %v2645, 0.036000773
    %v2766 = vmul.f32 %v2646, 0.036000773
    %v2767 = vmul.f32 %v2647, 0.036000773
    %v2768 = vmul.f32 %v2648, 0.036000773
    %v2769 = vmul.f32 %v2649, 0.036000773
    %v2770 = vmul.f32 %v2650, 0.036000773
    %v2771 = vmul.f32 %v2651, 0.036000773
    %v2772 = vmul.f32 %v2652, 0.036000773
    %v2773 = vmul.f32 %v2653, 0.036000773
    %v2774 = vmul.f32 %v2654, 0.036000773
    %v2775 = vmul.f32 %v2655, 0.036000773
    %v2776 = vmul.f32 %v2656, 0.036000773
    %v2777 = vmul.f32 %v2657, 0.036000773
    %v2778 = vmul.f32 %v2658, 0.036000773
    %v2779 = vmul.f32 %v2659, 0.036000773
    %v2780 = vmul.f32 %v2660, 0.036000773
    %v2781 = vmul.f32 %v2661, 0.036000773
    %v2782 = vmul.f32 %v2662, 0.036000773
    %v2783 = vmul.f32 %v2663, 0.036000773
    %v2784 = vmul.f32 %v2664, 0.036000773
    %v2785 = vmul.f32 %v2665, 0.036000773
    %v2786 = vmul.f32 %v2666, 0.036000773
    %v2787 = vmul.f32 %v2667, 0.036000773
    %v2788 = vmul.f32 %v2668, 0.036000773
    %v2789 = vmul.f32 %v2669, 0.036000773
    %v2790 = vmul.f32 %v2670, 0.036000773
    %v2791 = vmul.f32 %v2671, 0.036000773
    %v2792 = vmul.f32 %v2672, 0.036000773
    %v2793 = vmul.f32 %v2673, 0.036000773
    %v2794 = vmul.f32 %v2674, 0.036000773
    %v2795 = vmul.f32 %v2675, 0.036000773
    %v2796 = vmul.f32 %v2676, 0.036000773
    %v2797 = vmul.f32 %v2677, 0.036000773
    %v2798 = vmul.f32 %v2678, 0.036000773
    %v2799 = vmul.f32 %v2679, 0.036000773
    %v2800 = vmul.f32 %v2680, 0.036000773
    %v2801 = vmul.f32 %v2681, 0.036000773
    %v2802 = vmul.f32 %v2682, 0.036000773
    %v2803 = vmul.f32 %v2683, 0.036000773
    %v2804 = vmul.f32 %v2684, 0.036000773
    %v2805 = vmul.f32 %v2685, 0.036000773
    %vm2926 = vcmask 1042432
    %v2927 = vrot.slane %v2686, 5
    %v2928 = vrot.slane %v2687, 5
    %v2929 = vsel %vm2926, %v2927, %v2928
    %v2930 = vrot.slane %v2688, 5
    %v2931 = vsel %vm2926, %v2928, %v2930
    %v2932 = vrot.slane %v2689, 5
    %v2933 = vrot.slane %v2690, 5
    %v2934 = vsel %vm2926, %v2932, %v2933
    %v2935 = vrot.slane %v2691, 5
    %v2936 = vsel %vm2926, %v2933, %v2935
    %v2937 = vrot.slane %v2692, 5
    %v2938 = vrot.slane %v2693, 5
    %v2939 = vsel %vm2926, %v2937, %v2938
    %v2940 = vrot.slane %v2694, 5
    %v2941 = vsel %vm2926, %v2938, %v2940
    %v2942 = vrot.slane %v2695, 5
    %v2943 = vrot.slane %v2696, 5
    %v2944 = vsel %vm2926, %v2942, %v2943
    %v2945 = vrot.slane %v2697, 5
    %v2946 = vsel %vm2926, %v2943, %v2945
    %v2947 = vrot.slane %v2698, 5
    %v2948 = vrot.slane %v2699, 5
    %v2949 = vsel %vm2926, %v2947, %v2948
    %v2950 = vrot.slane %v2700, 5
    %v2951 = vsel %vm2926, %v2948, %v2950
    %v2952 = vrot.slane %v2701, 5
    %v2953 = vrot.slane %v2702, 5
    %v2954 = vsel %vm2926, %v2952, %v2953
    %v2955 = vrot.slane %v2703, 5
    %v2956 = vsel %vm2926, %v2953, %v2955
    %v2957 = vrot.slane %v2704, 5
    %v2958 = vrot.slane %v2705, 5
    %v2959 = vsel %vm2926, %v2957, %v2958
    %v2960 = vrot.slane %v2706, 5
    %v2961 = vsel %vm2926, %v2958, %v2960
    %v2962 = vrot.slane %v2707, 5
    %v2963 = vrot.slane %v2708, 5
    %v2964 = vsel %vm2926, %v2962, %v2963
    %v2965 = vrot.slane %v2709, 5
    %v2966 = vsel %vm2926, %v2963, %v2965
    %v2967 = vrot.slane %v2710, 5
    %v2968 = vrot.slane %v2711, 5
    %v2969 = vsel %vm2926, %v2967, %v2968
    %v2970 = vrot.slane %v2712, 5
    %v2971 = vsel %vm2926, %v2968, %v2970
    %v2972 = vrot.slane %v2713, 5
    %v2973 = vrot.slane %v2714, 5
    %v2974 = vsel %vm2926, %v2972, %v2973
    %v2975 = vrot.slane %v2715, 5
    %v2976 = vsel %vm2926, %v2973, %v2975
    %v2977 = vrot.slane %v2716, 5
    %v2978 = vrot.slane %v2717, 5
    %v2979 = vsel %vm2926, %v2977, %v2978
    %v2980 = vrot.slane %v2718, 5
    %v2981 = vsel %vm2926, %v2978, %v2980
    %v2982 = vrot.slane %v2719, 5
    %v2983 = vrot.slane %v2720, 5
    %v2984 = vsel %vm2926, %v2982, %v2983
    %v2985 = vrot.slane %v2721, 5
    %v2986 = vsel %vm2926, %v2983, %v2985
    %v2987 = vrot.slane %v2722, 5
    %v2988 = vrot.slane %v2723, 5
    %v2989 = vsel %vm2926, %v2987, %v2988
    %v2990 = vrot.slane %v2724, 5
    %v2991 = vsel %vm2926, %v2988, %v2990
    %v2992 = vrot.slane %v2725, 5
    %v2993 = vrot.slane %v2726, 5
    %v2994 = vsel %vm2926, %v2992, %v2993
    %v2995 = vrot.slane %v2727, 5
    %v2996 = vsel %vm2926, %v2993, %v2995
    %v2997 = vrot.slane %v2728, 5
    %v2998 = vrot.slane %v2729, 5
    %v2999 = vsel %vm2926, %v2997, %v2998
    %v3000 = vrot.slane %v2730, 5
    %v3001 = vsel %vm2926, %v2998, %v3000
    %v3002 = vrot.slane %v2731, 5
    %v3003 = vrot.slane %v2732, 5
    %v3004 = vsel %vm2926, %v3002, %v3003
    %v3005 = vrot.slane %v2733, 5
    %v3006 = vsel %vm2926, %v3003, %v3005
    %v3007 = vrot.slane %v2734, 5
    %v3008 = vrot.slane %v2735, 5
    %v3009 = vsel %vm2926, %v3007, %v3008
    %v3010 = vrot.slane %v2736, 5
    %v3011 = vsel %vm2926, %v3008, %v3010
    %v3012 = vrot.slane %v2737, 5
    %v3013 = vrot.slane %v2738, 5
    %v3014 = vsel %vm2926, %v3012, %v3013
    %v3015 = vrot.slane %v2739, 5
    %v3016 = vsel %vm2926, %v3013, %v3015
    %v3017 = vrot.slane %v2740, 5
    %v3018 = vrot.slane %v2741, 5
    %v3019 = vsel %vm2926, %v3017, %v3018
    %v3020 = vrot.slane %v2742, 5
    %v3021 = vsel %vm2926, %v3018, %v3020
    %v3022 = vrot.slane %v2743, 5
    %v3023 = vrot.slane %v2744, 5
    %v3024 = vsel %vm2926, %v3022, %v3023
    %v3025 = vrot.slane %v2745, 5
    %v3026 = vsel %vm2926, %v3023, %v3025
    %v3027 = vrot.slane %v2746, 5
    %v3028 = vrot.slane %v2747, 5
    %v3029 = vsel %vm2926, %v3027, %v3028
    %v3030 = vrot.slane %v2748, 5
    %v3031 = vsel %vm2926, %v3028, %v3030
    %v3032 = vrot.slane %v2749, 5
    %v3033 = vrot.slane %v2750, 5
    %v3034 = vsel %vm2926, %v3032, %v3033
    %v3035 = vrot.slane %v2751, 5
    %v3036 = vsel %vm2926, %v3033, %v3035
    %v3037 = vrot.slane %v2752, 5
    %v3038 = vrot.slane %v2753, 5
    %v3039 = vsel %vm2926, %v3037, %v3038
    %v3040 = vrot.slane %v2754, 5
    %v3041 = vsel %vm2926, %v3038, %v3040
    %v3042 = vrot.slane %v2755, 5
    %v3043 = vrot.slane %v2756, 5
    %v3044 = vsel %vm2926, %v3042, %v3043
    %v3045 = vrot.slane %v2757, 5
    %v3046 = vsel %vm2926, %v3043, %v3045
    %v3047 = vrot.slane %v2758, 5
    %v3048 = vrot.slane %v2759, 5
    %v3049 = vsel %vm2926, %v3047, %v3048
    %v3050 = vrot.slane %v2760, 5
    %v3051 = vsel %vm2926, %v3048, %v3050
    %v3052 = vrot.slane %v2761, 5
    %v3053 = vrot.slane %v2762, 5
    %v3054 = vsel %vm2926, %v3052, %v3053
    %v3055 = vrot.slane %v2763, 5
    %v3056 = vsel %vm2926, %v3053, %v3055
    %v3057 = vrot.slane %v2764, 5
    %v3058 = vrot.slane %v2765, 5
    %v3059 = vsel %vm2926, %v3057, %v3058
    %v3060 = vrot.slane %v2766, 5
    %v3061 = vsel %vm2926, %v3058, %v3060
    %v3062 = vrot.slane %v2767, 5
    %v3063 = vrot.slane %v2768, 5
    %v3064 = vsel %vm2926, %v3062, %v3063
    %v3065 = vrot.slane %v2769, 5
    %v3066 = vsel %vm2926, %v3063, %v3065
    %v3067 = vrot.slane %v2770, 5
    %v3068 = vrot.slane %v2771, 5
    %v3069 = vsel %vm2926, %v3067, %v3068
    %v3070 = vrot.slane %v2772, 5
    %v3071 = vsel %vm2926, %v3068, %v3070
    %v3072 = vrot.slane %v2773, 5
    %v3073 = vrot.slane %v2774, 5
    %v3074 = vsel %vm2926, %v3072, %v3073
    %v3075 = vrot.slane %v2775, 5
    %v3076 = vsel %vm2926, %v3073, %v3075
    %v3077 = vrot.slane %v2776, 5
    %v3078 = vrot.slane %v2777, 5
    %v3079 = vsel %vm2926, %v3077, %v3078
    %v3080 = vrot.slane %v2778, 5
    %v3081 = vsel %vm2926, %v3078, %v3080
    %v3082 = vrot.slane %v2779, 5
    %v3083 = vrot.slane %v2780, 5
    %v3084 = vsel %vm2926, %v3082, %v3083
    %v3085 = vrot.slane %v2781, 5
    %v3086 = vsel %vm2926, %v3083, %v3085
    %v3087 = vrot.slane %v2782, 5
    %v3088 = vrot.slane %v2783, 5
    %v3089 = vsel %vm2926, %v3087, %v3088
    %v3090 = vrot.slane %v2784, 5
    %v3091 = vsel %vm2926, %v3088, %v3090
    %v3092 = vrot.slane %v2785, 5
    %v3093 = vrot.slane %v2786, 5
    %v3094 = vsel %vm2926, %v3092, %v3093
    %v3095 = vrot.slane %v2787, 5
    %v3096 = vsel %vm2926, %v3093, %v3095
    %v3097 = vrot.slane %v2788, 5
    %v3098 = vrot.slane %v2789, 5
    %v3099 = vsel %vm2926, %v3097, %v3098
    %v3100 = vrot.slane %v2790, 5
    %v3101 = vsel %vm2926, %v3098, %v3100
    %v3102 = vrot.slane %v2791, 5
    %v3103 = vrot.slane %v2792, 5
    %v3104 = vsel %vm2926, %v3102, %v3103
    %v3105 = vrot.slane %v2793, 5
    %v3106 = vsel %vm2926, %v3103, %v3105
    %v3107 = vrot.slane %v2794, 5
    %v3108 = vrot.slane %v2795, 5
    %v3109 = vsel %vm2926, %v3107, %v3108
    %v3110 = vrot.slane %v2796, 5
    %v3111 = vsel %vm2926, %v3108, %v3110
    %v3112 = vrot.slane %v2797, 5
    %v3113 = vrot.slane %v2798, 5
    %v3114 = vsel %vm2926, %v3112, %v3113
    %v3115 = vrot.slane %v2799, 5
    %v3116 = vsel %vm2926, %v3113, %v3115
    %v3117 = vrot.slane %v2800, 5
    %v3118 = vrot.slane %v2801, 5
    %v3119 = vsel %vm2926, %v3117, %v3118
    %v3120 = vrot.slane %v2802, 5
    %v3121 = vsel %vm2926, %v3118, %v3120
    %v3122 = vrot.slane %v2803, 5
    %v3123 = vrot.slane %v2804, 5
    %v3124 = vsel %vm2926, %v3122, %v3123
    %v3125 = vrot.slane %v2805, 5
    %v3126 = vsel %vm2926, %v3123, %v3125
    %v3247 = vadd.f32 %v2205, %v2927
    %v3248 = vadd.f32 %v2206, %v2929
    %v3249 = vadd.f32 %v2207, %v2931
    %v3250 = vadd.f32 %v2208, %v2932
    %v3251 = vadd.f32 %v2209, %v2934
    %v3252 = vadd.f32 %v2210, %v2936
    %v3253 = vadd.f32 %v2211, %v2937
    %v3254 = vadd.f32 %v2212, %v2939
    %v3255 = vadd.f32 %v2213, %v2941
    %v3256 = vadd.f32 %v2214, %v2942
    %v3257 = vadd.f32 %v2215, %v2944
    %v3258 = vadd.f32 %v2216, %v2946
    %v3259 = vadd.f32 %v2217, %v2947
    %v3260 = vadd.f32 %v2218, %v2949
    %v3261 = vadd.f32 %v2219, %v2951
    %v3262 = vadd.f32 %v2220, %v2952
    %v3263 = vadd.f32 %v2221, %v2954
    %v3264 = vadd.f32 %v2222, %v2956
    %v3265 = vadd.f32 %v2223, %v2957
    %v3266 = vadd.f32 %v2224, %v2959
    %v3267 = vadd.f32 %v2225, %v2961
    %v3268 = vadd.f32 %v2226, %v2962
    %v3269 = vadd.f32 %v2227, %v2964
    %v3270 = vadd.f32 %v2228, %v2966
    %v3271 = vadd.f32 %v2229, %v2967
    %v3272 = vadd.f32 %v2230, %v2969
    %v3273 = vadd.f32 %v2231, %v2971
    %v3274 = vadd.f32 %v2232, %v2972
    %v3275 = vadd.f32 %v2233, %v2974
    %v3276 = vadd.f32 %v2234, %v2976
    %v3277 = vadd.f32 %v2235, %v2977
    %v3278 = vadd.f32 %v2236, %v2979
    %v3279 = vadd.f32 %v2237, %v2981
    %v3280 = vadd.f32 %v2238, %v2982
    %v3281 = vadd.f32 %v2239, %v2984
    %v3282 = vadd.f32 %v2240, %v2986
    %v3283 = vadd.f32 %v2241, %v2987
    %v3284 = vadd.f32 %v2242, %v2989
    %v3285 = vadd.f32 %v2243, %v2991
    %v3286 = vadd.f32 %v2244, %v2992
    %v3287 = vadd.f32 %v2245, %v2994
    %v3288 = vadd.f32 %v2246, %v2996
    %v3289 = vadd.f32 %v2247, %v2997
    %v3290 = vadd.f32 %v2248, %v2999
    %v3291 = vadd.f32 %v2249, %v3001
    %v3292 = vadd.f32 %v2250, %v3002
    %v3293 = vadd.f32 %v2251, %v3004
    %v3294 = vadd.f32 %v2252, %v3006
    %v3295 = vadd.f32 %v2253, %v3007
    %v3296 = vadd.f32 %v2254, %v3009
    %v3297 = vadd.f32 %v2255, %v3011
    %v3298 = vadd.f32 %v2256, %v3012
    %v3299 = vadd.f32 %v2257, %v3014
    %v3300 = vadd.f32 %v2258, %v3016
    %v3301 = vadd.f32 %v2259, %v3017
    %v3302 = vadd.f32 %v2260, %v3019
    %v3303 = vadd.f32 %v2261, %v3021
    %v3304 = vadd.f32 %v2262, %v3022
    %v3305 = vadd.f32 %v2263, %v3024
    %v3306 = vadd.f32 %v2264, %v3026
    %v3307 = vadd.f32 %v2265, %v3027
    %v3308 = vadd.f32 %v2266, %v3029
    %v3309 = vadd.f32 %v2267, %v3031
    %v3310 = vadd.f32 %v2268, %v3032
    %v3311 = vadd.f32 %v2269, %v3034
    %v3312 = vadd.f32 %v2270, %v3036
    %v3313 = vadd.f32 %v2271, %v3037
    %v3314 = vadd.f32 %v2272, %v3039
    %v3315 = vadd.f32 %v2273, %v3041
    %v3316 = vadd.f32 %v2274, %v3042
    %v3317 = vadd.f32 %v2275, %v3044
    %v3318 = vadd.f32 %v2276, %v3046
    %v3319 = vadd.f32 %v2277, %v3047
    %v3320 = vadd.f32 %v2278, %v3049
    %v3321 = vadd.f32 %v2279, %v3051
    %v3322 = vadd.f32 %v2280, %v3052
    %v3323 = vadd.f32 %v2281, %v3054
    %v3324 = vadd.f32 %v2282, %v3056
    %v3325 = vadd.f32 %v2283, %v3057
    %v3326 = vadd.f32 %v2284, %v3059
    %v3327 = vadd.f32 %v2285, %v3061
    %v3328 = vadd.f32 %v2286, %v3062
    %v3329 = vadd.f32 %v2287, %v3064
    %v3330 = vadd.f32 %v2288, %v3066
    %v3331 = vadd.f32 %v2289, %v3067
    %v3332 = vadd.f32 %v2290, %v3069
    %v3333 = vadd.f32 %v2291, %v3071
    %v3334 = vadd.f32 %v2292, %v3072
    %v3335 = vadd.f32 %v2293, %v3074
    %v3336 = vadd.f32 %v2294, %v3076
    %v3337 = vadd.f32 %v2295, %v3077
    %v3338 = vadd.f32 %v2296, %v3079
    %v3339 = vadd.f32 %v2297, %v3081
    %v3340 = vadd.f32 %v2298, %v3082
    %v3341 = vadd.f32 %v2299, %v3084
    %v3342 = vadd.f32 %v2300, %v3086
    %v3343 = vadd.f32 %v2301, %v3087
    %v3344 = vadd.f32 %v2302, %v3089
    %v3345 = vadd.f32 %v2303, %v3091
    %v3346 = vadd.f32 %v2304, %v3092
    %v3347 = vadd.f32 %v2305, %v3094
    %v3348 = vadd.f32 %v2306, %v3096
    %v3349 = vadd.f32 %v2307, %v3097
    %v3350 = vadd.f32 %v2308, %v3099
    %v3351 = vadd.f32 %v2309, %v3101
    %v3352 = vadd.f32 %v2310, %v3102
    %v3353 = vadd.f32 %v2311, %v3104
    %v3354 = vadd.f32 %v2312, %v3106
    %v3355 = vadd.f32 %v2313, %v3107
    %v3356 = vadd.f32 %v2314, %v3109
    %v3357 = vadd.f32 %v2315, %v3111
    %v3358 = vadd.f32 %v2316, %v3112
    %v3359 = vadd.f32 %v2317, %v3114
    %v3360 = vadd.f32 %v2318, %v3116
    %v3361 = vadd.f32 %v2319, %v3117
    %v3362 = vadd.f32 %v2320, %v3119
    %v3363 = vadd.f32 %v2321, %v3121
    %v3364 = vadd.f32 %v2322, %v3122
    %v3365 = vadd.f32 %v2323, %v3124
    %v3366 = vadd.f32 %v2324, %v3126
    %v3407 = vrot.slane %v441, 4
    %v3408 = vrot.slane %v203, 4
    %v3409 = vsel %vm1884, %v3407, %v3408
    %v3410 = vrot.slane %v481, 4
    %v3411 = vsel %vm1884, %v3408, %v3410
    %v3412 = vrot.slane %v442, 4
    %v3413 = vrot.slane %v206, 4
    %v3414 = vsel %vm1884, %v3412, %v3413
    %v3415 = vrot.slane %v482, 4
    %v3416 = vsel %vm1884, %v3413, %v3415
    %v3417 = vrot.slane %v443, 4
    %v3418 = vrot.slane %v209, 4
    %v3419 = vsel %vm1884, %v3417, %v3418
    %v3420 = vrot.slane %v483, 4
    %v3421 = vsel %vm1884, %v3418, %v3420
    %v3422 = vrot.slane %v444, 4
    %v3423 = vrot.slane %v212, 4
    %v3424 = vsel %vm1884, %v3422, %v3423
    %v3425 = vrot.slane %v484, 4
    %v3426 = vsel %vm1884, %v3423, %v3425
    %v3427 = vrot.slane %v445, 4
    %v3428 = vrot.slane %v215, 4
    %v3429 = vsel %vm1884, %v3427, %v3428
    %v3430 = vrot.slane %v485, 4
    %v3431 = vsel %vm1884, %v3428, %v3430
    %v3432 = vrot.slane %v446, 4
    %v3433 = vrot.slane %v218, 4
    %v3434 = vsel %vm1884, %v3432, %v3433
    %v3435 = vrot.slane %v486, 4
    %v3436 = vsel %vm1884, %v3433, %v3435
    %v3437 = vrot.slane %v447, 4
    %v3438 = vrot.slane %v221, 4
    %v3439 = vsel %vm1884, %v3437, %v3438
    %v3440 = vrot.slane %v487, 4
    %v3441 = vsel %vm1884, %v3438, %v3440
    %v3442 = vrot.slane %v448, 4
    %v3443 = vrot.slane %v224, 4
    %v3444 = vsel %vm1884, %v3442, %v3443
    %v3445 = vrot.slane %v488, 4
    %v3446 = vsel %vm1884, %v3443, %v3445
    %v3447 = vrot.slane %v449, 4
    %v3448 = vrot.slane %v227, 4
    %v3449 = vsel %vm1884, %v3447, %v3448
    %v3450 = vrot.slane %v489, 4
    %v3451 = vsel %vm1884, %v3448, %v3450
    %v3452 = vrot.slane %v450, 4
    %v3453 = vrot.slane %v230, 4
    %v3454 = vsel %vm1884, %v3452, %v3453
    %v3455 = vrot.slane %v490, 4
    %v3456 = vsel %vm1884, %v3453, %v3455
    %v3457 = vrot.slane %v451, 4
    %v3458 = vrot.slane %v233, 4
    %v3459 = vsel %vm1884, %v3457, %v3458
    %v3460 = vrot.slane %v491, 4
    %v3461 = vsel %vm1884, %v3458, %v3460
    %v3462 = vrot.slane %v452, 4
    %v3463 = vrot.slane %v236, 4
    %v3464 = vsel %vm1884, %v3462, %v3463
    %v3465 = vrot.slane %v492, 4
    %v3466 = vsel %vm1884, %v3463, %v3465
    %v3467 = vrot.slane %v453, 4
    %v3468 = vrot.slane %v239, 4
    %v3469 = vsel %vm1884, %v3467, %v3468
    %v3470 = vrot.slane %v493, 4
    %v3471 = vsel %vm1884, %v3468, %v3470
    %v3472 = vrot.slane %v454, 4
    %v3473 = vrot.slane %v242, 4
    %v3474 = vsel %vm1884, %v3472, %v3473
    %v3475 = vrot.slane %v494, 4
    %v3476 = vsel %vm1884, %v3473, %v3475
    %v3477 = vrot.slane %v455, 4
    %v3478 = vrot.slane %v245, 4
    %v3479 = vsel %vm1884, %v3477, %v3478
    %v3480 = vrot.slane %v495, 4
    %v3481 = vsel %vm1884, %v3478, %v3480
    %v3482 = vrot.slane %v456, 4
    %v3483 = vrot.slane %v248, 4
    %v3484 = vsel %vm1884, %v3482, %v3483
    %v3485 = vrot.slane %v496, 4
    %v3486 = vsel %vm1884, %v3483, %v3485
    %v3487 = vrot.slane %v457, 4
    %v3488 = vrot.slane %v251, 4
    %v3489 = vsel %vm1884, %v3487, %v3488
    %v3490 = vrot.slane %v497, 4
    %v3491 = vsel %vm1884, %v3488, %v3490
    %v3492 = vrot.slane %v458, 4
    %v3493 = vrot.slane %v254, 4
    %v3494 = vsel %vm1884, %v3492, %v3493
    %v3495 = vrot.slane %v498, 4
    %v3496 = vsel %vm1884, %v3493, %v3495
    %v3497 = vrot.slane %v459, 4
    %v3498 = vrot.slane %v257, 4
    %v3499 = vsel %vm1884, %v3497, %v3498
    %v3500 = vrot.slane %v499, 4
    %v3501 = vsel %vm1884, %v3498, %v3500
    %v3502 = vrot.slane %v460, 4
    %v3503 = vrot.slane %v260, 4
    %v3504 = vsel %vm1884, %v3502, %v3503
    %v3505 = vrot.slane %v500, 4
    %v3506 = vsel %vm1884, %v3503, %v3505
    %v3507 = vrot.slane %v461, 4
    %v3508 = vrot.slane %v263, 4
    %v3509 = vsel %vm1884, %v3507, %v3508
    %v3510 = vrot.slane %v501, 4
    %v3511 = vsel %vm1884, %v3508, %v3510
    %v3512 = vrot.slane %v462, 4
    %v3513 = vrot.slane %v266, 4
    %v3514 = vsel %vm1884, %v3512, %v3513
    %v3515 = vrot.slane %v502, 4
    %v3516 = vsel %vm1884, %v3513, %v3515
    %v3517 = vrot.slane %v463, 4
    %v3518 = vrot.slane %v269, 4
    %v3519 = vsel %vm1884, %v3517, %v3518
    %v3520 = vrot.slane %v503, 4
    %v3521 = vsel %vm1884, %v3518, %v3520
    %v3522 = vrot.slane %v464, 4
    %v3523 = vrot.slane %v272, 4
    %v3524 = vsel %vm1884, %v3522, %v3523
    %v3525 = vrot.slane %v504, 4
    %v3526 = vsel %vm1884, %v3523, %v3525
    %v3527 = vrot.slane %v465, 4
    %v3528 = vrot.slane %v275, 4
    %v3529 = vsel %vm1884, %v3527, %v3528
    %v3530 = vrot.slane %v505, 4
    %v3531 = vsel %vm1884, %v3528, %v3530
    %v3532 = vrot.slane %v466, 4
    %v3533 = vrot.slane %v278, 4
    %v3534 = vsel %vm1884, %v3532, %v3533
    %v3535 = vrot.slane %v506, 4
    %v3536 = vsel %vm1884, %v3533, %v3535
    %v3537 = vrot.slane %v467, 4
    %v3538 = vrot.slane %v281, 4
    %v3539 = vsel %vm1884, %v3537, %v3538
    %v3540 = vrot.slane %v507, 4
    %v3541 = vsel %vm1884, %v3538, %v3540
    %v3542 = vrot.slane %v468, 4
    %v3543 = vrot.slane %v284, 4
    %v3544 = vsel %vm1884, %v3542, %v3543
    %v3545 = vrot.slane %v508, 4
    %v3546 = vsel %vm1884, %v3543, %v3545
    %v3547 = vrot.slane %v469, 4
    %v3548 = vrot.slane %v287, 4
    %v3549 = vsel %vm1884, %v3547, %v3548
    %v3550 = vrot.slane %v509, 4
    %v3551 = vsel %vm1884, %v3548, %v3550
    %v3552 = vrot.slane %v470, 4
    %v3553 = vrot.slane %v290, 4
    %v3554 = vsel %vm1884, %v3552, %v3553
    %v3555 = vrot.slane %v510, 4
    %v3556 = vsel %vm1884, %v3553, %v3555
    %v3557 = vrot.slane %v471, 4
    %v3558 = vrot.slane %v293, 4
    %v3559 = vsel %vm1884, %v3557, %v3558
    %v3560 = vrot.slane %v511, 4
    %v3561 = vsel %vm1884, %v3558, %v3560
    %v3562 = vrot.slane %v472, 4
    %v3563 = vrot.slane %v296, 4
    %v3564 = vsel %vm1884, %v3562, %v3563
    %v3565 = vrot.slane %v512, 4
    %v3566 = vsel %vm1884, %v3563, %v3565
    %v3567 = vrot.slane %v473, 4
    %v3568 = vrot.slane %v299, 4
    %v3569 = vsel %vm1884, %v3567, %v3568
    %v3570 = vrot.slane %v513, 4
    %v3571 = vsel %vm1884, %v3568, %v3570
    %v3572 = vrot.slane %v474, 4
    %v3573 = vrot.slane %v302, 4
    %v3574 = vsel %vm1884, %v3572, %v3573
    %v3575 = vrot.slane %v514, 4
    %v3576 = vsel %vm1884, %v3573, %v3575
    %v3577 = vrot.slane %v475, 4
    %v3578 = vrot.slane %v305, 4
    %v3579 = vsel %vm1884, %v3577, %v3578
    %v3580 = vrot.slane %v515, 4
    %v3581 = vsel %vm1884, %v3578, %v3580
    %v3582 = vrot.slane %v476, 4
    %v3583 = vrot.slane %v308, 4
    %v3584 = vsel %vm1884, %v3582, %v3583
    %v3585 = vrot.slane %v516, 4
    %v3586 = vsel %vm1884, %v3583, %v3585
    %v3587 = vrot.slane %v477, 4
    %v3588 = vrot.slane %v311, 4
    %v3589 = vsel %vm1884, %v3587, %v3588
    %v3590 = vrot.slane %v517, 4
    %v3591 = vsel %vm1884, %v3588, %v3590
    %v3592 = vrot.slane %v478, 4
    %v3593 = vrot.slane %v314, 4
    %v3594 = vsel %vm1884, %v3592, %v3593
    %v3595 = vrot.slane %v518, 4
    %v3596 = vsel %vm1884, %v3593, %v3595
    %v3597 = vrot.slane %v479, 4
    %v3598 = vrot.slane %v317, 4
    %v3599 = vsel %vm1884, %v3597, %v3598
    %v3600 = vrot.slane %v519, 4
    %v3601 = vsel %vm1884, %v3598, %v3600
    %v3602 = vrot.slane %v480, 4
    %v3603 = vrot.slane %v320, 4
    %v3604 = vsel %vm1884, %v3602, %v3603
    %v3605 = vrot.slane %v520, 4
    %v3606 = vsel %vm1884, %v3603, %v3605
    %v3727 = vadd.f32 %v441, %v3409
    %v3728 = vadd.f32 %v203, %v3411
    %v3729 = vadd.f32 %v481, %v3410
    %v3730 = vadd.f32 %v442, %v3414
    %v3731 = vadd.f32 %v206, %v3416
    %v3732 = vadd.f32 %v482, %v3415
    %v3733 = vadd.f32 %v443, %v3419
    %v3734 = vadd.f32 %v209, %v3421
    %v3735 = vadd.f32 %v483, %v3420
    %v3736 = vadd.f32 %v444, %v3424
    %v3737 = vadd.f32 %v212, %v3426
    %v3738 = vadd.f32 %v484, %v3425
    %v3739 = vadd.f32 %v445, %v3429
    %v3740 = vadd.f32 %v215, %v3431
    %v3741 = vadd.f32 %v485, %v3430
    %v3742 = vadd.f32 %v446, %v3434
    %v3743 = vadd.f32 %v218, %v3436
    %v3744 = vadd.f32 %v486, %v3435
    %v3745 = vadd.f32 %v447, %v3439
    %v3746 = vadd.f32 %v221, %v3441
    %v3747 = vadd.f32 %v487, %v3440
    %v3748 = vadd.f32 %v448, %v3444
    %v3749 = vadd.f32 %v224, %v3446
    %v3750 = vadd.f32 %v488, %v3445
    %v3751 = vadd.f32 %v449, %v3449
    %v3752 = vadd.f32 %v227, %v3451
    %v3753 = vadd.f32 %v489, %v3450
    %v3754 = vadd.f32 %v450, %v3454
    %v3755 = vadd.f32 %v230, %v3456
    %v3756 = vadd.f32 %v490, %v3455
    %v3757 = vadd.f32 %v451, %v3459
    %v3758 = vadd.f32 %v233, %v3461
    %v3759 = vadd.f32 %v491, %v3460
    %v3760 = vadd.f32 %v452, %v3464
    %v3761 = vadd.f32 %v236, %v3466
    %v3762 = vadd.f32 %v492, %v3465
    %v3763 = vadd.f32 %v453, %v3469
    %v3764 = vadd.f32 %v239, %v3471
    %v3765 = vadd.f32 %v493, %v3470
    %v3766 = vadd.f32 %v454, %v3474
    %v3767 = vadd.f32 %v242, %v3476
    %v3768 = vadd.f32 %v494, %v3475
    %v3769 = vadd.f32 %v455, %v3479
    %v3770 = vadd.f32 %v245, %v3481
    %v3771 = vadd.f32 %v495, %v3480
    %v3772 = vadd.f32 %v456, %v3484
    %v3773 = vadd.f32 %v248, %v3486
    %v3774 = vadd.f32 %v496, %v3485
    %v3775 = vadd.f32 %v457, %v3489
    %v3776 = vadd.f32 %v251, %v3491
    %v3777 = vadd.f32 %v497, %v3490
    %v3778 = vadd.f32 %v458, %v3494
    %v3779 = vadd.f32 %v254, %v3496
    %v3780 = vadd.f32 %v498, %v3495
    %v3781 = vadd.f32 %v459, %v3499
    %v3782 = vadd.f32 %v257, %v3501
    %v3783 = vadd.f32 %v499, %v3500
    %v3784 = vadd.f32 %v460, %v3504
    %v3785 = vadd.f32 %v260, %v3506
    %v3786 = vadd.f32 %v500, %v3505
    %v3787 = vadd.f32 %v461, %v3509
    %v3788 = vadd.f32 %v263, %v3511
    %v3789 = vadd.f32 %v501, %v3510
    %v3790 = vadd.f32 %v462, %v3514
    %v3791 = vadd.f32 %v266, %v3516
    %v3792 = vadd.f32 %v502, %v3515
    %v3793 = vadd.f32 %v463, %v3519
    %v3794 = vadd.f32 %v269, %v3521
    %v3795 = vadd.f32 %v503, %v3520
    %v3796 = vadd.f32 %v464, %v3524
    %v3797 = vadd.f32 %v272, %v3526
    %v3798 = vadd.f32 %v504, %v3525
    %v3799 = vadd.f32 %v465, %v3529
    %v3800 = vadd.f32 %v275, %v3531
    %v3801 = vadd.f32 %v505, %v3530
    %v3802 = vadd.f32 %v466, %v3534
    %v3803 = vadd.f32 %v278, %v3536
    %v3804 = vadd.f32 %v506, %v3535
    %v3805 = vadd.f32 %v467, %v3539
    %v3806 = vadd.f32 %v281, %v3541
    %v3807 = vadd.f32 %v507, %v3540
    %v3808 = vadd.f32 %v468, %v3544
    %v3809 = vadd.f32 %v284, %v3546
    %v3810 = vadd.f32 %v508, %v3545
    %v3811 = vadd.f32 %v469, %v3549
    %v3812 = vadd.f32 %v287, %v3551
    %v3813 = vadd.f32 %v509, %v3550
    %v3814 = vadd.f32 %v470, %v3554
    %v3815 = vadd.f32 %v290, %v3556
    %v3816 = vadd.f32 %v510, %v3555
    %v3817 = vadd.f32 %v471, %v3559
    %v3818 = vadd.f32 %v293, %v3561
    %v3819 = vadd.f32 %v511, %v3560
    %v3820 = vadd.f32 %v472, %v3564
    %v3821 = vadd.f32 %v296, %v3566
    %v3822 = vadd.f32 %v512, %v3565
    %v3823 = vadd.f32 %v473, %v3569
    %v3824 = vadd.f32 %v299, %v3571
    %v3825 = vadd.f32 %v513, %v3570
    %v3826 = vadd.f32 %v474, %v3574
    %v3827 = vadd.f32 %v302, %v3576
    %v3828 = vadd.f32 %v514, %v3575
    %v3829 = vadd.f32 %v475, %v3579
    %v3830 = vadd.f32 %v305, %v3581
    %v3831 = vadd.f32 %v515, %v3580
    %v3832 = vadd.f32 %v476, %v3584
    %v3833 = vadd.f32 %v308, %v3586
    %v3834 = vadd.f32 %v516, %v3585
    %v3835 = vadd.f32 %v477, %v3589
    %v3836 = vadd.f32 %v311, %v3591
    %v3837 = vadd.f32 %v517, %v3590
    %v3838 = vadd.f32 %v478, %v3594
    %v3839 = vadd.f32 %v314, %v3596
    %v3840 = vadd.f32 %v518, %v3595
    %v3841 = vadd.f32 %v479, %v3599
    %v3842 = vadd.f32 %v317, %v3601
    %v3843 = vadd.f32 %v519, %v3600
    %v3844 = vadd.f32 %v480, %v3604
    %v3845 = vadd.f32 %v320, %v3606
    %v3846 = vadd.f32 %v520, %v3605
    %v3847 = vmul.f32 %v3727, 0.1093607
    %v3848 = vmul.f32 %v3728, 0.1093607
    %v3849 = vmul.f32 %v3729, 0.1093607
    %v3850 = vmul.f32 %v3730, 0.1093607
    %v3851 = vmul.f32 %v3731, 0.1093607
    %v3852 = vmul.f32 %v3732, 0.1093607
    %v3853 = vmul.f32 %v3733, 0.1093607
    %v3854 = vmul.f32 %v3734, 0.1093607
    %v3855 = vmul.f32 %v3735, 0.1093607
    %v3856 = vmul.f32 %v3736, 0.1093607
    %v3857 = vmul.f32 %v3737, 0.1093607
    %v3858 = vmul.f32 %v3738, 0.1093607
    %v3859 = vmul.f32 %v3739, 0.1093607
    %v3860 = vmul.f32 %v3740, 0.1093607
    %v3861 = vmul.f32 %v3741, 0.1093607
    %v3862 = vmul.f32 %v3742, 0.1093607
    %v3863 = vmul.f32 %v3743, 0.1093607
    %v3864 = vmul.f32 %v3744, 0.1093607
    %v3865 = vmul.f32 %v3745, 0.1093607
    %v3866 = vmul.f32 %v3746, 0.1093607
    %v3867 = vmul.f32 %v3747, 0.1093607
    %v3868 = vmul.f32 %v3748, 0.1093607
    %v3869 = vmul.f32 %v3749, 0.1093607
    %v3870 = vmul.f32 %v3750, 0.1093607
    %v3871 = vmul.f32 %v3751, 0.1093607
    %v3872 = vmul.f32 %v3752, 0.1093607
    %v3873 = vmul.f32 %v3753, 0.1093607
    %v3874 = vmul.f32 %v3754, 0.1093607
    %v3875 = vmul.f32 %v3755, 0.1093607
    %v3876 = vmul.f32 %v3756, 0.1093607
    %v3877 = vmul.f32 %v3757, 0.1093607
    %v3878 = vmul.f32 %v3758, 0.1093607
    %v3879 = vmul.f32 %v3759, 0.1093607
    %v3880 = vmul.f32 %v3760, 0.1093607
    %v3881 = vmul.f32 %v3761, 0.1093607
    %v3882 = vmul.f32 %v3762, 0.1093607
    %v3883 = vmul.f32 %v3763, 0.1093607
    %v3884 = vmul.f32 %v3764, 0.1093607
    %v3885 = vmul.f32 %v3765, 0.1093607
    %v3886 = vmul.f32 %v3766, 0.1093607
    %v3887 = vmul.f32 %v3767, 0.1093607
    %v3888 = vmul.f32 %v3768, 0.1093607
    %v3889 = vmul.f32 %v3769, 0.1093607
    %v3890 = vmul.f32 %v3770, 0.1093607
    %v3891 = vmul.f32 %v3771, 0.1093607
    %v3892 = vmul.f32 %v3772, 0.1093607
    %v3893 = vmul.f32 %v3773, 0.1093607
    %v3894 = vmul.f32 %v3774, 0.1093607
    %v3895 = vmul.f32 %v3775, 0.1093607
    %v3896 = vmul.f32 %v3776, 0.1093607
    %v3897 = vmul.f32 %v3777, 0.1093607
    %v3898 = vmul.f32 %v3778, 0.1093607
    %v3899 = vmul.f32 %v3779, 0.1093607
    %v3900 = vmul.f32 %v3780, 0.1093607
    %v3901 = vmul.f32 %v3781, 0.1093607
    %v3902 = vmul.f32 %v3782, 0.1093607
    %v3903 = vmul.f32 %v3783, 0.1093607
    %v3904 = vmul.f32 %v3784, 0.1093607
    %v3905 = vmul.f32 %v3785, 0.1093607
    %v3906 = vmul.f32 %v3786, 0.1093607
    %v3907 = vmul.f32 %v3787, 0.1093607
    %v3908 = vmul.f32 %v3788, 0.1093607
    %v3909 = vmul.f32 %v3789, 0.1093607
    %v3910 = vmul.f32 %v3790, 0.1093607
    %v3911 = vmul.f32 %v3791, 0.1093607
    %v3912 = vmul.f32 %v3792, 0.1093607
    %v3913 = vmul.f32 %v3793, 0.1093607
    %v3914 = vmul.f32 %v3794, 0.1093607
    %v3915 = vmul.f32 %v3795, 0.1093607
    %v3916 = vmul.f32 %v3796, 0.1093607
    %v3917 = vmul.f32 %v3797, 0.1093607
    %v3918 = vmul.f32 %v3798, 0.1093607
    %v3919 = vmul.f32 %v3799, 0.1093607
    %v3920 = vmul.f32 %v3800, 0.1093607
    %v3921 = vmul.f32 %v3801, 0.1093607
    %v3922 = vmul.f32 %v3802, 0.1093607
    %v3923 = vmul.f32 %v3803, 0.1093607
    %v3924 = vmul.f32 %v3804, 0.1093607
    %v3925 = vmul.f32 %v3805, 0.1093607
    %v3926 = vmul.f32 %v3806, 0.1093607
    %v3927 = vmul.f32 %v3807, 0.1093607
    %v3928 = vmul.f32 %v3808, 0.1093607
    %v3929 = vmul.f32 %v3809, 0.1093607
    %v3930 = vmul.f32 %v3810, 0.1093607
    %v3931 = vmul.f32 %v3811, 0.1093607
    %v3932 = vmul.f32 %v3812, 0.1093607
    %v3933 = vmul.f32 %v3813, 0.1093607
    %v3934 = vmul.f32 %v3814, 0.1093607
    %v3935 = vmul.f32 %v3815, 0.1093607
    %v3936 = vmul.f32 %v3816, 0.1093607
    %v3937 = vmul.f32 %v3817, 0.1093607
    %v3938 = vmul.f32 %v3818, 0.1093607
    %v3939 = vmul.f32 %v3819, 0.1093607
    %v3940 = vmul.f32 %v3820, 0.1093607
    %v3941 = vmul.f32 %v3821, 0.1093607
    %v3942 = vmul.f32 %v3822, 0.1093607
    %v3943 = vmul.f32 %v3823, 0.1093607
    %v3944 = vmul.f32 %v3824, 0.1093607
    %v3945 = vmul.f32 %v3825, 0.1093607
    %v3946 = vmul.f32 %v3826, 0.1093607
    %v3947 = vmul.f32 %v3827, 0.1093607
    %v3948 = vmul.f32 %v3828, 0.1093607
    %v3949 = vmul.f32 %v3829, 0.1093607
    %v3950 = vmul.f32 %v3830, 0.1093607
    %v3951 = vmul.f32 %v3831, 0.1093607
    %v3952 = vmul.f32 %v3832, 0.1093607
    %v3953 = vmul.f32 %v3833, 0.1093607
    %v3954 = vmul.f32 %v3834, 0.1093607
    %v3955 = vmul.f32 %v3835, 0.1093607
    %v3956 = vmul.f32 %v3836, 0.1093607
    %v3957 = vmul.f32 %v3837, 0.1093607
    %v3958 = vmul.f32 %v3838, 0.1093607
    %v3959 = vmul.f32 %v3839, 0.1093607
    %v3960 = vmul.f32 %v3840, 0.1093607
    %v3961 = vmul.f32 %v3841, 0.1093607
    %v3962 = vmul.f32 %v3842, 0.1093607
    %v3963 = vmul.f32 %v3843, 0.1093607
    %v3964 = vmul.f32 %v3844, 0.1093607
    %v3965 = vmul.f32 %v3845, 0.1093607
    %v3966 = vmul.f32 %v3846, 0.1093607
    %v4087 = vrot.slane %v3847, 6
    %v4088 = vrot.slane %v3848, 6
    %v4089 = vsel %vm2325, %v4087, %v4088
    %v4090 = vrot.slane %v3849, 6
    %v4091 = vsel %vm2325, %v4088, %v4090
    %v4092 = vrot.slane %v3850, 6
    %v4093 = vrot.slane %v3851, 6
    %v4094 = vsel %vm2325, %v4092, %v4093
    %v4095 = vrot.slane %v3852, 6
    %v4096 = vsel %vm2325, %v4093, %v4095
    %v4097 = vrot.slane %v3853, 6
    %v4098 = vrot.slane %v3854, 6
    %v4099 = vsel %vm2325, %v4097, %v4098
    %v4100 = vrot.slane %v3855, 6
    %v4101 = vsel %vm2325, %v4098, %v4100
    %v4102 = vrot.slane %v3856, 6
    %v4103 = vrot.slane %v3857, 6
    %v4104 = vsel %vm2325, %v4102, %v4103
    %v4105 = vrot.slane %v3858, 6
    %v4106 = vsel %vm2325, %v4103, %v4105
    %v4107 = vrot.slane %v3859, 6
    %v4108 = vrot.slane %v3860, 6
    %v4109 = vsel %vm2325, %v4107, %v4108
    %v4110 = vrot.slane %v3861, 6
    %v4111 = vsel %vm2325, %v4108, %v4110
    %v4112 = vrot.slane %v3862, 6
    %v4113 = vrot.slane %v3863, 6
    %v4114 = vsel %vm2325, %v4112, %v4113
    %v4115 = vrot.slane %v3864, 6
    %v4116 = vsel %vm2325, %v4113, %v4115
    %v4117 = vrot.slane %v3865, 6
    %v4118 = vrot.slane %v3866, 6
    %v4119 = vsel %vm2325, %v4117, %v4118
    %v4120 = vrot.slane %v3867, 6
    %v4121 = vsel %vm2325, %v4118, %v4120
    %v4122 = vrot.slane %v3868, 6
    %v4123 = vrot.slane %v3869, 6
    %v4124 = vsel %vm2325, %v4122, %v4123
    %v4125 = vrot.slane %v3870, 6
    %v4126 = vsel %vm2325, %v4123, %v4125
    %v4127 = vrot.slane %v3871, 6
    %v4128 = vrot.slane %v3872, 6
    %v4129 = vsel %vm2325, %v4127, %v4128
    %v4130 = vrot.slane %v3873, 6
    %v4131 = vsel %vm2325, %v4128, %v4130
    %v4132 = vrot.slane %v3874, 6
    %v4133 = vrot.slane %v3875, 6
    %v4134 = vsel %vm2325, %v4132, %v4133
    %v4135 = vrot.slane %v3876, 6
    %v4136 = vsel %vm2325, %v4133, %v4135
    %v4137 = vrot.slane %v3877, 6
    %v4138 = vrot.slane %v3878, 6
    %v4139 = vsel %vm2325, %v4137, %v4138
    %v4140 = vrot.slane %v3879, 6
    %v4141 = vsel %vm2325, %v4138, %v4140
    %v4142 = vrot.slane %v3880, 6
    %v4143 = vrot.slane %v3881, 6
    %v4144 = vsel %vm2325, %v4142, %v4143
    %v4145 = vrot.slane %v3882, 6
    %v4146 = vsel %vm2325, %v4143, %v4145
    %v4147 = vrot.slane %v3883, 6
    %v4148 = vrot.slane %v3884, 6
    %v4149 = vsel %vm2325, %v4147, %v4148
    %v4150 = vrot.slane %v3885, 6
    %v4151 = vsel %vm2325, %v4148, %v4150
    %v4152 = vrot.slane %v3886, 6
    %v4153 = vrot.slane %v3887, 6
    %v4154 = vsel %vm2325, %v4152, %v4153
    %v4155 = vrot.slane %v3888, 6
    %v4156 = vsel %vm2325, %v4153, %v4155
    %v4157 = vrot.slane %v3889, 6
    %v4158 = vrot.slane %v3890, 6
    %v4159 = vsel %vm2325, %v4157, %v4158
    %v4160 = vrot.slane %v3891, 6
    %v4161 = vsel %vm2325, %v4158, %v4160
    %v4162 = vrot.slane %v3892, 6
    %v4163 = vrot.slane %v3893, 6
    %v4164 = vsel %vm2325, %v4162, %v4163
    %v4165 = vrot.slane %v3894, 6
    %v4166 = vsel %vm2325, %v4163, %v4165
    %v4167 = vrot.slane %v3895, 6
    %v4168 = vrot.slane %v3896, 6
    %v4169 = vsel %vm2325, %v4167, %v4168
    %v4170 = vrot.slane %v3897, 6
    %v4171 = vsel %vm2325, %v4168, %v4170
    %v4172 = vrot.slane %v3898, 6
    %v4173 = vrot.slane %v3899, 6
    %v4174 = vsel %vm2325, %v4172, %v4173
    %v4175 = vrot.slane %v3900, 6
    %v4176 = vsel %vm2325, %v4173, %v4175
    %v4177 = vrot.slane %v3901, 6
    %v4178 = vrot.slane %v3902, 6
    %v4179 = vsel %vm2325, %v4177, %v4178
    %v4180 = vrot.slane %v3903, 6
    %v4181 = vsel %vm2325, %v4178, %v4180
    %v4182 = vrot.slane %v3904, 6
    %v4183 = vrot.slane %v3905, 6
    %v4184 = vsel %vm2325, %v4182, %v4183
    %v4185 = vrot.slane %v3906, 6
    %v4186 = vsel %vm2325, %v4183, %v4185
    %v4187 = vrot.slane %v3907, 6
    %v4188 = vrot.slane %v3908, 6
    %v4189 = vsel %vm2325, %v4187, %v4188
    %v4190 = vrot.slane %v3909, 6
    %v4191 = vsel %vm2325, %v4188, %v4190
    %v4192 = vrot.slane %v3910, 6
    %v4193 = vrot.slane %v3911, 6
    %v4194 = vsel %vm2325, %v4192, %v4193
    %v4195 = vrot.slane %v3912, 6
    %v4196 = vsel %vm2325, %v4193, %v4195
    %v4197 = vrot.slane %v3913, 6
    %v4198 = vrot.slane %v3914, 6
    %v4199 = vsel %vm2325, %v4197, %v4198
    %v4200 = vrot.slane %v3915, 6
    %v4201 = vsel %vm2325, %v4198, %v4200
    %v4202 = vrot.slane %v3916, 6
    %v4203 = vrot.slane %v3917, 6
    %v4204 = vsel %vm2325, %v4202, %v4203
    %v4205 = vrot.slane %v3918, 6
    %v4206 = vsel %vm2325, %v4203, %v4205
    %v4207 = vrot.slane %v3919, 6
    %v4208 = vrot.slane %v3920, 6
    %v4209 = vsel %vm2325, %v4207, %v4208
    %v4210 = vrot.slane %v3921, 6
    %v4211 = vsel %vm2325, %v4208, %v4210
    %v4212 = vrot.slane %v3922, 6
    %v4213 = vrot.slane %v3923, 6
    %v4214 = vsel %vm2325, %v4212, %v4213
    %v4215 = vrot.slane %v3924, 6
    %v4216 = vsel %vm2325, %v4213, %v4215
    %v4217 = vrot.slane %v3925, 6
    %v4218 = vrot.slane %v3926, 6
    %v4219 = vsel %vm2325, %v4217, %v4218
    %v4220 = vrot.slane %v3927, 6
    %v4221 = vsel %vm2325, %v4218, %v4220
    %v4222 = vrot.slane %v3928, 6
    %v4223 = vrot.slane %v3929, 6
    %v4224 = vsel %vm2325, %v4222, %v4223
    %v4225 = vrot.slane %v3930, 6
    %v4226 = vsel %vm2325, %v4223, %v4225
    %v4227 = vrot.slane %v3931, 6
    %v4228 = vrot.slane %v3932, 6
    %v4229 = vsel %vm2325, %v4227, %v4228
    %v4230 = vrot.slane %v3933, 6
    %v4231 = vsel %vm2325, %v4228, %v4230
    %v4232 = vrot.slane %v3934, 6
    %v4233 = vrot.slane %v3935, 6
    %v4234 = vsel %vm2325, %v4232, %v4233
    %v4235 = vrot.slane %v3936, 6
    %v4236 = vsel %vm2325, %v4233, %v4235
    %v4237 = vrot.slane %v3937, 6
    %v4238 = vrot.slane %v3938, 6
    %v4239 = vsel %vm2325, %v4237, %v4238
    %v4240 = vrot.slane %v3939, 6
    %v4241 = vsel %vm2325, %v4238, %v4240
    %v4242 = vrot.slane %v3940, 6
    %v4243 = vrot.slane %v3941, 6
    %v4244 = vsel %vm2325, %v4242, %v4243
    %v4245 = vrot.slane %v3942, 6
    %v4246 = vsel %vm2325, %v4243, %v4245
    %v4247 = vrot.slane %v3943, 6
    %v4248 = vrot.slane %v3944, 6
    %v4249 = vsel %vm2325, %v4247, %v4248
    %v4250 = vrot.slane %v3945, 6
    %v4251 = vsel %vm2325, %v4248, %v4250
    %v4252 = vrot.slane %v3946, 6
    %v4253 = vrot.slane %v3947, 6
    %v4254 = vsel %vm2325, %v4252, %v4253
    %v4255 = vrot.slane %v3948, 6
    %v4256 = vsel %vm2325, %v4253, %v4255
    %v4257 = vrot.slane %v3949, 6
    %v4258 = vrot.slane %v3950, 6
    %v4259 = vsel %vm2325, %v4257, %v4258
    %v4260 = vrot.slane %v3951, 6
    %v4261 = vsel %vm2325, %v4258, %v4260
    %v4262 = vrot.slane %v3952, 6
    %v4263 = vrot.slane %v3953, 6
    %v4264 = vsel %vm2325, %v4262, %v4263
    %v4265 = vrot.slane %v3954, 6
    %v4266 = vsel %vm2325, %v4263, %v4265
    %v4267 = vrot.slane %v3955, 6
    %v4268 = vrot.slane %v3956, 6
    %v4269 = vsel %vm2325, %v4267, %v4268
    %v4270 = vrot.slane %v3957, 6
    %v4271 = vsel %vm2325, %v4268, %v4270
    %v4272 = vrot.slane %v3958, 6
    %v4273 = vrot.slane %v3959, 6
    %v4274 = vsel %vm2325, %v4272, %v4273
    %v4275 = vrot.slane %v3960, 6
    %v4276 = vsel %vm2325, %v4273, %v4275
    %v4277 = vrot.slane %v3961, 6
    %v4278 = vrot.slane %v3962, 6
    %v4279 = vsel %vm2325, %v4277, %v4278
    %v4280 = vrot.slane %v3963, 6
    %v4281 = vsel %vm2325, %v4278, %v4280
    %v4282 = vrot.slane %v3964, 6
    %v4283 = vrot.slane %v3965, 6
    %v4284 = vsel %vm2325, %v4282, %v4283
    %v4285 = vrot.slane %v3966, 6
    %v4286 = vsel %vm2325, %v4283, %v4285
    %v4407 = vadd.f32 %v3247, %v4087
    %v4408 = vadd.f32 %v3248, %v4089
    %v4409 = vadd.f32 %v3249, %v4091
    %v4410 = vadd.f32 %v3250, %v4092
    %v4411 = vadd.f32 %v3251, %v4094
    %v4412 = vadd.f32 %v3252, %v4096
    %v4413 = vadd.f32 %v3253, %v4097
    %v4414 = vadd.f32 %v3254, %v4099
    %v4415 = vadd.f32 %v3255, %v4101
    %v4416 = vadd.f32 %v3256, %v4102
    %v4417 = vadd.f32 %v3257, %v4104
    %v4418 = vadd.f32 %v3258, %v4106
    %v4419 = vadd.f32 %v3259, %v4107
    %v4420 = vadd.f32 %v3260, %v4109
    %v4421 = vadd.f32 %v3261, %v4111
    %v4422 = vadd.f32 %v3262, %v4112
    %v4423 = vadd.f32 %v3263, %v4114
    %v4424 = vadd.f32 %v3264, %v4116
    %v4425 = vadd.f32 %v3265, %v4117
    %v4426 = vadd.f32 %v3266, %v4119
    %v4427 = vadd.f32 %v3267, %v4121
    %v4428 = vadd.f32 %v3268, %v4122
    %v4429 = vadd.f32 %v3269, %v4124
    %v4430 = vadd.f32 %v3270, %v4126
    %v4431 = vadd.f32 %v3271, %v4127
    %v4432 = vadd.f32 %v3272, %v4129
    %v4433 = vadd.f32 %v3273, %v4131
    %v4434 = vadd.f32 %v3274, %v4132
    %v4435 = vadd.f32 %v3275, %v4134
    %v4436 = vadd.f32 %v3276, %v4136
    %v4437 = vadd.f32 %v3277, %v4137
    %v4438 = vadd.f32 %v3278, %v4139
    %v4439 = vadd.f32 %v3279, %v4141
    %v4440 = vadd.f32 %v3280, %v4142
    %v4441 = vadd.f32 %v3281, %v4144
    %v4442 = vadd.f32 %v3282, %v4146
    %v4443 = vadd.f32 %v3283, %v4147
    %v4444 = vadd.f32 %v3284, %v4149
    %v4445 = vadd.f32 %v3285, %v4151
    %v4446 = vadd.f32 %v3286, %v4152
    %v4447 = vadd.f32 %v3287, %v4154
    %v4448 = vadd.f32 %v3288, %v4156
    %v4449 = vadd.f32 %v3289, %v4157
    %v4450 = vadd.f32 %v3290, %v4159
    %v4451 = vadd.f32 %v3291, %v4161
    %v4452 = vadd.f32 %v3292, %v4162
    %v4453 = vadd.f32 %v3293, %v4164
    %v4454 = vadd.f32 %v3294, %v4166
    %v4455 = vadd.f32 %v3295, %v4167
    %v4456 = vadd.f32 %v3296, %v4169
    %v4457 = vadd.f32 %v3297, %v4171
    %v4458 = vadd.f32 %v3298, %v4172
    %v4459 = vadd.f32 %v3299, %v4174
    %v4460 = vadd.f32 %v3300, %v4176
    %v4461 = vadd.f32 %v3301, %v4177
    %v4462 = vadd.f32 %v3302, %v4179
    %v4463 = vadd.f32 %v3303, %v4181
    %v4464 = vadd.f32 %v3304, %v4182
    %v4465 = vadd.f32 %v3305, %v4184
    %v4466 = vadd.f32 %v3306, %v4186
    %v4467 = vadd.f32 %v3307, %v4187
    %v4468 = vadd.f32 %v3308, %v4189
    %v4469 = vadd.f32 %v3309, %v4191
    %v4470 = vadd.f32 %v3310, %v4192
    %v4471 = vadd.f32 %v3311, %v4194
    %v4472 = vadd.f32 %v3312, %v4196
    %v4473 = vadd.f32 %v3313, %v4197
    %v4474 = vadd.f32 %v3314, %v4199
    %v4475 = vadd.f32 %v3315, %v4201
    %v4476 = vadd.f32 %v3316, %v4202
    %v4477 = vadd.f32 %v3317, %v4204
    %v4478 = vadd.f32 %v3318, %v4206
    %v4479 = vadd.f32 %v3319, %v4207
    %v4480 = vadd.f32 %v3320, %v4209
    %v4481 = vadd.f32 %v3321, %v4211
    %v4482 = vadd.f32 %v3322, %v4212
    %v4483 = vadd.f32 %v3323, %v4214
    %v4484 = vadd.f32 %v3324, %v4216
    %v4485 = vadd.f32 %v3325, %v4217
    %v4486 = vadd.f32 %v3326, %v4219
    %v4487 = vadd.f32 %v3327, %v4221
    %v4488 = vadd.f32 %v3328, %v4222
    %v4489 = vadd.f32 %v3329, %v4224
    %v4490 = vadd.f32 %v3330, %v4226
    %v4491 = vadd.f32 %v3331, %v4227
    %v4492 = vadd.f32 %v3332, %v4229
    %v4493 = vadd.f32 %v3333, %v4231
    %v4494 = vadd.f32 %v3334, %v4232
    %v4495 = vadd.f32 %v3335, %v4234
    %v4496 = vadd.f32 %v3336, %v4236
    %v4497 = vadd.f32 %v3337, %v4237
    %v4498 = vadd.f32 %v3338, %v4239
    %v4499 = vadd.f32 %v3339, %v4241
    %v4500 = vadd.f32 %v3340, %v4242
    %v4501 = vadd.f32 %v3341, %v4244
    %v4502 = vadd.f32 %v3342, %v4246
    %v4503 = vadd.f32 %v3343, %v4247
    %v4504 = vadd.f32 %v3344, %v4249
    %v4505 = vadd.f32 %v3345, %v4251
    %v4506 = vadd.f32 %v3346, %v4252
    %v4507 = vadd.f32 %v3347, %v4254
    %v4508 = vadd.f32 %v3348, %v4256
    %v4509 = vadd.f32 %v3349, %v4257
    %v4510 = vadd.f32 %v3350, %v4259
    %v4511 = vadd.f32 %v3351, %v4261
    %v4512 = vadd.f32 %v3352, %v4262
    %v4513 = vadd.f32 %v3353, %v4264
    %v4514 = vadd.f32 %v3354, %v4266
    %v4515 = vadd.f32 %v3355, %v4267
    %v4516 = vadd.f32 %v3356, %v4269
    %v4517 = vadd.f32 %v3357, %v4271
    %v4518 = vadd.f32 %v3358, %v4272
    %v4519 = vadd.f32 %v3359, %v4274
    %v4520 = vadd.f32 %v3360, %v4276
    %v4521 = vadd.f32 %v3361, %v4277
    %v4522 = vadd.f32 %v3362, %v4279
    %v4523 = vadd.f32 %v3363, %v4281
    %v4524 = vadd.f32 %v3364, %v4282
    %v4525 = vadd.f32 %v3365, %v4284
    %v4526 = vadd.f32 %v3366, %v4286
    %v4527 = vrot.slane %v441, 2
    %v4528 = vsel %vm682, %v4527, %v683
    %v4529 = vrot.slane %v442, 2
    %v4530 = vsel %vm682, %v4529, %v688
    %v4531 = vrot.slane %v443, 2
    %v4532 = vsel %vm682, %v4531, %v692
    %v4533 = vrot.slane %v444, 2
    %v4534 = vsel %vm682, %v4533, %v696
    %v4535 = vrot.slane %v445, 2
    %v4536 = vsel %vm682, %v4535, %v700
    %v4537 = vrot.slane %v446, 2
    %v4538 = vsel %vm682, %v4537, %v704
    %v4539 = vrot.slane %v447, 2
    %v4540 = vsel %vm682, %v4539, %v708
    %v4541 = vrot.slane %v448, 2
    %v4542 = vsel %vm682, %v4541, %v712
    %v4543 = vrot.slane %v449, 2
    %v4544 = vsel %vm682, %v4543, %v716
    %v4545 = vrot.slane %v450, 2
    %v4546 = vsel %vm682, %v4545, %v720
    %v4547 = vrot.slane %v451, 2
    %v4548 = vsel %vm682, %v4547, %v724
    %v4549 = vrot.slane %v452, 2
    %v4550 = vsel %vm682, %v4549, %v728
    %v4551 = vrot.slane %v453, 2
    %v4552 = vsel %vm682, %v4551, %v732
    %v4553 = vrot.slane %v454, 2
    %v4554 = vsel %vm682, %v4553, %v736
    %v4555 = vrot.slane %v455, 2
    %v4556 = vsel %vm682, %v4555, %v740
    %v4557 = vrot.slane %v456, 2
    %v4558 = vsel %vm682, %v4557, %v744
    %v4559 = vrot.slane %v457, 2
    %v4560 = vsel %vm682, %v4559, %v748
    %v4561 = vrot.slane %v458, 2
    %v4562 = vsel %vm682, %v4561, %v752
    %v4563 = vrot.slane %v459, 2
    %v4564 = vsel %vm682, %v4563, %v756
    %v4565 = vrot.slane %v460, 2
    %v4566 = vsel %vm682, %v4565, %v760
    %v4567 = vrot.slane %v461, 2
    %v4568 = vsel %vm682, %v4567, %v764
    %v4569 = vrot.slane %v462, 2
    %v4570 = vsel %vm682, %v4569, %v768
    %v4571 = vrot.slane %v463, 2
    %v4572 = vsel %vm682, %v4571, %v772
    %v4573 = vrot.slane %v464, 2
    %v4574 = vsel %vm682, %v4573, %v776
    %v4575 = vrot.slane %v465, 2
    %v4576 = vsel %vm682, %v4575, %v780
    %v4577 = vrot.slane %v466, 2
    %v4578 = vsel %vm682, %v4577, %v784
    %v4579 = vrot.slane %v467, 2
    %v4580 = vsel %vm682, %v4579, %v788
    %v4581 = vrot.slane %v468, 2
    %v4582 = vsel %vm682, %v4581, %v792
    %v4583 = vrot.slane %v469, 2
    %v4584 = vsel %vm682, %v4583, %v796
    %v4585 = vrot.slane %v470, 2
    %v4586 = vsel %vm682, %v4585, %v800
    %v4587 = vrot.slane %v471, 2
    %v4588 = vsel %vm682, %v4587, %v804
    %v4589 = vrot.slane %v472, 2
    %v4590 = vsel %vm682, %v4589, %v808
    %v4591 = vrot.slane %v473, 2
    %v4592 = vsel %vm682, %v4591, %v812
    %v4593 = vrot.slane %v474, 2
    %v4594 = vsel %vm682, %v4593, %v816
    %v4595 = vrot.slane %v475, 2
    %v4596 = vsel %vm682, %v4595, %v820
    %v4597 = vrot.slane %v476, 2
    %v4598 = vsel %vm682, %v4597, %v824
    %v4599 = vrot.slane %v477, 2
    %v4600 = vsel %vm682, %v4599, %v828
    %v4601 = vrot.slane %v478, 2
    %v4602 = vsel %vm682, %v4601, %v832
    %v4603 = vrot.slane %v479, 2
    %v4604 = vsel %vm682, %v4603, %v836
    %v4605 = vrot.slane %v480, 2
    %v4606 = vsel %vm682, %v4605, %v840
    %v4687 = vadd.f32 %v441, %v4528
    %v4688 = vadd.f32 %v203, %v685
    %v4689 = vadd.f32 %v481, %v684
    %v4690 = vadd.f32 %v442, %v4530
    %v4691 = vadd.f32 %v206, %v690
    %v4692 = vadd.f32 %v482, %v689
    %v4693 = vadd.f32 %v443, %v4532
    %v4694 = vadd.f32 %v209, %v694
    %v4695 = vadd.f32 %v483, %v693
    %v4696 = vadd.f32 %v444, %v4534
    %v4697 = vadd.f32 %v212, %v698
    %v4698 = vadd.f32 %v484, %v697
    %v4699 = vadd.f32 %v445, %v4536
    %v4700 = vadd.f32 %v215, %v702
    %v4701 = vadd.f32 %v485, %v701
    %v4702 = vadd.f32 %v446, %v4538
    %v4703 = vadd.f32 %v218, %v706
    %v4704 = vadd.f32 %v486, %v705
    %v4705 = vadd.f32 %v447, %v4540
    %v4706 = vadd.f32 %v221, %v710
    %v4707 = vadd.f32 %v487, %v709
    %v4708 = vadd.f32 %v448, %v4542
    %v4709 = vadd.f32 %v224, %v714
    %v4710 = vadd.f32 %v488, %v713
    %v4711 = vadd.f32 %v449, %v4544
    %v4712 = vadd.f32 %v227, %v718
    %v4713 = vadd.f32 %v489, %v717
    %v4714 = vadd.f32 %v450, %v4546
    %v4715 = vadd.f32 %v230, %v722
    %v4716 = vadd.f32 %v490, %v721
    %v4717 = vadd.f32 %v451, %v4548
    %v4718 = vadd.f32 %v233, %v726
    %v4719 = vadd.f32 %v491, %v725
    %v4720 = vadd.f32 %v452, %v4550
    %v4721 = vadd.f32 %v236, %v730
    %v4722 = vadd.f32 %v492, %v729
    %v4723 = vadd.f32 %v453, %v4552
    %v4724 = vadd.f32 %v239, %v734
    %v4725 = vadd.f32 %v493, %v733
    %v4726 = vadd.f32 %v454, %v4554
    %v4727 = vadd.f32 %v242, %v738
    %v4728 = vadd.f32 %v494, %v737
    %v4729 = vadd.f32 %v455, %v4556
    %v4730 = vadd.f32 %v245, %v742
    %v4731 = vadd.f32 %v495, %v741
    %v4732 = vadd.f32 %v456, %v4558
    %v4733 = vadd.f32 %v248, %v746
    %v4734 = vadd.f32 %v496, %v745
    %v4735 = vadd.f32 %v457, %v4560
    %v4736 = vadd.f32 %v251, %v750
    %v4737 = vadd.f32 %v497, %v749
    %v4738 = vadd.f32 %v458, %v4562
    %v4739 = vadd.f32 %v254, %v754
    %v4740 = vadd.f32 %v498, %v753
    %v4741 = vadd.f32 %v459, %v4564
    %v4742 = vadd.f32 %v257, %v758
    %v4743 = vadd.f32 %v499, %v757
    %v4744 = vadd.f32 %v460, %v4566
    %v4745 = vadd.f32 %v260, %v762
    %v4746 = vadd.f32 %v500, %v761
    %v4747 = vadd.f32 %v461, %v4568
    %v4748 = vadd.f32 %v263, %v766
    %v4749 = vadd.f32 %v501, %v765
    %v4750 = vadd.f32 %v462, %v4570
    %v4751 = vadd.f32 %v266, %v770
    %v4752 = vadd.f32 %v502, %v769
    %v4753 = vadd.f32 %v463, %v4572
    %v4754 = vadd.f32 %v269, %v774
    %v4755 = vadd.f32 %v503, %v773
    %v4756 = vadd.f32 %v464, %v4574
    %v4757 = vadd.f32 %v272, %v778
    %v4758 = vadd.f32 %v504, %v777
    %v4759 = vadd.f32 %v465, %v4576
    %v4760 = vadd.f32 %v275, %v782
    %v4761 = vadd.f32 %v505, %v781
    %v4762 = vadd.f32 %v466, %v4578
    %v4763 = vadd.f32 %v278, %v786
    %v4764 = vadd.f32 %v506, %v785
    %v4765 = vadd.f32 %v467, %v4580
    %v4766 = vadd.f32 %v281, %v790
    %v4767 = vadd.f32 %v507, %v789
    %v4768 = vadd.f32 %v468, %v4582
    %v4769 = vadd.f32 %v284, %v794
    %v4770 = vadd.f32 %v508, %v793
    %v4771 = vadd.f32 %v469, %v4584
    %v4772 = vadd.f32 %v287, %v798
    %v4773 = vadd.f32 %v509, %v797
    %v4774 = vadd.f32 %v470, %v4586
    %v4775 = vadd.f32 %v290, %v802
    %v4776 = vadd.f32 %v510, %v801
    %v4777 = vadd.f32 %v471, %v4588
    %v4778 = vadd.f32 %v293, %v806
    %v4779 = vadd.f32 %v511, %v805
    %v4780 = vadd.f32 %v472, %v4590
    %v4781 = vadd.f32 %v296, %v810
    %v4782 = vadd.f32 %v512, %v809
    %v4783 = vadd.f32 %v473, %v4592
    %v4784 = vadd.f32 %v299, %v814
    %v4785 = vadd.f32 %v513, %v813
    %v4786 = vadd.f32 %v474, %v4594
    %v4787 = vadd.f32 %v302, %v818
    %v4788 = vadd.f32 %v514, %v817
    %v4789 = vadd.f32 %v475, %v4596
    %v4790 = vadd.f32 %v305, %v822
    %v4791 = vadd.f32 %v515, %v821
    %v4792 = vadd.f32 %v476, %v4598
    %v4793 = vadd.f32 %v308, %v826
    %v4794 = vadd.f32 %v516, %v825
    %v4795 = vadd.f32 %v477, %v4600
    %v4796 = vadd.f32 %v311, %v830
    %v4797 = vadd.f32 %v517, %v829
    %v4798 = vadd.f32 %v478, %v4602
    %v4799 = vadd.f32 %v314, %v834
    %v4800 = vadd.f32 %v518, %v833
    %v4801 = vadd.f32 %v479, %v4604
    %v4802 = vadd.f32 %v317, %v838
    %v4803 = vadd.f32 %v519, %v837
    %v4804 = vadd.f32 %v480, %v4606
    %v4805 = vadd.f32 %v320, %v842
    %v4806 = vadd.f32 %v520, %v841
    %v4807 = vmul.f32 %v4687, 0.21300554
    %v4808 = vmul.f32 %v4688, 0.21300554
    %v4809 = vmul.f32 %v4689, 0.21300554
    %v4810 = vmul.f32 %v4690, 0.21300554
    %v4811 = vmul.f32 %v4691, 0.21300554
    %v4812 = vmul.f32 %v4692, 0.21300554
    %v4813 = vmul.f32 %v4693, 0.21300554
    %v4814 = vmul.f32 %v4694, 0.21300554
    %v4815 = vmul.f32 %v4695, 0.21300554
    %v4816 = vmul.f32 %v4696, 0.21300554
    %v4817 = vmul.f32 %v4697, 0.21300554
    %v4818 = vmul.f32 %v4698, 0.21300554
    %v4819 = vmul.f32 %v4699, 0.21300554
    %v4820 = vmul.f32 %v4700, 0.21300554
    %v4821 = vmul.f32 %v4701, 0.21300554
    %v4822 = vmul.f32 %v4702, 0.21300554
    %v4823 = vmul.f32 %v4703, 0.21300554
    %v4824 = vmul.f32 %v4704, 0.21300554
    %v4825 = vmul.f32 %v4705, 0.21300554
    %v4826 = vmul.f32 %v4706, 0.21300554
    %v4827 = vmul.f32 %v4707, 0.21300554
    %v4828 = vmul.f32 %v4708, 0.21300554
    %v4829 = vmul.f32 %v4709, 0.21300554
    %v4830 = vmul.f32 %v4710, 0.21300554
    %v4831 = vmul.f32 %v4711, 0.21300554
    %v4832 = vmul.f32 %v4712, 0.21300554
    %v4833 = vmul.f32 %v4713, 0.21300554
    %v4834 = vmul.f32 %v4714, 0.21300554
    %v4835 = vmul.f32 %v4715, 0.21300554
    %v4836 = vmul.f32 %v4716, 0.21300554
    %v4837 = vmul.f32 %v4717, 0.21300554
    %v4838 = vmul.f32 %v4718, 0.21300554
    %v4839 = vmul.f32 %v4719, 0.21300554
    %v4840 = vmul.f32 %v4720, 0.21300554
    %v4841 = vmul.f32 %v4721, 0.21300554
    %v4842 = vmul.f32 %v4722, 0.21300554
    %v4843 = vmul.f32 %v4723, 0.21300554
    %v4844 = vmul.f32 %v4724, 0.21300554
    %v4845 = vmul.f32 %v4725, 0.21300554
    %v4846 = vmul.f32 %v4726, 0.21300554
    %v4847 = vmul.f32 %v4727, 0.21300554
    %v4848 = vmul.f32 %v4728, 0.21300554
    %v4849 = vmul.f32 %v4729, 0.21300554
    %v4850 = vmul.f32 %v4730, 0.21300554
    %v4851 = vmul.f32 %v4731, 0.21300554
    %v4852 = vmul.f32 %v4732, 0.21300554
    %v4853 = vmul.f32 %v4733, 0.21300554
    %v4854 = vmul.f32 %v4734, 0.21300554
    %v4855 = vmul.f32 %v4735, 0.21300554
    %v4856 = vmul.f32 %v4736, 0.21300554
    %v4857 = vmul.f32 %v4737, 0.21300554
    %v4858 = vmul.f32 %v4738, 0.21300554
    %v4859 = vmul.f32 %v4739, 0.21300554
    %v4860 = vmul.f32 %v4740, 0.21300554
    %v4861 = vmul.f32 %v4741, 0.21300554
    %v4862 = vmul.f32 %v4742, 0.21300554
    %v4863 = vmul.f32 %v4743, 0.21300554
    %v4864 = vmul.f32 %v4744, 0.21300554
    %v4865 = vmul.f32 %v4745, 0.21300554
    %v4866 = vmul.f32 %v4746, 0.21300554
    %v4867 = vmul.f32 %v4747, 0.21300554
    %v4868 = vmul.f32 %v4748, 0.21300554
    %v4869 = vmul.f32 %v4749, 0.21300554
    %v4870 = vmul.f32 %v4750, 0.21300554
    %v4871 = vmul.f32 %v4751, 0.21300554
    %v4872 = vmul.f32 %v4752, 0.21300554
    %v4873 = vmul.f32 %v4753, 0.21300554
    %v4874 = vmul.f32 %v4754, 0.21300554
    %v4875 = vmul.f32 %v4755, 0.21300554
    %v4876 = vmul.f32 %v4756, 0.21300554
    %v4877 = vmul.f32 %v4757, 0.21300554
    %v4878 = vmul.f32 %v4758, 0.21300554
    %v4879 = vmul.f32 %v4759, 0.21300554
    %v4880 = vmul.f32 %v4760, 0.21300554
    %v4881 = vmul.f32 %v4761, 0.21300554
    %v4882 = vmul.f32 %v4762, 0.21300554
    %v4883 = vmul.f32 %v4763, 0.21300554
    %v4884 = vmul.f32 %v4764, 0.21300554
    %v4885 = vmul.f32 %v4765, 0.21300554
    %v4886 = vmul.f32 %v4766, 0.21300554
    %v4887 = vmul.f32 %v4767, 0.21300554
    %v4888 = vmul.f32 %v4768, 0.21300554
    %v4889 = vmul.f32 %v4769, 0.21300554
    %v4890 = vmul.f32 %v4770, 0.21300554
    %v4891 = vmul.f32 %v4771, 0.21300554
    %v4892 = vmul.f32 %v4772, 0.21300554
    %v4893 = vmul.f32 %v4773, 0.21300554
    %v4894 = vmul.f32 %v4774, 0.21300554
    %v4895 = vmul.f32 %v4775, 0.21300554
    %v4896 = vmul.f32 %v4776, 0.21300554
    %v4897 = vmul.f32 %v4777, 0.21300554
    %v4898 = vmul.f32 %v4778, 0.21300554
    %v4899 = vmul.f32 %v4779, 0.21300554
    %v4900 = vmul.f32 %v4780, 0.21300554
    %v4901 = vmul.f32 %v4781, 0.21300554
    %v4902 = vmul.f32 %v4782, 0.21300554
    %v4903 = vmul.f32 %v4783, 0.21300554
    %v4904 = vmul.f32 %v4784, 0.21300554
    %v4905 = vmul.f32 %v4785, 0.21300554
    %v4906 = vmul.f32 %v4786, 0.21300554
    %v4907 = vmul.f32 %v4787, 0.21300554
    %v4908 = vmul.f32 %v4788, 0.21300554
    %v4909 = vmul.f32 %v4789, 0.21300554
    %v4910 = vmul.f32 %v4790, 0.21300554
    %v4911 = vmul.f32 %v4791, 0.21300554
    %v4912 = vmul.f32 %v4792, 0.21300554
    %v4913 = vmul.f32 %v4793, 0.21300554
    %v4914 = vmul.f32 %v4794, 0.21300554
    %v4915 = vmul.f32 %v4795, 0.21300554
    %v4916 = vmul.f32 %v4796, 0.21300554
    %v4917 = vmul.f32 %v4797, 0.21300554
    %v4918 = vmul.f32 %v4798, 0.21300554
    %v4919 = vmul.f32 %v4799, 0.21300554
    %v4920 = vmul.f32 %v4800, 0.21300554
    %v4921 = vmul.f32 %v4801, 0.21300554
    %v4922 = vmul.f32 %v4802, 0.21300554
    %v4923 = vmul.f32 %v4803, 0.21300554
    %v4924 = vmul.f32 %v4804, 0.21300554
    %v4925 = vmul.f32 %v4805, 0.21300554
    %v4926 = vmul.f32 %v4806, 0.21300554
    %vm5047 = vcmask 1040384
    %v5048 = vrot.slane %v4807, 7
    %v5049 = vrot.slane %v4808, 7
    %v5050 = vsel %vm5047, %v5048, %v5049
    %v5051 = vrot.slane %v4809, 7
    %v5052 = vsel %vm5047, %v5049, %v5051
    %v5053 = vrot.slane %v4810, 7
    %v5054 = vrot.slane %v4811, 7
    %v5055 = vsel %vm5047, %v5053, %v5054
    %v5056 = vrot.slane %v4812, 7
    %v5057 = vsel %vm5047, %v5054, %v5056
    %v5058 = vrot.slane %v4813, 7
    %v5059 = vrot.slane %v4814, 7
    %v5060 = vsel %vm5047, %v5058, %v5059
    %v5061 = vrot.slane %v4815, 7
    %v5062 = vsel %vm5047, %v5059, %v5061
    %v5063 = vrot.slane %v4816, 7
    %v5064 = vrot.slane %v4817, 7
    %v5065 = vsel %vm5047, %v5063, %v5064
    %v5066 = vrot.slane %v4818, 7
    %v5067 = vsel %vm5047, %v5064, %v5066
    %v5068 = vrot.slane %v4819, 7
    %v5069 = vrot.slane %v4820, 7
    %v5070 = vsel %vm5047, %v5068, %v5069
    %v5071 = vrot.slane %v4821, 7
    %v5072 = vsel %vm5047, %v5069, %v5071
    %v5073 = vrot.slane %v4822, 7
    %v5074 = vrot.slane %v4823, 7
    %v5075 = vsel %vm5047, %v5073, %v5074
    %v5076 = vrot.slane %v4824, 7
    %v5077 = vsel %vm5047, %v5074, %v5076
    %v5078 = vrot.slane %v4825, 7
    %v5079 = vrot.slane %v4826, 7
    %v5080 = vsel %vm5047, %v5078, %v5079
    %v5081 = vrot.slane %v4827, 7
    %v5082 = vsel %vm5047, %v5079, %v5081
    %v5083 = vrot.slane %v4828, 7
    %v5084 = vrot.slane %v4829, 7
    %v5085 = vsel %vm5047, %v5083, %v5084
    %v5086 = vrot.slane %v4830, 7
    %v5087 = vsel %vm5047, %v5084, %v5086
    %v5088 = vrot.slane %v4831, 7
    %v5089 = vrot.slane %v4832, 7
    %v5090 = vsel %vm5047, %v5088, %v5089
    %v5091 = vrot.slane %v4833, 7
    %v5092 = vsel %vm5047, %v5089, %v5091
    %v5093 = vrot.slane %v4834, 7
    %v5094 = vrot.slane %v4835, 7
    %v5095 = vsel %vm5047, %v5093, %v5094
    %v5096 = vrot.slane %v4836, 7
    %v5097 = vsel %vm5047, %v5094, %v5096
    %v5098 = vrot.slane %v4837, 7
    %v5099 = vrot.slane %v4838, 7
    %v5100 = vsel %vm5047, %v5098, %v5099
    %v5101 = vrot.slane %v4839, 7
    %v5102 = vsel %vm5047, %v5099, %v5101
    %v5103 = vrot.slane %v4840, 7
    %v5104 = vrot.slane %v4841, 7
    %v5105 = vsel %vm5047, %v5103, %v5104
    %v5106 = vrot.slane %v4842, 7
    %v5107 = vsel %vm5047, %v5104, %v5106
    %v5108 = vrot.slane %v4843, 7
    %v5109 = vrot.slane %v4844, 7
    %v5110 = vsel %vm5047, %v5108, %v5109
    %v5111 = vrot.slane %v4845, 7
    %v5112 = vsel %vm5047, %v5109, %v5111
    %v5113 = vrot.slane %v4846, 7
    %v5114 = vrot.slane %v4847, 7
    %v5115 = vsel %vm5047, %v5113, %v5114
    %v5116 = vrot.slane %v4848, 7
    %v5117 = vsel %vm5047, %v5114, %v5116
    %v5118 = vrot.slane %v4849, 7
    %v5119 = vrot.slane %v4850, 7
    %v5120 = vsel %vm5047, %v5118, %v5119
    %v5121 = vrot.slane %v4851, 7
    %v5122 = vsel %vm5047, %v5119, %v5121
    %v5123 = vrot.slane %v4852, 7
    %v5124 = vrot.slane %v4853, 7
    %v5125 = vsel %vm5047, %v5123, %v5124
    %v5126 = vrot.slane %v4854, 7
    %v5127 = vsel %vm5047, %v5124, %v5126
    %v5128 = vrot.slane %v4855, 7
    %v5129 = vrot.slane %v4856, 7
    %v5130 = vsel %vm5047, %v5128, %v5129
    %v5131 = vrot.slane %v4857, 7
    %v5132 = vsel %vm5047, %v5129, %v5131
    %v5133 = vrot.slane %v4858, 7
    %v5134 = vrot.slane %v4859, 7
    %v5135 = vsel %vm5047, %v5133, %v5134
    %v5136 = vrot.slane %v4860, 7
    %v5137 = vsel %vm5047, %v5134, %v5136
    %v5138 = vrot.slane %v4861, 7
    %v5139 = vrot.slane %v4862, 7
    %v5140 = vsel %vm5047, %v5138, %v5139
    %v5141 = vrot.slane %v4863, 7
    %v5142 = vsel %vm5047, %v5139, %v5141
    %v5143 = vrot.slane %v4864, 7
    %v5144 = vrot.slane %v4865, 7
    %v5145 = vsel %vm5047, %v5143, %v5144
    %v5146 = vrot.slane %v4866, 7
    %v5147 = vsel %vm5047, %v5144, %v5146
    %v5148 = vrot.slane %v4867, 7
    %v5149 = vrot.slane %v4868, 7
    %v5150 = vsel %vm5047, %v5148, %v5149
    %v5151 = vrot.slane %v4869, 7
    %v5152 = vsel %vm5047, %v5149, %v5151
    %v5153 = vrot.slane %v4870, 7
    %v5154 = vrot.slane %v4871, 7
    %v5155 = vsel %vm5047, %v5153, %v5154
    %v5156 = vrot.slane %v4872, 7
    %v5157 = vsel %vm5047, %v5154, %v5156
    %v5158 = vrot.slane %v4873, 7
    %v5159 = vrot.slane %v4874, 7
    %v5160 = vsel %vm5047, %v5158, %v5159
    %v5161 = vrot.slane %v4875, 7
    %v5162 = vsel %vm5047, %v5159, %v5161
    %v5163 = vrot.slane %v4876, 7
    %v5164 = vrot.slane %v4877, 7
    %v5165 = vsel %vm5047, %v5163, %v5164
    %v5166 = vrot.slane %v4878, 7
    %v5167 = vsel %vm5047, %v5164, %v5166
    %v5168 = vrot.slane %v4879, 7
    %v5169 = vrot.slane %v4880, 7
    %v5170 = vsel %vm5047, %v5168, %v5169
    %v5171 = vrot.slane %v4881, 7
    %v5172 = vsel %vm5047, %v5169, %v5171
    %v5173 = vrot.slane %v4882, 7
    %v5174 = vrot.slane %v4883, 7
    %v5175 = vsel %vm5047, %v5173, %v5174
    %v5176 = vrot.slane %v4884, 7
    %v5177 = vsel %vm5047, %v5174, %v5176
    %v5178 = vrot.slane %v4885, 7
    %v5179 = vrot.slane %v4886, 7
    %v5180 = vsel %vm5047, %v5178, %v5179
    %v5181 = vrot.slane %v4887, 7
    %v5182 = vsel %vm5047, %v5179, %v5181
    %v5183 = vrot.slane %v4888, 7
    %v5184 = vrot.slane %v4889, 7
    %v5185 = vsel %vm5047, %v5183, %v5184
    %v5186 = vrot.slane %v4890, 7
    %v5187 = vsel %vm5047, %v5184, %v5186
    %v5188 = vrot.slane %v4891, 7
    %v5189 = vrot.slane %v4892, 7
    %v5190 = vsel %vm5047, %v5188, %v5189
    %v5191 = vrot.slane %v4893, 7
    %v5192 = vsel %vm5047, %v5189, %v5191
    %v5193 = vrot.slane %v4894, 7
    %v5194 = vrot.slane %v4895, 7
    %v5195 = vsel %vm5047, %v5193, %v5194
    %v5196 = vrot.slane %v4896, 7
    %v5197 = vsel %vm5047, %v5194, %v5196
    %v5198 = vrot.slane %v4897, 7
    %v5199 = vrot.slane %v4898, 7
    %v5200 = vsel %vm5047, %v5198, %v5199
    %v5201 = vrot.slane %v4899, 7
    %v5202 = vsel %vm5047, %v5199, %v5201
    %v5203 = vrot.slane %v4900, 7
    %v5204 = vrot.slane %v4901, 7
    %v5205 = vsel %vm5047, %v5203, %v5204
    %v5206 = vrot.slane %v4902, 7
    %v5207 = vsel %vm5047, %v5204, %v5206
    %v5208 = vrot.slane %v4903, 7
    %v5209 = vrot.slane %v4904, 7
    %v5210 = vsel %vm5047, %v5208, %v5209
    %v5211 = vrot.slane %v4905, 7
    %v5212 = vsel %vm5047, %v5209, %v5211
    %v5213 = vrot.slane %v4906, 7
    %v5214 = vrot.slane %v4907, 7
    %v5215 = vsel %vm5047, %v5213, %v5214
    %v5216 = vrot.slane %v4908, 7
    %v5217 = vsel %vm5047, %v5214, %v5216
    %v5218 = vrot.slane %v4909, 7
    %v5219 = vrot.slane %v4910, 7
    %v5220 = vsel %vm5047, %v5218, %v5219
    %v5221 = vrot.slane %v4911, 7
    %v5222 = vsel %vm5047, %v5219, %v5221
    %v5223 = vrot.slane %v4912, 7
    %v5224 = vrot.slane %v4913, 7
    %v5225 = vsel %vm5047, %v5223, %v5224
    %v5226 = vrot.slane %v4914, 7
    %v5227 = vsel %vm5047, %v5224, %v5226
    %v5228 = vrot.slane %v4915, 7
    %v5229 = vrot.slane %v4916, 7
    %v5230 = vsel %vm5047, %v5228, %v5229
    %v5231 = vrot.slane %v4917, 7
    %v5232 = vsel %vm5047, %v5229, %v5231
    %v5233 = vrot.slane %v4918, 7
    %v5234 = vrot.slane %v4919, 7
    %v5235 = vsel %vm5047, %v5233, %v5234
    %v5236 = vrot.slane %v4920, 7
    %v5237 = vsel %vm5047, %v5234, %v5236
    %v5238 = vrot.slane %v4921, 7
    %v5239 = vrot.slane %v4922, 7
    %v5240 = vsel %vm5047, %v5238, %v5239
    %v5241 = vrot.slane %v4923, 7
    %v5242 = vsel %vm5047, %v5239, %v5241
    %v5243 = vrot.slane %v4924, 7
    %v5244 = vrot.slane %v4925, 7
    %v5245 = vsel %vm5047, %v5243, %v5244
    %v5246 = vrot.slane %v4926, 7
    %v5247 = vsel %vm5047, %v5244, %v5246
    %v5368 = vadd.f32 %v4407, %v5048
    %v5369 = vadd.f32 %v4408, %v5050
    %v5370 = vadd.f32 %v4409, %v5052
    %v5371 = vadd.f32 %v4410, %v5053
    %v5372 = vadd.f32 %v4411, %v5055
    %v5373 = vadd.f32 %v4412, %v5057
    %v5374 = vadd.f32 %v4413, %v5058
    %v5375 = vadd.f32 %v4414, %v5060
    %v5376 = vadd.f32 %v4415, %v5062
    %v5377 = vadd.f32 %v4416, %v5063
    %v5378 = vadd.f32 %v4417, %v5065
    %v5379 = vadd.f32 %v4418, %v5067
    %v5380 = vadd.f32 %v4419, %v5068
    %v5381 = vadd.f32 %v4420, %v5070
    %v5382 = vadd.f32 %v4421, %v5072
    %v5383 = vadd.f32 %v4422, %v5073
    %v5384 = vadd.f32 %v4423, %v5075
    %v5385 = vadd.f32 %v4424, %v5077
    %v5386 = vadd.f32 %v4425, %v5078
    %v5387 = vadd.f32 %v4426, %v5080
    %v5388 = vadd.f32 %v4427, %v5082
    %v5389 = vadd.f32 %v4428, %v5083
    %v5390 = vadd.f32 %v4429, %v5085
    %v5391 = vadd.f32 %v4430, %v5087
    %v5392 = vadd.f32 %v4431, %v5088
    %v5393 = vadd.f32 %v4432, %v5090
    %v5394 = vadd.f32 %v4433, %v5092
    %v5395 = vadd.f32 %v4434, %v5093
    %v5396 = vadd.f32 %v4435, %v5095
    %v5397 = vadd.f32 %v4436, %v5097
    %v5398 = vadd.f32 %v4437, %v5098
    %v5399 = vadd.f32 %v4438, %v5100
    %v5400 = vadd.f32 %v4439, %v5102
    %v5401 = vadd.f32 %v4440, %v5103
    %v5402 = vadd.f32 %v4441, %v5105
    %v5403 = vadd.f32 %v4442, %v5107
    %v5404 = vadd.f32 %v4443, %v5108
    %v5405 = vadd.f32 %v4444, %v5110
    %v5406 = vadd.f32 %v4445, %v5112
    %v5407 = vadd.f32 %v4446, %v5113
    %v5408 = vadd.f32 %v4447, %v5115
    %v5409 = vadd.f32 %v4448, %v5117
    %v5410 = vadd.f32 %v4449, %v5118
    %v5411 = vadd.f32 %v4450, %v5120
    %v5412 = vadd.f32 %v4451, %v5122
    %v5413 = vadd.f32 %v4452, %v5123
    %v5414 = vadd.f32 %v4453, %v5125
    %v5415 = vadd.f32 %v4454, %v5127
    %v5416 = vadd.f32 %v4455, %v5128
    %v5417 = vadd.f32 %v4456, %v5130
    %v5418 = vadd.f32 %v4457, %v5132
    %v5419 = vadd.f32 %v4458, %v5133
    %v5420 = vadd.f32 %v4459, %v5135
    %v5421 = vadd.f32 %v4460, %v5137
    %v5422 = vadd.f32 %v4461, %v5138
    %v5423 = vadd.f32 %v4462, %v5140
    %v5424 = vadd.f32 %v4463, %v5142
    %v5425 = vadd.f32 %v4464, %v5143
    %v5426 = vadd.f32 %v4465, %v5145
    %v5427 = vadd.f32 %v4466, %v5147
    %v5428 = vadd.f32 %v4467, %v5148
    %v5429 = vadd.f32 %v4468, %v5150
    %v5430 = vadd.f32 %v4469, %v5152
    %v5431 = vadd.f32 %v4470, %v5153
    %v5432 = vadd.f32 %v4471, %v5155
    %v5433 = vadd.f32 %v4472, %v5157
    %v5434 = vadd.f32 %v4473, %v5158
    %v5435 = vadd.f32 %v4474, %v5160
    %v5436 = vadd.f32 %v4475, %v5162
    %v5437 = vadd.f32 %v4476, %v5163
    %v5438 = vadd.f32 %v4477, %v5165
    %v5439 = vadd.f32 %v4478, %v5167
    %v5440 = vadd.f32 %v4479, %v5168
    %v5441 = vadd.f32 %v4480, %v5170
    %v5442 = vadd.f32 %v4481, %v5172
    %v5443 = vadd.f32 %v4482, %v5173
    %v5444 = vadd.f32 %v4483, %v5175
    %v5445 = vadd.f32 %v4484, %v5177
    %v5446 = vadd.f32 %v4485, %v5178
    %v5447 = vadd.f32 %v4486, %v5180
    %v5448 = vadd.f32 %v4487, %v5182
    %v5449 = vadd.f32 %v4488, %v5183
    %v5450 = vadd.f32 %v4489, %v5185
    %v5451 = vadd.f32 %v4490, %v5187
    %v5452 = vadd.f32 %v4491, %v5188
    %v5453 = vadd.f32 %v4492, %v5190
    %v5454 = vadd.f32 %v4493, %v5192
    %v5455 = vadd.f32 %v4494, %v5193
    %v5456 = vadd.f32 %v4495, %v5195
    %v5457 = vadd.f32 %v4496, %v5197
    %v5458 = vadd.f32 %v4497, %v5198
    %v5459 = vadd.f32 %v4498, %v5200
    %v5460 = vadd.f32 %v4499, %v5202
    %v5461 = vadd.f32 %v4500, %v5203
    %v5462 = vadd.f32 %v4501, %v5205
    %v5463 = vadd.f32 %v4502, %v5207
    %v5464 = vadd.f32 %v4503, %v5208
    %v5465 = vadd.f32 %v4504, %v5210
    %v5466 = vadd.f32 %v4505, %v5212
    %v5467 = vadd.f32 %v4506, %v5213
    %v5468 = vadd.f32 %v4507, %v5215
    %v5469 = vadd.f32 %v4508, %v5217
    %v5470 = vadd.f32 %v4509, %v5218
    %v5471 = vadd.f32 %v4510, %v5220
    %v5472 = vadd.f32 %v4511, %v5222
    %v5473 = vadd.f32 %v4512, %v5223
    %v5474 = vadd.f32 %v4513, %v5225
    %v5475 = vadd.f32 %v4514, %v5227
    %v5476 = vadd.f32 %v4515, %v5228
    %v5477 = vadd.f32 %v4516, %v5230
    %v5478 = vadd.f32 %v4517, %v5232
    %v5479 = vadd.f32 %v4518, %v5233
    %v5480 = vadd.f32 %v4519, %v5235
    %v5481 = vadd.f32 %v4520, %v5237
    %v5482 = vadd.f32 %v4521, %v5238
    %v5483 = vadd.f32 %v4522, %v5240
    %v5484 = vadd.f32 %v4523, %v5242
    %v5485 = vadd.f32 %v4524, %v5243
    %v5486 = vadd.f32 %v4525, %v5245
    %v5487 = vadd.f32 %v4526, %v5247
    %v5608 = vrot.slane %v5368, 5
    %v5609 = vrot.slane %v5369, 5
    %v5610 = vsel %vm2926, %v5608, %v5609
    %v5611 = vrot.slane %v5370, 5
    %v5612 = vsel %vm2926, %v5609, %v5611
    %v5613 = vrot.slane %v5371, 5
    %v5614 = vrot.slane %v5372, 5
    %v5615 = vsel %vm2926, %v5613, %v5614
    %v5616 = vrot.slane %v5373, 5
    %v5617 = vsel %vm2926, %v5614, %v5616
    %v5618 = vrot.slane %v5374, 5
    %v5619 = vrot.slane %v5375, 5
    %v5620 = vsel %vm2926, %v5618, %v5619
    %v5621 = vrot.slane %v5376, 5
    %v5622 = vsel %vm2926, %v5619, %v5621
    %v5623 = vrot.slane %v5377, 5
    %v5624 = vrot.slane %v5378, 5
    %v5625 = vsel %vm2926, %v5623, %v5624
    %v5626 = vrot.slane %v5379, 5
    %v5627 = vsel %vm2926, %v5624, %v5626
    %v5628 = vrot.slane %v5380, 5
    %v5629 = vrot.slane %v5381, 5
    %v5630 = vsel %vm2926, %v5628, %v5629
    %v5631 = vrot.slane %v5382, 5
    %v5632 = vsel %vm2926, %v5629, %v5631
    %v5633 = vrot.slane %v5383, 5
    %v5634 = vrot.slane %v5384, 5
    %v5635 = vsel %vm2926, %v5633, %v5634
    %v5636 = vrot.slane %v5385, 5
    %v5637 = vsel %vm2926, %v5634, %v5636
    %v5638 = vrot.slane %v5386, 5
    %v5639 = vrot.slane %v5387, 5
    %v5640 = vsel %vm2926, %v5638, %v5639
    %v5641 = vrot.slane %v5388, 5
    %v5642 = vsel %vm2926, %v5639, %v5641
    %v5643 = vrot.slane %v5389, 5
    %v5644 = vrot.slane %v5390, 5
    %v5645 = vsel %vm2926, %v5643, %v5644
    %v5646 = vrot.slane %v5391, 5
    %v5647 = vsel %vm2926, %v5644, %v5646
    %v5648 = vrot.slane %v5392, 5
    %v5649 = vrot.slane %v5393, 5
    %v5650 = vsel %vm2926, %v5648, %v5649
    %v5651 = vrot.slane %v5394, 5
    %v5652 = vsel %vm2926, %v5649, %v5651
    %v5653 = vrot.slane %v5395, 5
    %v5654 = vrot.slane %v5396, 5
    %v5655 = vsel %vm2926, %v5653, %v5654
    %v5656 = vrot.slane %v5397, 5
    %v5657 = vsel %vm2926, %v5654, %v5656
    %v5658 = vrot.slane %v5398, 5
    %v5659 = vrot.slane %v5399, 5
    %v5660 = vsel %vm2926, %v5658, %v5659
    %v5661 = vrot.slane %v5400, 5
    %v5662 = vsel %vm2926, %v5659, %v5661
    %v5663 = vrot.slane %v5401, 5
    %v5664 = vrot.slane %v5402, 5
    %v5665 = vsel %vm2926, %v5663, %v5664
    %v5666 = vrot.slane %v5403, 5
    %v5667 = vsel %vm2926, %v5664, %v5666
    %v5668 = vrot.slane %v5404, 5
    %v5669 = vrot.slane %v5405, 5
    %v5670 = vsel %vm2926, %v5668, %v5669
    %v5671 = vrot.slane %v5406, 5
    %v5672 = vsel %vm2926, %v5669, %v5671
    %v5673 = vrot.slane %v5407, 5
    %v5674 = vrot.slane %v5408, 5
    %v5675 = vsel %vm2926, %v5673, %v5674
    %v5676 = vrot.slane %v5409, 5
    %v5677 = vsel %vm2926, %v5674, %v5676
    %v5678 = vrot.slane %v5410, 5
    %v5679 = vrot.slane %v5411, 5
    %v5680 = vsel %vm2926, %v5678, %v5679
    %v5681 = vrot.slane %v5412, 5
    %v5682 = vsel %vm2926, %v5679, %v5681
    %v5683 = vrot.slane %v5413, 5
    %v5684 = vrot.slane %v5414, 5
    %v5685 = vsel %vm2926, %v5683, %v5684
    %v5686 = vrot.slane %v5415, 5
    %v5687 = vsel %vm2926, %v5684, %v5686
    %v5688 = vrot.slane %v5416, 5
    %v5689 = vrot.slane %v5417, 5
    %v5690 = vsel %vm2926, %v5688, %v5689
    %v5691 = vrot.slane %v5418, 5
    %v5692 = vsel %vm2926, %v5689, %v5691
    %v5693 = vrot.slane %v5419, 5
    %v5694 = vrot.slane %v5420, 5
    %v5695 = vsel %vm2926, %v5693, %v5694
    %v5696 = vrot.slane %v5421, 5
    %v5697 = vsel %vm2926, %v5694, %v5696
    %v5698 = vrot.slane %v5422, 5
    %v5699 = vrot.slane %v5423, 5
    %v5700 = vsel %vm2926, %v5698, %v5699
    %v5701 = vrot.slane %v5424, 5
    %v5702 = vsel %vm2926, %v5699, %v5701
    %v5703 = vrot.slane %v5425, 5
    %v5704 = vrot.slane %v5426, 5
    %v5705 = vsel %vm2926, %v5703, %v5704
    %v5706 = vrot.slane %v5427, 5
    %v5707 = vsel %vm2926, %v5704, %v5706
    %v5708 = vrot.slane %v5428, 5
    %v5709 = vrot.slane %v5429, 5
    %v5710 = vsel %vm2926, %v5708, %v5709
    %v5711 = vrot.slane %v5430, 5
    %v5712 = vsel %vm2926, %v5709, %v5711
    %v5713 = vrot.slane %v5431, 5
    %v5714 = vrot.slane %v5432, 5
    %v5715 = vsel %vm2926, %v5713, %v5714
    %v5716 = vrot.slane %v5433, 5
    %v5717 = vsel %vm2926, %v5714, %v5716
    %v5718 = vrot.slane %v5434, 5
    %v5719 = vrot.slane %v5435, 5
    %v5720 = vsel %vm2926, %v5718, %v5719
    %v5721 = vrot.slane %v5436, 5
    %v5722 = vsel %vm2926, %v5719, %v5721
    %v5723 = vrot.slane %v5437, 5
    %v5724 = vrot.slane %v5438, 5
    %v5725 = vsel %vm2926, %v5723, %v5724
    %v5726 = vrot.slane %v5439, 5
    %v5727 = vsel %vm2926, %v5724, %v5726
    %v5728 = vrot.slane %v5440, 5
    %v5729 = vrot.slane %v5441, 5
    %v5730 = vsel %vm2926, %v5728, %v5729
    %v5731 = vrot.slane %v5442, 5
    %v5732 = vsel %vm2926, %v5729, %v5731
    %v5733 = vrot.slane %v5443, 5
    %v5734 = vrot.slane %v5444, 5
    %v5735 = vsel %vm2926, %v5733, %v5734
    %v5736 = vrot.slane %v5445, 5
    %v5737 = vsel %vm2926, %v5734, %v5736
    %v5738 = vrot.slane %v5446, 5
    %v5739 = vrot.slane %v5447, 5
    %v5740 = vsel %vm2926, %v5738, %v5739
    %v5741 = vrot.slane %v5448, 5
    %v5742 = vsel %vm2926, %v5739, %v5741
    %v5743 = vrot.slane %v5449, 5
    %v5744 = vrot.slane %v5450, 5
    %v5745 = vsel %vm2926, %v5743, %v5744
    %v5746 = vrot.slane %v5451, 5
    %v5747 = vsel %vm2926, %v5744, %v5746
    %v5748 = vrot.slane %v5452, 5
    %v5749 = vrot.slane %v5453, 5
    %v5750 = vsel %vm2926, %v5748, %v5749
    %v5751 = vrot.slane %v5454, 5
    %v5752 = vsel %vm2926, %v5749, %v5751
    %v5753 = vrot.slane %v5455, 5
    %v5754 = vrot.slane %v5456, 5
    %v5755 = vsel %vm2926, %v5753, %v5754
    %v5756 = vrot.slane %v5457, 5
    %v5757 = vsel %vm2926, %v5754, %v5756
    %v5758 = vrot.slane %v5458, 5
    %v5759 = vrot.slane %v5459, 5
    %v5760 = vsel %vm2926, %v5758, %v5759
    %v5761 = vrot.slane %v5460, 5
    %v5762 = vsel %vm2926, %v5759, %v5761
    %v5763 = vrot.slane %v5461, 5
    %v5764 = vrot.slane %v5462, 5
    %v5765 = vsel %vm2926, %v5763, %v5764
    %v5766 = vrot.slane %v5463, 5
    %v5767 = vsel %vm2926, %v5764, %v5766
    %v5768 = vrot.slane %v5464, 5
    %v5769 = vrot.slane %v5465, 5
    %v5770 = vsel %vm2926, %v5768, %v5769
    %v5771 = vrot.slane %v5466, 5
    %v5772 = vsel %vm2926, %v5769, %v5771
    %v5773 = vrot.slane %v5467, 5
    %v5774 = vrot.slane %v5468, 5
    %v5775 = vsel %vm2926, %v5773, %v5774
    %v5776 = vrot.slane %v5469, 5
    %v5777 = vsel %vm2926, %v5774, %v5776
    %v5778 = vrot.slane %v5470, 5
    %v5779 = vrot.slane %v5471, 5
    %v5780 = vsel %vm2926, %v5778, %v5779
    %v5781 = vrot.slane %v5472, 5
    %v5782 = vsel %vm2926, %v5779, %v5781
    %v5783 = vrot.slane %v5473, 5
    %v5784 = vrot.slane %v5474, 5
    %v5785 = vsel %vm2926, %v5783, %v5784
    %v5786 = vrot.slane %v5475, 5
    %v5787 = vsel %vm2926, %v5784, %v5786
    %v5788 = vrot.slane %v5476, 5
    %v5789 = vrot.slane %v5477, 5
    %v5790 = vsel %vm2926, %v5788, %v5789
    %v5791 = vrot.slane %v5478, 5
    %v5792 = vsel %vm2926, %v5789, %v5791
    %v5793 = vrot.slane %v5479, 5
    %v5794 = vrot.slane %v5480, 5
    %v5795 = vsel %vm2926, %v5793, %v5794
    %v5796 = vrot.slane %v5481, 5
    %v5797 = vsel %vm2926, %v5794, %v5796
    %v5798 = vrot.slane %v5482, 5
    %v5799 = vrot.slane %v5483, 5
    %v5800 = vsel %vm2926, %v5798, %v5799
    %v5801 = vrot.slane %v5484, 5
    %v5802 = vsel %vm2926, %v5799, %v5801
    %v5803 = vrot.slane %v5485, 5
    %v5804 = vrot.slane %v5486, 5
    %v5805 = vsel %vm2926, %v5803, %v5804
    %v5806 = vrot.slane %v5487, 5
    %v5807 = vsel %vm2926, %v5804, %v5806
    %5808 = vrot.lane.b32.xlu0 %v5610, 5
    %v5809 = vpop.permute.xlu0 %5808
    %5810 = vrot.lane.b32.xlu0 %v5612, 5
    %v5811 = vpop.permute.xlu0 %5810
    %5812 = vrot.lane.b32.xlu0 %v5615, 5
    %v5813 = vpop.permute.xlu0 %5812
    %5814 = vrot.lane.b32.xlu0 %v5617, 5
    %v5815 = vpop.permute.xlu0 %5814
    %5816 = vrot.lane.b32.xlu0 %v5620, 5
    %v5817 = vpop.permute.xlu0 %5816
    %5818 = vrot.lane.b32.xlu0 %v5622, 5
    %v5819 = vpop.permute.xlu0 %5818
    %5820 = vrot.lane.b32.xlu0 %v5625, 5
    %v5821 = vpop.permute.xlu0 %5820
    %5822 = vrot.lane.b32.xlu0 %v5627, 5
    %v5823 = vpop.permute.xlu0 %5822
    %5824 = vrot.lane.b32.xlu0 %v5630, 5
    %v5825 = vpop.permute.xlu0 %5824
    %5826 = vrot.lane.b32.xlu0 %v5632, 5
    %v5827 = vpop.permute.xlu0 %5826
    %5828 = vrot.lane.b32.xlu0 %v5635, 5
    %v5829 = vpop.permute.xlu0 %5828
    %5830 = vrot.lane.b32.xlu0 %v5637, 5
    %v5831 = vpop.permute.xlu0 %5830
    %5832 = vrot.lane.b32.xlu0 %v5640, 5
    %v5833 = vpop.permute.xlu0 %5832
    %5834 = vrot.lane.b32.xlu0 %v5642, 5
    %v5835 = vpop.permute.xlu0 %5834
    %5836 = vrot.lane.b32.xlu0 %v5645, 5
    %v5837 = vpop.permute.xlu0 %5836
    %5838 = vrot.lane.b32.xlu0 %v5647, 5
    %v5839 = vpop.permute.xlu0 %5838
    %5840 = vrot.lane.b32.xlu0 %v5650, 5
    %v5841 = vpop.permute.xlu0 %5840
    %5842 = vrot.lane.b32.xlu0 %v5652, 5
    %v5843 = vpop.permute.xlu0 %5842
    %5844 = vrot.lane.b32.xlu0 %v5655, 5
    %v5845 = vpop.permute.xlu0 %5844
    %5846 = vrot.lane.b32.xlu0 %v5657, 5
    %v5847 = vpop.permute.xlu0 %5846
    %5848 = vrot.lane.b32.xlu0 %v5660, 5
    %v5849 = vpop.permute.xlu0 %5848
    %5850 = vrot.lane.b32.xlu0 %v5662, 5
    %v5851 = vpop.permute.xlu0 %5850
    %5852 = vrot.lane.b32.xlu0 %v5665, 5
    %v5853 = vpop.permute.xlu0 %5852
    %5854 = vrot.lane.b32.xlu0 %v5667, 5
    %v5855 = vpop.permute.xlu0 %5854
    %5856 = vrot.lane.b32.xlu0 %v5670, 5
    %v5857 = vpop.permute.xlu0 %5856
    %5858 = vrot.lane.b32.xlu0 %v5672, 5
    %v5859 = vpop.permute.xlu0 %5858
    %5860 = vrot.lane.b32.xlu0 %v5675, 5
    %v5861 = vpop.permute.xlu0 %5860
    %5862 = vrot.lane.b32.xlu0 %v5677, 5
    %v5863 = vpop.permute.xlu0 %5862
    %5864 = vrot.lane.b32.xlu0 %v5680, 5
    %v5865 = vpop.permute.xlu0 %5864
    %5866 = vrot.lane.b32.xlu0 %v5682, 5
    %v5867 = vpop.permute.xlu0 %5866
    %5868 = vrot.lane.b32.xlu0 %v5685, 5
    %v5869 = vpop.permute.xlu0 %5868
    %5870 = vrot.lane.b32.xlu0 %v5687, 5
    %v5871 = vpop.permute.xlu0 %5870
    %5872 = vrot.lane.b32.xlu0 %v5690, 5
    %v5873 = vpop.permute.xlu0 %5872
    %5874 = vrot.lane.b32.xlu0 %v5692, 5
    %v5875 = vpop.permute.xlu0 %5874
    %5876 = vrot.lane.b32.xlu0 %v5695, 5
    %v5877 = vpop.permute.xlu0 %5876
    %5878 = vrot.lane.b32.xlu0 %v5697, 5
    %v5879 = vpop.permute.xlu0 %5878
    %5880 = vrot.lane.b32.xlu0 %v5700, 5
    %v5881 = vpop.permute.xlu0 %5880
    %5882 = vrot.lane.b32.xlu0 %v5702, 5
    %v5883 = vpop.permute.xlu0 %5882
    %5884 = vrot.lane.b32.xlu0 %v5705, 5
    %v5885 = vpop.permute.xlu0 %5884
    %5886 = vrot.lane.b32.xlu0 %v5707, 5
    %v5887 = vpop.permute.xlu0 %5886
    %5888 = vrot.lane.b32.xlu0 %v5710, 5
    %v5889 = vpop.permute.xlu0 %5888
    %5890 = vrot.lane.b32.xlu0 %v5712, 5
    %v5891 = vpop.permute.xlu0 %5890
    %5892 = vrot.lane.b32.xlu0 %v5715, 5
    %v5893 = vpop.permute.xlu0 %5892
    %5894 = vrot.lane.b32.xlu0 %v5717, 5
    %v5895 = vpop.permute.xlu0 %5894
    %5896 = vrot.lane.b32.xlu0 %v5720, 5
    %v5897 = vpop.permute.xlu0 %5896
    %5898 = vrot.lane.b32.xlu0 %v5722, 5
    %v5899 = vpop.permute.xlu0 %5898
    %5900 = vrot.lane.b32.xlu0 %v5725, 5
    %v5901 = vpop.permute.xlu0 %5900
    %5902 = vrot.lane.b32.xlu0 %v5727, 5
    %v5903 = vpop.permute.xlu0 %5902
    %5904 = vrot.lane.b32.xlu0 %v5730, 5
    %v5905 = vpop.permute.xlu0 %5904
    %5906 = vrot.lane.b32.xlu0 %v5732, 5
    %v5907 = vpop.permute.xlu0 %5906
    %5908 = vrot.lane.b32.xlu0 %v5735, 5
    %v5909 = vpop.permute.xlu0 %5908
    %5910 = vrot.lane.b32.xlu0 %v5737, 5
    %v5911 = vpop.permute.xlu0 %5910
    %5912 = vrot.lane.b32.xlu0 %v5740, 5
    %v5913 = vpop.permute.xlu0 %5912
    %5914 = vrot.lane.b32.xlu0 %v5742, 5
    %v5915 = vpop.permute.xlu0 %5914
    %5916 = vrot.lane.b32.xlu0 %v5745, 5
    %v5917 = vpop.permute.xlu0 %5916
    %5918 = vrot.lane.b32.xlu0 %v5747, 5
    %v5919 = vpop.permute.xlu0 %5918
    %5920 = vrot.lane.b32.xlu0 %v5750, 5
    %v5921 = vpop.permute.xlu0 %5920
    %5922 = vrot.lane.b32.xlu0 %v5752, 5
    %v5923 = vpop.permute.xlu0 %5922
    %5924 = vrot.lane.b32.xlu0 %v5755, 5
    %v5925 = vpop.permute.xlu0 %5924
    %5926 = vrot.lane.b32.xlu0 %v5757, 5
    %v5927 = vpop.permute.xlu0 %5926
    %5928 = vrot.lane.b32.xlu0 %v5760, 5
    %v5929 = vpop.permute.xlu0 %5928
    %5930 = vrot.lane.b32.xlu0 %v5762, 5
    %v5931 = vpop.permute.xlu0 %5930
    %5932 = vrot.lane.b32.xlu0 %v5765, 5
    %v5933 = vpop.permute.xlu0 %5932
    %5934 = vrot.lane.b32.xlu0 %v5767, 5
    %v5935 = vpop.permute.xlu0 %5934
    %5936 = vrot.lane.b32.xlu0 %v5770, 5
    %v5937 = vpop.permute.xlu0 %5936
    %5938 = vrot.lane.b32.xlu0 %v5772, 5
    %v5939 = vpop.permute.xlu0 %5938
    %5940 = vrot.lane.b32.xlu0 %v5775, 5
    %v5941 = vpop.permute.xlu0 %5940
    %5942 = vrot.lane.b32.xlu0 %v5777, 5
    %v5943 = vpop.permute.xlu0 %5942
    %5944 = vrot.lane.b32.xlu0 %v5780, 5
    %v5945 = vpop.permute.xlu0 %5944
    %5946 = vrot.lane.b32.xlu0 %v5782, 5
    %v5947 = vpop.permute.xlu0 %5946
    %5948 = vrot.lane.b32.xlu0 %v5785, 5
    %v5949 = vpop.permute.xlu0 %5948
    %5950 = vrot.lane.b32.xlu0 %v5787, 5
    %v5951 = vpop.permute.xlu0 %5950
    %5952 = vrot.lane.b32.xlu0 %v5790, 5
    %v5953 = vpop.permute.xlu0 %5952
    %5954 = vrot.lane.b32.xlu0 %v5792, 5
    %v5955 = vpop.permute.xlu0 %5954
    %5956 = vrot.lane.b32.xlu0 %v5795, 5
    %v5957 = vpop.permute.xlu0 %5956
    %5958 = vrot.lane.b32.xlu0 %v5797, 5
    %v5959 = vpop.permute.xlu0 %5958
    %5960 = vrot.lane.b32.xlu0 %v5800, 5
    %v5961 = vpop.permute.xlu0 %5960
    %5962 = vrot.lane.b32.xlu0 %v5802, 5
    %v5963 = vpop.permute.xlu0 %5962
    %5964 = vrot.lane.b32.xlu0 %v5805, 5
    %v5965 = vpop.permute.xlu0 %5964
    %5966 = vrot.lane.b32.xlu0 %v5807, 5
    %v5967 = vpop.permute.xlu0 %5966
    %vm6048 = vcmask 39936
    %v6049 = vsel %vm6048, 0.0, %v5809
    %v6050 = vsel %vm6048, 0.0, %v5811
    %v6051 = vsel %vm6048, 0.0, %v5813
    %v6052 = vsel %vm6048, 0.0, %v5815
    %v6053 = vsel %vm6048, 0.0, %v5817
    %v6054 = vsel %vm6048, 0.0, %v5819
    %v6055 = vsel %vm6048, 0.0, %v5821
    %v6056 = vsel %vm6048, 0.0, %v5823
    %v6057 = vsel %vm6048, 0.0, %v5825
    %v6058 = vsel %vm6048, 0.0, %v5827
    %v6059 = vsel %vm6048, 0.0, %v5829
    %v6060 = vsel %vm6048, 0.0, %v5831
    %v6061 = vsel %vm6048, 0.0, %v5833
    %v6062 = vsel %vm6048, 0.0, %v5835
    %v6063 = vsel %vm6048, 0.0, %v5837
    %v6064 = vsel %vm6048, 0.0, %v5839
    %v6065 = vsel %vm6048, 0.0, %v5841
    %v6066 = vsel %vm6048, 0.0, %v5843
    %v6067 = vsel %vm6048, 0.0, %v5845
    %v6068 = vsel %vm6048, 0.0, %v5847
    %v6069 = vsel %vm6048, 0.0, %v5849
    %v6070 = vsel %vm6048, 0.0, %v5851
    %v6071 = vsel %vm6048, 0.0, %v5853
    %v6072 = vsel %vm6048, 0.0, %v5855
    %v6073 = vsel %vm6048, 0.0, %v5857
    %v6074 = vsel %vm6048, 0.0, %v5859
    %v6075 = vsel %vm6048, 0.0, %v5861
    %v6076 = vsel %vm6048, 0.0, %v5863
    %v6077 = vsel %vm6048, 0.0, %v5865
    %v6078 = vsel %vm6048, 0.0, %v5867
    %v6079 = vsel %vm6048, 0.0, %v5869
    %v6080 = vsel %vm6048, 0.0, %v5871
    %v6081 = vsel %vm6048, 0.0, %v5873
    %v6082 = vsel %vm6048, 0.0, %v5875
    %v6083 = vsel %vm6048, 0.0, %v5877
    %v6084 = vsel %vm6048, 0.0, %v5879
    %v6085 = vsel %vm6048, 0.0, %v5881
    %v6086 = vsel %vm6048, 0.0, %v5883
    %v6087 = vsel %vm6048, 0.0, %v5885
    %v6088 = vsel %vm6048, 0.0, %v5887
    %v6089 = vsel %vm6048, 0.0, %v5889
    %v6090 = vsel %vm6048, 0.0, %v5891
    %v6091 = vsel %vm6048, 0.0, %v5893
    %v6092 = vsel %vm6048, 0.0, %v5895
    %v6093 = vsel %vm6048, 0.0, %v5897
    %v6094 = vsel %vm6048, 0.0, %v5899
    %v6095 = vsel %vm6048, 0.0, %v5901
    %v6096 = vsel %vm6048, 0.0, %v5903
    %v6097 = vsel %vm6048, 0.0, %v5905
    %v6098 = vsel %vm6048, 0.0, %v5907
    %v6099 = vsel %vm6048, 0.0, %v5909
    %v6100 = vsel %vm6048, 0.0, %v5911
    %v6101 = vsel %vm6048, 0.0, %v5913
    %v6102 = vsel %vm6048, 0.0, %v5915
    %v6103 = vsel %vm6048, 0.0, %v5917
    %v6104 = vsel %vm6048, 0.0, %v5919
    %v6105 = vsel %vm6048, 0.0, %v5921
    %v6106 = vsel %vm6048, 0.0, %v5923
    %v6107 = vsel %vm6048, 0.0, %v5925
    %v6108 = vsel %vm6048, 0.0, %v5927
    %v6109 = vsel %vm6048, 0.0, %v5929
    %v6110 = vsel %vm6048, 0.0, %v5931
    %v6111 = vsel %vm6048, 0.0, %v5933
    %v6112 = vsel %vm6048, 0.0, %v5935
    %v6113 = vsel %vm6048, 0.0, %v5937
    %v6114 = vsel %vm6048, 0.0, %v5939
    %v6115 = vsel %vm6048, 0.0, %v5941
    %v6116 = vsel %vm6048, 0.0, %v5943
    %v6117 = vsel %vm6048, 0.0, %v5945
    %v6118 = vsel %vm6048, 0.0, %v5947
    %v6119 = vsel %vm6048, 0.0, %v5949
    %v6120 = vsel %vm6048, 0.0, %v5951
    %v6121 = vsel %vm6048, 0.0, %v5953
    %v6122 = vsel %vm6048, 0.0, %v5955
    %v6123 = vsel %vm6048, 0.0, %v5957
    %v6124 = vsel %vm6048, 0.0, %v5959
    %v6125 = vsel %vm6048, 0.0, %v5961
    %v6126 = vsel %vm6048, 0.0, %v5963
    %v6127 = vsel %vm6048, 0.0, %v5965
    %v6128 = vsel %vm6048, 0.0, %v5967
    %vm6129 = vcmask 171008
    %v6130 = vsel %vm6129, %v6049, 0.0
    %v6131 = vsel %vm6129, %v6050, 0.0
    %v6132 = vsel %vm6129, %v6051, 0.0
    %v6133 = vsel %vm6129, %v6052, 0.0
    %v6134 = vsel %vm6129, %v6053, 0.0
    %v6135 = vsel %vm6129, %v6054, 0.0
    %v6136 = vsel %vm6129, %v6055, 0.0
    %v6137 = vsel %vm6129, %v6056, 0.0
    %v6138 = vsel %vm6129, %v6057, 0.0
    %v6139 = vsel %vm6129, %v6058, 0.0
    %v6140 = vsel %vm6129, %v6059, 0.0
    %v6141 = vsel %vm6129, %v6060, 0.0
    %v6142 = vsel %vm6129, %v6061, 0.0
    %v6143 = vsel %vm6129, %v6062, 0.0
    %v6144 = vsel %vm6129, %v6063, 0.0
    %v6145 = vsel %vm6129, %v6064, 0.0
    %v6146 = vsel %vm6129, %v6065, 0.0
    %v6147 = vsel %vm6129, %v6066, 0.0
    %v6148 = vsel %vm6129, %v6067, 0.0
    %v6149 = vsel %vm6129, %v6068, 0.0
    %v6150 = vsel %vm6129, %v6069, 0.0
    %v6151 = vsel %vm6129, %v6070, 0.0
    %v6152 = vsel %vm6129, %v6071, 0.0
    %v6153 = vsel %vm6129, %v6072, 0.0
    %v6154 = vsel %vm6129, %v6073, 0.0
    %v6155 = vsel %vm6129, %v6074, 0.0
    %v6156 = vsel %vm6129, %v6075, 0.0
    %v6157 = vsel %vm6129, %v6076, 0.0
    %v6158 = vsel %vm6129, %v6077, 0.0
    %v6159 = vsel %vm6129, %v6078, 0.0
    %v6160 = vsel %vm6129, %v6079, 0.0
    %v6161 = vsel %vm6129, %v6080, 0.0
    %v6162 = vsel %vm6129, %v6081, 0.0
    %v6163 = vsel %vm6129, %v6082, 0.0
    %v6164 = vsel %vm6129, %v6083, 0.0
    %v6165 = vsel %vm6129, %v6084, 0.0
    %v6166 = vsel %vm6129, %v6085, 0.0
    %v6167 = vsel %vm6129, %v6086, 0.0
    %v6168 = vsel %vm6129, %v6087, 0.0
    %v6169 = vsel %vm6129, %v6088, 0.0
    %v6170 = vsel %vm6129, %v6089, 0.0
    %v6171 = vsel %vm6129, %v6090, 0.0
    %v6172 = vsel %vm6129, %v6091, 0.0
    %v6173 = vsel %vm6129, %v6092, 0.0
    %v6174 = vsel %vm6129, %v6093, 0.0
    %v6175 = vsel %vm6129, %v6094, 0.0
    %v6176 = vsel %vm6129, %v6095, 0.0
    %v6177 = vsel %vm6129, %v6096, 0.0
    %v6178 = vsel %vm6129, %v6097, 0.0
    %v6179 = vsel %vm6129, %v6098, 0.0
    %v6180 = vsel %vm6129, %v6099, 0.0
    %v6181 = vsel %vm6129, %v6100, 0.0
    %v6182 = vsel %vm6129, %v6101, 0.0
    %v6183 = vsel %vm6129, %v6102, 0.0
    %v6184 = vsel %vm6129, %v6103, 0.0
    %v6185 = vsel %vm6129, %v6104, 0.0
    %v6186 = vsel %vm6129, %v6105, 0.0
    %v6187 = vsel %vm6129, %v6106, 0.0
    %v6188 = vsel %vm6129, %v6107, 0.0
    %v6189 = vsel %vm6129, %v6108, 0.0
    %v6190 = vsel %vm6129, %v6109, 0.0
    %v6191 = vsel %vm6129, %v6110, 0.0
    %v6192 = vsel %vm6129, %v6111, 0.0
    %v6193 = vsel %vm6129, %v6112, 0.0
    %v6194 = vsel %vm6129, %v6113, 0.0
    %v6195 = vsel %vm6129, %v6114, 0.0
    %v6196 = vsel %vm6129, %v6115, 0.0
    %v6197 = vsel %vm6129, %v6116, 0.0
    %v6198 = vsel %vm6129, %v6117, 0.0
    %v6199 = vsel %vm6129, %v6118, 0.0
    %v6200 = vsel %vm6129, %v6119, 0.0
    %v6201 = vsel %vm6129, %v6120, 0.0
    %v6202 = vsel %vm6129, %v6121, 0.0
    %v6203 = vsel %vm6129, %v6122, 0.0
    %v6204 = vsel %vm6129, %v6123, 0.0
    %v6205 = vsel %vm6129, %v6124, 0.0
    %v6206 = vsel %vm6129, %v6125, 0.0
    %v6207 = vsel %vm6129, %v6126, 0.0
    %v6208 = vsel %vm6129, %v6127, 0.0
    %v6209 = vsel %vm6129, %v6128, 0.0
    %v6210 = vmul.f32 %v6130, 0.26601174
    %v6211 = vmul.f32 %v6131, 0.26601174
    %v6212 = vmul.f32 %v6132, 0.26601174
    %v6213 = vmul.f32 %v6133, 0.26601174
    %v6214 = vmul.f32 %v6134, 0.26601174
    %v6215 = vmul.f32 %v6135, 0.26601174
    %v6216 = vmul.f32 %v6136, 0.26601174
    %v6217 = vmul.f32 %v6137, 0.26601174
    %v6218 = vmul.f32 %v6138, 0.26601174
    %v6219 = vmul.f32 %v6139, 0.26601174
    %v6220 = vmul.f32 %v6140, 0.26601174
    %v6221 = vmul.f32 %v6141, 0.26601174
    %v6222 = vmul.f32 %v6142, 0.26601174
    %v6223 = vmul.f32 %v6143, 0.26601174
    %v6224 = vmul.f32 %v6144, 0.26601174
    %v6225 = vmul.f32 %v6145, 0.26601174
    %v6226 = vmul.f32 %v6146, 0.26601174
    %v6227 = vmul.f32 %v6147, 0.26601174
    %v6228 = vmul.f32 %v6148, 0.26601174
    %v6229 = vmul.f32 %v6149, 0.26601174
    %v6230 = vmul.f32 %v6150, 0.26601174
    %v6231 = vmul.f32 %v6151, 0.26601174
    %v6232 = vmul.f32 %v6152, 0.26601174
    %v6233 = vmul.f32 %v6153, 0.26601174
    %v6234 = vmul.f32 %v6154, 0.26601174
    %v6235 = vmul.f32 %v6155, 0.26601174
    %v6236 = vmul.f32 %v6156, 0.26601174
    %v6237 = vmul.f32 %v6157, 0.26601174
    %v6238 = vmul.f32 %v6158, 0.26601174
    %v6239 = vmul.f32 %v6159, 0.26601174
    %v6240 = vmul.f32 %v6160, 0.26601174
    %v6241 = vmul.f32 %v6161, 0.26601174
    %v6242 = vmul.f32 %v6162, 0.26601174
    %v6243 = vmul.f32 %v6163, 0.26601174
    %v6244 = vmul.f32 %v6164, 0.26601174
    %v6245 = vmul.f32 %v6165, 0.26601174
    %v6246 = vmul.f32 %v6166, 0.26601174
    %v6247 = vmul.f32 %v6167, 0.26601174
    %v6248 = vmul.f32 %v6168, 0.26601174
    %v6249 = vmul.f32 %v6169, 0.26601174
    %v6250 = vmul.f32 %v6170, 0.26601174
    %v6251 = vmul.f32 %v6171, 0.26601174
    %v6252 = vmul.f32 %v6172, 0.26601174
    %v6253 = vmul.f32 %v6173, 0.26601174
    %v6254 = vmul.f32 %v6174, 0.26601174
    %v6255 = vmul.f32 %v6175, 0.26601174
    %v6256 = vmul.f32 %v6176, 0.26601174
    %v6257 = vmul.f32 %v6177, 0.26601174
    %v6258 = vmul.f32 %v6178, 0.26601174
    %v6259 = vmul.f32 %v6179, 0.26601174
    %v6260 = vmul.f32 %v6180, 0.26601174
    %v6261 = vmul.f32 %v6181, 0.26601174
    %v6262 = vmul.f32 %v6182, 0.26601174
    %v6263 = vmul.f32 %v6183, 0.26601174
    %v6264 = vmul.f32 %v6184, 0.26601174
    %v6265 = vmul.f32 %v6185, 0.26601174
    %v6266 = vmul.f32 %v6186, 0.26601174
    %v6267 = vmul.f32 %v6187, 0.26601174
    %v6268 = vmul.f32 %v6188, 0.26601174
    %v6269 = vmul.f32 %v6189, 0.26601174
    %v6270 = vmul.f32 %v6190, 0.26601174
    %v6271 = vmul.f32 %v6191, 0.26601174
    %v6272 = vmul.f32 %v6192, 0.26601174
    %v6273 = vmul.f32 %v6193, 0.26601174
    %v6274 = vmul.f32 %v6194, 0.26601174
    %v6275 = vmul.f32 %v6195, 0.26601174
    %v6276 = vmul.f32 %v6196, 0.26601174
    %v6277 = vmul.f32 %v6197, 0.26601174
    %v6278 = vmul.f32 %v6198, 0.26601174
    %v6279 = vmul.f32 %v6199, 0.26601174
    %v6280 = vmul.f32 %v6200, 0.26601174
    %v6281 = vmul.f32 %v6201, 0.26601174
    %v6282 = vmul.f32 %v6202, 0.26601174
    %v6283 = vmul.f32 %v6203, 0.26601174
    %v6284 = vmul.f32 %v6204, 0.26601174
    %v6285 = vmul.f32 %v6205, 0.26601174
    %v6286 = vmul.f32 %v6206, 0.26601174
    %v6287 = vmul.f32 %v6207, 0.26601174
    %v6288 = vmul.f32 %v6208, 0.26601174
    %v6289 = vmul.f32 %v6209, 0.26601174
    %6370 = vrot.lane.b32.xlu0 %v6130, 118
    %v6371 = vpop.permute.xlu0 %6370
    %6372 = vrot.lane.b32.xlu0 %v6131, 118
    %v6373 = vpop.permute.xlu0 %6372
    %6374 = vrot.lane.b32.xlu0 %v6132, 118
    %v6375 = vpop.permute.xlu0 %6374
    %6376 = vrot.lane.b32.xlu0 %v6133, 118
    %v6377 = vpop.permute.xlu0 %6376
    %6378 = vrot.lane.b32.xlu0 %v6134, 118
    %v6379 = vpop.permute.xlu0 %6378
    %6380 = vrot.lane.b32.xlu0 %v6135, 118
    %v6381 = vpop.permute.xlu0 %6380
    %6382 = vrot.lane.b32.xlu0 %v6136, 118
    %v6383 = vpop.permute.xlu0 %6382
    %6384 = vrot.lane.b32.xlu0 %v6137, 118
    %v6385 = vpop.permute.xlu0 %6384
    %6386 = vrot.lane.b32.xlu0 %v6138, 118
    %v6387 = vpop.permute.xlu0 %6386
    %6388 = vrot.lane.b32.xlu0 %v6139, 118
    %v6389 = vpop.permute.xlu0 %6388
    %6390 = vrot.lane.b32.xlu0 %v6140, 118
    %v6391 = vpop.permute.xlu0 %6390
    %6392 = vrot.lane.b32.xlu0 %v6141, 118
    %v6393 = vpop.permute.xlu0 %6392
    %6394 = vrot.lane.b32.xlu0 %v6142, 118
    %v6395 = vpop.permute.xlu0 %6394
    %6396 = vrot.lane.b32.xlu0 %v6143, 118
    %v6397 = vpop.permute.xlu0 %6396
    %6398 = vrot.lane.b32.xlu0 %v6144, 118
    %v6399 = vpop.permute.xlu0 %6398
    %6400 = vrot.lane.b32.xlu0 %v6145, 118
    %v6401 = vpop.permute.xlu0 %6400
    %6402 = vrot.lane.b32.xlu0 %v6146, 118
    %v6403 = vpop.permute.xlu0 %6402
    %6404 = vrot.lane.b32.xlu0 %v6147, 118
    %v6405 = vpop.permute.xlu0 %6404
    %6406 = vrot.lane.b32.xlu0 %v6148, 118
    %v6407 = vpop.permute.xlu0 %6406
    %6408 = vrot.lane.b32.xlu0 %v6149, 118
    %v6409 = vpop.permute.xlu0 %6408
    %6410 = vrot.lane.b32.xlu0 %v6150, 118
    %v6411 = vpop.permute.xlu0 %6410
    %6412 = vrot.lane.b32.xlu0 %v6151, 118
    %v6413 = vpop.permute.xlu0 %6412
    %6414 = vrot.lane.b32.xlu0 %v6152, 118
    %v6415 = vpop.permute.xlu0 %6414
    %6416 = vrot.lane.b32.xlu0 %v6153, 118
    %v6417 = vpop.permute.xlu0 %6416
    %6418 = vrot.lane.b32.xlu0 %v6154, 118
    %v6419 = vpop.permute.xlu0 %6418
    %6420 = vrot.lane.b32.xlu0 %v6155, 118
    %v6421 = vpop.permute.xlu0 %6420
    %6422 = vrot.lane.b32.xlu0 %v6156, 118
    %v6423 = vpop.permute.xlu0 %6422
    %6424 = vrot.lane.b32.xlu0 %v6157, 118
    %v6425 = vpop.permute.xlu0 %6424
    %6426 = vrot.lane.b32.xlu0 %v6158, 118
    %v6427 = vpop.permute.xlu0 %6426
    %6428 = vrot.lane.b32.xlu0 %v6159, 118
    %v6429 = vpop.permute.xlu0 %6428
    %6430 = vrot.lane.b32.xlu0 %v6160, 118
    %v6431 = vpop.permute.xlu0 %6430
    %6432 = vrot.lane.b32.xlu0 %v6161, 118
    %v6433 = vpop.permute.xlu0 %6432
    %6434 = vrot.lane.b32.xlu0 %v6162, 118
    %v6435 = vpop.permute.xlu0 %6434
    %6436 = vrot.lane.b32.xlu0 %v6163, 118
    %v6437 = vpop.permute.xlu0 %6436
    %6438 = vrot.lane.b32.xlu0 %v6164, 118
    %v6439 = vpop.permute.xlu0 %6438
    %6440 = vrot.lane.b32.xlu0 %v6165, 118
    %v6441 = vpop.permute.xlu0 %6440
    %6442 = vrot.lane.b32.xlu0 %v6166, 118
    %v6443 = vpop.permute.xlu0 %6442
    %6444 = vrot.lane.b32.xlu0 %v6167, 118
    %v6445 = vpop.permute.xlu0 %6444
    %6446 = vrot.lane.b32.xlu0 %v6168, 118
    %v6447 = vpop.permute.xlu0 %6446
    %6448 = vrot.lane.b32.xlu0 %v6169, 118
    %v6449 = vpop.permute.xlu0 %6448
    %6450 = vrot.lane.b32.xlu0 %v6170, 118
    %v6451 = vpop.permute.xlu0 %6450
    %6452 = vrot.lane.b32.xlu0 %v6171, 118
    %v6453 = vpop.permute.xlu0 %6452
    %6454 = vrot.lane.b32.xlu0 %v6172, 118
    %v6455 = vpop.permute.xlu0 %6454
    %6456 = vrot.lane.b32.xlu0 %v6173, 118
    %v6457 = vpop.permute.xlu0 %6456
    %6458 = vrot.lane.b32.xlu0 %v6174, 118
    %v6459 = vpop.permute.xlu0 %6458
    %6460 = vrot.lane.b32.xlu0 %v6175, 118
    %v6461 = vpop.permute.xlu0 %6460
    %6462 = vrot.lane.b32.xlu0 %v6176, 118
    %v6463 = vpop.permute.xlu0 %6462
    %6464 = vrot.lane.b32.xlu0 %v6177, 118
    %v6465 = vpop.permute.xlu0 %6464
    %6466 = vrot.lane.b32.xlu0 %v6178, 118
    %v6467 = vpop.permute.xlu0 %6466
    %6468 = vrot.lane.b32.xlu0 %v6179, 118
    %v6469 = vpop.permute.xlu0 %6468
    %6470 = vrot.lane.b32.xlu0 %v6180, 118
    %v6471 = vpop.permute.xlu0 %6470
    %6472 = vrot.lane.b32.xlu0 %v6181, 118
    %v6473 = vpop.permute.xlu0 %6472
    %6474 = vrot.lane.b32.xlu0 %v6182, 118
    %v6475 = vpop.permute.xlu0 %6474
    %6476 = vrot.lane.b32.xlu0 %v6183, 118
    %v6477 = vpop.permute.xlu0 %6476
    %6478 = vrot.lane.b32.xlu0 %v6184, 118
    %v6479 = vpop.permute.xlu0 %6478
    %6480 = vrot.lane.b32.xlu0 %v6185, 118
    %v6481 = vpop.permute.xlu0 %6480
    %6482 = vrot.lane.b32.xlu0 %v6186, 118
    %v6483 = vpop.permute.xlu0 %6482
    %6484 = vrot.lane.b32.xlu0 %v6187, 118
    %v6485 = vpop.permute.xlu0 %6484
    %6486 = vrot.lane.b32.xlu0 %v6188, 118
    %v6487 = vpop.permute.xlu0 %6486
    %6488 = vrot.lane.b32.xlu0 %v6189, 118
    %v6489 = vpop.permute.xlu0 %6488
    %6490 = vrot.lane.b32.xlu0 %v6190, 118
    %v6491 = vpop.permute.xlu0 %6490
    %6492 = vrot.lane.b32.xlu0 %v6191, 118
    %v6493 = vpop.permute.xlu0 %6492
    %6494 = vrot.lane.b32.xlu0 %v6192, 118
    %v6495 = vpop.permute.xlu0 %6494
    %6496 = vrot.lane.b32.xlu0 %v6193, 118
    %v6497 = vpop.permute.xlu0 %6496
    %6498 = vrot.lane.b32.xlu0 %v6194, 118
    %v6499 = vpop.permute.xlu0 %6498
    %6500 = vrot.lane.b32.xlu0 %v6195, 118
    %v6501 = vpop.permute.xlu0 %6500
    %6502 = vrot.lane.b32.xlu0 %v6196, 118
    %v6503 = vpop.permute.xlu0 %6502
    %6504 = vrot.lane.b32.xlu0 %v6197, 118
    %v6505 = vpop.permute.xlu0 %6504
    %6506 = vrot.lane.b32.xlu0 %v6198, 118
    %v6507 = vpop.permute.xlu0 %6506
    %6508 = vrot.lane.b32.xlu0 %v6199, 118
    %v6509 = vpop.permute.xlu0 %6508
    %6510 = vrot.lane.b32.xlu0 %v6200, 118
    %v6511 = vpop.permute.xlu0 %6510
    %6512 = vrot.lane.b32.xlu0 %v6201, 118
    %v6513 = vpop.permute.xlu0 %6512
    %6514 = vrot.lane.b32.xlu0 %v6202, 118
    %v6515 = vpop.permute.xlu0 %6514
    %6516 = vrot.lane.b32.xlu0 %v6203, 118
    %v6517 = vpop.permute.xlu0 %6516
    %6518 = vrot.lane.b32.xlu0 %v6204, 118
    %v6519 = vpop.permute.xlu0 %6518
    %6520 = vrot.lane.b32.xlu0 %v6205, 118
    %v6521 = vpop.permute.xlu0 %6520
    %6522 = vrot.lane.b32.xlu0 %v6206, 118
    %v6523 = vpop.permute.xlu0 %6522
    %6524 = vrot.lane.b32.xlu0 %v6207, 118
    %v6525 = vpop.permute.xlu0 %6524
    %6526 = vrot.lane.b32.xlu0 %v6208, 118
    %v6527 = vpop.permute.xlu0 %6526
    %6528 = vrot.lane.b32.xlu0 %v6209, 118
    %v6529 = vpop.permute.xlu0 %6528
    %v6610 = vadd.f32 %v6130, %v6371
    %v6611 = vadd.f32 %v6131, %v6373
    %v6612 = vadd.f32 %v6132, %v6375
    %v6613 = vadd.f32 %v6133, %v6377
    %v6614 = vadd.f32 %v6134, %v6379
    %v6615 = vadd.f32 %v6135, %v6381
    %v6616 = vadd.f32 %v6136, %v6383
    %v6617 = vadd.f32 %v6137, %v6385
    %v6618 = vadd.f32 %v6138, %v6387
    %v6619 = vadd.f32 %v6139, %v6389
    %v6620 = vadd.f32 %v6140, %v6391
    %v6621 = vadd.f32 %v6141, %v6393
    %v6622 = vadd.f32 %v6142, %v6395
    %v6623 = vadd.f32 %v6143, %v6397
    %v6624 = vadd.f32 %v6144, %v6399
    %v6625 = vadd.f32 %v6145, %v6401
    %v6626 = vadd.f32 %v6146, %v6403
    %v6627 = vadd.f32 %v6147, %v6405
    %v6628 = vadd.f32 %v6148, %v6407
    %v6629 = vadd.f32 %v6149, %v6409
    %v6630 = vadd.f32 %v6150, %v6411
    %v6631 = vadd.f32 %v6151, %v6413
    %v6632 = vadd.f32 %v6152, %v6415
    %v6633 = vadd.f32 %v6153, %v6417
    %v6634 = vadd.f32 %v6154, %v6419
    %v6635 = vadd.f32 %v6155, %v6421
    %v6636 = vadd.f32 %v6156, %v6423
    %v6637 = vadd.f32 %v6157, %v6425
    %v6638 = vadd.f32 %v6158, %v6427
    %v6639 = vadd.f32 %v6159, %v6429
    %v6640 = vadd.f32 %v6160, %v6431
    %v6641 = vadd.f32 %v6161, %v6433
    %v6642 = vadd.f32 %v6162, %v6435
    %v6643 = vadd.f32 %v6163, %v6437
    %v6644 = vadd.f32 %v6164, %v6439
    %v6645 = vadd.f32 %v6165, %v6441
    %v6646 = vadd.f32 %v6166, %v6443
    %v6647 = vadd.f32 %v6167, %v6445
    %v6648 = vadd.f32 %v6168, %v6447
    %v6649 = vadd.f32 %v6169, %v6449
    %v6650 = vadd.f32 %v6170, %v6451
    %v6651 = vadd.f32 %v6171, %v6453
    %v6652 = vadd.f32 %v6172, %v6455
    %v6653 = vadd.f32 %v6173, %v6457
    %v6654 = vadd.f32 %v6174, %v6459
    %v6655 = vadd.f32 %v6175, %v6461
    %v6656 = vadd.f32 %v6176, %v6463
    %v6657 = vadd.f32 %v6177, %v6465
    %v6658 = vadd.f32 %v6178, %v6467
    %v6659 = vadd.f32 %v6179, %v6469
    %v6660 = vadd.f32 %v6180, %v6471
    %v6661 = vadd.f32 %v6181, %v6473
    %v6662 = vadd.f32 %v6182, %v6475
    %v6663 = vadd.f32 %v6183, %v6477
    %v6664 = vadd.f32 %v6184, %v6479
    %v6665 = vadd.f32 %v6185, %v6481
    %v6666 = vadd.f32 %v6186, %v6483
    %v6667 = vadd.f32 %v6187, %v6485
    %v6668 = vadd.f32 %v6188, %v6487
    %v6669 = vadd.f32 %v6189, %v6489
    %v6670 = vadd.f32 %v6190, %v6491
    %v6671 = vadd.f32 %v6191, %v6493
    %v6672 = vadd.f32 %v6192, %v6495
    %v6673 = vadd.f32 %v6193, %v6497
    %v6674 = vadd.f32 %v6194, %v6499
    %v6675 = vadd.f32 %v6195, %v6501
    %v6676 = vadd.f32 %v6196, %v6503
    %v6677 = vadd.f32 %v6197, %v6505
    %v6678 = vadd.f32 %v6198, %v6507
    %v6679 = vadd.f32 %v6199, %v6509
    %v6680 = vadd.f32 %v6200, %v6511
    %v6681 = vadd.f32 %v6201, %v6513
    %v6682 = vadd.f32 %v6202, %v6515
    %v6683 = vadd.f32 %v6203, %v6517
    %v6684 = vadd.f32 %v6204, %v6519
    %v6685 = vadd.f32 %v6205, %v6521
    %v6686 = vadd.f32 %v6206, %v6523
    %v6687 = vadd.f32 %v6207, %v6525
    %v6688 = vadd.f32 %v6208, %v6527
    %v6689 = vadd.f32 %v6209, %v6529
    %v6690 = vmul.f32 %v6610, 0.0010283804
    %v6691 = vmul.f32 %v6611, 0.0010283804
    %v6692 = vmul.f32 %v6612, 0.0010283804
    %v6693 = vmul.f32 %v6613, 0.0010283804
    %v6694 = vmul.f32 %v6614, 0.0010283804
    %v6695 = vmul.f32 %v6615, 0.0010283804
    %v6696 = vmul.f32 %v6616, 0.0010283804
    %v6697 = vmul.f32 %v6617, 0.0010283804
    %v6698 = vmul.f32 %v6618, 0.0010283804
    %v6699 = vmul.f32 %v6619, 0.0010283804
    %v6700 = vmul.f32 %v6620, 0.0010283804
    %v6701 = vmul.f32 %v6621, 0.0010283804
    %v6702 = vmul.f32 %v6622, 0.0010283804
    %v6703 = vmul.f32 %v6623, 0.0010283804
    %v6704 = vmul.f32 %v6624, 0.0010283804
    %v6705 = vmul.f32 %v6625, 0.0010283804
    %v6706 = vmul.f32 %v6626, 0.0010283804
    %v6707 = vmul.f32 %v6627, 0.0010283804
    %v6708 = vmul.f32 %v6628, 0.0010283804
    %v6709 = vmul.f32 %v6629, 0.0010283804
    %v6710 = vmul.f32 %v6630, 0.0010283804
    %v6711 = vmul.f32 %v6631, 0.0010283804
    %v6712 = vmul.f32 %v6632, 0.0010283804
    %v6713 = vmul.f32 %v6633, 0.0010283804
    %v6714 = vmul.f32 %v6634, 0.0010283804
    %v6715 = vmul.f32 %v6635, 0.0010283804
    %v6716 = vmul.f32 %v6636, 0.0010283804
    %v6717 = vmul.f32 %v6637, 0.0010283804
    %v6718 = vmul.f32 %v6638, 0.0010283804
    %v6719 = vmul.f32 %v6639, 0.0010283804
    %v6720 = vmul.f32 %v6640, 0.0010283804
    %v6721 = vmul.f32 %v6641, 0.0010283804
    %v6722 = vmul.f32 %v6642, 0.0010283804
    %v6723 = vmul.f32 %v6643, 0.0010283804
    %v6724 = vmul.f32 %v6644, 0.0010283804
    %v6725 = vmul.f32 %v6645, 0.0010283804
    %v6726 = vmul.f32 %v6646, 0.0010283804
    %v6727 = vmul.f32 %v6647, 0.0010283804
    %v6728 = vmul.f32 %v6648, 0.0010283804
    %v6729 = vmul.f32 %v6649, 0.0010283804
    %v6730 = vmul.f32 %v6650, 0.0010283804
    %v6731 = vmul.f32 %v6651, 0.0010283804
    %v6732 = vmul.f32 %v6652, 0.0010283804
    %v6733 = vmul.f32 %v6653, 0.0010283804
    %v6734 = vmul.f32 %v6654, 0.0010283804
    %v6735 = vmul.f32 %v6655, 0.0010283804
    %v6736 = vmul.f32 %v6656, 0.0010283804
    %v6737 = vmul.f32 %v6657, 0.0010283804
    %v6738 = vmul.f32 %v6658, 0.0010283804
    %v6739 = vmul.f32 %v6659, 0.0010283804
    %v6740 = vmul.f32 %v6660, 0.0010283804
    %v6741 = vmul.f32 %v6661, 0.0010283804
    %v6742 = vmul.f32 %v6662, 0.0010283804
    %v6743 = vmul.f32 %v6663, 0.0010283804
    %v6744 = vmul.f32 %v6664, 0.0010283804
    %v6745 = vmul.f32 %v6665, 0.0010283804
    %v6746 = vmul.f32 %v6666, 0.0010283804
    %v6747 = vmul.f32 %v6667, 0.0010283804
    %v6748 = vmul.f32 %v6668, 0.0010283804
    %v6749 = vmul.f32 %v6669, 0.0010283804
    %v6750 = vmul.f32 %v6670, 0.0010283804
    %v6751 = vmul.f32 %v6671, 0.0010283804
    %v6752 = vmul.f32 %v6672, 0.0010283804
    %v6753 = vmul.f32 %v6673, 0.0010283804
    %v6754 = vmul.f32 %v6674, 0.0010283804
    %v6755 = vmul.f32 %v6675, 0.0010283804
    %v6756 = vmul.f32 %v6676, 0.0010283804
    %v6757 = vmul.f32 %v6677, 0.0010283804
    %v6758 = vmul.f32 %v6678, 0.0010283804
    %v6759 = vmul.f32 %v6679, 0.0010283804
    %v6760 = vmul.f32 %v6680, 0.0010283804
    %v6761 = vmul.f32 %v6681, 0.0010283804
    %v6762 = vmul.f32 %v6682, 0.0010283804
    %v6763 = vmul.f32 %v6683, 0.0010283804
    %v6764 = vmul.f32 %v6684, 0.0010283804
    %v6765 = vmul.f32 %v6685, 0.0010283804
    %v6766 = vmul.f32 %v6686, 0.0010283804
    %v6767 = vmul.f32 %v6687, 0.0010283804
    %v6768 = vmul.f32 %v6688, 0.0010283804
    %v6769 = vmul.f32 %v6689, 0.0010283804
    %6850 = vrot.lane.b32.xlu0 %v6690, 5
    %v6851 = vpop.permute.xlu0 %6850
    %6852 = vrot.lane.b32.xlu0 %v6691, 5
    %v6853 = vpop.permute.xlu0 %6852
    %6854 = vrot.lane.b32.xlu0 %v6692, 5
    %v6855 = vpop.permute.xlu0 %6854
    %6856 = vrot.lane.b32.xlu0 %v6693, 5
    %v6857 = vpop.permute.xlu0 %6856
    %6858 = vrot.lane.b32.xlu0 %v6694, 5
    %v6859 = vpop.permute.xlu0 %6858
    %6860 = vrot.lane.b32.xlu0 %v6695, 5
    %v6861 = vpop.permute.xlu0 %6860
    %6862 = vrot.lane.b32.xlu0 %v6696, 5
    %v6863 = vpop.permute.xlu0 %6862
    %6864 = vrot.lane.b32.xlu0 %v6697, 5
    %v6865 = vpop.permute.xlu0 %6864
    %6866 = vrot.lane.b32.xlu0 %v6698, 5
    %v6867 = vpop.permute.xlu0 %6866
    %6868 = vrot.lane.b32.xlu0 %v6699, 5
    %v6869 = vpop.permute.xlu0 %6868
    %6870 = vrot.lane.b32.xlu0 %v6700, 5
    %v6871 = vpop.permute.xlu0 %6870
    %6872 = vrot.lane.b32.xlu0 %v6701, 5
    %v6873 = vpop.permute.xlu0 %6872
    %6874 = vrot.lane.b32.xlu0 %v6702, 5
    %v6875 = vpop.permute.xlu0 %6874
    %6876 = vrot.lane.b32.xlu0 %v6703, 5
    %v6877 = vpop.permute.xlu0 %6876
    %6878 = vrot.lane.b32.xlu0 %v6704, 5
    %v6879 = vpop.permute.xlu0 %6878
    %6880 = vrot.lane.b32.xlu0 %v6705, 5
    %v6881 = vpop.permute.xlu0 %6880
    %6882 = vrot.lane.b32.xlu0 %v6706, 5
    %v6883 = vpop.permute.xlu0 %6882
    %6884 = vrot.lane.b32.xlu0 %v6707, 5
    %v6885 = vpop.permute.xlu0 %6884
    %6886 = vrot.lane.b32.xlu0 %v6708, 5
    %v6887 = vpop.permute.xlu0 %6886
    %6888 = vrot.lane.b32.xlu0 %v6709, 5
    %v6889 = vpop.permute.xlu0 %6888
    %6890 = vrot.lane.b32.xlu0 %v6710, 5
    %v6891 = vpop.permute.xlu0 %6890
    %6892 = vrot.lane.b32.xlu0 %v6711, 5
    %v6893 = vpop.permute.xlu0 %6892
    %6894 = vrot.lane.b32.xlu0 %v6712, 5
    %v6895 = vpop.permute.xlu0 %6894
    %6896 = vrot.lane.b32.xlu0 %v6713, 5
    %v6897 = vpop.permute.xlu0 %6896
    %6898 = vrot.lane.b32.xlu0 %v6714, 5
    %v6899 = vpop.permute.xlu0 %6898
    %6900 = vrot.lane.b32.xlu0 %v6715, 5
    %v6901 = vpop.permute.xlu0 %6900
    %6902 = vrot.lane.b32.xlu0 %v6716, 5
    %v6903 = vpop.permute.xlu0 %6902
    %6904 = vrot.lane.b32.xlu0 %v6717, 5
    %v6905 = vpop.permute.xlu0 %6904
    %6906 = vrot.lane.b32.xlu0 %v6718, 5
    %v6907 = vpop.permute.xlu0 %6906
    %6908 = vrot.lane.b32.xlu0 %v6719, 5
    %v6909 = vpop.permute.xlu0 %6908
    %6910 = vrot.lane.b32.xlu0 %v6720, 5
    %v6911 = vpop.permute.xlu0 %6910
    %6912 = vrot.lane.b32.xlu0 %v6721, 5
    %v6913 = vpop.permute.xlu0 %6912
    %6914 = vrot.lane.b32.xlu0 %v6722, 5
    %v6915 = vpop.permute.xlu0 %6914
    %6916 = vrot.lane.b32.xlu0 %v6723, 5
    %v6917 = vpop.permute.xlu0 %6916
    %6918 = vrot.lane.b32.xlu0 %v6724, 5
    %v6919 = vpop.permute.xlu0 %6918
    %6920 = vrot.lane.b32.xlu0 %v6725, 5
    %v6921 = vpop.permute.xlu0 %6920
    %6922 = vrot.lane.b32.xlu0 %v6726, 5
    %v6923 = vpop.permute.xlu0 %6922
    %6924 = vrot.lane.b32.xlu0 %v6727, 5
    %v6925 = vpop.permute.xlu0 %6924
    %6926 = vrot.lane.b32.xlu0 %v6728, 5
    %v6927 = vpop.permute.xlu0 %6926
    %6928 = vrot.lane.b32.xlu0 %v6729, 5
    %v6929 = vpop.permute.xlu0 %6928
    %6930 = vrot.lane.b32.xlu0 %v6730, 5
    %v6931 = vpop.permute.xlu0 %6930
    %6932 = vrot.lane.b32.xlu0 %v6731, 5
    %v6933 = vpop.permute.xlu0 %6932
    %6934 = vrot.lane.b32.xlu0 %v6732, 5
    %v6935 = vpop.permute.xlu0 %6934
    %6936 = vrot.lane.b32.xlu0 %v6733, 5
    %v6937 = vpop.permute.xlu0 %6936
    %6938 = vrot.lane.b32.xlu0 %v6734, 5
    %v6939 = vpop.permute.xlu0 %6938
    %6940 = vrot.lane.b32.xlu0 %v6735, 5
    %v6941 = vpop.permute.xlu0 %6940
    %6942 = vrot.lane.b32.xlu0 %v6736, 5
    %v6943 = vpop.permute.xlu0 %6942
    %6944 = vrot.lane.b32.xlu0 %v6737, 5
    %v6945 = vpop.permute.xlu0 %6944
    %6946 = vrot.lane.b32.xlu0 %v6738, 5
    %v6947 = vpop.permute.xlu0 %6946
    %6948 = vrot.lane.b32.xlu0 %v6739, 5
    %v6949 = vpop.permute.xlu0 %6948
    %6950 = vrot.lane.b32.xlu0 %v6740, 5
    %v6951 = vpop.permute.xlu0 %6950
    %6952 = vrot.lane.b32.xlu0 %v6741, 5
    %v6953 = vpop.permute.xlu0 %6952
    %6954 = vrot.lane.b32.xlu0 %v6742, 5
    %v6955 = vpop.permute.xlu0 %6954
    %6956 = vrot.lane.b32.xlu0 %v6743, 5
    %v6957 = vpop.permute.xlu0 %6956
    %6958 = vrot.lane.b32.xlu0 %v6744, 5
    %v6959 = vpop.permute.xlu0 %6958
    %6960 = vrot.lane.b32.xlu0 %v6745, 5
    %v6961 = vpop.permute.xlu0 %6960
    %6962 = vrot.lane.b32.xlu0 %v6746, 5
    %v6963 = vpop.permute.xlu0 %6962
    %6964 = vrot.lane.b32.xlu0 %v6747, 5
    %v6965 = vpop.permute.xlu0 %6964
    %6966 = vrot.lane.b32.xlu0 %v6748, 5
    %v6967 = vpop.permute.xlu0 %6966
    %6968 = vrot.lane.b32.xlu0 %v6749, 5
    %v6969 = vpop.permute.xlu0 %6968
    %6970 = vrot.lane.b32.xlu0 %v6750, 5
    %v6971 = vpop.permute.xlu0 %6970
    %6972 = vrot.lane.b32.xlu0 %v6751, 5
    %v6973 = vpop.permute.xlu0 %6972
    %6974 = vrot.lane.b32.xlu0 %v6752, 5
    %v6975 = vpop.permute.xlu0 %6974
    %6976 = vrot.lane.b32.xlu0 %v6753, 5
    %v6977 = vpop.permute.xlu0 %6976
    %6978 = vrot.lane.b32.xlu0 %v6754, 5
    %v6979 = vpop.permute.xlu0 %6978
    %6980 = vrot.lane.b32.xlu0 %v6755, 5
    %v6981 = vpop.permute.xlu0 %6980
    %6982 = vrot.lane.b32.xlu0 %v6756, 5
    %v6983 = vpop.permute.xlu0 %6982
    %6984 = vrot.lane.b32.xlu0 %v6757, 5
    %v6985 = vpop.permute.xlu0 %6984
    %6986 = vrot.lane.b32.xlu0 %v6758, 5
    %v6987 = vpop.permute.xlu0 %6986
    %6988 = vrot.lane.b32.xlu0 %v6759, 5
    %v6989 = vpop.permute.xlu0 %6988
    %6990 = vrot.lane.b32.xlu0 %v6760, 5
    %v6991 = vpop.permute.xlu0 %6990
    %6992 = vrot.lane.b32.xlu0 %v6761, 5
    %v6993 = vpop.permute.xlu0 %6992
    %6994 = vrot.lane.b32.xlu0 %v6762, 5
    %v6995 = vpop.permute.xlu0 %6994
    %6996 = vrot.lane.b32.xlu0 %v6763, 5
    %v6997 = vpop.permute.xlu0 %6996
    %6998 = vrot.lane.b32.xlu0 %v6764, 5
    %v6999 = vpop.permute.xlu0 %6998
    %7000 = vrot.lane.b32.xlu0 %v6765, 5
    %v7001 = vpop.permute.xlu0 %7000
    %7002 = vrot.lane.b32.xlu0 %v6766, 5
    %v7003 = vpop.permute.xlu0 %7002
    %7004 = vrot.lane.b32.xlu0 %v6767, 5
    %v7005 = vpop.permute.xlu0 %7004
    %7006 = vrot.lane.b32.xlu0 %v6768, 5
    %v7007 = vpop.permute.xlu0 %7006
    %7008 = vrot.lane.b32.xlu0 %v6769, 5
    %v7009 = vpop.permute.xlu0 %7008
    %v7090 = vadd.f32 %v6210, %v6851
    %v7091 = vadd.f32 %v6211, %v6853
    %v7092 = vadd.f32 %v6212, %v6855
    %v7093 = vadd.f32 %v6213, %v6857
    %v7094 = vadd.f32 %v6214, %v6859
    %v7095 = vadd.f32 %v6215, %v6861
    %v7096 = vadd.f32 %v6216, %v6863
    %v7097 = vadd.f32 %v6217, %v6865
    %v7098 = vadd.f32 %v6218, %v6867
    %v7099 = vadd.f32 %v6219, %v6869
    %v7100 = vadd.f32 %v6220, %v6871
    %v7101 = vadd.f32 %v6221, %v6873
    %v7102 = vadd.f32 %v6222, %v6875
    %v7103 = vadd.f32 %v6223, %v6877
    %v7104 = vadd.f32 %v6224, %v6879
    %v7105 = vadd.f32 %v6225, %v6881
    %v7106 = vadd.f32 %v6226, %v6883
    %v7107 = vadd.f32 %v6227, %v6885
    %v7108 = vadd.f32 %v6228, %v6887
    %v7109 = vadd.f32 %v6229, %v6889
    %v7110 = vadd.f32 %v6230, %v6891
    %v7111 = vadd.f32 %v6231, %v6893
    %v7112 = vadd.f32 %v6232, %v6895
    %v7113 = vadd.f32 %v6233, %v6897
    %v7114 = vadd.f32 %v6234, %v6899
    %v7115 = vadd.f32 %v6235, %v6901
    %v7116 = vadd.f32 %v6236, %v6903
    %v7117 = vadd.f32 %v6237, %v6905
    %v7118 = vadd.f32 %v6238, %v6907
    %v7119 = vadd.f32 %v6239, %v6909
    %v7120 = vadd.f32 %v6240, %v6911
    %v7121 = vadd.f32 %v6241, %v6913
    %v7122 = vadd.f32 %v6242, %v6915
    %v7123 = vadd.f32 %v6243, %v6917
    %v7124 = vadd.f32 %v6244, %v6919
    %v7125 = vadd.f32 %v6245, %v6921
    %v7126 = vadd.f32 %v6246, %v6923
    %v7127 = vadd.f32 %v6247, %v6925
    %v7128 = vadd.f32 %v6248, %v6927
    %v7129 = vadd.f32 %v6249, %v6929
    %v7130 = vadd.f32 %v6250, %v6931
    %v7131 = vadd.f32 %v6251, %v6933
    %v7132 = vadd.f32 %v6252, %v6935
    %v7133 = vadd.f32 %v6253, %v6937
    %v7134 = vadd.f32 %v6254, %v6939
    %v7135 = vadd.f32 %v6255, %v6941
    %v7136 = vadd.f32 %v6256, %v6943
    %v7137 = vadd.f32 %v6257, %v6945
    %v7138 = vadd.f32 %v6258, %v6947
    %v7139 = vadd.f32 %v6259, %v6949
    %v7140 = vadd.f32 %v6260, %v6951
    %v7141 = vadd.f32 %v6261, %v6953
    %v7142 = vadd.f32 %v6262, %v6955
    %v7143 = vadd.f32 %v6263, %v6957
    %v7144 = vadd.f32 %v6264, %v6959
    %v7145 = vadd.f32 %v6265, %v6961
    %v7146 = vadd.f32 %v6266, %v6963
    %v7147 = vadd.f32 %v6267, %v6965
    %v7148 = vadd.f32 %v6268, %v6967
    %v7149 = vadd.f32 %v6269, %v6969
    %v7150 = vadd.f32 %v6270, %v6971
    %v7151 = vadd.f32 %v6271, %v6973
    %v7152 = vadd.f32 %v6272, %v6975
    %v7153 = vadd.f32 %v6273, %v6977
    %v7154 = vadd.f32 %v6274, %v6979
    %v7155 = vadd.f32 %v6275, %v6981
    %v7156 = vadd.f32 %v6276, %v6983
    %v7157 = vadd.f32 %v6277, %v6985
    %v7158 = vadd.f32 %v6278, %v6987
    %v7159 = vadd.f32 %v6279, %v6989
    %v7160 = vadd.f32 %v6280, %v6991
    %v7161 = vadd.f32 %v6281, %v6993
    %v7162 = vadd.f32 %v6282, %v6995
    %v7163 = vadd.f32 %v6283, %v6997
    %v7164 = vadd.f32 %v6284, %v6999
    %v7165 = vadd.f32 %v6285, %v7001
    %v7166 = vadd.f32 %v6286, %v7003
    %v7167 = vadd.f32 %v6287, %v7005
    %v7168 = vadd.f32 %v6288, %v7007
    %v7169 = vadd.f32 %v6289, %v7009
    %7170 = vrot.lane.b32.xlu0 %v6130, 120
    %v7171 = vpop.permute.xlu0 %7170
    %7172 = vrot.lane.b32.xlu0 %v6131, 120
    %v7173 = vpop.permute.xlu0 %7172
    %7174 = vrot.lane.b32.xlu0 %v6132, 120
    %v7175 = vpop.permute.xlu0 %7174
    %7176 = vrot.lane.b32.xlu0 %v6133, 120
    %v7177 = vpop.permute.xlu0 %7176
    %7178 = vrot.lane.b32.xlu0 %v6134, 120
    %v7179 = vpop.permute.xlu0 %7178
    %7180 = vrot.lane.b32.xlu0 %v6135, 120
    %v7181 = vpop.permute.xlu0 %7180
    %7182 = vrot.lane.b32.xlu0 %v6136, 120
    %v7183 = vpop.permute.xlu0 %7182
    %7184 = vrot.lane.b32.xlu0 %v6137, 120
    %v7185 = vpop.permute.xlu0 %7184
    %7186 = vrot.lane.b32.xlu0 %v6138, 120
    %v7187 = vpop.permute.xlu0 %7186
    %7188 = vrot.lane.b32.xlu0 %v6139, 120
    %v7189 = vpop.permute.xlu0 %7188
    %7190 = vrot.lane.b32.xlu0 %v6140, 120
    %v7191 = vpop.permute.xlu0 %7190
    %7192 = vrot.lane.b32.xlu0 %v6141, 120
    %v7193 = vpop.permute.xlu0 %7192
    %7194 = vrot.lane.b32.xlu0 %v6142, 120
    %v7195 = vpop.permute.xlu0 %7194
    %7196 = vrot.lane.b32.xlu0 %v6143, 120
    %v7197 = vpop.permute.xlu0 %7196
    %7198 = vrot.lane.b32.xlu0 %v6144, 120
    %v7199 = vpop.permute.xlu0 %7198
    %7200 = vrot.lane.b32.xlu0 %v6145, 120
    %v7201 = vpop.permute.xlu0 %7200
    %7202 = vrot.lane.b32.xlu0 %v6146, 120
    %v7203 = vpop.permute.xlu0 %7202
    %7204 = vrot.lane.b32.xlu0 %v6147, 120
    %v7205 = vpop.permute.xlu0 %7204
    %7206 = vrot.lane.b32.xlu0 %v6148, 120
    %v7207 = vpop.permute.xlu0 %7206
    %7208 = vrot.lane.b32.xlu0 %v6149, 120
    %v7209 = vpop.permute.xlu0 %7208
    %7210 = vrot.lane.b32.xlu0 %v6150, 120
    %v7211 = vpop.permute.xlu0 %7210
    %7212 = vrot.lane.b32.xlu0 %v6151, 120
    %v7213 = vpop.permute.xlu0 %7212
    %7214 = vrot.lane.b32.xlu0 %v6152, 120
    %v7215 = vpop.permute.xlu0 %7214
    %7216 = vrot.lane.b32.xlu0 %v6153, 120
    %v7217 = vpop.permute.xlu0 %7216
    %7218 = vrot.lane.b32.xlu0 %v6154, 120
    %v7219 = vpop.permute.xlu0 %7218
    %7220 = vrot.lane.b32.xlu0 %v6155, 120
    %v7221 = vpop.permute.xlu0 %7220
    %7222 = vrot.lane.b32.xlu0 %v6156, 120
    %v7223 = vpop.permute.xlu0 %7222
    %7224 = vrot.lane.b32.xlu0 %v6157, 120
    %v7225 = vpop.permute.xlu0 %7224
    %7226 = vrot.lane.b32.xlu0 %v6158, 120
    %v7227 = vpop.permute.xlu0 %7226
    %7228 = vrot.lane.b32.xlu0 %v6159, 120
    %v7229 = vpop.permute.xlu0 %7228
    %7230 = vrot.lane.b32.xlu0 %v6160, 120
    %v7231 = vpop.permute.xlu0 %7230
    %7232 = vrot.lane.b32.xlu0 %v6161, 120
    %v7233 = vpop.permute.xlu0 %7232
    %7234 = vrot.lane.b32.xlu0 %v6162, 120
    %v7235 = vpop.permute.xlu0 %7234
    %7236 = vrot.lane.b32.xlu0 %v6163, 120
    %v7237 = vpop.permute.xlu0 %7236
    %7238 = vrot.lane.b32.xlu0 %v6164, 120
    %v7239 = vpop.permute.xlu0 %7238
    %7240 = vrot.lane.b32.xlu0 %v6165, 120
    %v7241 = vpop.permute.xlu0 %7240
    %7242 = vrot.lane.b32.xlu0 %v6166, 120
    %v7243 = vpop.permute.xlu0 %7242
    %7244 = vrot.lane.b32.xlu0 %v6167, 120
    %v7245 = vpop.permute.xlu0 %7244
    %7246 = vrot.lane.b32.xlu0 %v6168, 120
    %v7247 = vpop.permute.xlu0 %7246
    %7248 = vrot.lane.b32.xlu0 %v6169, 120
    %v7249 = vpop.permute.xlu0 %7248
    %7250 = vrot.lane.b32.xlu0 %v6170, 120
    %v7251 = vpop.permute.xlu0 %7250
    %7252 = vrot.lane.b32.xlu0 %v6171, 120
    %v7253 = vpop.permute.xlu0 %7252
    %7254 = vrot.lane.b32.xlu0 %v6172, 120
    %v7255 = vpop.permute.xlu0 %7254
    %7256 = vrot.lane.b32.xlu0 %v6173, 120
    %v7257 = vpop.permute.xlu0 %7256
    %7258 = vrot.lane.b32.xlu0 %v6174, 120
    %v7259 = vpop.permute.xlu0 %7258
    %7260 = vrot.lane.b32.xlu0 %v6175, 120
    %v7261 = vpop.permute.xlu0 %7260
    %7262 = vrot.lane.b32.xlu0 %v6176, 120
    %v7263 = vpop.permute.xlu0 %7262
    %7264 = vrot.lane.b32.xlu0 %v6177, 120
    %v7265 = vpop.permute.xlu0 %7264
    %7266 = vrot.lane.b32.xlu0 %v6178, 120
    %v7267 = vpop.permute.xlu0 %7266
    %7268 = vrot.lane.b32.xlu0 %v6179, 120
    %v7269 = vpop.permute.xlu0 %7268
    %7270 = vrot.lane.b32.xlu0 %v6180, 120
    %v7271 = vpop.permute.xlu0 %7270
    %7272 = vrot.lane.b32.xlu0 %v6181, 120
    %v7273 = vpop.permute.xlu0 %7272
    %7274 = vrot.lane.b32.xlu0 %v6182, 120
    %v7275 = vpop.permute.xlu0 %7274
    %7276 = vrot.lane.b32.xlu0 %v6183, 120
    %v7277 = vpop.permute.xlu0 %7276
    %7278 = vrot.lane.b32.xlu0 %v6184, 120
    %v7279 = vpop.permute.xlu0 %7278
    %7280 = vrot.lane.b32.xlu0 %v6185, 120
    %v7281 = vpop.permute.xlu0 %7280
    %7282 = vrot.lane.b32.xlu0 %v6186, 120
    %v7283 = vpop.permute.xlu0 %7282
    %7284 = vrot.lane.b32.xlu0 %v6187, 120
    %v7285 = vpop.permute.xlu0 %7284
    %7286 = vrot.lane.b32.xlu0 %v6188, 120
    %v7287 = vpop.permute.xlu0 %7286
    %7288 = vrot.lane.b32.xlu0 %v6189, 120
    %v7289 = vpop.permute.xlu0 %7288
    %7290 = vrot.lane.b32.xlu0 %v6190, 120
    %v7291 = vpop.permute.xlu0 %7290
    %7292 = vrot.lane.b32.xlu0 %v6191, 120
    %v7293 = vpop.permute.xlu0 %7292
    %7294 = vrot.lane.b32.xlu0 %v6192, 120
    %v7295 = vpop.permute.xlu0 %7294
    %7296 = vrot.lane.b32.xlu0 %v6193, 120
    %v7297 = vpop.permute.xlu0 %7296
    %7298 = vrot.lane.b32.xlu0 %v6194, 120
    %v7299 = vpop.permute.xlu0 %7298
    %7300 = vrot.lane.b32.xlu0 %v6195, 120
    %v7301 = vpop.permute.xlu0 %7300
    %7302 = vrot.lane.b32.xlu0 %v6196, 120
    %v7303 = vpop.permute.xlu0 %7302
    %7304 = vrot.lane.b32.xlu0 %v6197, 120
    %v7305 = vpop.permute.xlu0 %7304
    %7306 = vrot.lane.b32.xlu0 %v6198, 120
    %v7307 = vpop.permute.xlu0 %7306
    %7308 = vrot.lane.b32.xlu0 %v6199, 120
    %v7309 = vpop.permute.xlu0 %7308
    %7310 = vrot.lane.b32.xlu0 %v6200, 120
    %v7311 = vpop.permute.xlu0 %7310
    %7312 = vrot.lane.b32.xlu0 %v6201, 120
    %v7313 = vpop.permute.xlu0 %7312
    %7314 = vrot.lane.b32.xlu0 %v6202, 120
    %v7315 = vpop.permute.xlu0 %7314
    %7316 = vrot.lane.b32.xlu0 %v6203, 120
    %v7317 = vpop.permute.xlu0 %7316
    %7318 = vrot.lane.b32.xlu0 %v6204, 120
    %v7319 = vpop.permute.xlu0 %7318
    %7320 = vrot.lane.b32.xlu0 %v6205, 120
    %v7321 = vpop.permute.xlu0 %7320
    %7322 = vrot.lane.b32.xlu0 %v6206, 120
    %v7323 = vpop.permute.xlu0 %7322
    %7324 = vrot.lane.b32.xlu0 %v6207, 120
    %v7325 = vpop.permute.xlu0 %7324
    %7326 = vrot.lane.b32.xlu0 %v6208, 120
    %v7327 = vpop.permute.xlu0 %7326
    %7328 = vrot.lane.b32.xlu0 %v6209, 120
    %v7329 = vpop.permute.xlu0 %7328
    %v7410 = vadd.f32 %v6130, %v7171
    %v7411 = vadd.f32 %v6131, %v7173
    %v7412 = vadd.f32 %v6132, %v7175
    %v7413 = vadd.f32 %v6133, %v7177
    %v7414 = vadd.f32 %v6134, %v7179
    %v7415 = vadd.f32 %v6135, %v7181
    %v7416 = vadd.f32 %v6136, %v7183
    %v7417 = vadd.f32 %v6137, %v7185
    %v7418 = vadd.f32 %v6138, %v7187
    %v7419 = vadd.f32 %v6139, %v7189
    %v7420 = vadd.f32 %v6140, %v7191
    %v7421 = vadd.f32 %v6141, %v7193
    %v7422 = vadd.f32 %v6142, %v7195
    %v7423 = vadd.f32 %v6143, %v7197
    %v7424 = vadd.f32 %v6144, %v7199
    %v7425 = vadd.f32 %v6145, %v7201
    %v7426 = vadd.f32 %v6146, %v7203
    %v7427 = vadd.f32 %v6147, %v7205
    %v7428 = vadd.f32 %v6148, %v7207
    %v7429 = vadd.f32 %v6149, %v7209
    %v7430 = vadd.f32 %v6150, %v7211
    %v7431 = vadd.f32 %v6151, %v7213
    %v7432 = vadd.f32 %v6152, %v7215
    %v7433 = vadd.f32 %v6153, %v7217
    %v7434 = vadd.f32 %v6154, %v7219
    %v7435 = vadd.f32 %v6155, %v7221
    %v7436 = vadd.f32 %v6156, %v7223
    %v7437 = vadd.f32 %v6157, %v7225
    %v7438 = vadd.f32 %v6158, %v7227
    %v7439 = vadd.f32 %v6159, %v7229
    %v7440 = vadd.f32 %v6160, %v7231
    %v7441 = vadd.f32 %v6161, %v7233
    %v7442 = vadd.f32 %v6162, %v7235
    %v7443 = vadd.f32 %v6163, %v7237
    %v7444 = vadd.f32 %v6164, %v7239
    %v7445 = vadd.f32 %v6165, %v7241
    %v7446 = vadd.f32 %v6166, %v7243
    %v7447 = vadd.f32 %v6167, %v7245
    %v7448 = vadd.f32 %v6168, %v7247
    %v7449 = vadd.f32 %v6169, %v7249
    %v7450 = vadd.f32 %v6170, %v7251
    %v7451 = vadd.f32 %v6171, %v7253
    %v7452 = vadd.f32 %v6172, %v7255
    %v7453 = vadd.f32 %v6173, %v7257
    %v7454 = vadd.f32 %v6174, %v7259
    %v7455 = vadd.f32 %v6175, %v7261
    %v7456 = vadd.f32 %v6176, %v7263
    %v7457 = vadd.f32 %v6177, %v7265
    %v7458 = vadd.f32 %v6178, %v7267
    %v7459 = vadd.f32 %v6179, %v7269
    %v7460 = vadd.f32 %v6180, %v7271
    %v7461 = vadd.f32 %v6181, %v7273
    %v7462 = vadd.f32 %v6182, %v7275
    %v7463 = vadd.f32 %v6183, %v7277
    %v7464 = vadd.f32 %v6184, %v7279
    %v7465 = vadd.f32 %v6185, %v7281
    %v7466 = vadd.f32 %v6186, %v7283
    %v7467 = vadd.f32 %v6187, %v7285
    %v7468 = vadd.f32 %v6188, %v7287
    %v7469 = vadd.f32 %v6189, %v7289
    %v7470 = vadd.f32 %v6190, %v7291
    %v7471 = vadd.f32 %v6191, %v7293
    %v7472 = vadd.f32 %v6192, %v7295
    %v7473 = vadd.f32 %v6193, %v7297
    %v7474 = vadd.f32 %v6194, %v7299
    %v7475 = vadd.f32 %v6195, %v7301
    %v7476 = vadd.f32 %v6196, %v7303
    %v7477 = vadd.f32 %v6197, %v7305
    %v7478 = vadd.f32 %v6198, %v7307
    %v7479 = vadd.f32 %v6199, %v7309
    %v7480 = vadd.f32 %v6200, %v7311
    %v7481 = vadd.f32 %v6201, %v7313
    %v7482 = vadd.f32 %v6202, %v7315
    %v7483 = vadd.f32 %v6203, %v7317
    %v7484 = vadd.f32 %v6204, %v7319
    %v7485 = vadd.f32 %v6205, %v7321
    %v7486 = vadd.f32 %v6206, %v7323
    %v7487 = vadd.f32 %v6207, %v7325
    %v7488 = vadd.f32 %v6208, %v7327
    %v7489 = vadd.f32 %v6209, %v7329
    %v7490 = vmul.f32 %v7410, 0.0075987587
    %v7491 = vmul.f32 %v7411, 0.0075987587
    %v7492 = vmul.f32 %v7412, 0.0075987587
    %v7493 = vmul.f32 %v7413, 0.0075987587
    %v7494 = vmul.f32 %v7414, 0.0075987587
    %v7495 = vmul.f32 %v7415, 0.0075987587
    %v7496 = vmul.f32 %v7416, 0.0075987587
    %v7497 = vmul.f32 %v7417, 0.0075987587
    %v7498 = vmul.f32 %v7418, 0.0075987587
    %v7499 = vmul.f32 %v7419, 0.0075987587
    %v7500 = vmul.f32 %v7420, 0.0075987587
    %v7501 = vmul.f32 %v7421, 0.0075987587
    %v7502 = vmul.f32 %v7422, 0.0075987587
    %v7503 = vmul.f32 %v7423, 0.0075987587
    %v7504 = vmul.f32 %v7424, 0.0075987587
    %v7505 = vmul.f32 %v7425, 0.0075987587
    %v7506 = vmul.f32 %v7426, 0.0075987587
    %v7507 = vmul.f32 %v7427, 0.0075987587
    %v7508 = vmul.f32 %v7428, 0.0075987587
    %v7509 = vmul.f32 %v7429, 0.0075987587
    %v7510 = vmul.f32 %v7430, 0.0075987587
    %v7511 = vmul.f32 %v7431, 0.0075987587
    %v7512 = vmul.f32 %v7432, 0.0075987587
    %v7513 = vmul.f32 %v7433, 0.0075987587
    %v7514 = vmul.f32 %v7434, 0.0075987587
    %v7515 = vmul.f32 %v7435, 0.0075987587
    %v7516 = vmul.f32 %v7436, 0.0075987587
    %v7517 = vmul.f32 %v7437, 0.0075987587
    %v7518 = vmul.f32 %v7438, 0.0075987587
    %v7519 = vmul.f32 %v7439, 0.0075987587
    %v7520 = vmul.f32 %v7440, 0.0075987587
    %v7521 = vmul.f32 %v7441, 0.0075987587
    %v7522 = vmul.f32 %v7442, 0.0075987587
    %v7523 = vmul.f32 %v7443, 0.0075987587
    %v7524 = vmul.f32 %v7444, 0.0075987587
    %v7525 = vmul.f32 %v7445, 0.0075987587
    %v7526 = vmul.f32 %v7446, 0.0075987587
    %v7527 = vmul.f32 %v7447, 0.0075987587
    %v7528 = vmul.f32 %v7448, 0.0075987587
    %v7529 = vmul.f32 %v7449, 0.0075987587
    %v7530 = vmul.f32 %v7450, 0.0075987587
    %v7531 = vmul.f32 %v7451, 0.0075987587
    %v7532 = vmul.f32 %v7452, 0.0075987587
    %v7533 = vmul.f32 %v7453, 0.0075987587
    %v7534 = vmul.f32 %v7454, 0.0075987587
    %v7535 = vmul.f32 %v7455, 0.0075987587
    %v7536 = vmul.f32 %v7456, 0.0075987587
    %v7537 = vmul.f32 %v7457, 0.0075987587
    %v7538 = vmul.f32 %v7458, 0.0075987587
    %v7539 = vmul.f32 %v7459, 0.0075987587
    %v7540 = vmul.f32 %v7460, 0.0075987587
    %v7541 = vmul.f32 %v7461, 0.0075987587
    %v7542 = vmul.f32 %v7462, 0.0075987587
    %v7543 = vmul.f32 %v7463, 0.0075987587
    %v7544 = vmul.f32 %v7464, 0.0075987587
    %v7545 = vmul.f32 %v7465, 0.0075987587
    %v7546 = vmul.f32 %v7466, 0.0075987587
    %v7547 = vmul.f32 %v7467, 0.0075987587
    %v7548 = vmul.f32 %v7468, 0.0075987587
    %v7549 = vmul.f32 %v7469, 0.0075987587
    %v7550 = vmul.f32 %v7470, 0.0075987587
    %v7551 = vmul.f32 %v7471, 0.0075987587
    %v7552 = vmul.f32 %v7472, 0.0075987587
    %v7553 = vmul.f32 %v7473, 0.0075987587
    %v7554 = vmul.f32 %v7474, 0.0075987587
    %v7555 = vmul.f32 %v7475, 0.0075987587
    %v7556 = vmul.f32 %v7476, 0.0075987587
    %v7557 = vmul.f32 %v7477, 0.0075987587
    %v7558 = vmul.f32 %v7478, 0.0075987587
    %v7559 = vmul.f32 %v7479, 0.0075987587
    %v7560 = vmul.f32 %v7480, 0.0075987587
    %v7561 = vmul.f32 %v7481, 0.0075987587
    %v7562 = vmul.f32 %v7482, 0.0075987587
    %v7563 = vmul.f32 %v7483, 0.0075987587
    %v7564 = vmul.f32 %v7484, 0.0075987587
    %v7565 = vmul.f32 %v7485, 0.0075987587
    %v7566 = vmul.f32 %v7486, 0.0075987587
    %v7567 = vmul.f32 %v7487, 0.0075987587
    %v7568 = vmul.f32 %v7488, 0.0075987587
    %v7569 = vmul.f32 %v7489, 0.0075987587
    %7650 = vrot.lane.b32.xlu0 %v7490, 4
    %v7651 = vpop.permute.xlu0 %7650
    %7652 = vrot.lane.b32.xlu0 %v7491, 4
    %v7653 = vpop.permute.xlu0 %7652
    %7654 = vrot.lane.b32.xlu0 %v7492, 4
    %v7655 = vpop.permute.xlu0 %7654
    %7656 = vrot.lane.b32.xlu0 %v7493, 4
    %v7657 = vpop.permute.xlu0 %7656
    %7658 = vrot.lane.b32.xlu0 %v7494, 4
    %v7659 = vpop.permute.xlu0 %7658
    %7660 = vrot.lane.b32.xlu0 %v7495, 4
    %v7661 = vpop.permute.xlu0 %7660
    %7662 = vrot.lane.b32.xlu0 %v7496, 4
    %v7663 = vpop.permute.xlu0 %7662
    %7664 = vrot.lane.b32.xlu0 %v7497, 4
    %v7665 = vpop.permute.xlu0 %7664
    %7666 = vrot.lane.b32.xlu0 %v7498, 4
    %v7667 = vpop.permute.xlu0 %7666
    %7668 = vrot.lane.b32.xlu0 %v7499, 4
    %v7669 = vpop.permute.xlu0 %7668
    %7670 = vrot.lane.b32.xlu0 %v7500, 4
    %v7671 = vpop.permute.xlu0 %7670
    %7672 = vrot.lane.b32.xlu0 %v7501, 4
    %v7673 = vpop.permute.xlu0 %7672
    %7674 = vrot.lane.b32.xlu0 %v7502, 4
    %v7675 = vpop.permute.xlu0 %7674
    %7676 = vrot.lane.b32.xlu0 %v7503, 4
    %v7677 = vpop.permute.xlu0 %7676
    %7678 = vrot.lane.b32.xlu0 %v7504, 4
    %v7679 = vpop.permute.xlu0 %7678
    %7680 = vrot.lane.b32.xlu0 %v7505, 4
    %v7681 = vpop.permute.xlu0 %7680
    %7682 = vrot.lane.b32.xlu0 %v7506, 4
    %v7683 = vpop.permute.xlu0 %7682
    %7684 = vrot.lane.b32.xlu0 %v7507, 4
    %v7685 = vpop.permute.xlu0 %7684
    %7686 = vrot.lane.b32.xlu0 %v7508, 4
    %v7687 = vpop.permute.xlu0 %7686
    %7688 = vrot.lane.b32.xlu0 %v7509, 4
    %v7689 = vpop.permute.xlu0 %7688
    %7690 = vrot.lane.b32.xlu0 %v7510, 4
    %v7691 = vpop.permute.xlu0 %7690
    %7692 = vrot.lane.b32.xlu0 %v7511, 4
    %v7693 = vpop.permute.xlu0 %7692
    %7694 = vrot.lane.b32.xlu0 %v7512, 4
    %v7695 = vpop.permute.xlu0 %7694
    %7696 = vrot.lane.b32.xlu0 %v7513, 4
    %v7697 = vpop.permute.xlu0 %7696
    %7698 = vrot.lane.b32.xlu0 %v7514, 4
    %v7699 = vpop.permute.xlu0 %7698
    %7700 = vrot.lane.b32.xlu0 %v7515, 4
    %v7701 = vpop.permute.xlu0 %7700
    %7702 = vrot.lane.b32.xlu0 %v7516, 4
    %v7703 = vpop.permute.xlu0 %7702
    %7704 = vrot.lane.b32.xlu0 %v7517, 4
    %v7705 = vpop.permute.xlu0 %7704
    %7706 = vrot.lane.b32.xlu0 %v7518, 4
    %v7707 = vpop.permute.xlu0 %7706
    %7708 = vrot.lane.b32.xlu0 %v7519, 4
    %v7709 = vpop.permute.xlu0 %7708
    %7710 = vrot.lane.b32.xlu0 %v7520, 4
    %v7711 = vpop.permute.xlu0 %7710
    %7712 = vrot.lane.b32.xlu0 %v7521, 4
    %v7713 = vpop.permute.xlu0 %7712
    %7714 = vrot.lane.b32.xlu0 %v7522, 4
    %v7715 = vpop.permute.xlu0 %7714
    %7716 = vrot.lane.b32.xlu0 %v7523, 4
    %v7717 = vpop.permute.xlu0 %7716
    %7718 = vrot.lane.b32.xlu0 %v7524, 4
    %v7719 = vpop.permute.xlu0 %7718
    %7720 = vrot.lane.b32.xlu0 %v7525, 4
    %v7721 = vpop.permute.xlu0 %7720
    %7722 = vrot.lane.b32.xlu0 %v7526, 4
    %v7723 = vpop.permute.xlu0 %7722
    %7724 = vrot.lane.b32.xlu0 %v7527, 4
    %v7725 = vpop.permute.xlu0 %7724
    %7726 = vrot.lane.b32.xlu0 %v7528, 4
    %v7727 = vpop.permute.xlu0 %7726
    %7728 = vrot.lane.b32.xlu0 %v7529, 4
    %v7729 = vpop.permute.xlu0 %7728
    %7730 = vrot.lane.b32.xlu0 %v7530, 4
    %v7731 = vpop.permute.xlu0 %7730
    %7732 = vrot.lane.b32.xlu0 %v7531, 4
    %v7733 = vpop.permute.xlu0 %7732
    %7734 = vrot.lane.b32.xlu0 %v7532, 4
    %v7735 = vpop.permute.xlu0 %7734
    %7736 = vrot.lane.b32.xlu0 %v7533, 4
    %v7737 = vpop.permute.xlu0 %7736
    %7738 = vrot.lane.b32.xlu0 %v7534, 4
    %v7739 = vpop.permute.xlu0 %7738
    %7740 = vrot.lane.b32.xlu0 %v7535, 4
    %v7741 = vpop.permute.xlu0 %7740
    %7742 = vrot.lane.b32.xlu0 %v7536, 4
    %v7743 = vpop.permute.xlu0 %7742
    %7744 = vrot.lane.b32.xlu0 %v7537, 4
    %v7745 = vpop.permute.xlu0 %7744
    %7746 = vrot.lane.b32.xlu0 %v7538, 4
    %v7747 = vpop.permute.xlu0 %7746
    %7748 = vrot.lane.b32.xlu0 %v7539, 4
    %v7749 = vpop.permute.xlu0 %7748
    %7750 = vrot.lane.b32.xlu0 %v7540, 4
    %v7751 = vpop.permute.xlu0 %7750
    %7752 = vrot.lane.b32.xlu0 %v7541, 4
    %v7753 = vpop.permute.xlu0 %7752
    %7754 = vrot.lane.b32.xlu0 %v7542, 4
    %v7755 = vpop.permute.xlu0 %7754
    %7756 = vrot.lane.b32.xlu0 %v7543, 4
    %v7757 = vpop.permute.xlu0 %7756
    %7758 = vrot.lane.b32.xlu0 %v7544, 4
    %v7759 = vpop.permute.xlu0 %7758
    %7760 = vrot.lane.b32.xlu0 %v7545, 4
    %v7761 = vpop.permute.xlu0 %7760
    %7762 = vrot.lane.b32.xlu0 %v7546, 4
    %v7763 = vpop.permute.xlu0 %7762
    %7764 = vrot.lane.b32.xlu0 %v7547, 4
    %v7765 = vpop.permute.xlu0 %7764
    %7766 = vrot.lane.b32.xlu0 %v7548, 4
    %v7767 = vpop.permute.xlu0 %7766
    %7768 = vrot.lane.b32.xlu0 %v7549, 4
    %v7769 = vpop.permute.xlu0 %7768
    %7770 = vrot.lane.b32.xlu0 %v7550, 4
    %v7771 = vpop.permute.xlu0 %7770
    %7772 = vrot.lane.b32.xlu0 %v7551, 4
    %v7773 = vpop.permute.xlu0 %7772
    %7774 = vrot.lane.b32.xlu0 %v7552, 4
    %v7775 = vpop.permute.xlu0 %7774
    %7776 = vrot.lane.b32.xlu0 %v7553, 4
    %v7777 = vpop.permute.xlu0 %7776
    %7778 = vrot.lane.b32.xlu0 %v7554, 4
    %v7779 = vpop.permute.xlu0 %7778
    %7780 = vrot.lane.b32.xlu0 %v7555, 4
    %v7781 = vpop.permute.xlu0 %7780
    %7782 = vrot.lane.b32.xlu0 %v7556, 4
    %v7783 = vpop.permute.xlu0 %7782
    %7784 = vrot.lane.b32.xlu0 %v7557, 4
    %v7785 = vpop.permute.xlu0 %7784
    %7786 = vrot.lane.b32.xlu0 %v7558, 4
    %v7787 = vpop.permute.xlu0 %7786
    %7788 = vrot.lane.b32.xlu0 %v7559, 4
    %v7789 = vpop.permute.xlu0 %7788
    %7790 = vrot.lane.b32.xlu0 %v7560, 4
    %v7791 = vpop.permute.xlu0 %7790
    %7792 = vrot.lane.b32.xlu0 %v7561, 4
    %v7793 = vpop.permute.xlu0 %7792
    %7794 = vrot.lane.b32.xlu0 %v7562, 4
    %v7795 = vpop.permute.xlu0 %7794
    %7796 = vrot.lane.b32.xlu0 %v7563, 4
    %v7797 = vpop.permute.xlu0 %7796
    %7798 = vrot.lane.b32.xlu0 %v7564, 4
    %v7799 = vpop.permute.xlu0 %7798
    %7800 = vrot.lane.b32.xlu0 %v7565, 4
    %v7801 = vpop.permute.xlu0 %7800
    %7802 = vrot.lane.b32.xlu0 %v7566, 4
    %v7803 = vpop.permute.xlu0 %7802
    %7804 = vrot.lane.b32.xlu0 %v7567, 4
    %v7805 = vpop.permute.xlu0 %7804
    %7806 = vrot.lane.b32.xlu0 %v7568, 4
    %v7807 = vpop.permute.xlu0 %7806
    %7808 = vrot.lane.b32.xlu0 %v7569, 4
    %v7809 = vpop.permute.xlu0 %7808
    %v7890 = vadd.f32 %v7090, %v7651
    %v7891 = vadd.f32 %v7091, %v7653
    %v7892 = vadd.f32 %v7092, %v7655
    %v7893 = vadd.f32 %v7093, %v7657
    %v7894 = vadd.f32 %v7094, %v7659
    %v7895 = vadd.f32 %v7095, %v7661
    %v7896 = vadd.f32 %v7096, %v7663
    %v7897 = vadd.f32 %v7097, %v7665
    %v7898 = vadd.f32 %v7098, %v7667
    %v7899 = vadd.f32 %v7099, %v7669
    %v7900 = vadd.f32 %v7100, %v7671
    %v7901 = vadd.f32 %v7101, %v7673
    %v7902 = vadd.f32 %v7102, %v7675
    %v7903 = vadd.f32 %v7103, %v7677
    %v7904 = vadd.f32 %v7104, %v7679
    %v7905 = vadd.f32 %v7105, %v7681
    %v7906 = vadd.f32 %v7106, %v7683
    %v7907 = vadd.f32 %v7107, %v7685
    %v7908 = vadd.f32 %v7108, %v7687
    %v7909 = vadd.f32 %v7109, %v7689
    %v7910 = vadd.f32 %v7110, %v7691
    %v7911 = vadd.f32 %v7111, %v7693
    %v7912 = vadd.f32 %v7112, %v7695
    %v7913 = vadd.f32 %v7113, %v7697
    %v7914 = vadd.f32 %v7114, %v7699
    %v7915 = vadd.f32 %v7115, %v7701
    %v7916 = vadd.f32 %v7116, %v7703
    %v7917 = vadd.f32 %v7117, %v7705
    %v7918 = vadd.f32 %v7118, %v7707
    %v7919 = vadd.f32 %v7119, %v7709
    %v7920 = vadd.f32 %v7120, %v7711
    %v7921 = vadd.f32 %v7121, %v7713
    %v7922 = vadd.f32 %v7122, %v7715
    %v7923 = vadd.f32 %v7123, %v7717
    %v7924 = vadd.f32 %v7124, %v7719
    %v7925 = vadd.f32 %v7125, %v7721
    %v7926 = vadd.f32 %v7126, %v7723
    %v7927 = vadd.f32 %v7127, %v7725
    %v7928 = vadd.f32 %v7128, %v7727
    %v7929 = vadd.f32 %v7129, %v7729
    %v7930 = vadd.f32 %v7130, %v7731
    %v7931 = vadd.f32 %v7131, %v7733
    %v7932 = vadd.f32 %v7132, %v7735
    %v7933 = vadd.f32 %v7133, %v7737
    %v7934 = vadd.f32 %v7134, %v7739
    %v7935 = vadd.f32 %v7135, %v7741
    %v7936 = vadd.f32 %v7136, %v7743
    %v7937 = vadd.f32 %v7137, %v7745
    %v7938 = vadd.f32 %v7138, %v7747
    %v7939 = vadd.f32 %v7139, %v7749
    %v7940 = vadd.f32 %v7140, %v7751
    %v7941 = vadd.f32 %v7141, %v7753
    %v7942 = vadd.f32 %v7142, %v7755
    %v7943 = vadd.f32 %v7143, %v7757
    %v7944 = vadd.f32 %v7144, %v7759
    %v7945 = vadd.f32 %v7145, %v7761
    %v7946 = vadd.f32 %v7146, %v7763
    %v7947 = vadd.f32 %v7147, %v7765
    %v7948 = vadd.f32 %v7148, %v7767
    %v7949 = vadd.f32 %v7149, %v7769
    %v7950 = vadd.f32 %v7150, %v7771
    %v7951 = vadd.f32 %v7151, %v7773
    %v7952 = vadd.f32 %v7152, %v7775
    %v7953 = vadd.f32 %v7153, %v7777
    %v7954 = vadd.f32 %v7154, %v7779
    %v7955 = vadd.f32 %v7155, %v7781
    %v7956 = vadd.f32 %v7156, %v7783
    %v7957 = vadd.f32 %v7157, %v7785
    %v7958 = vadd.f32 %v7158, %v7787
    %v7959 = vadd.f32 %v7159, %v7789
    %v7960 = vadd.f32 %v7160, %v7791
    %v7961 = vadd.f32 %v7161, %v7793
    %v7962 = vadd.f32 %v7162, %v7795
    %v7963 = vadd.f32 %v7163, %v7797
    %v7964 = vadd.f32 %v7164, %v7799
    %v7965 = vadd.f32 %v7165, %v7801
    %v7966 = vadd.f32 %v7166, %v7803
    %v7967 = vadd.f32 %v7167, %v7805
    %v7968 = vadd.f32 %v7168, %v7807
    %v7969 = vadd.f32 %v7169, %v7809
    %7970 = vrot.lane.b32.xlu0 %v6130, 122
    %v7971 = vpop.permute.xlu0 %7970
    %7972 = vrot.lane.b32.xlu0 %v6131, 122
    %v7973 = vpop.permute.xlu0 %7972
    %7974 = vrot.lane.b32.xlu0 %v6132, 122
    %v7975 = vpop.permute.xlu0 %7974
    %7976 = vrot.lane.b32.xlu0 %v6133, 122
    %v7977 = vpop.permute.xlu0 %7976
    %7978 = vrot.lane.b32.xlu0 %v6134, 122
    %v7979 = vpop.permute.xlu0 %7978
    %7980 = vrot.lane.b32.xlu0 %v6135, 122
    %v7981 = vpop.permute.xlu0 %7980
    %7982 = vrot.lane.b32.xlu0 %v6136, 122
    %v7983 = vpop.permute.xlu0 %7982
    %7984 = vrot.lane.b32.xlu0 %v6137, 122
    %v7985 = vpop.permute.xlu0 %7984
    %7986 = vrot.lane.b32.xlu0 %v6138, 122
    %v7987 = vpop.permute.xlu0 %7986
    %7988 = vrot.lane.b32.xlu0 %v6139, 122
    %v7989 = vpop.permute.xlu0 %7988
    %7990 = vrot.lane.b32.xlu0 %v6140, 122
    %v7991 = vpop.permute.xlu0 %7990
    %7992 = vrot.lane.b32.xlu0 %v6141, 122
    %v7993 = vpop.permute.xlu0 %7992
    %7994 = vrot.lane.b32.xlu0 %v6142, 122
    %v7995 = vpop.permute.xlu0 %7994
    %7996 = vrot.lane.b32.xlu0 %v6143, 122
    %v7997 = vpop.permute.xlu0 %7996
    %7998 = vrot.lane.b32.xlu0 %v6144, 122
    %v7999 = vpop.permute.xlu0 %7998
    %8000 = vrot.lane.b32.xlu0 %v6145, 122
    %v8001 = vpop.permute.xlu0 %8000
    %8002 = vrot.lane.b32.xlu0 %v6146, 122
    %v8003 = vpop.permute.xlu0 %8002
    %8004 = vrot.lane.b32.xlu0 %v6147, 122
    %v8005 = vpop.permute.xlu0 %8004
    %8006 = vrot.lane.b32.xlu0 %v6148, 122
    %v8007 = vpop.permute.xlu0 %8006
    %8008 = vrot.lane.b32.xlu0 %v6149, 122
    %v8009 = vpop.permute.xlu0 %8008
    %8010 = vrot.lane.b32.xlu0 %v6150, 122
    %v8011 = vpop.permute.xlu0 %8010
    %8012 = vrot.lane.b32.xlu0 %v6151, 122
    %v8013 = vpop.permute.xlu0 %8012
    %8014 = vrot.lane.b32.xlu0 %v6152, 122
    %v8015 = vpop.permute.xlu0 %8014
    %8016 = vrot.lane.b32.xlu0 %v6153, 122
    %v8017 = vpop.permute.xlu0 %8016
    %8018 = vrot.lane.b32.xlu0 %v6154, 122
    %v8019 = vpop.permute.xlu0 %8018
    %8020 = vrot.lane.b32.xlu0 %v6155, 122
    %v8021 = vpop.permute.xlu0 %8020
    %8022 = vrot.lane.b32.xlu0 %v6156, 122
    %v8023 = vpop.permute.xlu0 %8022
    %8024 = vrot.lane.b32.xlu0 %v6157, 122
    %v8025 = vpop.permute.xlu0 %8024
    %8026 = vrot.lane.b32.xlu0 %v6158, 122
    %v8027 = vpop.permute.xlu0 %8026
    %8028 = vrot.lane.b32.xlu0 %v6159, 122
    %v8029 = vpop.permute.xlu0 %8028
    %8030 = vrot.lane.b32.xlu0 %v6160, 122
    %v8031 = vpop.permute.xlu0 %8030
    %8032 = vrot.lane.b32.xlu0 %v6161, 122
    %v8033 = vpop.permute.xlu0 %8032
    %8034 = vrot.lane.b32.xlu0 %v6162, 122
    %v8035 = vpop.permute.xlu0 %8034
    %8036 = vrot.lane.b32.xlu0 %v6163, 122
    %v8037 = vpop.permute.xlu0 %8036
    %8038 = vrot.lane.b32.xlu0 %v6164, 122
    %v8039 = vpop.permute.xlu0 %8038
    %8040 = vrot.lane.b32.xlu0 %v6165, 122
    %v8041 = vpop.permute.xlu0 %8040
    %8042 = vrot.lane.b32.xlu0 %v6166, 122
    %v8043 = vpop.permute.xlu0 %8042
    %8044 = vrot.lane.b32.xlu0 %v6167, 122
    %v8045 = vpop.permute.xlu0 %8044
    %8046 = vrot.lane.b32.xlu0 %v6168, 122
    %v8047 = vpop.permute.xlu0 %8046
    %8048 = vrot.lane.b32.xlu0 %v6169, 122
    %v8049 = vpop.permute.xlu0 %8048
    %8050 = vrot.lane.b32.xlu0 %v6170, 122
    %v8051 = vpop.permute.xlu0 %8050
    %8052 = vrot.lane.b32.xlu0 %v6171, 122
    %v8053 = vpop.permute.xlu0 %8052
    %8054 = vrot.lane.b32.xlu0 %v6172, 122
    %v8055 = vpop.permute.xlu0 %8054
    %8056 = vrot.lane.b32.xlu0 %v6173, 122
    %v8057 = vpop.permute.xlu0 %8056
    %8058 = vrot.lane.b32.xlu0 %v6174, 122
    %v8059 = vpop.permute.xlu0 %8058
    %8060 = vrot.lane.b32.xlu0 %v6175, 122
    %v8061 = vpop.permute.xlu0 %8060
    %8062 = vrot.lane.b32.xlu0 %v6176, 122
    %v8063 = vpop.permute.xlu0 %8062
    %8064 = vrot.lane.b32.xlu0 %v6177, 122
    %v8065 = vpop.permute.xlu0 %8064
    %8066 = vrot.lane.b32.xlu0 %v6178, 122
    %v8067 = vpop.permute.xlu0 %8066
    %8068 = vrot.lane.b32.xlu0 %v6179, 122
    %v8069 = vpop.permute.xlu0 %8068
    %8070 = vrot.lane.b32.xlu0 %v6180, 122
    %v8071 = vpop.permute.xlu0 %8070
    %8072 = vrot.lane.b32.xlu0 %v6181, 122
    %v8073 = vpop.permute.xlu0 %8072
    %8074 = vrot.lane.b32.xlu0 %v6182, 122
    %v8075 = vpop.permute.xlu0 %8074
    %8076 = vrot.lane.b32.xlu0 %v6183, 122
    %v8077 = vpop.permute.xlu0 %8076
    %8078 = vrot.lane.b32.xlu0 %v6184, 122
    %v8079 = vpop.permute.xlu0 %8078
    %8080 = vrot.lane.b32.xlu0 %v6185, 122
    %v8081 = vpop.permute.xlu0 %8080
    %8082 = vrot.lane.b32.xlu0 %v6186, 122
    %v8083 = vpop.permute.xlu0 %8082
    %8084 = vrot.lane.b32.xlu0 %v6187, 122
    %v8085 = vpop.permute.xlu0 %8084
    %8086 = vrot.lane.b32.xlu0 %v6188, 122
    %v8087 = vpop.permute.xlu0 %8086
    %8088 = vrot.lane.b32.xlu0 %v6189, 122
    %v8089 = vpop.permute.xlu0 %8088
    %8090 = vrot.lane.b32.xlu0 %v6190, 122
    %v8091 = vpop.permute.xlu0 %8090
    %8092 = vrot.lane.b32.xlu0 %v6191, 122
    %v8093 = vpop.permute.xlu0 %8092
    %8094 = vrot.lane.b32.xlu0 %v6192, 122
    %v8095 = vpop.permute.xlu0 %8094
    %8096 = vrot.lane.b32.xlu0 %v6193, 122
    %v8097 = vpop.permute.xlu0 %8096
    %8098 = vrot.lane.b32.xlu0 %v6194, 122
    %v8099 = vpop.permute.xlu0 %8098
    %8100 = vrot.lane.b32.xlu0 %v6195, 122
    %v8101 = vpop.permute.xlu0 %8100
    %8102 = vrot.lane.b32.xlu0 %v6196, 122
    %v8103 = vpop.permute.xlu0 %8102
    %8104 = vrot.lane.b32.xlu0 %v6197, 122
    %v8105 = vpop.permute.xlu0 %8104
    %8106 = vrot.lane.b32.xlu0 %v6198, 122
    %v8107 = vpop.permute.xlu0 %8106
    %8108 = vrot.lane.b32.xlu0 %v6199, 122
    %v8109 = vpop.permute.xlu0 %8108
    %8110 = vrot.lane.b32.xlu0 %v6200, 122
    %v8111 = vpop.permute.xlu0 %8110
    %8112 = vrot.lane.b32.xlu0 %v6201, 122
    %v8113 = vpop.permute.xlu0 %8112
    %8114 = vrot.lane.b32.xlu0 %v6202, 122
    %v8115 = vpop.permute.xlu0 %8114
    %8116 = vrot.lane.b32.xlu0 %v6203, 122
    %v8117 = vpop.permute.xlu0 %8116
    %8118 = vrot.lane.b32.xlu0 %v6204, 122
    %v8119 = vpop.permute.xlu0 %8118
    %8120 = vrot.lane.b32.xlu0 %v6205, 122
    %v8121 = vpop.permute.xlu0 %8120
    %8122 = vrot.lane.b32.xlu0 %v6206, 122
    %v8123 = vpop.permute.xlu0 %8122
    %8124 = vrot.lane.b32.xlu0 %v6207, 122
    %v8125 = vpop.permute.xlu0 %8124
    %8126 = vrot.lane.b32.xlu0 %v6208, 122
    %v8127 = vpop.permute.xlu0 %8126
    %8128 = vrot.lane.b32.xlu0 %v6209, 122
    %v8129 = vpop.permute.xlu0 %8128
    %v8210 = vadd.f32 %v6130, %v7971
    %v8211 = vadd.f32 %v6131, %v7973
    %v8212 = vadd.f32 %v6132, %v7975
    %v8213 = vadd.f32 %v6133, %v7977
    %v8214 = vadd.f32 %v6134, %v7979
    %v8215 = vadd.f32 %v6135, %v7981
    %v8216 = vadd.f32 %v6136, %v7983
    %v8217 = vadd.f32 %v6137, %v7985
    %v8218 = vadd.f32 %v6138, %v7987
    %v8219 = vadd.f32 %v6139, %v7989
    %v8220 = vadd.f32 %v6140, %v7991
    %v8221 = vadd.f32 %v6141, %v7993
    %v8222 = vadd.f32 %v6142, %v7995
    %v8223 = vadd.f32 %v6143, %v7997
    %v8224 = vadd.f32 %v6144, %v7999
    %v8225 = vadd.f32 %v6145, %v8001
    %v8226 = vadd.f32 %v6146, %v8003
    %v8227 = vadd.f32 %v6147, %v8005
    %v8228 = vadd.f32 %v6148, %v8007
    %v8229 = vadd.f32 %v6149, %v8009
    %v8230 = vadd.f32 %v6150, %v8011
    %v8231 = vadd.f32 %v6151, %v8013
    %v8232 = vadd.f32 %v6152, %v8015
    %v8233 = vadd.f32 %v6153, %v8017
    %v8234 = vadd.f32 %v6154, %v8019
    %v8235 = vadd.f32 %v6155, %v8021
    %v8236 = vadd.f32 %v6156, %v8023
    %v8237 = vadd.f32 %v6157, %v8025
    %v8238 = vadd.f32 %v6158, %v8027
    %v8239 = vadd.f32 %v6159, %v8029
    %v8240 = vadd.f32 %v6160, %v8031
    %v8241 = vadd.f32 %v6161, %v8033
    %v8242 = vadd.f32 %v6162, %v8035
    %v8243 = vadd.f32 %v6163, %v8037
    %v8244 = vadd.f32 %v6164, %v8039
    %v8245 = vadd.f32 %v6165, %v8041
    %v8246 = vadd.f32 %v6166, %v8043
    %v8247 = vadd.f32 %v6167, %v8045
    %v8248 = vadd.f32 %v6168, %v8047
    %v8249 = vadd.f32 %v6169, %v8049
    %v8250 = vadd.f32 %v6170, %v8051
    %v8251 = vadd.f32 %v6171, %v8053
    %v8252 = vadd.f32 %v6172, %v8055
    %v8253 = vadd.f32 %v6173, %v8057
    %v8254 = vadd.f32 %v6174, %v8059
    %v8255 = vadd.f32 %v6175, %v8061
    %v8256 = vadd.f32 %v6176, %v8063
    %v8257 = vadd.f32 %v6177, %v8065
    %v8258 = vadd.f32 %v6178, %v8067
    %v8259 = vadd.f32 %v6179, %v8069
    %v8260 = vadd.f32 %v6180, %v8071
    %v8261 = vadd.f32 %v6181, %v8073
    %v8262 = vadd.f32 %v6182, %v8075
    %v8263 = vadd.f32 %v6183, %v8077
    %v8264 = vadd.f32 %v6184, %v8079
    %v8265 = vadd.f32 %v6185, %v8081
    %v8266 = vadd.f32 %v6186, %v8083
    %v8267 = vadd.f32 %v6187, %v8085
    %v8268 = vadd.f32 %v6188, %v8087
    %v8269 = vadd.f32 %v6189, %v8089
    %v8270 = vadd.f32 %v6190, %v8091
    %v8271 = vadd.f32 %v6191, %v8093
    %v8272 = vadd.f32 %v6192, %v8095
    %v8273 = vadd.f32 %v6193, %v8097
    %v8274 = vadd.f32 %v6194, %v8099
    %v8275 = vadd.f32 %v6195, %v8101
    %v8276 = vadd.f32 %v6196, %v8103
    %v8277 = vadd.f32 %v6197, %v8105
    %v8278 = vadd.f32 %v6198, %v8107
    %v8279 = vadd.f32 %v6199, %v8109
    %v8280 = vadd.f32 %v6200, %v8111
    %v8281 = vadd.f32 %v6201, %v8113
    %v8282 = vadd.f32 %v6202, %v8115
    %v8283 = vadd.f32 %v6203, %v8117
    %v8284 = vadd.f32 %v6204, %v8119
    %v8285 = vadd.f32 %v6205, %v8121
    %v8286 = vadd.f32 %v6206, %v8123
    %v8287 = vadd.f32 %v6207, %v8125
    %v8288 = vadd.f32 %v6208, %v8127
    %v8289 = vadd.f32 %v6209, %v8129
    %v8290 = vmul.f32 %v8210, 0.036000773
    %v8291 = vmul.f32 %v8211, 0.036000773
    %v8292 = vmul.f32 %v8212, 0.036000773
    %v8293 = vmul.f32 %v8213, 0.036000773
    %v8294 = vmul.f32 %v8214, 0.036000773
    %v8295 = vmul.f32 %v8215, 0.036000773
    %v8296 = vmul.f32 %v8216, 0.036000773
    %v8297 = vmul.f32 %v8217, 0.036000773
    %v8298 = vmul.f32 %v8218, 0.036000773
    %v8299 = vmul.f32 %v8219, 0.036000773
    %v8300 = vmul.f32 %v8220, 0.036000773
    %v8301 = vmul.f32 %v8221, 0.036000773
    %v8302 = vmul.f32 %v8222, 0.036000773
    %v8303 = vmul.f32 %v8223, 0.036000773
    %v8304 = vmul.f32 %v8224, 0.036000773
    %v8305 = vmul.f32 %v8225, 0.036000773
    %v8306 = vmul.f32 %v8226, 0.036000773
    %v8307 = vmul.f32 %v8227, 0.036000773
    %v8308 = vmul.f32 %v8228, 0.036000773
    %v8309 = vmul.f32 %v8229, 0.036000773
    %v8310 = vmul.f32 %v8230, 0.036000773
    %v8311 = vmul.f32 %v8231, 0.036000773
    %v8312 = vmul.f32 %v8232, 0.036000773
    %v8313 = vmul.f32 %v8233, 0.036000773
    %v8314 = vmul.f32 %v8234, 0.036000773
    %v8315 = vmul.f32 %v8235, 0.036000773
    %v8316 = vmul.f32 %v8236, 0.036000773
    %v8317 = vmul.f32 %v8237, 0.036000773
    %v8318 = vmul.f32 %v8238, 0.036000773
    %v8319 = vmul.f32 %v8239, 0.036000773
    %v8320 = vmul.f32 %v8240, 0.036000773
    %v8321 = vmul.f32 %v8241, 0.036000773
    %v8322 = vmul.f32 %v8242, 0.036000773
    %v8323 = vmul.f32 %v8243, 0.036000773
    %v8324 = vmul.f32 %v8244, 0.036000773
    %v8325 = vmul.f32 %v8245, 0.036000773
    %v8326 = vmul.f32 %v8246, 0.036000773
    %v8327 = vmul.f32 %v8247, 0.036000773
    %v8328 = vmul.f32 %v8248, 0.036000773
    %v8329 = vmul.f32 %v8249, 0.036000773
    %v8330 = vmul.f32 %v8250, 0.036000773
    %v8331 = vmul.f32 %v8251, 0.036000773
    %v8332 = vmul.f32 %v8252, 0.036000773
    %v8333 = vmul.f32 %v8253, 0.036000773
    %v8334 = vmul.f32 %v8254, 0.036000773
    %v8335 = vmul.f32 %v8255, 0.036000773
    %v8336 = vmul.f32 %v8256, 0.036000773
    %v8337 = vmul.f32 %v8257, 0.036000773
    %v8338 = vmul.f32 %v8258, 0.036000773
    %v8339 = vmul.f32 %v8259, 0.036000773
    %v8340 = vmul.f32 %v8260, 0.036000773
    %v8341 = vmul.f32 %v8261, 0.036000773
    %v8342 = vmul.f32 %v8262, 0.036000773
    %v8343 = vmul.f32 %v8263, 0.036000773
    %v8344 = vmul.f32 %v8264, 0.036000773
    %v8345 = vmul.f32 %v8265, 0.036000773
    %v8346 = vmul.f32 %v8266, 0.036000773
    %v8347 = vmul.f32 %v8267, 0.036000773
    %v8348 = vmul.f32 %v8268, 0.036000773
    %v8349 = vmul.f32 %v8269, 0.036000773
    %v8350 = vmul.f32 %v8270, 0.036000773
    %v8351 = vmul.f32 %v8271, 0.036000773
    %v8352 = vmul.f32 %v8272, 0.036000773
    %v8353 = vmul.f32 %v8273, 0.036000773
    %v8354 = vmul.f32 %v8274, 0.036000773
    %v8355 = vmul.f32 %v8275, 0.036000773
    %v8356 = vmul.f32 %v8276, 0.036000773
    %v8357 = vmul.f32 %v8277, 0.036000773
    %v8358 = vmul.f32 %v8278, 0.036000773
    %v8359 = vmul.f32 %v8279, 0.036000773
    %v8360 = vmul.f32 %v8280, 0.036000773
    %v8361 = vmul.f32 %v8281, 0.036000773
    %v8362 = vmul.f32 %v8282, 0.036000773
    %v8363 = vmul.f32 %v8283, 0.036000773
    %v8364 = vmul.f32 %v8284, 0.036000773
    %v8365 = vmul.f32 %v8285, 0.036000773
    %v8366 = vmul.f32 %v8286, 0.036000773
    %v8367 = vmul.f32 %v8287, 0.036000773
    %v8368 = vmul.f32 %v8288, 0.036000773
    %v8369 = vmul.f32 %v8289, 0.036000773
    %8450 = vrot.lane.b32.xlu0 %v8290, 3
    %v8451 = vpop.permute.xlu0 %8450
    %8452 = vrot.lane.b32.xlu0 %v8291, 3
    %v8453 = vpop.permute.xlu0 %8452
    %8454 = vrot.lane.b32.xlu0 %v8292, 3
    %v8455 = vpop.permute.xlu0 %8454
    %8456 = vrot.lane.b32.xlu0 %v8293, 3
    %v8457 = vpop.permute.xlu0 %8456
    %8458 = vrot.lane.b32.xlu0 %v8294, 3
    %v8459 = vpop.permute.xlu0 %8458
    %8460 = vrot.lane.b32.xlu0 %v8295, 3
    %v8461 = vpop.permute.xlu0 %8460
    %8462 = vrot.lane.b32.xlu0 %v8296, 3
    %v8463 = vpop.permute.xlu0 %8462
    %8464 = vrot.lane.b32.xlu0 %v8297, 3
    %v8465 = vpop.permute.xlu0 %8464
    %8466 = vrot.lane.b32.xlu0 %v8298, 3
    %v8467 = vpop.permute.xlu0 %8466
    %8468 = vrot.lane.b32.xlu0 %v8299, 3
    %v8469 = vpop.permute.xlu0 %8468
    %8470 = vrot.lane.b32.xlu0 %v8300, 3
    %v8471 = vpop.permute.xlu0 %8470
    %8472 = vrot.lane.b32.xlu0 %v8301, 3
    %v8473 = vpop.permute.xlu0 %8472
    %8474 = vrot.lane.b32.xlu0 %v8302, 3
    %v8475 = vpop.permute.xlu0 %8474
    %8476 = vrot.lane.b32.xlu0 %v8303, 3
    %v8477 = vpop.permute.xlu0 %8476
    %8478 = vrot.lane.b32.xlu0 %v8304, 3
    %v8479 = vpop.permute.xlu0 %8478
    %8480 = vrot.lane.b32.xlu0 %v8305, 3
    %v8481 = vpop.permute.xlu0 %8480
    %8482 = vrot.lane.b32.xlu0 %v8306, 3
    %v8483 = vpop.permute.xlu0 %8482
    %8484 = vrot.lane.b32.xlu0 %v8307, 3
    %v8485 = vpop.permute.xlu0 %8484
    %8486 = vrot.lane.b32.xlu0 %v8308, 3
    %v8487 = vpop.permute.xlu0 %8486
    %8488 = vrot.lane.b32.xlu0 %v8309, 3
    %v8489 = vpop.permute.xlu0 %8488
    %8490 = vrot.lane.b32.xlu0 %v8310, 3
    %v8491 = vpop.permute.xlu0 %8490
    %8492 = vrot.lane.b32.xlu0 %v8311, 3
    %v8493 = vpop.permute.xlu0 %8492
    %8494 = vrot.lane.b32.xlu0 %v8312, 3
    %v8495 = vpop.permute.xlu0 %8494
    %8496 = vrot.lane.b32.xlu0 %v8313, 3
    %v8497 = vpop.permute.xlu0 %8496
    %8498 = vrot.lane.b32.xlu0 %v8314, 3
    %v8499 = vpop.permute.xlu0 %8498
    %8500 = vrot.lane.b32.xlu0 %v8315, 3
    %v8501 = vpop.permute.xlu0 %8500
    %8502 = vrot.lane.b32.xlu0 %v8316, 3
    %v8503 = vpop.permute.xlu0 %8502
    %8504 = vrot.lane.b32.xlu0 %v8317, 3
    %v8505 = vpop.permute.xlu0 %8504
    %8506 = vrot.lane.b32.xlu0 %v8318, 3
    %v8507 = vpop.permute.xlu0 %8506
    %8508 = vrot.lane.b32.xlu0 %v8319, 3
    %v8509 = vpop.permute.xlu0 %8508
    %8510 = vrot.lane.b32.xlu0 %v8320, 3
    %v8511 = vpop.permute.xlu0 %8510
    %8512 = vrot.lane.b32.xlu0 %v8321, 3
    %v8513 = vpop.permute.xlu0 %8512
    %8514 = vrot.lane.b32.xlu0 %v8322, 3
    %v8515 = vpop.permute.xlu0 %8514
    %8516 = vrot.lane.b32.xlu0 %v8323, 3
    %v8517 = vpop.permute.xlu0 %8516
    %8518 = vrot.lane.b32.xlu0 %v8324, 3
    %v8519 = vpop.permute.xlu0 %8518
    %8520 = vrot.lane.b32.xlu0 %v8325, 3
    %v8521 = vpop.permute.xlu0 %8520
    %8522 = vrot.lane.b32.xlu0 %v8326, 3
    %v8523 = vpop.permute.xlu0 %8522
    %8524 = vrot.lane.b32.xlu0 %v8327, 3
    %v8525 = vpop.permute.xlu0 %8524
    %8526 = vrot.lane.b32.xlu0 %v8328, 3
    %v8527 = vpop.permute.xlu0 %8526
    %8528 = vrot.lane.b32.xlu0 %v8329, 3
    %v8529 = vpop.permute.xlu0 %8528
    %8530 = vrot.lane.b32.xlu0 %v8330, 3
    %v8531 = vpop.permute.xlu0 %8530
    %8532 = vrot.lane.b32.xlu0 %v8331, 3
    %v8533 = vpop.permute.xlu0 %8532
    %8534 = vrot.lane.b32.xlu0 %v8332, 3
    %v8535 = vpop.permute.xlu0 %8534
    %8536 = vrot.lane.b32.xlu0 %v8333, 3
    %v8537 = vpop.permute.xlu0 %8536
    %8538 = vrot.lane.b32.xlu0 %v8334, 3
    %v8539 = vpop.permute.xlu0 %8538
    %8540 = vrot.lane.b32.xlu0 %v8335, 3
    %v8541 = vpop.permute.xlu0 %8540
    %8542 = vrot.lane.b32.xlu0 %v8336, 3
    %v8543 = vpop.permute.xlu0 %8542
    %8544 = vrot.lane.b32.xlu0 %v8337, 3
    %v8545 = vpop.permute.xlu0 %8544
    %8546 = vrot.lane.b32.xlu0 %v8338, 3
    %v8547 = vpop.permute.xlu0 %8546
    %8548 = vrot.lane.b32.xlu0 %v8339, 3
    %v8549 = vpop.permute.xlu0 %8548
    %8550 = vrot.lane.b32.xlu0 %v8340, 3
    %v8551 = vpop.permute.xlu0 %8550
    %8552 = vrot.lane.b32.xlu0 %v8341, 3
    %v8553 = vpop.permute.xlu0 %8552
    %8554 = vrot.lane.b32.xlu0 %v8342, 3
    %v8555 = vpop.permute.xlu0 %8554
    %8556 = vrot.lane.b32.xlu0 %v8343, 3
    %v8557 = vpop.permute.xlu0 %8556
    %8558 = vrot.lane.b32.xlu0 %v8344, 3
    %v8559 = vpop.permute.xlu0 %8558
    %8560 = vrot.lane.b32.xlu0 %v8345, 3
    %v8561 = vpop.permute.xlu0 %8560
    %8562 = vrot.lane.b32.xlu0 %v8346, 3
    %v8563 = vpop.permute.xlu0 %8562
    %8564 = vrot.lane.b32.xlu0 %v8347, 3
    %v8565 = vpop.permute.xlu0 %8564
    %8566 = vrot.lane.b32.xlu0 %v8348, 3
    %v8567 = vpop.permute.xlu0 %8566
    %8568 = vrot.lane.b32.xlu0 %v8349, 3
    %v8569 = vpop.permute.xlu0 %8568
    %8570 = vrot.lane.b32.xlu0 %v8350, 3
    %v8571 = vpop.permute.xlu0 %8570
    %8572 = vrot.lane.b32.xlu0 %v8351, 3
    %v8573 = vpop.permute.xlu0 %8572
    %8574 = vrot.lane.b32.xlu0 %v8352, 3
    %v8575 = vpop.permute.xlu0 %8574
    %8576 = vrot.lane.b32.xlu0 %v8353, 3
    %v8577 = vpop.permute.xlu0 %8576
    %8578 = vrot.lane.b32.xlu0 %v8354, 3
    %v8579 = vpop.permute.xlu0 %8578
    %8580 = vrot.lane.b32.xlu0 %v8355, 3
    %v8581 = vpop.permute.xlu0 %8580
    %8582 = vrot.lane.b32.xlu0 %v8356, 3
    %v8583 = vpop.permute.xlu0 %8582
    %8584 = vrot.lane.b32.xlu0 %v8357, 3
    %v8585 = vpop.permute.xlu0 %8584
    %8586 = vrot.lane.b32.xlu0 %v8358, 3
    %v8587 = vpop.permute.xlu0 %8586
    %8588 = vrot.lane.b32.xlu0 %v8359, 3
    %v8589 = vpop.permute.xlu0 %8588
    %8590 = vrot.lane.b32.xlu0 %v8360, 3
    %v8591 = vpop.permute.xlu0 %8590
    %8592 = vrot.lane.b32.xlu0 %v8361, 3
    %v8593 = vpop.permute.xlu0 %8592
    %8594 = vrot.lane.b32.xlu0 %v8362, 3
    %v8595 = vpop.permute.xlu0 %8594
    %8596 = vrot.lane.b32.xlu0 %v8363, 3
    %v8597 = vpop.permute.xlu0 %8596
    %8598 = vrot.lane.b32.xlu0 %v8364, 3
    %v8599 = vpop.permute.xlu0 %8598
    %8600 = vrot.lane.b32.xlu0 %v8365, 3
    %v8601 = vpop.permute.xlu0 %8600
    %8602 = vrot.lane.b32.xlu0 %v8366, 3
    %v8603 = vpop.permute.xlu0 %8602
    %8604 = vrot.lane.b32.xlu0 %v8367, 3
    %v8605 = vpop.permute.xlu0 %8604
    %8606 = vrot.lane.b32.xlu0 %v8368, 3
    %v8607 = vpop.permute.xlu0 %8606
    %8608 = vrot.lane.b32.xlu0 %v8369, 3
    %v8609 = vpop.permute.xlu0 %8608
    %v8690 = vadd.f32 %v7890, %v8451
    %v8691 = vadd.f32 %v7891, %v8453
    %v8692 = vadd.f32 %v7892, %v8455
    %v8693 = vadd.f32 %v7893, %v8457
    %v8694 = vadd.f32 %v7894, %v8459
    %v8695 = vadd.f32 %v7895, %v8461
    %v8696 = vadd.f32 %v7896, %v8463
    %v8697 = vadd.f32 %v7897, %v8465
    %v8698 = vadd.f32 %v7898, %v8467
    %v8699 = vadd.f32 %v7899, %v8469
    %v8700 = vadd.f32 %v7900, %v8471
    %v8701 = vadd.f32 %v7901, %v8473
    %v8702 = vadd.f32 %v7902, %v8475
    %v8703 = vadd.f32 %v7903, %v8477
    %v8704 = vadd.f32 %v7904, %v8479
    %v8705 = vadd.f32 %v7905, %v8481
    %v8706 = vadd.f32 %v7906, %v8483
    %v8707 = vadd.f32 %v7907, %v8485
    %v8708 = vadd.f32 %v7908, %v8487
    %v8709 = vadd.f32 %v7909, %v8489
    %v8710 = vadd.f32 %v7910, %v8491
    %v8711 = vadd.f32 %v7911, %v8493
    %v8712 = vadd.f32 %v7912, %v8495
    %v8713 = vadd.f32 %v7913, %v8497
    %v8714 = vadd.f32 %v7914, %v8499
    %v8715 = vadd.f32 %v7915, %v8501
    %v8716 = vadd.f32 %v7916, %v8503
    %v8717 = vadd.f32 %v7917, %v8505
    %v8718 = vadd.f32 %v7918, %v8507
    %v8719 = vadd.f32 %v7919, %v8509
    %v8720 = vadd.f32 %v7920, %v8511
    %v8721 = vadd.f32 %v7921, %v8513
    %v8722 = vadd.f32 %v7922, %v8515
    %v8723 = vadd.f32 %v7923, %v8517
    %v8724 = vadd.f32 %v7924, %v8519
    %v8725 = vadd.f32 %v7925, %v8521
    %v8726 = vadd.f32 %v7926, %v8523
    %v8727 = vadd.f32 %v7927, %v8525
    %v8728 = vadd.f32 %v7928, %v8527
    %v8729 = vadd.f32 %v7929, %v8529
    %v8730 = vadd.f32 %v7930, %v8531
    %v8731 = vadd.f32 %v7931, %v8533
    %v8732 = vadd.f32 %v7932, %v8535
    %v8733 = vadd.f32 %v7933, %v8537
    %v8734 = vadd.f32 %v7934, %v8539
    %v8735 = vadd.f32 %v7935, %v8541
    %v8736 = vadd.f32 %v7936, %v8543
    %v8737 = vadd.f32 %v7937, %v8545
    %v8738 = vadd.f32 %v7938, %v8547
    %v8739 = vadd.f32 %v7939, %v8549
    %v8740 = vadd.f32 %v7940, %v8551
    %v8741 = vadd.f32 %v7941, %v8553
    %v8742 = vadd.f32 %v7942, %v8555
    %v8743 = vadd.f32 %v7943, %v8557
    %v8744 = vadd.f32 %v7944, %v8559
    %v8745 = vadd.f32 %v7945, %v8561
    %v8746 = vadd.f32 %v7946, %v8563
    %v8747 = vadd.f32 %v7947, %v8565
    %v8748 = vadd.f32 %v7948, %v8567
    %v8749 = vadd.f32 %v7949, %v8569
    %v8750 = vadd.f32 %v7950, %v8571
    %v8751 = vadd.f32 %v7951, %v8573
    %v8752 = vadd.f32 %v7952, %v8575
    %v8753 = vadd.f32 %v7953, %v8577
    %v8754 = vadd.f32 %v7954, %v8579
    %v8755 = vadd.f32 %v7955, %v8581
    %v8756 = vadd.f32 %v7956, %v8583
    %v8757 = vadd.f32 %v7957, %v8585
    %v8758 = vadd.f32 %v7958, %v8587
    %v8759 = vadd.f32 %v7959, %v8589
    %v8760 = vadd.f32 %v7960, %v8591
    %v8761 = vadd.f32 %v7961, %v8593
    %v8762 = vadd.f32 %v7962, %v8595
    %v8763 = vadd.f32 %v7963, %v8597
    %v8764 = vadd.f32 %v7964, %v8599
    %v8765 = vadd.f32 %v7965, %v8601
    %v8766 = vadd.f32 %v7966, %v8603
    %v8767 = vadd.f32 %v7967, %v8605
    %v8768 = vadd.f32 %v7968, %v8607
    %v8769 = vadd.f32 %v7969, %v8609
    %8770 = vrot.lane.b32.xlu0 %v6130, 124
    %v8771 = vpop.permute.xlu0 %8770
    %8772 = vrot.lane.b32.xlu0 %v6131, 124
    %v8773 = vpop.permute.xlu0 %8772
    %8774 = vrot.lane.b32.xlu0 %v6132, 124
    %v8775 = vpop.permute.xlu0 %8774
    %8776 = vrot.lane.b32.xlu0 %v6133, 124
    %v8777 = vpop.permute.xlu0 %8776
    %8778 = vrot.lane.b32.xlu0 %v6134, 124
    %v8779 = vpop.permute.xlu0 %8778
    %8780 = vrot.lane.b32.xlu0 %v6135, 124
    %v8781 = vpop.permute.xlu0 %8780
    %8782 = vrot.lane.b32.xlu0 %v6136, 124
    %v8783 = vpop.permute.xlu0 %8782
    %8784 = vrot.lane.b32.xlu0 %v6137, 124
    %v8785 = vpop.permute.xlu0 %8784
    %8786 = vrot.lane.b32.xlu0 %v6138, 124
    %v8787 = vpop.permute.xlu0 %8786
    %8788 = vrot.lane.b32.xlu0 %v6139, 124
    %v8789 = vpop.permute.xlu0 %8788
    %8790 = vrot.lane.b32.xlu0 %v6140, 124
    %v8791 = vpop.permute.xlu0 %8790
    %8792 = vrot.lane.b32.xlu0 %v6141, 124
    %v8793 = vpop.permute.xlu0 %8792
    %8794 = vrot.lane.b32.xlu0 %v6142, 124
    %v8795 = vpop.permute.xlu0 %8794
    %8796 = vrot.lane.b32.xlu0 %v6143, 124
    %v8797 = vpop.permute.xlu0 %8796
    %8798 = vrot.lane.b32.xlu0 %v6144, 124
    %v8799 = vpop.permute.xlu0 %8798
    %8800 = vrot.lane.b32.xlu0 %v6145, 124
    %v8801 = vpop.permute.xlu0 %8800
    %8802 = vrot.lane.b32.xlu0 %v6146, 124
    %v8803 = vpop.permute.xlu0 %8802
    %8804 = vrot.lane.b32.xlu0 %v6147, 124
    %v8805 = vpop.permute.xlu0 %8804
    %8806 = vrot.lane.b32.xlu0 %v6148, 124
    %v8807 = vpop.permute.xlu0 %8806
    %8808 = vrot.lane.b32.xlu0 %v6149, 124
    %v8809 = vpop.permute.xlu0 %8808
    %8810 = vrot.lane.b32.xlu0 %v6150, 124
    %v8811 = vpop.permute.xlu0 %8810
    %8812 = vrot.lane.b32.xlu0 %v6151, 124
    %v8813 = vpop.permute.xlu0 %8812
    %8814 = vrot.lane.b32.xlu0 %v6152, 124
    %v8815 = vpop.permute.xlu0 %8814
    %8816 = vrot.lane.b32.xlu0 %v6153, 124
    %v8817 = vpop.permute.xlu0 %8816
    %8818 = vrot.lane.b32.xlu0 %v6154, 124
    %v8819 = vpop.permute.xlu0 %8818
    %8820 = vrot.lane.b32.xlu0 %v6155, 124
    %v8821 = vpop.permute.xlu0 %8820
    %8822 = vrot.lane.b32.xlu0 %v6156, 124
    %v8823 = vpop.permute.xlu0 %8822
    %8824 = vrot.lane.b32.xlu0 %v6157, 124
    %v8825 = vpop.permute.xlu0 %8824
    %8826 = vrot.lane.b32.xlu0 %v6158, 124
    %v8827 = vpop.permute.xlu0 %8826
    %8828 = vrot.lane.b32.xlu0 %v6159, 124
    %v8829 = vpop.permute.xlu0 %8828
    %8830 = vrot.lane.b32.xlu0 %v6160, 124
    %v8831 = vpop.permute.xlu0 %8830
    %8832 = vrot.lane.b32.xlu0 %v6161, 124
    %v8833 = vpop.permute.xlu0 %8832
    %8834 = vrot.lane.b32.xlu0 %v6162, 124
    %v8835 = vpop.permute.xlu0 %8834
    %8836 = vrot.lane.b32.xlu0 %v6163, 124
    %v8837 = vpop.permute.xlu0 %8836
    %8838 = vrot.lane.b32.xlu0 %v6164, 124
    %v8839 = vpop.permute.xlu0 %8838
    %8840 = vrot.lane.b32.xlu0 %v6165, 124
    %v8841 = vpop.permute.xlu0 %8840
    %8842 = vrot.lane.b32.xlu0 %v6166, 124
    %v8843 = vpop.permute.xlu0 %8842
    %8844 = vrot.lane.b32.xlu0 %v6167, 124
    %v8845 = vpop.permute.xlu0 %8844
    %8846 = vrot.lane.b32.xlu0 %v6168, 124
    %v8847 = vpop.permute.xlu0 %8846
    %8848 = vrot.lane.b32.xlu0 %v6169, 124
    %v8849 = vpop.permute.xlu0 %8848
    %8850 = vrot.lane.b32.xlu0 %v6170, 124
    %v8851 = vpop.permute.xlu0 %8850
    %8852 = vrot.lane.b32.xlu0 %v6171, 124
    %v8853 = vpop.permute.xlu0 %8852
    %8854 = vrot.lane.b32.xlu0 %v6172, 124
    %v8855 = vpop.permute.xlu0 %8854
    %8856 = vrot.lane.b32.xlu0 %v6173, 124
    %v8857 = vpop.permute.xlu0 %8856
    %8858 = vrot.lane.b32.xlu0 %v6174, 124
    %v8859 = vpop.permute.xlu0 %8858
    %8860 = vrot.lane.b32.xlu0 %v6175, 124
    %v8861 = vpop.permute.xlu0 %8860
    %8862 = vrot.lane.b32.xlu0 %v6176, 124
    %v8863 = vpop.permute.xlu0 %8862
    %8864 = vrot.lane.b32.xlu0 %v6177, 124
    %v8865 = vpop.permute.xlu0 %8864
    %8866 = vrot.lane.b32.xlu0 %v6178, 124
    %v8867 = vpop.permute.xlu0 %8866
    %8868 = vrot.lane.b32.xlu0 %v6179, 124
    %v8869 = vpop.permute.xlu0 %8868
    %8870 = vrot.lane.b32.xlu0 %v6180, 124
    %v8871 = vpop.permute.xlu0 %8870
    %8872 = vrot.lane.b32.xlu0 %v6181, 124
    %v8873 = vpop.permute.xlu0 %8872
    %8874 = vrot.lane.b32.xlu0 %v6182, 124
    %v8875 = vpop.permute.xlu0 %8874
    %8876 = vrot.lane.b32.xlu0 %v6183, 124
    %v8877 = vpop.permute.xlu0 %8876
    %8878 = vrot.lane.b32.xlu0 %v6184, 124
    %v8879 = vpop.permute.xlu0 %8878
    %8880 = vrot.lane.b32.xlu0 %v6185, 124
    %v8881 = vpop.permute.xlu0 %8880
    %8882 = vrot.lane.b32.xlu0 %v6186, 124
    %v8883 = vpop.permute.xlu0 %8882
    %8884 = vrot.lane.b32.xlu0 %v6187, 124
    %v8885 = vpop.permute.xlu0 %8884
    %8886 = vrot.lane.b32.xlu0 %v6188, 124
    %v8887 = vpop.permute.xlu0 %8886
    %8888 = vrot.lane.b32.xlu0 %v6189, 124
    %v8889 = vpop.permute.xlu0 %8888
    %8890 = vrot.lane.b32.xlu0 %v6190, 124
    %v8891 = vpop.permute.xlu0 %8890
    %8892 = vrot.lane.b32.xlu0 %v6191, 124
    %v8893 = vpop.permute.xlu0 %8892
    %8894 = vrot.lane.b32.xlu0 %v6192, 124
    %v8895 = vpop.permute.xlu0 %8894
    %8896 = vrot.lane.b32.xlu0 %v6193, 124
    %v8897 = vpop.permute.xlu0 %8896
    %8898 = vrot.lane.b32.xlu0 %v6194, 124
    %v8899 = vpop.permute.xlu0 %8898
    %8900 = vrot.lane.b32.xlu0 %v6195, 124
    %v8901 = vpop.permute.xlu0 %8900
    %8902 = vrot.lane.b32.xlu0 %v6196, 124
    %v8903 = vpop.permute.xlu0 %8902
    %8904 = vrot.lane.b32.xlu0 %v6197, 124
    %v8905 = vpop.permute.xlu0 %8904
    %8906 = vrot.lane.b32.xlu0 %v6198, 124
    %v8907 = vpop.permute.xlu0 %8906
    %8908 = vrot.lane.b32.xlu0 %v6199, 124
    %v8909 = vpop.permute.xlu0 %8908
    %8910 = vrot.lane.b32.xlu0 %v6200, 124
    %v8911 = vpop.permute.xlu0 %8910
    %8912 = vrot.lane.b32.xlu0 %v6201, 124
    %v8913 = vpop.permute.xlu0 %8912
    %8914 = vrot.lane.b32.xlu0 %v6202, 124
    %v8915 = vpop.permute.xlu0 %8914
    %8916 = vrot.lane.b32.xlu0 %v6203, 124
    %v8917 = vpop.permute.xlu0 %8916
    %8918 = vrot.lane.b32.xlu0 %v6204, 124
    %v8919 = vpop.permute.xlu0 %8918
    %8920 = vrot.lane.b32.xlu0 %v6205, 124
    %v8921 = vpop.permute.xlu0 %8920
    %8922 = vrot.lane.b32.xlu0 %v6206, 124
    %v8923 = vpop.permute.xlu0 %8922
    %8924 = vrot.lane.b32.xlu0 %v6207, 124
    %v8925 = vpop.permute.xlu0 %8924
    %8926 = vrot.lane.b32.xlu0 %v6208, 124
    %v8927 = vpop.permute.xlu0 %8926
    %8928 = vrot.lane.b32.xlu0 %v6209, 124
    %v8929 = vpop.permute.xlu0 %8928
    %v9010 = vadd.f32 %v6130, %v8771
    %v9011 = vadd.f32 %v6131, %v8773
    %v9012 = vadd.f32 %v6132, %v8775
    %v9013 = vadd.f32 %v6133, %v8777
    %v9014 = vadd.f32 %v6134, %v8779
    %v9015 = vadd.f32 %v6135, %v8781
    %v9016 = vadd.f32 %v6136, %v8783
    %v9017 = vadd.f32 %v6137, %v8785
    %v9018 = vadd.f32 %v6138, %v8787
    %v9019 = vadd.f32 %v6139, %v8789
    %v9020 = vadd.f32 %v6140, %v8791
    %v9021 = vadd.f32 %v6141, %v8793
    %v9022 = vadd.f32 %v6142, %v8795
    %v9023 = vadd.f32 %v6143, %v8797
    %v9024 = vadd.f32 %v6144, %v8799
    %v9025 = vadd.f32 %v6145, %v8801
    %v9026 = vadd.f32 %v6146, %v8803
    %v9027 = vadd.f32 %v6147, %v8805
    %v9028 = vadd.f32 %v6148, %v8807
    %v9029 = vadd.f32 %v6149, %v8809
    %v9030 = vadd.f32 %v6150, %v8811
    %v9031 = vadd.f32 %v6151, %v8813
    %v9032 = vadd.f32 %v6152, %v8815
    %v9033 = vadd.f32 %v6153, %v8817
    %v9034 = vadd.f32 %v6154, %v8819
    %v9035 = vadd.f32 %v6155, %v8821
    %v9036 = vadd.f32 %v6156, %v8823
    %v9037 = vadd.f32 %v6157, %v8825
    %v9038 = vadd.f32 %v6158, %v8827
    %v9039 = vadd.f32 %v6159, %v8829
    %v9040 = vadd.f32 %v6160, %v8831
    %v9041 = vadd.f32 %v6161, %v8833
    %v9042 = vadd.f32 %v6162, %v8835
    %v9043 = vadd.f32 %v6163, %v8837
    %v9044 = vadd.f32 %v6164, %v8839
    %v9045 = vadd.f32 %v6165, %v8841
    %v9046 = vadd.f32 %v6166, %v8843
    %v9047 = vadd.f32 %v6167, %v8845
    %v9048 = vadd.f32 %v6168, %v8847
    %v9049 = vadd.f32 %v6169, %v8849
    %v9050 = vadd.f32 %v6170, %v8851
    %v9051 = vadd.f32 %v6171, %v8853
    %v9052 = vadd.f32 %v6172, %v8855
    %v9053 = vadd.f32 %v6173, %v8857
    %v9054 = vadd.f32 %v6174, %v8859
    %v9055 = vadd.f32 %v6175, %v8861
    %v9056 = vadd.f32 %v6176, %v8863
    %v9057 = vadd.f32 %v6177, %v8865
    %v9058 = vadd.f32 %v6178, %v8867
    %v9059 = vadd.f32 %v6179, %v8869
    %v9060 = vadd.f32 %v6180, %v8871
    %v9061 = vadd.f32 %v6181, %v8873
    %v9062 = vadd.f32 %v6182, %v8875
    %v9063 = vadd.f32 %v6183, %v8877
    %v9064 = vadd.f32 %v6184, %v8879
    %v9065 = vadd.f32 %v6185, %v8881
    %v9066 = vadd.f32 %v6186, %v8883
    %v9067 = vadd.f32 %v6187, %v8885
    %v9068 = vadd.f32 %v6188, %v8887
    %v9069 = vadd.f32 %v6189, %v8889
    %v9070 = vadd.f32 %v6190, %v8891
    %v9071 = vadd.f32 %v6191, %v8893
    %v9072 = vadd.f32 %v6192, %v8895
    %v9073 = vadd.f32 %v6193, %v8897
    %v9074 = vadd.f32 %v6194, %v8899
    %v9075 = vadd.f32 %v6195, %v8901
    %v9076 = vadd.f32 %v6196, %v8903
    %v9077 = vadd.f32 %v6197, %v8905
    %v9078 = vadd.f32 %v6198, %v8907
    %v9079 = vadd.f32 %v6199, %v8909
    %v9080 = vadd.f32 %v6200, %v8911
    %v9081 = vadd.f32 %v6201, %v8913
    %v9082 = vadd.f32 %v6202, %v8915
    %v9083 = vadd.f32 %v6203, %v8917
    %v9084 = vadd.f32 %v6204, %v8919
    %v9085 = vadd.f32 %v6205, %v8921
    %v9086 = vadd.f32 %v6206, %v8923
    %v9087 = vadd.f32 %v6207, %v8925
    %v9088 = vadd.f32 %v6208, %v8927
    %v9089 = vadd.f32 %v6209, %v8929
    %v9090 = vmul.f32 %v9010, 0.1093607
    %v9091 = vmul.f32 %v9011, 0.1093607
    %v9092 = vmul.f32 %v9012, 0.1093607
    %v9093 = vmul.f32 %v9013, 0.1093607
    %v9094 = vmul.f32 %v9014, 0.1093607
    %v9095 = vmul.f32 %v9015, 0.1093607
    %v9096 = vmul.f32 %v9016, 0.1093607
    %v9097 = vmul.f32 %v9017, 0.1093607
    %v9098 = vmul.f32 %v9018, 0.1093607
    %v9099 = vmul.f32 %v9019, 0.1093607
    %v9100 = vmul.f32 %v9020, 0.1093607
    %v9101 = vmul.f32 %v9021, 0.1093607
    %v9102 = vmul.f32 %v9022, 0.1093607
    %v9103 = vmul.f32 %v9023, 0.1093607
    %v9104 = vmul.f32 %v9024, 0.1093607
    %v9105 = vmul.f32 %v9025, 0.1093607
    %v9106 = vmul.f32 %v9026, 0.1093607
    %v9107 = vmul.f32 %v9027, 0.1093607
    %v9108 = vmul.f32 %v9028, 0.1093607
    %v9109 = vmul.f32 %v9029, 0.1093607
    %v9110 = vmul.f32 %v9030, 0.1093607
    %v9111 = vmul.f32 %v9031, 0.1093607
    %v9112 = vmul.f32 %v9032, 0.1093607
    %v9113 = vmul.f32 %v9033, 0.1093607
    %v9114 = vmul.f32 %v9034, 0.1093607
    %v9115 = vmul.f32 %v9035, 0.1093607
    %v9116 = vmul.f32 %v9036, 0.1093607
    %v9117 = vmul.f32 %v9037, 0.1093607
    %v9118 = vmul.f32 %v9038, 0.1093607
    %v9119 = vmul.f32 %v9039, 0.1093607
    %v9120 = vmul.f32 %v9040, 0.1093607
    %v9121 = vmul.f32 %v9041, 0.1093607
    %v9122 = vmul.f32 %v9042, 0.1093607
    %v9123 = vmul.f32 %v9043, 0.1093607
    %v9124 = vmul.f32 %v9044, 0.1093607
    %v9125 = vmul.f32 %v9045, 0.1093607
    %v9126 = vmul.f32 %v9046, 0.1093607
    %v9127 = vmul.f32 %v9047, 0.1093607
    %v9128 = vmul.f32 %v9048, 0.1093607
    %v9129 = vmul.f32 %v9049, 0.1093607
    %v9130 = vmul.f32 %v9050, 0.1093607
    %v9131 = vmul.f32 %v9051, 0.1093607
    %v9132 = vmul.f32 %v9052, 0.1093607
    %v9133 = vmul.f32 %v9053, 0.1093607
    %v9134 = vmul.f32 %v9054, 0.1093607
    %v9135 = vmul.f32 %v9055, 0.1093607
    %v9136 = vmul.f32 %v9056, 0.1093607
    %v9137 = vmul.f32 %v9057, 0.1093607
    %v9138 = vmul.f32 %v9058, 0.1093607
    %v9139 = vmul.f32 %v9059, 0.1093607
    %v9140 = vmul.f32 %v9060, 0.1093607
    %v9141 = vmul.f32 %v9061, 0.1093607
    %v9142 = vmul.f32 %v9062, 0.1093607
    %v9143 = vmul.f32 %v9063, 0.1093607
    %v9144 = vmul.f32 %v9064, 0.1093607
    %v9145 = vmul.f32 %v9065, 0.1093607
    %v9146 = vmul.f32 %v9066, 0.1093607
    %v9147 = vmul.f32 %v9067, 0.1093607
    %v9148 = vmul.f32 %v9068, 0.1093607
    %v9149 = vmul.f32 %v9069, 0.1093607
    %v9150 = vmul.f32 %v9070, 0.1093607
    %v9151 = vmul.f32 %v9071, 0.1093607
    %v9152 = vmul.f32 %v9072, 0.1093607
    %v9153 = vmul.f32 %v9073, 0.1093607
    %v9154 = vmul.f32 %v9074, 0.1093607
    %v9155 = vmul.f32 %v9075, 0.1093607
    %v9156 = vmul.f32 %v9076, 0.1093607
    %v9157 = vmul.f32 %v9077, 0.1093607
    %v9158 = vmul.f32 %v9078, 0.1093607
    %v9159 = vmul.f32 %v9079, 0.1093607
    %v9160 = vmul.f32 %v9080, 0.1093607
    %v9161 = vmul.f32 %v9081, 0.1093607
    %v9162 = vmul.f32 %v9082, 0.1093607
    %v9163 = vmul.f32 %v9083, 0.1093607
    %v9164 = vmul.f32 %v9084, 0.1093607
    %v9165 = vmul.f32 %v9085, 0.1093607
    %v9166 = vmul.f32 %v9086, 0.1093607
    %v9167 = vmul.f32 %v9087, 0.1093607
    %v9168 = vmul.f32 %v9088, 0.1093607
    %v9169 = vmul.f32 %v9089, 0.1093607
    %9250 = vrot.lane.b32.xlu0 %v9090, 2
    %v9251 = vpop.permute.xlu0 %9250
    %9252 = vrot.lane.b32.xlu0 %v9091, 2
    %v9253 = vpop.permute.xlu0 %9252
    %9254 = vrot.lane.b32.xlu0 %v9092, 2
    %v9255 = vpop.permute.xlu0 %9254
    %9256 = vrot.lane.b32.xlu0 %v9093, 2
    %v9257 = vpop.permute.xlu0 %9256
    %9258 = vrot.lane.b32.xlu0 %v9094, 2
    %v9259 = vpop.permute.xlu0 %9258
    %9260 = vrot.lane.b32.xlu0 %v9095, 2
    %v9261 = vpop.permute.xlu0 %9260
    %9262 = vrot.lane.b32.xlu0 %v9096, 2
    %v9263 = vpop.permute.xlu0 %9262
    %9264 = vrot.lane.b32.xlu0 %v9097, 2
    %v9265 = vpop.permute.xlu0 %9264
    %9266 = vrot.lane.b32.xlu0 %v9098, 2
    %v9267 = vpop.permute.xlu0 %9266
    %9268 = vrot.lane.b32.xlu0 %v9099, 2
    %v9269 = vpop.permute.xlu0 %9268
    %9270 = vrot.lane.b32.xlu0 %v9100, 2
    %v9271 = vpop.permute.xlu0 %9270
    %9272 = vrot.lane.b32.xlu0 %v9101, 2
    %v9273 = vpop.permute.xlu0 %9272
    %9274 = vrot.lane.b32.xlu0 %v9102, 2
    %v9275 = vpop.permute.xlu0 %9274
    %9276 = vrot.lane.b32.xlu0 %v9103, 2
    %v9277 = vpop.permute.xlu0 %9276
    %9278 = vrot.lane.b32.xlu0 %v9104, 2
    %v9279 = vpop.permute.xlu0 %9278
    %9280 = vrot.lane.b32.xlu0 %v9105, 2
    %v9281 = vpop.permute.xlu0 %9280
    %9282 = vrot.lane.b32.xlu0 %v9106, 2
    %v9283 = vpop.permute.xlu0 %9282
    %9284 = vrot.lane.b32.xlu0 %v9107, 2
    %v9285 = vpop.permute.xlu0 %9284
    %9286 = vrot.lane.b32.xlu0 %v9108, 2
    %v9287 = vpop.permute.xlu0 %9286
    %9288 = vrot.lane.b32.xlu0 %v9109, 2
    %v9289 = vpop.permute.xlu0 %9288
    %9290 = vrot.lane.b32.xlu0 %v9110, 2
    %v9291 = vpop.permute.xlu0 %9290
    %9292 = vrot.lane.b32.xlu0 %v9111, 2
    %v9293 = vpop.permute.xlu0 %9292
    %9294 = vrot.lane.b32.xlu0 %v9112, 2
    %v9295 = vpop.permute.xlu0 %9294
    %9296 = vrot.lane.b32.xlu0 %v9113, 2
    %v9297 = vpop.permute.xlu0 %9296
    %9298 = vrot.lane.b32.xlu0 %v9114, 2
    %v9299 = vpop.permute.xlu0 %9298
    %9300 = vrot.lane.b32.xlu0 %v9115, 2
    %v9301 = vpop.permute.xlu0 %9300
    %9302 = vrot.lane.b32.xlu0 %v9116, 2
    %v9303 = vpop.permute.xlu0 %9302
    %9304 = vrot.lane.b32.xlu0 %v9117, 2
    %v9305 = vpop.permute.xlu0 %9304
    %9306 = vrot.lane.b32.xlu0 %v9118, 2
    %v9307 = vpop.permute.xlu0 %9306
    %9308 = vrot.lane.b32.xlu0 %v9119, 2
    %v9309 = vpop.permute.xlu0 %9308
    %9310 = vrot.lane.b32.xlu0 %v9120, 2
    %v9311 = vpop.permute.xlu0 %9310
    %9312 = vrot.lane.b32.xlu0 %v9121, 2
    %v9313 = vpop.permute.xlu0 %9312
    %9314 = vrot.lane.b32.xlu0 %v9122, 2
    %v9315 = vpop.permute.xlu0 %9314
    %9316 = vrot.lane.b32.xlu0 %v9123, 2
    %v9317 = vpop.permute.xlu0 %9316
    %9318 = vrot.lane.b32.xlu0 %v9124, 2
    %v9319 = vpop.permute.xlu0 %9318
    %9320 = vrot.lane.b32.xlu0 %v9125, 2
    %v9321 = vpop.permute.xlu0 %9320
    %9322 = vrot.lane.b32.xlu0 %v9126, 2
    %v9323 = vpop.permute.xlu0 %9322
    %9324 = vrot.lane.b32.xlu0 %v9127, 2
    %v9325 = vpop.permute.xlu0 %9324
    %9326 = vrot.lane.b32.xlu0 %v9128, 2
    %v9327 = vpop.permute.xlu0 %9326
    %9328 = vrot.lane.b32.xlu0 %v9129, 2
    %v9329 = vpop.permute.xlu0 %9328
    %9330 = vrot.lane.b32.xlu0 %v9130, 2
    %v9331 = vpop.permute.xlu0 %9330
    %9332 = vrot.lane.b32.xlu0 %v9131, 2
    %v9333 = vpop.permute.xlu0 %9332
    %9334 = vrot.lane.b32.xlu0 %v9132, 2
    %v9335 = vpop.permute.xlu0 %9334
    %9336 = vrot.lane.b32.xlu0 %v9133, 2
    %v9337 = vpop.permute.xlu0 %9336
    %9338 = vrot.lane.b32.xlu0 %v9134, 2
    %v9339 = vpop.permute.xlu0 %9338
    %9340 = vrot.lane.b32.xlu0 %v9135, 2
    %v9341 = vpop.permute.xlu0 %9340
    %9342 = vrot.lane.b32.xlu0 %v9136, 2
    %v9343 = vpop.permute.xlu0 %9342
    %9344 = vrot.lane.b32.xlu0 %v9137, 2
    %v9345 = vpop.permute.xlu0 %9344
    %9346 = vrot.lane.b32.xlu0 %v9138, 2
    %v9347 = vpop.permute.xlu0 %9346
    %9348 = vrot.lane.b32.xlu0 %v9139, 2
    %v9349 = vpop.permute.xlu0 %9348
    %9350 = vrot.lane.b32.xlu0 %v9140, 2
    %v9351 = vpop.permute.xlu0 %9350
    %9352 = vrot.lane.b32.xlu0 %v9141, 2
    %v9353 = vpop.permute.xlu0 %9352
    %9354 = vrot.lane.b32.xlu0 %v9142, 2
    %v9355 = vpop.permute.xlu0 %9354
    %9356 = vrot.lane.b32.xlu0 %v9143, 2
    %v9357 = vpop.permute.xlu0 %9356
    %9358 = vrot.lane.b32.xlu0 %v9144, 2
    %v9359 = vpop.permute.xlu0 %9358
    %9360 = vrot.lane.b32.xlu0 %v9145, 2
    %v9361 = vpop.permute.xlu0 %9360
    %9362 = vrot.lane.b32.xlu0 %v9146, 2
    %v9363 = vpop.permute.xlu0 %9362
    %9364 = vrot.lane.b32.xlu0 %v9147, 2
    %v9365 = vpop.permute.xlu0 %9364
    %9366 = vrot.lane.b32.xlu0 %v9148, 2
    %v9367 = vpop.permute.xlu0 %9366
    %9368 = vrot.lane.b32.xlu0 %v9149, 2
    %v9369 = vpop.permute.xlu0 %9368
    %9370 = vrot.lane.b32.xlu0 %v9150, 2
    %v9371 = vpop.permute.xlu0 %9370
    %9372 = vrot.lane.b32.xlu0 %v9151, 2
    %v9373 = vpop.permute.xlu0 %9372
    %9374 = vrot.lane.b32.xlu0 %v9152, 2
    %v9375 = vpop.permute.xlu0 %9374
    %9376 = vrot.lane.b32.xlu0 %v9153, 2
    %v9377 = vpop.permute.xlu0 %9376
    %9378 = vrot.lane.b32.xlu0 %v9154, 2
    %v9379 = vpop.permute.xlu0 %9378
    %9380 = vrot.lane.b32.xlu0 %v9155, 2
    %v9381 = vpop.permute.xlu0 %9380
    %9382 = vrot.lane.b32.xlu0 %v9156, 2
    %v9383 = vpop.permute.xlu0 %9382
    %9384 = vrot.lane.b32.xlu0 %v9157, 2
    %v9385 = vpop.permute.xlu0 %9384
    %9386 = vrot.lane.b32.xlu0 %v9158, 2
    %v9387 = vpop.permute.xlu0 %9386
    %9388 = vrot.lane.b32.xlu0 %v9159, 2
    %v9389 = vpop.permute.xlu0 %9388
    %9390 = vrot.lane.b32.xlu0 %v9160, 2
    %v9391 = vpop.permute.xlu0 %9390
    %9392 = vrot.lane.b32.xlu0 %v9161, 2
    %v9393 = vpop.permute.xlu0 %9392
    %9394 = vrot.lane.b32.xlu0 %v9162, 2
    %v9395 = vpop.permute.xlu0 %9394
    %9396 = vrot.lane.b32.xlu0 %v9163, 2
    %v9397 = vpop.permute.xlu0 %9396
    %9398 = vrot.lane.b32.xlu0 %v9164, 2
    %v9399 = vpop.permute.xlu0 %9398
    %9400 = vrot.lane.b32.xlu0 %v9165, 2
    %v9401 = vpop.permute.xlu0 %9400
    %9402 = vrot.lane.b32.xlu0 %v9166, 2
    %v9403 = vpop.permute.xlu0 %9402
    %9404 = vrot.lane.b32.xlu0 %v9167, 2
    %v9405 = vpop.permute.xlu0 %9404
    %9406 = vrot.lane.b32.xlu0 %v9168, 2
    %v9407 = vpop.permute.xlu0 %9406
    %9408 = vrot.lane.b32.xlu0 %v9169, 2
    %v9409 = vpop.permute.xlu0 %9408
    %v9490 = vadd.f32 %v8690, %v9251
    %v9491 = vadd.f32 %v8691, %v9253
    %v9492 = vadd.f32 %v8692, %v9255
    %v9493 = vadd.f32 %v8693, %v9257
    %v9494 = vadd.f32 %v8694, %v9259
    %v9495 = vadd.f32 %v8695, %v9261
    %v9496 = vadd.f32 %v8696, %v9263
    %v9497 = vadd.f32 %v8697, %v9265
    %v9498 = vadd.f32 %v8698, %v9267
    %v9499 = vadd.f32 %v8699, %v9269
    %v9500 = vadd.f32 %v8700, %v9271
    %v9501 = vadd.f32 %v8701, %v9273
    %v9502 = vadd.f32 %v8702, %v9275
    %v9503 = vadd.f32 %v8703, %v9277
    %v9504 = vadd.f32 %v8704, %v9279
    %v9505 = vadd.f32 %v8705, %v9281
    %v9506 = vadd.f32 %v8706, %v9283
    %v9507 = vadd.f32 %v8707, %v9285
    %v9508 = vadd.f32 %v8708, %v9287
    %v9509 = vadd.f32 %v8709, %v9289
    %v9510 = vadd.f32 %v8710, %v9291
    %v9511 = vadd.f32 %v8711, %v9293
    %v9512 = vadd.f32 %v8712, %v9295
    %v9513 = vadd.f32 %v8713, %v9297
    %v9514 = vadd.f32 %v8714, %v9299
    %v9515 = vadd.f32 %v8715, %v9301
    %v9516 = vadd.f32 %v8716, %v9303
    %v9517 = vadd.f32 %v8717, %v9305
    %v9518 = vadd.f32 %v8718, %v9307
    %v9519 = vadd.f32 %v8719, %v9309
    %v9520 = vadd.f32 %v8720, %v9311
    %v9521 = vadd.f32 %v8721, %v9313
    %v9522 = vadd.f32 %v8722, %v9315
    %v9523 = vadd.f32 %v8723, %v9317
    %v9524 = vadd.f32 %v8724, %v9319
    %v9525 = vadd.f32 %v8725, %v9321
    %v9526 = vadd.f32 %v8726, %v9323
    %v9527 = vadd.f32 %v8727, %v9325
    %v9528 = vadd.f32 %v8728, %v9327
    %v9529 = vadd.f32 %v8729, %v9329
    %v9530 = vadd.f32 %v8730, %v9331
    %v9531 = vadd.f32 %v8731, %v9333
    %v9532 = vadd.f32 %v8732, %v9335
    %v9533 = vadd.f32 %v8733, %v9337
    %v9534 = vadd.f32 %v8734, %v9339
    %v9535 = vadd.f32 %v8735, %v9341
    %v9536 = vadd.f32 %v8736, %v9343
    %v9537 = vadd.f32 %v8737, %v9345
    %v9538 = vadd.f32 %v8738, %v9347
    %v9539 = vadd.f32 %v8739, %v9349
    %v9540 = vadd.f32 %v8740, %v9351
    %v9541 = vadd.f32 %v8741, %v9353
    %v9542 = vadd.f32 %v8742, %v9355
    %v9543 = vadd.f32 %v8743, %v9357
    %v9544 = vadd.f32 %v8744, %v9359
    %v9545 = vadd.f32 %v8745, %v9361
    %v9546 = vadd.f32 %v8746, %v9363
    %v9547 = vadd.f32 %v8747, %v9365
    %v9548 = vadd.f32 %v8748, %v9367
    %v9549 = vadd.f32 %v8749, %v9369
    %v9550 = vadd.f32 %v8750, %v9371
    %v9551 = vadd.f32 %v8751, %v9373
    %v9552 = vadd.f32 %v8752, %v9375
    %v9553 = vadd.f32 %v8753, %v9377
    %v9554 = vadd.f32 %v8754, %v9379
    %v9555 = vadd.f32 %v8755, %v9381
    %v9556 = vadd.f32 %v8756, %v9383
    %v9557 = vadd.f32 %v8757, %v9385
    %v9558 = vadd.f32 %v8758, %v9387
    %v9559 = vadd.f32 %v8759, %v9389
    %v9560 = vadd.f32 %v8760, %v9391
    %v9561 = vadd.f32 %v8761, %v9393
    %v9562 = vadd.f32 %v8762, %v9395
    %v9563 = vadd.f32 %v8763, %v9397
    %v9564 = vadd.f32 %v8764, %v9399
    %v9565 = vadd.f32 %v8765, %v9401
    %v9566 = vadd.f32 %v8766, %v9403
    %v9567 = vadd.f32 %v8767, %v9405
    %v9568 = vadd.f32 %v8768, %v9407
    %v9569 = vadd.f32 %v8769, %v9409
    %9570 = vrot.lane.b32.xlu0 %v6130, 126
    %v9571 = vpop.permute.xlu0 %9570
    %9572 = vrot.lane.b32.xlu0 %v6131, 126
    %v9573 = vpop.permute.xlu0 %9572
    %9574 = vrot.lane.b32.xlu0 %v6132, 126
    %v9575 = vpop.permute.xlu0 %9574
    %9576 = vrot.lane.b32.xlu0 %v6133, 126
    %v9577 = vpop.permute.xlu0 %9576
    %9578 = vrot.lane.b32.xlu0 %v6134, 126
    %v9579 = vpop.permute.xlu0 %9578
    %9580 = vrot.lane.b32.xlu0 %v6135, 126
    %v9581 = vpop.permute.xlu0 %9580
    %9582 = vrot.lane.b32.xlu0 %v6136, 126
    %v9583 = vpop.permute.xlu0 %9582
    %9584 = vrot.lane.b32.xlu0 %v6137, 126
    %v9585 = vpop.permute.xlu0 %9584
    %9586 = vrot.lane.b32.xlu0 %v6138, 126
    %v9587 = vpop.permute.xlu0 %9586
    %9588 = vrot.lane.b32.xlu0 %v6139, 126
    %v9589 = vpop.permute.xlu0 %9588
    %9590 = vrot.lane.b32.xlu0 %v6140, 126
    %v9591 = vpop.permute.xlu0 %9590
    %9592 = vrot.lane.b32.xlu0 %v6141, 126
    %v9593 = vpop.permute.xlu0 %9592
    %9594 = vrot.lane.b32.xlu0 %v6142, 126
    %v9595 = vpop.permute.xlu0 %9594
    %9596 = vrot.lane.b32.xlu0 %v6143, 126
    %v9597 = vpop.permute.xlu0 %9596
    %9598 = vrot.lane.b32.xlu0 %v6144, 126
    %v9599 = vpop.permute.xlu0 %9598
    %9600 = vrot.lane.b32.xlu0 %v6145, 126
    %v9601 = vpop.permute.xlu0 %9600
    %9602 = vrot.lane.b32.xlu0 %v6146, 126
    %v9603 = vpop.permute.xlu0 %9602
    %9604 = vrot.lane.b32.xlu0 %v6147, 126
    %v9605 = vpop.permute.xlu0 %9604
    %9606 = vrot.lane.b32.xlu0 %v6148, 126
    %v9607 = vpop.permute.xlu0 %9606
    %9608 = vrot.lane.b32.xlu0 %v6149, 126
    %v9609 = vpop.permute.xlu0 %9608
    %9610 = vrot.lane.b32.xlu0 %v6150, 126
    %v9611 = vpop.permute.xlu0 %9610
    %9612 = vrot.lane.b32.xlu0 %v6151, 126
    %v9613 = vpop.permute.xlu0 %9612
    %9614 = vrot.lane.b32.xlu0 %v6152, 126
    %v9615 = vpop.permute.xlu0 %9614
    %9616 = vrot.lane.b32.xlu0 %v6153, 126
    %v9617 = vpop.permute.xlu0 %9616
    %9618 = vrot.lane.b32.xlu0 %v6154, 126
    %v9619 = vpop.permute.xlu0 %9618
    %9620 = vrot.lane.b32.xlu0 %v6155, 126
    %v9621 = vpop.permute.xlu0 %9620
    %9622 = vrot.lane.b32.xlu0 %v6156, 126
    %v9623 = vpop.permute.xlu0 %9622
    %9624 = vrot.lane.b32.xlu0 %v6157, 126
    %v9625 = vpop.permute.xlu0 %9624
    %9626 = vrot.lane.b32.xlu0 %v6158, 126
    %v9627 = vpop.permute.xlu0 %9626
    %9628 = vrot.lane.b32.xlu0 %v6159, 126
    %v9629 = vpop.permute.xlu0 %9628
    %9630 = vrot.lane.b32.xlu0 %v6160, 126
    %v9631 = vpop.permute.xlu0 %9630
    %9632 = vrot.lane.b32.xlu0 %v6161, 126
    %v9633 = vpop.permute.xlu0 %9632
    %9634 = vrot.lane.b32.xlu0 %v6162, 126
    %v9635 = vpop.permute.xlu0 %9634
    %9636 = vrot.lane.b32.xlu0 %v6163, 126
    %v9637 = vpop.permute.xlu0 %9636
    %9638 = vrot.lane.b32.xlu0 %v6164, 126
    %v9639 = vpop.permute.xlu0 %9638
    %9640 = vrot.lane.b32.xlu0 %v6165, 126
    %v9641 = vpop.permute.xlu0 %9640
    %9642 = vrot.lane.b32.xlu0 %v6166, 126
    %v9643 = vpop.permute.xlu0 %9642
    %9644 = vrot.lane.b32.xlu0 %v6167, 126
    %v9645 = vpop.permute.xlu0 %9644
    %9646 = vrot.lane.b32.xlu0 %v6168, 126
    %v9647 = vpop.permute.xlu0 %9646
    %9648 = vrot.lane.b32.xlu0 %v6169, 126
    %v9649 = vpop.permute.xlu0 %9648
    %9650 = vrot.lane.b32.xlu0 %v6170, 126
    %v9651 = vpop.permute.xlu0 %9650
    %9652 = vrot.lane.b32.xlu0 %v6171, 126
    %v9653 = vpop.permute.xlu0 %9652
    %9654 = vrot.lane.b32.xlu0 %v6172, 126
    %v9655 = vpop.permute.xlu0 %9654
    %9656 = vrot.lane.b32.xlu0 %v6173, 126
    %v9657 = vpop.permute.xlu0 %9656
    %9658 = vrot.lane.b32.xlu0 %v6174, 126
    %v9659 = vpop.permute.xlu0 %9658
    %9660 = vrot.lane.b32.xlu0 %v6175, 126
    %v9661 = vpop.permute.xlu0 %9660
    %9662 = vrot.lane.b32.xlu0 %v6176, 126
    %v9663 = vpop.permute.xlu0 %9662
    %9664 = vrot.lane.b32.xlu0 %v6177, 126
    %v9665 = vpop.permute.xlu0 %9664
    %9666 = vrot.lane.b32.xlu0 %v6178, 126
    %v9667 = vpop.permute.xlu0 %9666
    %9668 = vrot.lane.b32.xlu0 %v6179, 126
    %v9669 = vpop.permute.xlu0 %9668
    %9670 = vrot.lane.b32.xlu0 %v6180, 126
    %v9671 = vpop.permute.xlu0 %9670
    %9672 = vrot.lane.b32.xlu0 %v6181, 126
    %v9673 = vpop.permute.xlu0 %9672
    %9674 = vrot.lane.b32.xlu0 %v6182, 126
    %v9675 = vpop.permute.xlu0 %9674
    %9676 = vrot.lane.b32.xlu0 %v6183, 126
    %v9677 = vpop.permute.xlu0 %9676
    %9678 = vrot.lane.b32.xlu0 %v6184, 126
    %v9679 = vpop.permute.xlu0 %9678
    %9680 = vrot.lane.b32.xlu0 %v6185, 126
    %v9681 = vpop.permute.xlu0 %9680
    %9682 = vrot.lane.b32.xlu0 %v6186, 126
    %v9683 = vpop.permute.xlu0 %9682
    %9684 = vrot.lane.b32.xlu0 %v6187, 126
    %v9685 = vpop.permute.xlu0 %9684
    %9686 = vrot.lane.b32.xlu0 %v6188, 126
    %v9687 = vpop.permute.xlu0 %9686
    %9688 = vrot.lane.b32.xlu0 %v6189, 126
    %v9689 = vpop.permute.xlu0 %9688
    %9690 = vrot.lane.b32.xlu0 %v6190, 126
    %v9691 = vpop.permute.xlu0 %9690
    %9692 = vrot.lane.b32.xlu0 %v6191, 126
    %v9693 = vpop.permute.xlu0 %9692
    %9694 = vrot.lane.b32.xlu0 %v6192, 126
    %v9695 = vpop.permute.xlu0 %9694
    %9696 = vrot.lane.b32.xlu0 %v6193, 126
    %v9697 = vpop.permute.xlu0 %9696
    %9698 = vrot.lane.b32.xlu0 %v6194, 126
    %v9699 = vpop.permute.xlu0 %9698
    %9700 = vrot.lane.b32.xlu0 %v6195, 126
    %v9701 = vpop.permute.xlu0 %9700
    %9702 = vrot.lane.b32.xlu0 %v6196, 126
    %v9703 = vpop.permute.xlu0 %9702
    %9704 = vrot.lane.b32.xlu0 %v6197, 126
    %v9705 = vpop.permute.xlu0 %9704
    %9706 = vrot.lane.b32.xlu0 %v6198, 126
    %v9707 = vpop.permute.xlu0 %9706
    %9708 = vrot.lane.b32.xlu0 %v6199, 126
    %v9709 = vpop.permute.xlu0 %9708
    %9710 = vrot.lane.b32.xlu0 %v6200, 126
    %v9711 = vpop.permute.xlu0 %9710
    %9712 = vrot.lane.b32.xlu0 %v6201, 126
    %v9713 = vpop.permute.xlu0 %9712
    %9714 = vrot.lane.b32.xlu0 %v6202, 126
    %v9715 = vpop.permute.xlu0 %9714
    %9716 = vrot.lane.b32.xlu0 %v6203, 126
    %v9717 = vpop.permute.xlu0 %9716
    %9718 = vrot.lane.b32.xlu0 %v6204, 126
    %v9719 = vpop.permute.xlu0 %9718
    %9720 = vrot.lane.b32.xlu0 %v6205, 126
    %v9721 = vpop.permute.xlu0 %9720
    %9722 = vrot.lane.b32.xlu0 %v6206, 126
    %v9723 = vpop.permute.xlu0 %9722
    %9724 = vrot.lane.b32.xlu0 %v6207, 126
    %v9725 = vpop.permute.xlu0 %9724
    %9726 = vrot.lane.b32.xlu0 %v6208, 126
    %v9727 = vpop.permute.xlu0 %9726
    %9728 = vrot.lane.b32.xlu0 %v6209, 126
    %v9729 = vpop.permute.xlu0 %9728
    %v9810 = vadd.f32 %v6130, %v9571
    %v9811 = vadd.f32 %v6131, %v9573
    %v9812 = vadd.f32 %v6132, %v9575
    %v9813 = vadd.f32 %v6133, %v9577
    %v9814 = vadd.f32 %v6134, %v9579
    %v9815 = vadd.f32 %v6135, %v9581
    %v9816 = vadd.f32 %v6136, %v9583
    %v9817 = vadd.f32 %v6137, %v9585
    %v9818 = vadd.f32 %v6138, %v9587
    %v9819 = vadd.f32 %v6139, %v9589
    %v9820 = vadd.f32 %v6140, %v9591
    %v9821 = vadd.f32 %v6141, %v9593
    %v9822 = vadd.f32 %v6142, %v9595
    %v9823 = vadd.f32 %v6143, %v9597
    %v9824 = vadd.f32 %v6144, %v9599
    %v9825 = vadd.f32 %v6145, %v9601
    %v9826 = vadd.f32 %v6146, %v9603
    %v9827 = vadd.f32 %v6147, %v9605
    %v9828 = vadd.f32 %v6148, %v9607
    %v9829 = vadd.f32 %v6149, %v9609
    %v9830 = vadd.f32 %v6150, %v9611
    %v9831 = vadd.f32 %v6151, %v9613
    %v9832 = vadd.f32 %v6152, %v9615
    %v9833 = vadd.f32 %v6153, %v9617
    %v9834 = vadd.f32 %v6154, %v9619
    %v9835 = vadd.f32 %v6155, %v9621
    %v9836 = vadd.f32 %v6156, %v9623
    %v9837 = vadd.f32 %v6157, %v9625
    %v9838 = vadd.f32 %v6158, %v9627
    %v9839 = vadd.f32 %v6159, %v9629
    %v9840 = vadd.f32 %v6160, %v9631
    %v9841 = vadd.f32 %v6161, %v9633
    %v9842 = vadd.f32 %v6162, %v9635
    %v9843 = vadd.f32 %v6163, %v9637
    %v9844 = vadd.f32 %v6164, %v9639
    %v9845 = vadd.f32 %v6165, %v9641
    %v9846 = vadd.f32 %v6166, %v9643
    %v9847 = vadd.f32 %v6167, %v9645
    %v9848 = vadd.f32 %v6168, %v9647
    %v9849 = vadd.f32 %v6169, %v9649
    %v9850 = vadd.f32 %v6170, %v9651
    %v9851 = vadd.f32 %v6171, %v9653
    %v9852 = vadd.f32 %v6172, %v9655
    %v9853 = vadd.f32 %v6173, %v9657
    %v9854 = vadd.f32 %v6174, %v9659
    %v9855 = vadd.f32 %v6175, %v9661
    %v9856 = vadd.f32 %v6176, %v9663
    %v9857 = vadd.f32 %v6177, %v9665
    %v9858 = vadd.f32 %v6178, %v9667
    %v9859 = vadd.f32 %v6179, %v9669
    %v9860 = vadd.f32 %v6180, %v9671
    %v9861 = vadd.f32 %v6181, %v9673
    %v9862 = vadd.f32 %v6182, %v9675
    %v9863 = vadd.f32 %v6183, %v9677
    %v9864 = vadd.f32 %v6184, %v9679
    %v9865 = vadd.f32 %v6185, %v9681
    %v9866 = vadd.f32 %v6186, %v9683
    %v9867 = vadd.f32 %v6187, %v9685
    %v9868 = vadd.f32 %v6188, %v9687
    %v9869 = vadd.f32 %v6189, %v9689
    %v9870 = vadd.f32 %v6190, %v9691
    %v9871 = vadd.f32 %v6191, %v9693
    %v9872 = vadd.f32 %v6192, %v9695
    %v9873 = vadd.f32 %v6193, %v9697
    %v9874 = vadd.f32 %v6194, %v9699
    %v9875 = vadd.f32 %v6195, %v9701
    %v9876 = vadd.f32 %v6196, %v9703
    %v9877 = vadd.f32 %v6197, %v9705
    %v9878 = vadd.f32 %v6198, %v9707
    %v9879 = vadd.f32 %v6199, %v9709
    %v9880 = vadd.f32 %v6200, %v9711
    %v9881 = vadd.f32 %v6201, %v9713
    %v9882 = vadd.f32 %v6202, %v9715
    %v9883 = vadd.f32 %v6203, %v9717
    %v9884 = vadd.f32 %v6204, %v9719
    %v9885 = vadd.f32 %v6205, %v9721
    %v9886 = vadd.f32 %v6206, %v9723
    %v9887 = vadd.f32 %v6207, %v9725
    %v9888 = vadd.f32 %v6208, %v9727
    %v9889 = vadd.f32 %v6209, %v9729
    %v9890 = vmul.f32 %v9810, 0.21300554
    %v9891 = vmul.f32 %v9811, 0.21300554
    %v9892 = vmul.f32 %v9812, 0.21300554
    %v9893 = vmul.f32 %v9813, 0.21300554
    %v9894 = vmul.f32 %v9814, 0.21300554
    %v9895 = vmul.f32 %v9815, 0.21300554
    %v9896 = vmul.f32 %v9816, 0.21300554
    %v9897 = vmul.f32 %v9817, 0.21300554
    %v9898 = vmul.f32 %v9818, 0.21300554
    %v9899 = vmul.f32 %v9819, 0.21300554
    %v9900 = vmul.f32 %v9820, 0.21300554
    %v9901 = vmul.f32 %v9821, 0.21300554
    %v9902 = vmul.f32 %v9822, 0.21300554
    %v9903 = vmul.f32 %v9823, 0.21300554
    %v9904 = vmul.f32 %v9824, 0.21300554
    %v9905 = vmul.f32 %v9825, 0.21300554
    %v9906 = vmul.f32 %v9826, 0.21300554
    %v9907 = vmul.f32 %v9827, 0.21300554
    %v9908 = vmul.f32 %v9828, 0.21300554
    %v9909 = vmul.f32 %v9829, 0.21300554
    %v9910 = vmul.f32 %v9830, 0.21300554
    %v9911 = vmul.f32 %v9831, 0.21300554
    %v9912 = vmul.f32 %v9832, 0.21300554
    %v9913 = vmul.f32 %v9833, 0.21300554
    %v9914 = vmul.f32 %v9834, 0.21300554
    %v9915 = vmul.f32 %v9835, 0.21300554
    %v9916 = vmul.f32 %v9836, 0.21300554
    %v9917 = vmul.f32 %v9837, 0.21300554
    %v9918 = vmul.f32 %v9838, 0.21300554
    %v9919 = vmul.f32 %v9839, 0.21300554
    %v9920 = vmul.f32 %v9840, 0.21300554
    %v9921 = vmul.f32 %v9841, 0.21300554
    %v9922 = vmul.f32 %v9842, 0.21300554
    %v9923 = vmul.f32 %v9843, 0.21300554
    %v9924 = vmul.f32 %v9844, 0.21300554
    %v9925 = vmul.f32 %v9845, 0.21300554
    %v9926 = vmul.f32 %v9846, 0.21300554
    %v9927 = vmul.f32 %v9847, 0.21300554
    %v9928 = vmul.f32 %v9848, 0.21300554
    %v9929 = vmul.f32 %v9849, 0.21300554
    %v9930 = vmul.f32 %v9850, 0.21300554
    %v9931 = vmul.f32 %v9851, 0.21300554
    %v9932 = vmul.f32 %v9852, 0.21300554
    %v9933 = vmul.f32 %v9853, 0.21300554
    %v9934 = vmul.f32 %v9854, 0.21300554
    %v9935 = vmul.f32 %v9855, 0.21300554
    %v9936 = vmul.f32 %v9856, 0.21300554
    %v9937 = vmul.f32 %v9857, 0.21300554
    %v9938 = vmul.f32 %v9858, 0.21300554
    %v9939 = vmul.f32 %v9859, 0.21300554
    %v9940 = vmul.f32 %v9860, 0.21300554
    %v9941 = vmul.f32 %v9861, 0.21300554
    %v9942 = vmul.f32 %v9862, 0.21300554
    %v9943 = vmul.f32 %v9863, 0.21300554
    %v9944 = vmul.f32 %v9864, 0.21300554
    %v9945 = vmul.f32 %v9865, 0.21300554
    %v9946 = vmul.f32 %v9866, 0.21300554
    %v9947 = vmul.f32 %v9867, 0.21300554
    %v9948 = vmul.f32 %v9868, 0.21300554
    %v9949 = vmul.f32 %v9869, 0.21300554
    %v9950 = vmul.f32 %v9870, 0.21300554
    %v9951 = vmul.f32 %v9871, 0.21300554
    %v9952 = vmul.f32 %v9872, 0.21300554
    %v9953 = vmul.f32 %v9873, 0.21300554
    %v9954 = vmul.f32 %v9874, 0.21300554
    %v9955 = vmul.f32 %v9875, 0.21300554
    %v9956 = vmul.f32 %v9876, 0.21300554
    %v9957 = vmul.f32 %v9877, 0.21300554
    %v9958 = vmul.f32 %v9878, 0.21300554
    %v9959 = vmul.f32 %v9879, 0.21300554
    %v9960 = vmul.f32 %v9880, 0.21300554
    %v9961 = vmul.f32 %v9881, 0.21300554
    %v9962 = vmul.f32 %v9882, 0.21300554
    %v9963 = vmul.f32 %v9883, 0.21300554
    %v9964 = vmul.f32 %v9884, 0.21300554
    %v9965 = vmul.f32 %v9885, 0.21300554
    %v9966 = vmul.f32 %v9886, 0.21300554
    %v9967 = vmul.f32 %v9887, 0.21300554
    %v9968 = vmul.f32 %v9888, 0.21300554
    %v9969 = vmul.f32 %v9889, 0.21300554
    %10050 = vrot.lane.b32.xlu0 %v9890, 1
    %v10051 = vpop.permute.xlu0 %10050
    %10052 = vrot.lane.b32.xlu0 %v9891, 1
    %v10053 = vpop.permute.xlu0 %10052
    %10054 = vrot.lane.b32.xlu0 %v9892, 1
    %v10055 = vpop.permute.xlu0 %10054
    %10056 = vrot.lane.b32.xlu0 %v9893, 1
    %v10057 = vpop.permute.xlu0 %10056
    %10058 = vrot.lane.b32.xlu0 %v9894, 1
    %v10059 = vpop.permute.xlu0 %10058
    %10060 = vrot.lane.b32.xlu0 %v9895, 1
    %v10061 = vpop.permute.xlu0 %10060
    %10062 = vrot.lane.b32.xlu0 %v9896, 1
    %v10063 = vpop.permute.xlu0 %10062
    %10064 = vrot.lane.b32.xlu0 %v9897, 1
    %v10065 = vpop.permute.xlu0 %10064
    %10066 = vrot.lane.b32.xlu0 %v9898, 1
    %v10067 = vpop.permute.xlu0 %10066
    %10068 = vrot.lane.b32.xlu0 %v9899, 1
    %v10069 = vpop.permute.xlu0 %10068
    %10070 = vrot.lane.b32.xlu0 %v9900, 1
    %v10071 = vpop.permute.xlu0 %10070
    %10072 = vrot.lane.b32.xlu0 %v9901, 1
    %v10073 = vpop.permute.xlu0 %10072
    %10074 = vrot.lane.b32.xlu0 %v9902, 1
    %v10075 = vpop.permute.xlu0 %10074
    %10076 = vrot.lane.b32.xlu0 %v9903, 1
    %v10077 = vpop.permute.xlu0 %10076
    %10078 = vrot.lane.b32.xlu0 %v9904, 1
    %v10079 = vpop.permute.xlu0 %10078
    %10080 = vrot.lane.b32.xlu0 %v9905, 1
    %v10081 = vpop.permute.xlu0 %10080
    %10082 = vrot.lane.b32.xlu0 %v9906, 1
    %v10083 = vpop.permute.xlu0 %10082
    %10084 = vrot.lane.b32.xlu0 %v9907, 1
    %v10085 = vpop.permute.xlu0 %10084
    %10086 = vrot.lane.b32.xlu0 %v9908, 1
    %v10087 = vpop.permute.xlu0 %10086
    %10088 = vrot.lane.b32.xlu0 %v9909, 1
    %v10089 = vpop.permute.xlu0 %10088
    %10090 = vrot.lane.b32.xlu0 %v9910, 1
    %v10091 = vpop.permute.xlu0 %10090
    %10092 = vrot.lane.b32.xlu0 %v9911, 1
    %v10093 = vpop.permute.xlu0 %10092
    %10094 = vrot.lane.b32.xlu0 %v9912, 1
    %v10095 = vpop.permute.xlu0 %10094
    %10096 = vrot.lane.b32.xlu0 %v9913, 1
    %v10097 = vpop.permute.xlu0 %10096
    %10098 = vrot.lane.b32.xlu0 %v9914, 1
    %v10099 = vpop.permute.xlu0 %10098
    %10100 = vrot.lane.b32.xlu0 %v9915, 1
    %v10101 = vpop.permute.xlu0 %10100
    %10102 = vrot.lane.b32.xlu0 %v9916, 1
    %v10103 = vpop.permute.xlu0 %10102
    %10104 = vrot.lane.b32.xlu0 %v9917, 1
    %v10105 = vpop.permute.xlu0 %10104
    %10106 = vrot.lane.b32.xlu0 %v9918, 1
    %v10107 = vpop.permute.xlu0 %10106
    %10108 = vrot.lane.b32.xlu0 %v9919, 1
    %v10109 = vpop.permute.xlu0 %10108
    %10110 = vrot.lane.b32.xlu0 %v9920, 1
    %v10111 = vpop.permute.xlu0 %10110
    %10112 = vrot.lane.b32.xlu0 %v9921, 1
    %v10113 = vpop.permute.xlu0 %10112
    %10114 = vrot.lane.b32.xlu0 %v9922, 1
    %v10115 = vpop.permute.xlu0 %10114
    %10116 = vrot.lane.b32.xlu0 %v9923, 1
    %v10117 = vpop.permute.xlu0 %10116
    %10118 = vrot.lane.b32.xlu0 %v9924, 1
    %v10119 = vpop.permute.xlu0 %10118
    %10120 = vrot.lane.b32.xlu0 %v9925, 1
    %v10121 = vpop.permute.xlu0 %10120
    %10122 = vrot.lane.b32.xlu0 %v9926, 1
    %v10123 = vpop.permute.xlu0 %10122
    %10124 = vrot.lane.b32.xlu0 %v9927, 1
    %v10125 = vpop.permute.xlu0 %10124
    %10126 = vrot.lane.b32.xlu0 %v9928, 1
    %v10127 = vpop.permute.xlu0 %10126
    %10128 = vrot.lane.b32.xlu0 %v9929, 1
    %v10129 = vpop.permute.xlu0 %10128
    %10130 = vrot.lane.b32.xlu0 %v9930, 1
    %v10131 = vpop.permute.xlu0 %10130
    %10132 = vrot.lane.b32.xlu0 %v9931, 1
    %v10133 = vpop.permute.xlu0 %10132
    %10134 = vrot.lane.b32.xlu0 %v9932, 1
    %v10135 = vpop.permute.xlu0 %10134
    %10136 = vrot.lane.b32.xlu0 %v9933, 1
    %v10137 = vpop.permute.xlu0 %10136
    %10138 = vrot.lane.b32.xlu0 %v9934, 1
    %v10139 = vpop.permute.xlu0 %10138
    %10140 = vrot.lane.b32.xlu0 %v9935, 1
    %v10141 = vpop.permute.xlu0 %10140
    %10142 = vrot.lane.b32.xlu0 %v9936, 1
    %v10143 = vpop.permute.xlu0 %10142
    %10144 = vrot.lane.b32.xlu0 %v9937, 1
    %v10145 = vpop.permute.xlu0 %10144
    %10146 = vrot.lane.b32.xlu0 %v9938, 1
    %v10147 = vpop.permute.xlu0 %10146
    %10148 = vrot.lane.b32.xlu0 %v9939, 1
    %v10149 = vpop.permute.xlu0 %10148
    %10150 = vrot.lane.b32.xlu0 %v9940, 1
    %v10151 = vpop.permute.xlu0 %10150
    %10152 = vrot.lane.b32.xlu0 %v9941, 1
    %v10153 = vpop.permute.xlu0 %10152
    %10154 = vrot.lane.b32.xlu0 %v9942, 1
    %v10155 = vpop.permute.xlu0 %10154
    %10156 = vrot.lane.b32.xlu0 %v9943, 1
    %v10157 = vpop.permute.xlu0 %10156
    %10158 = vrot.lane.b32.xlu0 %v9944, 1
    %v10159 = vpop.permute.xlu0 %10158
    %10160 = vrot.lane.b32.xlu0 %v9945, 1
    %v10161 = vpop.permute.xlu0 %10160
    %10162 = vrot.lane.b32.xlu0 %v9946, 1
    %v10163 = vpop.permute.xlu0 %10162
    %10164 = vrot.lane.b32.xlu0 %v9947, 1
    %v10165 = vpop.permute.xlu0 %10164
    %10166 = vrot.lane.b32.xlu0 %v9948, 1
    %v10167 = vpop.permute.xlu0 %10166
    %10168 = vrot.lane.b32.xlu0 %v9949, 1
    %v10169 = vpop.permute.xlu0 %10168
    %10170 = vrot.lane.b32.xlu0 %v9950, 1
    %v10171 = vpop.permute.xlu0 %10170
    %10172 = vrot.lane.b32.xlu0 %v9951, 1
    %v10173 = vpop.permute.xlu0 %10172
    %10174 = vrot.lane.b32.xlu0 %v9952, 1
    %v10175 = vpop.permute.xlu0 %10174
    %10176 = vrot.lane.b32.xlu0 %v9953, 1
    %v10177 = vpop.permute.xlu0 %10176
    %10178 = vrot.lane.b32.xlu0 %v9954, 1
    %v10179 = vpop.permute.xlu0 %10178
    %10180 = vrot.lane.b32.xlu0 %v9955, 1
    %v10181 = vpop.permute.xlu0 %10180
    %10182 = vrot.lane.b32.xlu0 %v9956, 1
    %v10183 = vpop.permute.xlu0 %10182
    %10184 = vrot.lane.b32.xlu0 %v9957, 1
    %v10185 = vpop.permute.xlu0 %10184
    %10186 = vrot.lane.b32.xlu0 %v9958, 1
    %v10187 = vpop.permute.xlu0 %10186
    %10188 = vrot.lane.b32.xlu0 %v9959, 1
    %v10189 = vpop.permute.xlu0 %10188
    %10190 = vrot.lane.b32.xlu0 %v9960, 1
    %v10191 = vpop.permute.xlu0 %10190
    %10192 = vrot.lane.b32.xlu0 %v9961, 1
    %v10193 = vpop.permute.xlu0 %10192
    %10194 = vrot.lane.b32.xlu0 %v9962, 1
    %v10195 = vpop.permute.xlu0 %10194
    %10196 = vrot.lane.b32.xlu0 %v9963, 1
    %v10197 = vpop.permute.xlu0 %10196
    %10198 = vrot.lane.b32.xlu0 %v9964, 1
    %v10199 = vpop.permute.xlu0 %10198
    %10200 = vrot.lane.b32.xlu0 %v9965, 1
    %v10201 = vpop.permute.xlu0 %10200
    %10202 = vrot.lane.b32.xlu0 %v9966, 1
    %v10203 = vpop.permute.xlu0 %10202
    %10204 = vrot.lane.b32.xlu0 %v9967, 1
    %v10205 = vpop.permute.xlu0 %10204
    %10206 = vrot.lane.b32.xlu0 %v9968, 1
    %v10207 = vpop.permute.xlu0 %10206
    %10208 = vrot.lane.b32.xlu0 %v9969, 1
    %v10209 = vpop.permute.xlu0 %10208
    %v10290 = vadd.f32 %v9490, %v10051
    %v10291 = vadd.f32 %v9491, %v10053
    %v10292 = vadd.f32 %v9492, %v10055
    %v10293 = vadd.f32 %v9493, %v10057
    %v10294 = vadd.f32 %v9494, %v10059
    %v10295 = vadd.f32 %v9495, %v10061
    %v10296 = vadd.f32 %v9496, %v10063
    %v10297 = vadd.f32 %v9497, %v10065
    %v10298 = vadd.f32 %v9498, %v10067
    %v10299 = vadd.f32 %v9499, %v10069
    %v10300 = vadd.f32 %v9500, %v10071
    %v10301 = vadd.f32 %v9501, %v10073
    %v10302 = vadd.f32 %v9502, %v10075
    %v10303 = vadd.f32 %v9503, %v10077
    %v10304 = vadd.f32 %v9504, %v10079
    %v10305 = vadd.f32 %v9505, %v10081
    %v10306 = vadd.f32 %v9506, %v10083
    %v10307 = vadd.f32 %v9507, %v10085
    %v10308 = vadd.f32 %v9508, %v10087
    %v10309 = vadd.f32 %v9509, %v10089
    %v10310 = vadd.f32 %v9510, %v10091
    %v10311 = vadd.f32 %v9511, %v10093
    %v10312 = vadd.f32 %v9512, %v10095
    %v10313 = vadd.f32 %v9513, %v10097
    %v10314 = vadd.f32 %v9514, %v10099
    %v10315 = vadd.f32 %v9515, %v10101
    %v10316 = vadd.f32 %v9516, %v10103
    %v10317 = vadd.f32 %v9517, %v10105
    %v10318 = vadd.f32 %v9518, %v10107
    %v10319 = vadd.f32 %v9519, %v10109
    %v10320 = vadd.f32 %v9520, %v10111
    %v10321 = vadd.f32 %v9521, %v10113
    %v10322 = vadd.f32 %v9522, %v10115
    %v10323 = vadd.f32 %v9523, %v10117
    %v10324 = vadd.f32 %v9524, %v10119
    %v10325 = vadd.f32 %v9525, %v10121
    %v10326 = vadd.f32 %v9526, %v10123
    %v10327 = vadd.f32 %v9527, %v10125
    %v10328 = vadd.f32 %v9528, %v10127
    %v10329 = vadd.f32 %v9529, %v10129
    %v10330 = vadd.f32 %v9530, %v10131
    %v10331 = vadd.f32 %v9531, %v10133
    %v10332 = vadd.f32 %v9532, %v10135
    %v10333 = vadd.f32 %v9533, %v10137
    %v10334 = vadd.f32 %v9534, %v10139
    %v10335 = vadd.f32 %v9535, %v10141
    %v10336 = vadd.f32 %v9536, %v10143
    %v10337 = vadd.f32 %v9537, %v10145
    %v10338 = vadd.f32 %v9538, %v10147
    %v10339 = vadd.f32 %v9539, %v10149
    %v10340 = vadd.f32 %v9540, %v10151
    %v10341 = vadd.f32 %v9541, %v10153
    %v10342 = vadd.f32 %v9542, %v10155
    %v10343 = vadd.f32 %v9543, %v10157
    %v10344 = vadd.f32 %v9544, %v10159
    %v10345 = vadd.f32 %v9545, %v10161
    %v10346 = vadd.f32 %v9546, %v10163
    %v10347 = vadd.f32 %v9547, %v10165
    %v10348 = vadd.f32 %v9548, %v10167
    %v10349 = vadd.f32 %v9549, %v10169
    %v10350 = vadd.f32 %v9550, %v10171
    %v10351 = vadd.f32 %v9551, %v10173
    %v10352 = vadd.f32 %v9552, %v10175
    %v10353 = vadd.f32 %v9553, %v10177
    %v10354 = vadd.f32 %v9554, %v10179
    %v10355 = vadd.f32 %v9555, %v10181
    %v10356 = vadd.f32 %v9556, %v10183
    %v10357 = vadd.f32 %v9557, %v10185
    %v10358 = vadd.f32 %v9558, %v10187
    %v10359 = vadd.f32 %v9559, %v10189
    %v10360 = vadd.f32 %v9560, %v10191
    %v10361 = vadd.f32 %v9561, %v10193
    %v10362 = vadd.f32 %v9562, %v10195
    %v10363 = vadd.f32 %v9563, %v10197
    %v10364 = vadd.f32 %v9564, %v10199
    %v10365 = vadd.f32 %v9565, %v10201
    %v10366 = vadd.f32 %v9566, %v10203
    %v10367 = vadd.f32 %v9567, %v10205
    %v10368 = vadd.f32 %v9568, %v10207
    %v10369 = vadd.f32 %v9569, %v10209
    %v10370 = vmul.f32 %v10290, %v10290
    %v10371 = vmul.f32 %v10291, %v10291
    %v10372 = vmul.f32 %v10292, %v10292
    %v10373 = vmul.f32 %v10293, %v10293
    %v10374 = vmul.f32 %v10294, %v10294
    %v10375 = vmul.f32 %v10295, %v10295
    %v10376 = vmul.f32 %v10296, %v10296
    %v10377 = vmul.f32 %v10297, %v10297
    %v10378 = vmul.f32 %v10298, %v10298
    %v10379 = vmul.f32 %v10299, %v10299
    %v10380 = vmul.f32 %v10300, %v10300
    %v10381 = vmul.f32 %v10301, %v10301
    %v10382 = vmul.f32 %v10302, %v10302
    %v10383 = vmul.f32 %v10303, %v10303
    %v10384 = vmul.f32 %v10304, %v10304
    %v10385 = vmul.f32 %v10305, %v10305
    %v10386 = vmul.f32 %v10306, %v10306
    %v10387 = vmul.f32 %v10307, %v10307
    %v10388 = vmul.f32 %v10308, %v10308
    %v10389 = vmul.f32 %v10309, %v10309
    %v10390 = vmul.f32 %v10310, %v10310
    %v10391 = vmul.f32 %v10311, %v10311
    %v10392 = vmul.f32 %v10312, %v10312
    %v10393 = vmul.f32 %v10313, %v10313
    %v10394 = vmul.f32 %v10314, %v10314
    %v10395 = vmul.f32 %v10315, %v10315
    %v10396 = vmul.f32 %v10316, %v10316
    %v10397 = vmul.f32 %v10317, %v10317
    %v10398 = vmul.f32 %v10318, %v10318
    %v10399 = vmul.f32 %v10319, %v10319
    %v10400 = vmul.f32 %v10320, %v10320
    %v10401 = vmul.f32 %v10321, %v10321
    %v10402 = vmul.f32 %v10290, %v10306
    %v10403 = vmul.f32 %v10291, %v10307
    %v10404 = vmul.f32 %v10292, %v10308
    %v10405 = vmul.f32 %v10293, %v10309
    %v10406 = vmul.f32 %v10294, %v10310
    %v10407 = vmul.f32 %v10295, %v10311
    %v10408 = vmul.f32 %v10296, %v10312
    %v10409 = vmul.f32 %v10297, %v10313
    %v10410 = vmul.f32 %v10298, %v10314
    %v10411 = vmul.f32 %v10299, %v10315
    %v10412 = vmul.f32 %v10300, %v10316
    %v10413 = vmul.f32 %v10301, %v10317
    %v10414 = vmul.f32 %v10302, %v10318
    %v10415 = vmul.f32 %v10303, %v10319
    %v10416 = vmul.f32 %v10304, %v10320
    %v10417 = vmul.f32 %v10305, %v10321
    %v10418 = vsub.f32 %v10322, %v10370
    %v10419 = vsub.f32 %v10323, %v10371
    %v10420 = vsub.f32 %v10324, %v10372
    %v10421 = vsub.f32 %v10325, %v10373
    %v10422 = vsub.f32 %v10326, %v10374
    %v10423 = vsub.f32 %v10327, %v10375
    %v10424 = vsub.f32 %v10328, %v10376
    %v10425 = vsub.f32 %v10329, %v10377
    %v10426 = vsub.f32 %v10330, %v10378
    %v10427 = vsub.f32 %v10331, %v10379
    %v10428 = vsub.f32 %v10332, %v10380
    %v10429 = vsub.f32 %v10333, %v10381
    %v10430 = vsub.f32 %v10334, %v10382
    %v10431 = vsub.f32 %v10335, %v10383
    %v10432 = vsub.f32 %v10336, %v10384
    %v10433 = vsub.f32 %v10337, %v10385
    %v10434 = vsub.f32 %v10338, %v10386
    %v10435 = vsub.f32 %v10339, %v10387
    %v10436 = vsub.f32 %v10340, %v10388
    %v10437 = vsub.f32 %v10341, %v10389
    %v10438 = vsub.f32 %v10342, %v10390
    %v10439 = vsub.f32 %v10343, %v10391
    %v10440 = vsub.f32 %v10344, %v10392
    %v10441 = vsub.f32 %v10345, %v10393
    %v10442 = vsub.f32 %v10346, %v10394
    %v10443 = vsub.f32 %v10347, %v10395
    %v10444 = vsub.f32 %v10348, %v10396
    %v10445 = vsub.f32 %v10349, %v10397
    %v10446 = vsub.f32 %v10350, %v10398
    %v10447 = vsub.f32 %v10351, %v10399
    %v10448 = vsub.f32 %v10352, %v10400
    %v10449 = vsub.f32 %v10353, %v10401
    %v10450 = vsub.f32 %v10354, %v10402
    %v10451 = vsub.f32 %v10355, %v10403
    %v10452 = vsub.f32 %v10356, %v10404
    %v10453 = vsub.f32 %v10357, %v10405
    %v10454 = vsub.f32 %v10358, %v10406
    %v10455 = vsub.f32 %v10359, %v10407
    %v10456 = vsub.f32 %v10360, %v10408
    %v10457 = vsub.f32 %v10361, %v10409
    %v10458 = vsub.f32 %v10362, %v10410
    %v10459 = vsub.f32 %v10363, %v10411
    %v10460 = vsub.f32 %v10364, %v10412
    %v10461 = vsub.f32 %v10365, %v10413
    %v10462 = vsub.f32 %v10366, %v10414
    %v10463 = vsub.f32 %v10367, %v10415
    %v10464 = vsub.f32 %v10368, %v10416
    %v10465 = vsub.f32 %v10369, %v10417
    %v10466 = vmul.f32 %v10402, 2.0
    %v10467 = vmul.f32 %v10403, 2.0
    %v10468 = vmul.f32 %v10404, 2.0
    %v10469 = vmul.f32 %v10405, 2.0
    %v10470 = vmul.f32 %v10406, 2.0
    %v10471 = vmul.f32 %v10407, 2.0
    %v10472 = vmul.f32 %v10408, 2.0
    %v10473 = vmul.f32 %v10409, 2.0
    %v10474 = vmul.f32 %v10410, 2.0
    %v10475 = vmul.f32 %v10411, 2.0
    %v10476 = vmul.f32 %v10412, 2.0
    %v10477 = vmul.f32 %v10413, 2.0
    %v10478 = vmul.f32 %v10414, 2.0
    %v10479 = vmul.f32 %v10415, 2.0
    %v10480 = vmul.f32 %v10416, 2.0
    %v10481 = vmul.f32 %v10417, 2.0
    %v10482 = vadd.f32 %v10466, 0.0001
    %v10483 = vadd.f32 %v10467, 0.0001
    %v10484 = vadd.f32 %v10468, 0.0001
    %v10485 = vadd.f32 %v10469, 0.0001
    %v10486 = vadd.f32 %v10470, 0.0001
    %v10487 = vadd.f32 %v10471, 0.0001
    %v10488 = vadd.f32 %v10472, 0.0001
    %v10489 = vadd.f32 %v10473, 0.0001
    %v10490 = vadd.f32 %v10474, 0.0001
    %v10491 = vadd.f32 %v10475, 0.0001
    %v10492 = vadd.f32 %v10476, 0.0001
    %v10493 = vadd.f32 %v10477, 0.0001
    %v10494 = vadd.f32 %v10478, 0.0001
    %v10495 = vadd.f32 %v10479, 0.0001
    %v10496 = vadd.f32 %v10480, 0.0001
    %v10497 = vadd.f32 %v10481, 0.0001
    %v10498 = vmul.f32 %v10450, 2.0
    %v10499 = vmul.f32 %v10451, 2.0
    %v10500 = vmul.f32 %v10452, 2.0
    %v10501 = vmul.f32 %v10453, 2.0
    %v10502 = vmul.f32 %v10454, 2.0
    %v10503 = vmul.f32 %v10455, 2.0
    %v10504 = vmul.f32 %v10456, 2.0
    %v10505 = vmul.f32 %v10457, 2.0
    %v10506 = vmul.f32 %v10458, 2.0
    %v10507 = vmul.f32 %v10459, 2.0
    %v10508 = vmul.f32 %v10460, 2.0
    %v10509 = vmul.f32 %v10461, 2.0
    %v10510 = vmul.f32 %v10462, 2.0
    %v10511 = vmul.f32 %v10463, 2.0
    %v10512 = vmul.f32 %v10464, 2.0
    %v10513 = vmul.f32 %v10465, 2.0
    %v10514 = vadd.f32 %v10498, 0.0009
    %v10515 = vadd.f32 %v10499, 0.0009
    %v10516 = vadd.f32 %v10500, 0.0009
    %v10517 = vadd.f32 %v10501, 0.0009
    %v10518 = vadd.f32 %v10502, 0.0009
    %v10519 = vadd.f32 %v10503, 0.0009
    %v10520 = vadd.f32 %v10504, 0.0009
    %v10521 = vadd.f32 %v10505, 0.0009
    %v10522 = vadd.f32 %v10506, 0.0009
    %v10523 = vadd.f32 %v10507, 0.0009
    %v10524 = vadd.f32 %v10508, 0.0009
    %v10525 = vadd.f32 %v10509, 0.0009
    %v10526 = vadd.f32 %v10510, 0.0009
    %v10527 = vadd.f32 %v10511, 0.0009
    %v10528 = vadd.f32 %v10512, 0.0009
    %v10529 = vadd.f32 %v10513, 0.0009
    %v10530 = vmul.f32 %v10482, %v10514
    %v10531 = vmul.f32 %v10483, %v10515
    %v10532 = vmul.f32 %v10484, %v10516
    %v10533 = vmul.f32 %v10485, %v10517
    %v10534 = vmul.f32 %v10486, %v10518
    %v10535 = vmul.f32 %v10487, %v10519
    %v10536 = vmul.f32 %v10488, %v10520
    %v10537 = vmul.f32 %v10489, %v10521
    %v10538 = vmul.f32 %v10490, %v10522
    %v10539 = vmul.f32 %v10491, %v10523
    %v10540 = vmul.f32 %v10492, %v10524
    %v10541 = vmul.f32 %v10493, %v10525
    %v10542 = vmul.f32 %v10494, %v10526
    %v10543 = vmul.f32 %v10495, %v10527
    %v10544 = vmul.f32 %v10496, %v10528
    %v10545 = vmul.f32 %v10497, %v10529
    %v10546 = vadd.f32 %v10370, %v10386
    %v10547 = vadd.f32 %v10371, %v10387
    %v10548 = vadd.f32 %v10372, %v10388
    %v10549 = vadd.f32 %v10373, %v10389
    %v10550 = vadd.f32 %v10374, %v10390
    %v10551 = vadd.f32 %v10375, %v10391
    %v10552 = vadd.f32 %v10376, %v10392
    %v10553 = vadd.f32 %v10377, %v10393
    %v10554 = vadd.f32 %v10378, %v10394
    %v10555 = vadd.f32 %v10379, %v10395
    %v10556 = vadd.f32 %v10380, %v10396
    %v10557 = vadd.f32 %v10381, %v10397
    %v10558 = vadd.f32 %v10382, %v10398
    %v10559 = vadd.f32 %v10383, %v10399
    %v10560 = vadd.f32 %v10384, %v10400
    %v10561 = vadd.f32 %v10385, %v10401
    %v10562 = vadd.f32 %v10546, 0.0001
    %v10563 = vadd.f32 %v10547, 0.0001
    %v10564 = vadd.f32 %v10548, 0.0001
    %v10565 = vadd.f32 %v10549, 0.0001
    %v10566 = vadd.f32 %v10550, 0.0001
    %v10567 = vadd.f32 %v10551, 0.0001
    %v10568 = vadd.f32 %v10552, 0.0001
    %v10569 = vadd.f32 %v10553, 0.0001
    %v10570 = vadd.f32 %v10554, 0.0001
    %v10571 = vadd.f32 %v10555, 0.0001
    %v10572 = vadd.f32 %v10556, 0.0001
    %v10573 = vadd.f32 %v10557, 0.0001
    %v10574 = vadd.f32 %v10558, 0.0001
    %v10575 = vadd.f32 %v10559, 0.0001
    %v10576 = vadd.f32 %v10560, 0.0001
    %v10577 = vadd.f32 %v10561, 0.0001
    %v10578 = vadd.f32 %v10418, %v10434
    %v10579 = vadd.f32 %v10419, %v10435
    %v10580 = vadd.f32 %v10420, %v10436
    %v10581 = vadd.f32 %v10421, %v10437
    %v10582 = vadd.f32 %v10422, %v10438
    %v10583 = vadd.f32 %v10423, %v10439
    %v10584 = vadd.f32 %v10424, %v10440
    %v10585 = vadd.f32 %v10425, %v10441
    %v10586 = vadd.f32 %v10426, %v10442
    %v10587 = vadd.f32 %v10427, %v10443
    %v10588 = vadd.f32 %v10428, %v10444
    %v10589 = vadd.f32 %v10429, %v10445
    %v10590 = vadd.f32 %v10430, %v10446
    %v10591 = vadd.f32 %v10431, %v10447
    %v10592 = vadd.f32 %v10432, %v10448
    %v10593 = vadd.f32 %v10433, %v10449
    %v10594 = vadd.f32 %v10578, 0.0009
    %v10595 = vadd.f32 %v10579, 0.0009
    %v10596 = vadd.f32 %v10580, 0.0009
    %v10597 = vadd.f32 %v10581, 0.0009
    %v10598 = vadd.f32 %v10582, 0.0009
    %v10599 = vadd.f32 %v10583, 0.0009
    %v10600 = vadd.f32 %v10584, 0.0009
    %v10601 = vadd.f32 %v10585, 0.0009
    %v10602 = vadd.f32 %v10586, 0.0009
    %v10603 = vadd.f32 %v10587, 0.0009
    %v10604 = vadd.f32 %v10588, 0.0009
    %v10605 = vadd.f32 %v10589, 0.0009
    %v10606 = vadd.f32 %v10590, 0.0009
    %v10607 = vadd.f32 %v10591, 0.0009
    %v10608 = vadd.f32 %v10592, 0.0009
    %v10609 = vadd.f32 %v10593, 0.0009
    %v10610 = vmul.f32 %v10562, %v10594
    %v10611 = vmul.f32 %v10563, %v10595
    %v10612 = vmul.f32 %v10564, %v10596
    %v10613 = vmul.f32 %v10565, %v10597
    %v10614 = vmul.f32 %v10566, %v10598
    %v10615 = vmul.f32 %v10567, %v10599
    %v10616 = vmul.f32 %v10568, %v10600
    %v10617 = vmul.f32 %v10569, %v10601
    %v10618 = vmul.f32 %v10570, %v10602
    %v10619 = vmul.f32 %v10571, %v10603
    %v10620 = vmul.f32 %v10572, %v10604
    %v10621 = vmul.f32 %v10573, %v10605
    %v10622 = vmul.f32 %v10574, %v10606
    %v10623 = vmul.f32 %v10575, %v10607
    %v10624 = vmul.f32 %v10576, %v10608
    %v10625 = vmul.f32 %v10577, %v10609
    %v10626 = vrcp.pop %v10610
    %v10627 = vmul.f32 %v10530, %v10626
    %v10628 = vrcp.pop %v10611
    %v10629 = vmul.f32 %v10531, %v10628
    %v10630 = vrcp.pop %v10612
    %v10631 = vmul.f32 %v10532, %v10630
    %v10632 = vrcp.pop %v10613
    %v10633 = vmul.f32 %v10533, %v10632
    %v10634 = vrcp.pop %v10614
    %v10635 = vmul.f32 %v10534, %v10634
    %v10636 = vrcp.pop %v10615
    %v10637 = vmul.f32 %v10535, %v10636
    %v10638 = vrcp.pop %v10616
    %v10639 = vmul.f32 %v10536, %v10638
    %v10640 = vrcp.pop %v10617
    %v10641 = vmul.f32 %v10537, %v10640
    %v10642 = vrcp.pop %v10618
    %v10643 = vmul.f32 %v10538, %v10642
    %v10644 = vrcp.pop %v10619
    %v10645 = vmul.f32 %v10539, %v10644
    %v10646 = vrcp.pop %v10620
    %v10647 = vmul.f32 %v10540, %v10646
    %v10648 = vrcp.pop %v10621
    %v10649 = vmul.f32 %v10541, %v10648
    %v10650 = vrcp.pop %v10622
    %v10651 = vmul.f32 %v10542, %v10650
    %v10652 = vrcp.pop %v10623
    %v10653 = vmul.f32 %v10543, %v10652
    %v10654 = vrcp.pop %v10624
    %v10655 = vmul.f32 %v10544, %v10654
    %v10656 = vrcp.pop %v10625
    %v10657 = vmul.f32 %v10545, %v10656
    %s10658 = smul.u32 0, 8
    %v10659 = vstv %s10658
    %v10660 = vadd.s32 %v10659, 1
    %v10661 = vadd.s32 %v10659, 2
    %v10662 = vadd.s32 %v10659, 3
    %v10663 = vadd.s32 %v10659, 4
    %v10664 = vadd.s32 %v10659, 5
    %v10665 = vadd.s32 %v10659, 6
    %v10666 = vadd.s32 %v10659, 7
    %vm10667 = vcmp.lt.s32.totalorder %v10659, 8
    %vm10668 = vcmp.lt.s32.totalorder %v10660, 8
    %vm10669 = vcmp.lt.s32.totalorder %v10661, 8
    %vm10670 = vcmp.lt.s32.totalorder %v10662, 8
    %vm10671 = vcmp.lt.s32.totalorder %v10663, 8
    %vm10672 = vcmp.lt.s32.totalorder %v10664, 8
    %vm10673 = vcmp.lt.s32.totalorder %v10665, 8
    %vm10674 = vcmp.lt.s32.totalorder %v10666, 8
    %v10675 = vsel %vm10667, 1, 0
    %v10676 = vsel %vm10668, 1, 0
    %v10677 = vsel %vm10669, 1, 0
    %v10678 = vsel %vm10670, 1, 0
    %v10679 = vsel %vm10671, 1, 0
    %v10680 = vsel %vm10672, 1, 0
    %v10681 = vsel %vm10673, 1, 0
    %v10682 = vsel %vm10674, 1, 0
    %vm10683 = vcmp.eq.s32.totalorder %v10675, 1
    %vm10684 = vcmp.eq.s32.totalorder %v10676, 1
    %vm10685 = vcmp.eq.s32.totalorder %v10677, 1
    %vm10686 = vcmp.eq.s32.totalorder %v10678, 1
    %vm10687 = vcmp.eq.s32.totalorder %v10679, 1
    %vm10688 = vcmp.eq.s32.totalorder %v10680, 1
    %vm10689 = vcmp.eq.s32.totalorder %v10681, 1
    %vm10690 = vcmp.eq.s32.totalorder %v10682, 1
    %v10691 = vsel %vm10683, %v10627, 0.0
    %v10692 = vsel %vm10683, %v10629, 0.0
    %v10693 = vsel %vm10684, %v10631, 0.0
    %v10694 = vsel %vm10684, %v10633, 0.0
    %v10695 = vsel %vm10685, %v10635, 0.0
    %v10696 = vsel %vm10685, %v10637, 0.0
    %v10697 = vsel %vm10686, %v10639, 0.0
    %v10698 = vsel %vm10686, %v10641, 0.0
    %v10699 = vsel %vm10687, %v10643, 0.0
    %v10700 = vsel %vm10687, %v10645, 0.0
    %v10701 = vsel %vm10688, %v10647, 0.0
    %v10702 = vsel %vm10688, %v10649, 0.0
    %v10703 = vsel %vm10689, %v10651, 0.0
    %v10704 = vsel %vm10689, %v10653, 0.0
    %v10705 = vsel %vm10690, %v10655, 0.0
    %v10706 = vsel %vm10690, %v10657, 0.0
    %10723 = vrot.lane.b32.xlu0 %v10691, 123
    %v10724 = vpop.permute.xlu0 %10723
    %10725 = vrot.lane.b32.xlu0 %v10692, 123
    %v10726 = vpop.permute.xlu0 %10725
    %10727 = vrot.lane.b32.xlu0 %v10693, 123
    %v10728 = vpop.permute.xlu0 %10727
    %10729 = vrot.lane.b32.xlu0 %v10694, 123
    %v10730 = vpop.permute.xlu0 %10729
    %10731 = vrot.lane.b32.xlu0 %v10695, 123
    %v10732 = vpop.permute.xlu0 %10731
    %10733 = vrot.lane.b32.xlu0 %v10696, 123
    %v10734 = vpop.permute.xlu0 %10733
    %10735 = vrot.lane.b32.xlu0 %v10697, 123
    %v10736 = vpop.permute.xlu0 %10735
    %10737 = vrot.lane.b32.xlu0 %v10698, 123
    %v10738 = vpop.permute.xlu0 %10737
    %10739 = vrot.lane.b32.xlu0 %v10699, 123
    %v10740 = vpop.permute.xlu0 %10739
    %10741 = vrot.lane.b32.xlu0 %v10700, 123
    %v10742 = vpop.permute.xlu0 %10741
    %10743 = vrot.lane.b32.xlu0 %v10701, 123
    %v10744 = vpop.permute.xlu0 %10743
    %10745 = vrot.lane.b32.xlu0 %v10702, 123
    %v10746 = vpop.permute.xlu0 %10745
    %10747 = vrot.lane.b32.xlu0 %v10703, 123
    %v10748 = vpop.permute.xlu0 %10747
    %10749 = vrot.lane.b32.xlu0 %v10704, 123
    %v10750 = vpop.permute.xlu0 %10749
    %10751 = vrot.lane.b32.xlu0 %v10705, 123
    %v10752 = vpop.permute.xlu0 %10751
    %10753 = vrot.lane.b32.xlu0 %v10706, 123
    %v10754 = vpop.permute.xlu0 %10753
    %vm10771 = vcmask 130048
    %v10772 = vsel %vm10771, %v10724, 0.0
    %v10773 = vsel %vm10771, %v10726, 0.0
    %v10774 = vadd.f32 %v10772, %v10773
    %v10775 = vsel %vm10771, %v10728, 0.0
    %v10776 = vadd.f32 %v10774, %v10775
    %v10777 = vsel %vm10771, %v10730, 0.0
    %v10778 = vadd.f32 %v10776, %v10777
    %v10779 = vsel %vm10771, %v10732, 0.0
    %v10780 = vadd.f32 %v10778, %v10779
    %v10781 = vsel %vm10771, %v10734, 0.0
    %v10782 = vadd.f32 %v10780, %v10781
    %v10783 = vsel %vm10771, %v10736, 0.0
    %v10784 = vadd.f32 %v10782, %v10783
    %v10785 = vsel %vm10771, %v10738, 0.0
    %v10786 = vadd.f32 %v10784, %v10785
    %v10787 = vsel %vm10771, %v10740, 0.0
    %v10788 = vadd.f32 %v10786, %v10787
    %v10789 = vsel %vm10771, %v10742, 0.0
    %v10790 = vadd.f32 %v10788, %v10789
    %v10791 = vsel %vm10771, %v10744, 0.0
    %v10792 = vadd.f32 %v10790, %v10791
    %v10793 = vsel %vm10771, %v10746, 0.0
    %v10794 = vadd.f32 %v10792, %v10793
    %v10795 = vsel %vm10771, %v10748, 0.0
    %v10796 = vadd.f32 %v10794, %v10795
    %v10797 = vsel %vm10771, %v10750, 0.0
    %v10798 = vadd.f32 %v10796, %v10797
    %v10799 = vsel %vm10771, %v10752, 0.0
    %v10800 = vadd.f32 %v10798, %v10799
    %v10801 = vsel %vm10771, %v10754, 0.0
    %v10802 = vadd.f32 %v10800, %v10801
    %10803 = vadd.xlane.f32.xlu0 %v10802
    %v10804 = vpop.xlane.xlu0 %10803
    %v10805 = vrot.slane %v10804, 4
    %v10806 = vadd.f32 %v10804, %v10805
    %v10807 = vrot.slane %v10806, 2
    %v10808 = vadd.f32 %v10806, %v10807
    %v10809 = vrot.slane %v10808, 1
    %v10810 = vadd.f32 %v10808, %v10809
    %s10811 = vtos %v10810
    %s10812 = scalar_lea.smem [#allocation7], 0
    %10813 = sst [smem:[%s10812]] %s10811
    // Predicated region
    $region18: #{tpu_custom_call.1} parent=1 // pred_check
      _
    $region19: #{tpu_custom_call.1} parent=1 // pred_check_branch
      %10815 = sbr.rel (0) target = $region21
    $region20: #{tpu_custom_call.1} parent=1 // pred_region
      %s10817 = ssub.s32 16, 16
      %10818 = vsyncadd [#allocation4], %s10817
      %10821 = dma.smem_to_hbm [#allocation7], 16, %s2, [#allocation4]
    $region21: #{tpu_custom_call.1} parent=1 // pred_fallthru
      _
    // Predicated region
    $region22: #{tpu_custom_call.1} parent=1 // pred_check
      _
    $region23: #{tpu_custom_call.1} parent=1 // pred_check_branch
      %10823 = sbr.rel (0) target = $region25
    $region24: #{tpu_custom_call.1} parent=1 // pred_region
      %10824 = dma.done [#allocation4], 16
    $region25: #{tpu_custom_call.1} parent=1 // pred_fallthru
      _
    %10825 = sfence
    %10826 = vsyncpa [#allocation3], 1
    %10827 = vsyncpa [#allocation6], 1
    %10828 = vsyncpa [#allocation4], 1

</llo_original>
